<compile_context>
chip_gen: v6e
topology: v6e:2x2x1
jax: 0.10.0
libtpu: 0.0.40
codegen_flags: <defaults>
</compile_context>

<pallas_src>
import numpy as np
import jax
import jax.numpy as jnp
from jax.experimental import pallas as pl
from jax.experimental.pallas import tpu as pltpu

H = 128          # hidden size (module's H)
IN_DIM = 7       # RNN input feature size
OUT_DIM = 3      # final linear output size
OUT_PAD = 128    # lane-dense padded output width (kernel writes (N, 128))
NUM_LAYERS = 3   # layers per nn.RNN stack


# ----------------------------------------------------------------------------
# Single fused Pallas kernel: 3 x (3-layer tanh RNN) + residual adds + MLP head
# ----------------------------------------------------------------------------
def _make_fused_kernel(S, B):
    """Kernel closure with static seq-len / batch so every slice is static."""
    f32 = jnp.float32

    def kernel(*refs):
        # refs layout:
        #   [0]        x_flat   (S*B, IN_DIM)
        #   [1:28]     3 RNN stacks x 3 layers x (wih, whh, b)   (27 refs)
        #   [28:40]    head: w4,b4, w5a,b5a, w5b,b5b, w6a,b6a, w6b,b6b, w7p,b7p
        #   [40]       out_ref  (S*B, OUT_PAD)
        #   [41]       seq_s    VMEM scratch (S*B, H), reused by all 9 layers
        x_ref = refs[0]
        rnn_refs = refs[1:28]
        (w4, b4, w5a, b5a, w5b, b5b,
         w6a, b6a, w6b, b6b, w7p, b7p) = refs[28:40]
        out_ref = refs[40]
        seq_s = refs[41]

        def run_layer(cur, wih, whh, b):
            # Time-parallel input projection (+fused bias) hoisted out of the
            # recurrence: one (S*B, D) @ (D, H) MXU pass, bias broadcast once.
            pre = jnp.dot(cur, wih[...], preferred_element_type=f32) + b[...]
            whh_v = whh[...]
            # Serial recurrence, fully unrolled (S small & static); only one
            # (B, H) @ (H, H) matmul + tanh per step on the critical path.
            h = jnp.tanh(pre[0:B, :])                       # h_{-1} == 0
            seq_s[0:B, :] = h
            for t in range(1, S):
                h = jnp.tanh(pre[t * B:(t + 1) * B, :]
                             + jnp.dot(h, whh_v, preferred_element_type=f32))
                seq_s[t * B:(t + 1) * B, :] = h
            return seq_s[...]

        def run_stack(cur, stack):
            for l in range(NUM_LAYERS):
                cur = run_layer(cur, stack[3 * l], stack[3 * l + 1],
                                stack[3 * l + 2])
            return cur

        x1 = run_stack(x_ref[...], rnn_refs[0:9])       # in_1
        x2 = run_stack(x1, rnn_refs[9:18])              # in_2
        x3 = run_stack(x1 + x2, rnn_refs[18:27])        # in_3

        h = x1 + x2 + x3                                # head input
        h = jnp.dot(h, w4[...], preferred_element_type=f32) + b4[...]    # in_4
        h = jnp.tanh(h)
        h = jnp.dot(h, w5a[...], preferred_element_type=f32) + b5a[...]
        h = jnp.tanh(h)
        h = jnp.dot(h, w5b[...], preferred_element_type=f32) + b5b[...]  # in_5
        h = jnp.tanh(h)
        h = jnp.dot(h, w6a[...], preferred_element_type=f32) + b6a[...]
        h = jnp.tanh(h)
        h = jnp.dot(h, w6b[...], preferred_element_type=f32) + b6b[...]  # in_6
        # Lane-dense final store: (N, 128); wrapper slices [:, :OUT_DIM].
        out_ref[...] = (jnp.dot(h, w7p[...], preferred_element_type=f32)
                        + b7p[...])                                       # in_7

    return kernel


def nnfunc_pallas(x, params):
    """x: (S, B, IN_DIM) f32  ->  (S, B, OUT_DIM) f32, one pallas_call."""
    S, B, D = x.shape
    N = S * B
    flat_params = (params["rnn1"] + params["rnn2"] + params["rnn3"]
                   + params["head"])
    out = pl.pallas_call(
        _make_fused_kernel(S, B),
        out_shape=jax.ShapeDtypeStruct((N, OUT_PAD), jnp.float32),
        scratch_shapes=[pltpu.VMEM((N, H), jnp.float32)],
    )(x.reshape(N, D), *flat_params)
    return out[:, :OUT_DIM].reshape(S, B, OUT_DIM)


# ----------------------------------------------------------------------------
# Parameter init (deterministic, PyTorch-style U(-1/sqrt(H), 1/sqrt(H)))
# Weights are stored pre-transposed: (in_features, out_features).
# ----------------------------------------------------------------------------
def init_params(key):
    scale = 1.0 / np.sqrt(H)

    def uni(k, shape):
        return jax.random.uniform(k, shape, jnp.float32, -scale, scale)

    keys = iter(jax.random.split(key, 64))

    def rnn_params(in_dim):
        ps = []
        d = in_dim
        for _ in range(NUM_LAYERS):
            wih = uni(next(keys), (d, H))
            whh = uni(next(keys), (H, H))
            # b_ih + b_hh fused into one bias row
            b = uni(next(keys), (1, H)) + uni(next(keys), (1, H))
            ps += [wih, whh, b]
            d = H
        return tuple(ps)

    def lin(in_dim, out_dim):
        return uni(next(keys), (in_dim, out_dim)), uni(next(keys), (1, out_dim))

    w4, b4 = lin(H, H)
    w5a, b5a = lin(H, H)
    w5b, b5b = lin(H, H)
    w6a, b6a = lin(H, H)
    w6b, b6b = lin(H, H)
    w7, b7 = lin(H, OUT_DIM)
    # Lane-dense final linear: zero-pad output dim 3 -> 128 once at init.
    w7p = jnp.zeros((H, OUT_PAD), jnp.float32).at[:, :OUT_DIM].set(w7)
    b7p = jnp.zeros((1, OUT_PAD), jnp.float32).at[:, :OUT_DIM].set(b7)

    L = np.array([[1.7671], [3.2653], [5.0813]], np.float32)
    C = np.array([1.0, 0.0, 0.0], np.float32)

    return {
        "rnn1": rnn_params(IN_DIM),
        "rnn2": rnn_params(H),
        "rnn3": rnn_params(H),
        "head": (w4, b4, w5a, b5a, w5b, b5b, w6a, b6a, w6b, b6b, w7p, b7p),
        "A1": jnp.array([[0.0, 0.1, 0.0], [-0.1, 0.0, 0.1], [0.0, 0.0, 0.0]],
                        jnp.float32),
        "BU": jnp.array([0.3, 0.0, 0.1], jnp.float32),
        "LC": jnp.asarray(L @ C.reshape(1, 3)),
    }


# ----------------------------------------------------------------------------
# NNfunc.forward
# ----------------------------------------------------------------------------
def nnfunc_forward(params, x, is_train=False, y=None):
    x_hat = nnfunc_pallas(x, params)                  # in_1 .. in_7 fused
    dX_dt_gt = 0.0
    if is_train:
        # ((A1 - LC) @ x_hat.T).T + BU + (LC @ y.T).T, over the last axis
        # TODO(synk): training-only affine term stays in plain JAX (trivial).
        M = params["A1"] - params["LC"]
        dX_dt_gt = (jnp.einsum("...i,ji->...j", x_hat, M)
                    + params["BU"]
                    + jnp.einsum("...i,ji->...j", y, params["LC"]))
    return x_hat, dX_dt_gt


# ----------------------------------------------------------------------------
# Pure-JAX reference (for correctness check)
# ----------------------------------------------------------------------------
def _dot(a, b):
    return jnp.dot(a, b, precision=jax.lax.Precision.HIGHEST)


def rnn_stack_ref(x, params):
    out = x
    for l in range(NUM_LAYERS):
        wih, whh, b = params[3 * l], params[3 * l + 1], params[3 * l + 2]

        def step(h, xt, wih=wih, whh=whh, b=b):
            h_new = jnp.tanh(_dot(xt, wih) + _dot(h, whh) + b[0])
            return h_new, h_new

        h0 = jnp.zeros((out.shape[1], whh.shape[0]), jnp.float32)
        _, out = jax.lax.scan(step, h0, out)
    return out


def nnfunc_forward_ref(params, x):
    x1 = rnn_stack_ref(x, params["rnn1"])
    x2 = rnn_stack_ref(x1, params["rnn2"])
    x3 = rnn_stack_ref(x1 + x2, params["rnn3"])
    h = x1 + x2 + x3
    (w4, b4, w5a, b5a, w5b, b5b, w6a, b6a, w6b, b6b, w7p, b7p) = params["head"]
    h = _dot(h, w4) + b4
    h = _dot(jnp.tanh(h), w5a) + b5a
    h = _dot(jnp.tanh(h), w5b) + b5b
    h = _dot(jnp.tanh(h), w6a) + b6a
    h = _dot(jnp.tanh(h), w6b) + b6b
    out = _dot(h, w7p) + b7p
    return out[..., :OUT_DIM]


# ----------------------------------------------------------------------------
if __name__ == "__main__":
    key = jax.random.PRNGKey(0)
    pkey, xkey = jax.random.split(key)

    params = init_params(pkey)

    S, B = 8, 2  # small seq / batch; feature dim fixed at 7 by the module
    x = jax.random.normal(xkey, (S, B, IN_DIM), jnp.float32)

    x_hat, dX_dt_gt = jax.jit(nnfunc_forward)(params, x)
    x_hat = jax.block_until_ready(x_hat)

    assert x_hat.shape == (S, B, OUT_DIM)
    assert dX_dt_gt == 0.0

    ref = jax.jit(nnfunc_forward_ref)(params, x)
    ref = jax.block_until_ready(ref)
    assert np.all(np.isfinite(np.asarray(x_hat)))
    assert np.allclose(np.asarray(x_hat), np.asarray(ref), atol=1e-2, rtol=1e-2)

    print("KERNEL_OK")
</pallas_src>

<mosaic_0001>
module attributes {stable_mosaic.version = 11 : i64} {
  func.func @kernel(%arg0: memref<16x7xf32, #tpu.memory_space<vmem>>, %arg1: memref<7x128xf32, #tpu.memory_space<vmem>>, %arg2: memref<128x128xf32, #tpu.memory_space<vmem>>, %arg3: memref<1x128xf32, #tpu.memory_space<vmem>>, %arg4: memref<128x128xf32, #tpu.memory_space<vmem>>, %arg5: memref<128x128xf32, #tpu.memory_space<vmem>>, %arg6: memref<1x128xf32, #tpu.memory_space<vmem>>, %arg7: memref<128x128xf32, #tpu.memory_space<vmem>>, %arg8: memref<128x128xf32, #tpu.memory_space<vmem>>, %arg9: memref<1x128xf32, #tpu.memory_space<vmem>>, %arg10: memref<128x128xf32, #tpu.memory_space<vmem>>, %arg11: memref<128x128xf32, #tpu.memory_space<vmem>>, %arg12: memref<1x128xf32, #tpu.memory_space<vmem>>, %arg13: memref<128x128xf32, #tpu.memory_space<vmem>>, %arg14: memref<128x128xf32, #tpu.memory_space<vmem>>, %arg15: memref<1x128xf32, #tpu.memory_space<vmem>>, %arg16: memref<128x128xf32, #tpu.memory_space<vmem>>, %arg17: memref<128x128xf32, #tpu.memory_space<vmem>>, %arg18: memref<1x128xf32, #tpu.memory_space<vmem>>, %arg19: memref<128x128xf32, #tpu.memory_space<vmem>>, %arg20: memref<128x128xf32, #tpu.memory_space<vmem>>, %arg21: memref<1x128xf32, #tpu.memory_space<vmem>>, %arg22: memref<128x128xf32, #tpu.memory_space<vmem>>, %arg23: memref<128x128xf32, #tpu.memory_space<vmem>>, %arg24: memref<1x128xf32, #tpu.memory_space<vmem>>, %arg25: memref<128x128xf32, #tpu.memory_space<vmem>>, %arg26: memref<128x128xf32, #tpu.memory_space<vmem>>, %arg27: memref<1x128xf32, #tpu.memory_space<vmem>>, %arg28: memref<128x128xf32, #tpu.memory_space<vmem>>, %arg29: memref<1x128xf32, #tpu.memory_space<vmem>>, %arg30: memref<128x128xf32, #tpu.memory_space<vmem>>, %arg31: memref<1x128xf32, #tpu.memory_space<vmem>>, %arg32: memref<128x128xf32, #tpu.memory_space<vmem>>, %arg33: memref<1x128xf32, #tpu.memory_space<vmem>>, %arg34: memref<128x128xf32, #tpu.memory_space<vmem>>, %arg35: memref<1x128xf32, #tpu.memory_space<vmem>>, %arg36: memref<128x128xf32, #tpu.memory_space<vmem>>, %arg37: memref<1x128xf32, #tpu.memory_space<vmem>>, %arg38: memref<128x128xf32, #tpu.memory_space<vmem>>, %arg39: memref<1x128xf32, #tpu.memory_space<vmem>>, %arg40: memref<16x128xf32, #tpu.memory_space<vmem>>, %arg41: memref<16x128xf32, #tpu.memory_space<vmem>>) attributes {dimension_semantics = [], scalar_prefetch = 0 : i64, scratch_operands = 1 : i64, tpu.core_type = #tpu.core_type<tc>} {
    %c0 = arith.constant 0 : index
    %c0_0 = arith.constant 0 : index
    %0 = vector.load %arg0[%c0, %c0_0] : memref<16x7xf32, #tpu.memory_space<vmem>>, vector<16x7xf32>
    %c0_1 = arith.constant 0 : index
    %c0_2 = arith.constant 0 : index
    %1 = vector.load %arg1[%c0_1, %c0_2] : memref<7x128xf32, #tpu.memory_space<vmem>>, vector<7x128xf32>
    %cst = arith.constant dense<0.000000e+00> : vector<16x128xf32>
    %2 = tpu.matmul %0, %1, %cst {dimension_numbers = #tpu.dot_dimension_numbers<[1], [0], [0], [1], [0, 0, 1, 1], [], []>} : vector<16x7xf32>, vector<7x128xf32>, vector<16x128xf32> -> vector<16x128xf32>
    %c0_3 = arith.constant 0 : index
    %c0_4 = arith.constant 0 : index
    %3 = vector.load %arg3[%c0_3, %c0_4] : memref<1x128xf32, #tpu.memory_space<vmem>>, vector<1x128xf32>
    %4 = vector.broadcast %3 : vector<1x128xf32> to vector<16x128xf32>
    %5 = arith.addf %2, %4 : vector<16x128xf32>
    %c0_5 = arith.constant 0 : index
    %c0_6 = arith.constant 0 : index
    %6 = vector.load %arg2[%c0_5, %c0_6] : memref<128x128xf32, #tpu.memory_space<vmem>>, vector<128x128xf32>
    %7 = vector.extract_strided_slice %5 {offsets = [0, 0], sizes = [2, 128], strides = [1, 1]} : vector<16x128xf32> to vector<2x128xf32>
    %8 = math.tanh %7 : vector<2x128xf32>
    %c0_7 = arith.constant 0 : index
    %c0_8 = arith.constant 0 : index
    %9 = vector.load %arg41[%c0_7, %c0_8] : memref<16x128xf32, #tpu.memory_space<vmem>>, vector<2x128xf32>
    tpu.vector_store %arg41[%c0_7, %c0_8], %8 {strides = array<i32>} : memref<16x128xf32, #tpu.memory_space<vmem>>, vector<2x128xf32>,
    %10 = vector.extract_strided_slice %5 {offsets = [2, 0], sizes = [2, 128], strides = [1, 1]} : vector<16x128xf32> to vector<2x128xf32>
    %cst_9 = arith.constant dense<0.000000e+00> : vector<2x128xf32>
    %11 = tpu.matmul %8, %6, %cst_9 {dimension_numbers = #tpu.dot_dimension_numbers<[1], [0], [0], [1], [0, 0, 1, 1], [], []>} : vector<2x128xf32>, vector<128x128xf32>, vector<2x128xf32> -> vector<2x128xf32>
    %12 = arith.addf %10, %11 : vector<2x128xf32>
    %13 = math.tanh %12 : vector<2x128xf32>
    %c2 = arith.constant 2 : index
    %c0_10 = arith.constant 0 : index
    %14 = vector.load %arg41[%c2, %c0_10] : memref<16x128xf32, #tpu.memory_space<vmem>>, vector<2x128xf32>
    tpu.vector_store %arg41[%c2, %c0_10], %13 {strides = array<i32>} : memref<16x128xf32, #tpu.memory_space<vmem>>, vector<2x128xf32>,
    %15 = vector.extract_strided_slice %5 {offsets = [4, 0], sizes = [2, 128], strides = [1, 1]} : vector<16x128xf32> to vector<2x128xf32>
    %cst_11 = arith.constant dense<0.000000e+00> : vector<2x128xf32>
    %16 = tpu.matmul %13, %6, %cst_11 {dimension_numbers = #tpu.dot_dimension_numbers<[1], [0], [0], [1], [0, 0, 1, 1], [], []>} : vector<2x128xf32>, vector<128x128xf32>, vector<2x128xf32> -> vector<2x128xf32>
    %17 = arith.addf %15, %16 : vector<2x128xf32>
    %18 = math.tanh %17 : vector<2x128xf32>
    %c4 = arith.constant 4 : index
    %c0_12 = arith.constant 0 : index
    %19 = vector.load %arg41[%c4, %c0_12] : memref<16x128xf32, #tpu.memory_space<vmem>>, vector<2x128xf32>
    tpu.vector_store %arg41[%c4, %c0_12], %18 {strides = array<i32>} : memref<16x128xf32, #tpu.memory_space<vmem>>, vector<2x128xf32>,
    %20 = vector.extract_strided_slice %5 {offsets = [6, 0], sizes = [2, 128], strides = [1, 1]} : vector<16x128xf32> to vector<2x128xf32>
    %cst_13 = arith.constant dense<0.000000e+00> : vector<2x128xf32>
    %21 = tpu.matmul %18, %6, %cst_13 {dimension_numbers = #tpu.dot_dimension_numbers<[1], [0], [0], [1], [0, 0, 1, 1], [], []>} : vector<2x128xf32>, vector<128x128xf32>, vector<2x128xf32> -> vector<2x128xf32>
    %22 = arith.addf %20, %21 : vector<2x128xf32>
    %23 = math.tanh %22 : vector<2x128xf32>
    %c6 = arith.constant 6 : index
    %c0_14 = arith.constant 0 : index
    %24 = vector.load %arg41[%c6, %c0_14] : memref<16x128xf32, #tpu.memory_space<vmem>>, vector<2x128xf32>
    tpu.vector_store %arg41[%c6, %c0_14], %23 {strides = array<i32>} : memref<16x128xf32, #tpu.memory_space<vmem>>, vector<2x128xf32>,
    %25 = vector.extract_strided_slice %5 {offsets = [8, 0], sizes = [2, 128], strides = [1, 1]} : vector<16x128xf32> to vector<2x128xf32>
    %cst_15 = arith.constant dense<0.000000e+00> : vector<2x128xf32>
    %26 = tpu.matmul %23, %6, %cst_15 {dimension_numbers = #tpu.dot_dimension_numbers<[1], [0], [0], [1], [0, 0, 1, 1], [], []>} : vector<2x128xf32>, vector<128x128xf32>, vector<2x128xf32> -> vector<2x128xf32>
    %27 = arith.addf %25, %26 : vector<2x128xf32>
    %28 = math.tanh %27 : vector<2x128xf32>
    %c8 = arith.constant 8 : index
    %c0_16 = arith.constant 0 : index
    %29 = vector.load %arg41[%c8, %c0_16] : memref<16x128xf32, #tpu.memory_space<vmem>>, vector<2x128xf32>
    tpu.vector_store %arg41[%c8, %c0_16], %28 {strides = array<i32>} : memref<16x128xf32, #tpu.memory_space<vmem>>, vector<2x128xf32>,
    %30 = vector.extract_strided_slice %5 {offsets = [10, 0], sizes = [2, 128], strides = [1, 1]} : vector<16x128xf32> to vector<2x128xf32>
    %cst_17 = arith.constant dense<0.000000e+00> : vector<2x128xf32>
    %31 = tpu.matmul %28, %6, %cst_17 {dimension_numbers = #tpu.dot_dimension_numbers<[1], [0], [0], [1], [0, 0, 1, 1], [], []>} : vector<2x128xf32>, vector<128x128xf32>, vector<2x128xf32> -> vector<2x128xf32>
    %32 = arith.addf %30, %31 : vector<2x128xf32>
    %33 = math.tanh %32 : vector<2x128xf32>
    %c10 = arith.constant 10 : index
    %c0_18 = arith.constant 0 : index
    %34 = vector.load %arg41[%c10, %c0_18] : memref<16x128xf32, #tpu.memory_space<vmem>>, vector<2x128xf32>
    tpu.vector_store %arg41[%c10, %c0_18], %33 {strides = array<i32>} : memref<16x128xf32, #tpu.memory_space<vmem>>, vector<2x128xf32>,
    %35 = vector.extract_strided_slice %5 {offsets = [12, 0], sizes = [2, 128], strides = [1, 1]} : vector<16x128xf32> to vector<2x128xf32>
    %cst_19 = arith.constant dense<0.000000e+00> : vector<2x128xf32>
    %36 = tpu.matmul %33, %6, %cst_19 {dimension_numbers = #tpu.dot_dimension_numbers<[1], [0], [0], [1], [0, 0, 1, 1], [], []>} : vector<2x128xf32>, vector<128x128xf32>, vector<2x128xf32> -> vector<2x128xf32>
    %37 = arith.addf %35, %36 : vector<2x128xf32>
    %38 = math.tanh %37 : vector<2x128xf32>
    %c12 = arith.constant 12 : index
    %c0_20 = arith.constant 0 : index
    %39 = vector.load %arg41[%c12, %c0_20] : memref<16x128xf32, #tpu.memory_space<vmem>>, vector<2x128xf32>
    tpu.vector_store %arg41[%c12, %c0_20], %38 {strides = array<i32>} : memref<16x128xf32, #tpu.memory_space<vmem>>, vector<2x128xf32>,
    %40 = vector.extract_strided_slice %5 {offsets = [14, 0], sizes = [2, 128], strides = [1, 1]} : vector<16x128xf32> to vector<2x128xf32>
    %cst_21 = arith.constant dense<0.000000e+00> : vector<2x128xf32>
    %41 = tpu.matmul %38, %6, %cst_21 {dimension_numbers = #tpu.dot_dimension_numbers<[1], [0], [0], [1], [0, 0, 1, 1], [], []>} : vector<2x128xf32>, vector<128x128xf32>, vector<2x128xf32> -> vector<2x128xf32>
    %42 = arith.addf %40, %41 : vector<2x128xf32>
    %43 = math.tanh %42 : vector<2x128xf32>
    %c14 = arith.constant 14 : index
    %c0_22 = arith.constant 0 : index
    %44 = vector.load %arg41[%c14, %c0_22] : memref<16x128xf32, #tpu.memory_space<vmem>>, vector<2x128xf32>
    tpu.vector_store %arg41[%c14, %c0_22], %43 {strides = array<i32>} : memref<16x128xf32, #tpu.memory_space<vmem>>, vector<2x128xf32>,
    %c0_23 = arith.constant 0 : index
    %c0_24 = arith.constant 0 : index
    %45 = vector.load %arg41[%c0_23, %c0_24] : memref<16x128xf32, #tpu.memory_space<vmem>>, vector<16x128xf32>
    %c0_25 = arith.constant 0 : index
    %c0_26 = arith.constant 0 : index
    %46 = vector.load %arg4[%c0_25, %c0_26] : memref<128x128xf32, #tpu.memory_space<vmem>>, vector<128x128xf32>
    %cst_27 = arith.constant dense<0.000000e+00> : vector<16x128xf32>
    %47 = tpu.matmul %45, %46, %cst_27 {dimension_numbers = #tpu.dot_dimension_numbers<[1], [0], [0], [1], [0, 0, 1, 1], [], []>} : vector<16x128xf32>, vector<128x128xf32>, vector<16x128xf32> -> vector<16x128xf32>
    %c0_28 = arith.constant 0 : index
    %c0_29 = arith.constant 0 : index
    %48 = vector.load %arg6[%c0_28, %c0_29] : memref<1x128xf32, #tpu.memory_space<vmem>>, vector<1x128xf32>
    %49 = vector.broadcast %48 : vector<1x128xf32> to vector<16x128xf32>
    %50 = arith.addf %47, %49 : vector<16x128xf32>
    %c0_30 = arith.constant 0 : index
    %c0_31 = arith.constant 0 : index
    %51 = vector.load %arg5[%c0_30, %c0_31] : memref<128x128xf32, #tpu.memory_space<vmem>>, vector<128x128xf32>
    %52 = vector.extract_strided_slice %50 {offsets = [0, 0], sizes = [2, 128], strides = [1, 1]} : vector<16x128xf32> to vector<2x128xf32>
    %53 = math.tanh %52 : vector<2x128xf32>
    %c0_32 = arith.constant 0 : index
    %c0_33 = arith.constant 0 : index
    %54 = vector.load %arg41[%c0_32, %c0_33] : memref<16x128xf32, #tpu.memory_space<vmem>>, vector<2x128xf32>
    tpu.vector_store %arg41[%c0_32, %c0_33], %53 {strides = array<i32>} : memref<16x128xf32, #tpu.memory_space<vmem>>, vector<2x128xf32>,
    %55 = vector.extract_strided_slice %50 {offsets = [2, 0], sizes = [2, 128], strides = [1, 1]} : vector<16x128xf32> to vector<2x128xf32>
    %cst_34 = arith.constant dense<0.000000e+00> : vector<2x128xf32>
    %56 = tpu.matmul %53, %51, %cst_34 {dimension_numbers = #tpu.dot_dimension_numbers<[1], [0], [0], [1], [0, 0, 1, 1], [], []>} : vector<2x128xf32>, vector<128x128xf32>, vector<2x128xf32> -> vector<2x128xf32>
    %57 = arith.addf %55, %56 : vector<2x128xf32>
    %58 = math.tanh %57 : vector<2x128xf32>
    %c2_35 = arith.constant 2 : index
    %c0_36 = arith.constant 0 : index
    %59 = vector.load %arg41[%c2_35, %c0_36] : memref<16x128xf32, #tpu.memory_space<vmem>>, vector<2x128xf32>
    tpu.vector_store %arg41[%c2_35, %c0_36], %58 {strides = array<i32>} : memref<16x128xf32, #tpu.memory_space<vmem>>, vector<2x128xf32>,
    %60 = vector.extract_strided_slice %50 {offsets = [4, 0], sizes = [2, 128], strides = [1, 1]} : vector<16x128xf32> to vector<2x128xf32>
    %cst_37 = arith.constant dense<0.000000e+00> : vector<2x128xf32>
    %61 = tpu.matmul %58, %51, %cst_37 {dimension_numbers = #tpu.dot_dimension_numbers<[1], [0], [0], [1], [0, 0, 1, 1], [], []>} : vector<2x128xf32>, vector<128x128xf32>, vector<2x128xf32> -> vector<2x128xf32>
    %62 = arith.addf %60, %61 : vector<2x128xf32>
    %63 = math.tanh %62 : vector<2x128xf32>
    %c4_38 = arith.constant 4 : index
    %c0_39 = arith.constant 0 : index
    %64 = vector.load %arg41[%c4_38, %c0_39] : memref<16x128xf32, #tpu.memory_space<vmem>>, vector<2x128xf32>
    tpu.vector_store %arg41[%c4_38, %c0_39], %63 {strides = array<i32>} : memref<16x128xf32, #tpu.memory_space<vmem>>, vector<2x128xf32>,
    %65 = vector.extract_strided_slice %50 {offsets = [6, 0], sizes = [2, 128], strides = [1, 1]} : vector<16x128xf32> to vector<2x128xf32>
    %cst_40 = arith.constant dense<0.000000e+00> : vector<2x128xf32>
    %66 = tpu.matmul %63, %51, %cst_40 {dimension_numbers = #tpu.dot_dimension_numbers<[1], [0], [0], [1], [0, 0, 1, 1], [], []>} : vector<2x128xf32>, vector<128x128xf32>, vector<2x128xf32> -> vector<2x128xf32>
    %67 = arith.addf %65, %66 : vector<2x128xf32>
    %68 = math.tanh %67 : vector<2x128xf32>
    %c6_41 = arith.constant 6 : index
    %c0_42 = arith.constant 0 : index
    %69 = vector.load %arg41[%c6_41, %c0_42] : memref<16x128xf32, #tpu.memory_space<vmem>>, vector<2x128xf32>
    tpu.vector_store %arg41[%c6_41, %c0_42], %68 {strides = array<i32>} : memref<16x128xf32, #tpu.memory_space<vmem>>, vector<2x128xf32>,
    %70 = vector.extract_strided_slice %50 {offsets = [8, 0], sizes = [2, 128], strides = [1, 1]} : vector<16x128xf32> to vector<2x128xf32>
    %cst_43 = arith.constant dense<0.000000e+00> : vector<2x128xf32>
    %71 = tpu.matmul %68, %51, %cst_43 {dimension_numbers = #tpu.dot_dimension_numbers<[1], [0], [0], [1], [0, 0, 1, 1], [], []>} : vector<2x128xf32>, vector<128x128xf32>, vector<2x128xf32> -> vector<2x128xf32>
    %72 = arith.addf %70, %71 : vector<2x128xf32>
    %73 = math.tanh %72 : vector<2x128xf32>
    %c8_44 = arith.constant 8 : index
    %c0_45 = arith.constant 0 : index
    %74 = vector.load %arg41[%c8_44, %c0_45] : memref<16x128xf32, #tpu.memory_space<vmem>>, vector<2x128xf32>
    tpu.vector_store %arg41[%c8_44, %c0_45], %73 {strides = array<i32>} : memref<16x128xf32, #tpu.memory_space<vmem>>, vector<2x128xf32>,
    %75 = vector.extract_strided_slice %50 {offsets = [10, 0], sizes = [2, 128], strides = [1, 1]} : vector<16x128xf32> to vector<2x128xf32>
    %cst_46 = arith.constant dense<0.000000e+00> : vector<2x128xf32>
    %76 = tpu.matmul %73, %51, %cst_46 {dimension_numbers = #tpu.dot_dimension_numbers<[1], [0], [0], [1], [0, 0, 1, 1], [], []>} : vector<2x128xf32>, vector<128x128xf32>, vector<2x128xf32> -> vector<2x128xf32>
    %77 = arith.addf %75, %76 : vector<2x128xf32>
    %78 = math.tanh %77 : vector<2x128xf32>
    %c10_47 = arith.constant 10 : index
    %c0_48 = arith.constant 0 : index
    %79 = vector.load %arg41[%c10_47, %c0_48] : memref<16x128xf32, #tpu.memory_space<vmem>>, vector<2x128xf32>
    tpu.vector_store %arg41[%c10_47, %c0_48], %78 {strides = array<i32>} : memref<16x128xf32, #tpu.memory_space<vmem>>, vector<2x128xf32>,
    %80 = vector.extract_strided_slice %50 {offsets = [12, 0], sizes = [2, 128], strides = [1, 1]} : vector<16x128xf32> to vector<2x128xf32>
    %cst_49 = arith.constant dense<0.000000e+00> : vector<2x128xf32>
    %81 = tpu.matmul %78, %51, %cst_49 {dimension_numbers = #tpu.dot_dimension_numbers<[1], [0], [0], [1], [0, 0, 1, 1], [], []>} : vector<2x128xf32>, vector<128x128xf32>, vector<2x128xf32> -> vector<2x128xf32>
    %82 = arith.addf %80, %81 : vector<2x128xf32>
    %83 = math.tanh %82 : vector<2x128xf32>
    %c12_50 = arith.constant 12 : index
    %c0_51 = arith.constant 0 : index
    %84 = vector.load %arg41[%c12_50, %c0_51] : memref<16x128xf32, #tpu.memory_space<vmem>>, vector<2x128xf32>
    tpu.vector_store %arg41[%c12_50, %c0_51], %83 {strides = array<i32>} : memref<16x128xf32, #tpu.memory_space<vmem>>, vector<2x128xf32>,
    %85 = vector.extract_strided_slice %50 {offsets = [14, 0], sizes = [2, 128], strides = [1, 1]} : vector<16x128xf32> to vector<2x128xf32>
    %cst_52 = arith.constant dense<0.000000e+00> : vector<2x128xf32>
    %86 = tpu.matmul %83, %51, %cst_52 {dimension_numbers = #tpu.dot_dimension_numbers<[1], [0], [0], [1], [0, 0, 1, 1], [], []>} : vector<2x128xf32>, vector<128x128xf32>, vector<2x128xf32> -> vector<2x128xf32>
    %87 = arith.addf %85, %86 : vector<2x128xf32>
    %88 = math.tanh %87 : vector<2x128xf32>
    %c14_53 = arith.constant 14 : index
    %c0_54 = arith.constant 0 : index
    %89 = vector.load %arg41[%c14_53, %c0_54] : memref<16x128xf32, #tpu.memory_space<vmem>>, vector<2x128xf32>
    tpu.vector_store %arg41[%c14_53, %c0_54], %88 {strides = array<i32>} : memref<16x128xf32, #tpu.memory_space<vmem>>, vector<2x128xf32>,
    %c0_55 = arith.constant 0 : index
    %c0_56 = arith.constant 0 : index
    %90 = vector.load %arg41[%c0_55, %c0_56] : memref<16x128xf32, #tpu.memory_space<vmem>>, vector<16x128xf32>
    %c0_57 = arith.constant 0 : index
    %c0_58 = arith.constant 0 : index
    %91 = vector.load %arg7[%c0_57, %c0_58] : memref<128x128xf32, #tpu.memory_space<vmem>>, vector<128x128xf32>
    %cst_59 = arith.constant dense<0.000000e+00> : vector<16x128xf32>
    %92 = tpu.matmul %90, %91, %cst_59 {dimension_numbers = #tpu.dot_dimension_numbers<[1], [0], [0], [1], [0, 0, 1, 1], [], []>} : vector<16x128xf32>, vector<128x128xf32>, vector<16x128xf32> -> vector<16x128xf32>
    %c0_60 = arith.constant 0 : index
    %c0_61 = arith.constant 0 : index
    %93 = vector.load %arg9[%c0_60, %c0_61] : memref<1x128xf32, #tpu.memory_space<vmem>>, vector<1x128xf32>
    %94 = vector.broadcast %93 : vector<1x128xf32> to vector<16x128xf32>
    %95 = arith.addf %92, %94 : vector<16x128xf32>
    %c0_62 = arith.constant 0 : index
    %c0_63 = arith.constant 0 : index
    %96 = vector.load %arg8[%c0_62, %c0_63] : memref<128x128xf32, #tpu.memory_space<vmem>>, vector<128x128xf32>
    %97 = vector.extract_strided_slice %95 {offsets = [0, 0], sizes = [2, 128], strides = [1, 1]} : vector<16x128xf32> to vector<2x128xf32>
    %98 = math.tanh %97 : vector<2x128xf32>
    %c0_64 = arith.constant 0 : index
    %c0_65 = arith.constant 0 : index
    %99 = vector.load %arg41[%c0_64, %c0_65] : memref<16x128xf32, #tpu.memory_space<vmem>>, vector<2x128xf32>
    tpu.vector_store %arg41[%c0_64, %c0_65], %98 {strides = array<i32>} : memref<16x128xf32, #tpu.memory_space<vmem>>, vector<2x128xf32>,
    %100 = vector.extract_strided_slice %95 {offsets = [2, 0], sizes = [2, 128], strides = [1, 1]} : vector<16x128xf32> to vector<2x128xf32>
    %cst_66 = arith.constant dense<0.000000e+00> : vector<2x128xf32>
    %101 = tpu.matmul %98, %96, %cst_66 {dimension_numbers = #tpu.dot_dimension_numbers<[1], [0], [0], [1], [0, 0, 1, 1], [], []>} : vector<2x128xf32>, vector<128x128xf32>, vector<2x128xf32> -> vector<2x128xf32>
    %102 = arith.addf %100, %101 : vector<2x128xf32>
    %103 = math.tanh %102 : vector<2x128xf32>
    %c2_67 = arith.constant 2 : index
    %c0_68 = arith.constant 0 : index
    %104 = vector.load %arg41[%c2_67, %c0_68] : memref<16x128xf32, #tpu.memory_space<vmem>>, vector<2x128xf32>
    tpu.vector_store %arg41[%c2_67, %c0_68], %103 {strides = array<i32>} : memref<16x128xf32, #tpu.memory_space<vmem>>, vector<2x128xf32>,
    %105 = vector.extract_strided_slice %95 {offsets = [4, 0], sizes = [2, 128], strides = [1, 1]} : vector<16x128xf32> to vector<2x128xf32>
    %cst_69 = arith.constant dense<0.000000e+00> : vector<2x128xf32>
    %106 = tpu.matmul %103, %96, %cst_69 {dimension_numbers = #tpu.dot_dimension_numbers<[1], [0], [0], [1], [0, 0, 1, 1], [], []>} : vector<2x128xf32>, vector<128x128xf32>, vector<2x128xf32> -> vector<2x128xf32>
    %107 = arith.addf %105, %106 : vector<2x128xf32>
    %108 = math.tanh %107 : vector<2x128xf32>
    %c4_70 = arith.constant 4 : index
    %c0_71 = arith.constant 0 : index
    %109 = vector.load %arg41[%c4_70, %c0_71] : memref<16x128xf32, #tpu.memory_space<vmem>>, vector<2x128xf32>
    tpu.vector_store %arg41[%c4_70, %c0_71], %108 {strides = array<i32>} : memref<16x128xf32, #tpu.memory_space<vmem>>, vector<2x128xf32>,
    %110 = vector.extract_strided_slice %95 {offsets = [6, 0], sizes = [2, 128], strides = [1, 1]} : vector<16x128xf32> to vector<2x128xf32>
    %cst_72 = arith.constant dense<0.000000e+00> : vector<2x128xf32>
    %111 = tpu.matmul %108, %96, %cst_72 {dimension_numbers = #tpu.dot_dimension_numbers<[1], [0], [0], [1], [0, 0, 1, 1], [], []>} : vector<2x128xf32>, vector<128x128xf32>, vector<2x128xf32> -> vector<2x128xf32>
    %112 = arith.addf %110, %111 : vector<2x128xf32>
    %113 = math.tanh %112 : vector<2x128xf32>
    %c6_73 = arith.constant 6 : index
    %c0_74 = arith.constant 0 : index
    %114 = vector.load %arg41[%c6_73, %c0_74] : memref<16x128xf32, #tpu.memory_space<vmem>>, vector<2x128xf32>
    tpu.vector_store %arg41[%c6_73, %c0_74], %113 {strides = array<i32>} : memref<16x128xf32, #tpu.memory_space<vmem>>, vector<2x128xf32>,
    %115 = vector.extract_strided_slice %95 {offsets = [8, 0], sizes = [2, 128], strides = [1, 1]} : vector<16x128xf32> to vector<2x128xf32>
    %cst_75 = arith.constant dense<0.000000e+00> : vector<2x128xf32>
    %116 = tpu.matmul %113, %96, %cst_75 {dimension_numbers = #tpu.dot_dimension_numbers<[1], [0], [0], [1], [0, 0, 1, 1], [], []>} : vector<2x128xf32>, vector<128x128xf32>, vector<2x128xf32> -> vector<2x128xf32>
    %117 = arith.addf %115, %116 : vector<2x128xf32>
    %118 = math.tanh %117 : vector<2x128xf32>
    %c8_76 = arith.constant 8 : index
    %c0_77 = arith.constant 0 : index
    %119 = vector.load %arg41[%c8_76, %c0_77] : memref<16x128xf32, #tpu.memory_space<vmem>>, vector<2x128xf32>
    tpu.vector_store %arg41[%c8_76, %c0_77], %118 {strides = array<i32>} : memref<16x128xf32, #tpu.memory_space<vmem>>, vector<2x128xf32>,
    %120 = vector.extract_strided_slice %95 {offsets = [10, 0], sizes = [2, 128], strides = [1, 1]} : vector<16x128xf32> to vector<2x128xf32>
    %cst_78 = arith.constant dense<0.000000e+00> : vector<2x128xf32>
    %121 = tpu.matmul %118, %96, %cst_78 {dimension_numbers = #tpu.dot_dimension_numbers<[1], [0], [0], [1], [0, 0, 1, 1], [], []>} : vector<2x128xf32>, vector<128x128xf32>, vector<2x128xf32> -> vector<2x128xf32>
    %122 = arith.addf %120, %121 : vector<2x128xf32>
    %123 = math.tanh %122 : vector<2x128xf32>
    %c10_79 = arith.constant 10 : index
    %c0_80 = arith.constant 0 : index
    %124 = vector.load %arg41[%c10_79, %c0_80] : memref<16x128xf32, #tpu.memory_space<vmem>>, vector<2x128xf32>
    tpu.vector_store %arg41[%c10_79, %c0_80], %123 {strides = array<i32>} : memref<16x128xf32, #tpu.memory_space<vmem>>, vector<2x128xf32>,
    %125 = vector.extract_strided_slice %95 {offsets = [12, 0], sizes = [2, 128], strides = [1, 1]} : vector<16x128xf32> to vector<2x128xf32>
    %cst_81 = arith.constant dense<0.000000e+00> : vector<2x128xf32>
    %126 = tpu.matmul %123, %96, %cst_81 {dimension_numbers = #tpu.dot_dimension_numbers<[1], [0], [0], [1], [0, 0, 1, 1], [], []>} : vector<2x128xf32>, vector<128x128xf32>, vector<2x128xf32> -> vector<2x128xf32>
    %127 = arith.addf %125, %126 : vector<2x128xf32>
    %128 = math.tanh %127 : vector<2x128xf32>
    %c12_82 = arith.constant 12 : index
    %c0_83 = arith.constant 0 : index
    %129 = vector.load %arg41[%c12_82, %c0_83] : memref<16x128xf32, #tpu.memory_space<vmem>>, vector<2x128xf32>
    tpu.vector_store %arg41[%c12_82, %c0_83], %128 {strides = array<i32>} : memref<16x128xf32, #tpu.memory_space<vmem>>, vector<2x128xf32>,
    %130 = vector.extract_strided_slice %95 {offsets = [14, 0], sizes = [2, 128], strides = [1, 1]} : vector<16x128xf32> to vector<2x128xf32>
    %cst_84 = arith.constant dense<0.000000e+00> : vector<2x128xf32>
    %131 = tpu.matmul %128, %96, %cst_84 {dimension_numbers = #tpu.dot_dimension_numbers<[1], [0], [0], [1], [0, 0, 1, 1], [], []>} : vector<2x128xf32>, vector<128x128xf32>, vector<2x128xf32> -> vector<2x128xf32>
    %132 = arith.addf %130, %131 : vector<2x128xf32>
    %133 = math.tanh %132 : vector<2x128xf32>
    %c14_85 = arith.constant 14 : index
    %c0_86 = arith.constant 0 : index
    %134 = vector.load %arg41[%c14_85, %c0_86] : memref<16x128xf32, #tpu.memory_space<vmem>>, vector<2x128xf32>
    tpu.vector_store %arg41[%c14_85, %c0_86], %133 {strides = array<i32>} : memref<16x128xf32, #tpu.memory_space<vmem>>, vector<2x128xf32>,
    %c0_87 = arith.constant 0 : index
    %c0_88 = arith.constant 0 : index
    %135 = vector.load %arg41[%c0_87, %c0_88] : memref<16x128xf32, #tpu.memory_space<vmem>>, vector<16x128xf32>
    %c0_89 = arith.constant 0 : index
    %c0_90 = arith.constant 0 : index
    %136 = vector.load %arg10[%c0_89, %c0_90] : memref<128x128xf32, #tpu.memory_space<vmem>>, vector<128x128xf32>
    %cst_91 = arith.constant dense<0.000000e+00> : vector<16x128xf32>
    %137 = tpu.matmul %135, %136, %cst_91 {dimension_numbers = #tpu.dot_dimension_numbers<[1], [0], [0], [1], [0, 0, 1, 1], [], []>} : vector<16x128xf32>, vector<128x128xf32>, vector<16x128xf32> -> vector<16x128xf32>
    %c0_92 = arith.constant 0 : index
    %c0_93 = arith.constant 0 : index
    %138 = vector.load %arg12[%c0_92, %c0_93] : memref<1x128xf32, #tpu.memory_space<vmem>>, vector<1x128xf32>
    %139 = vector.broadcast %138 : vector<1x128xf32> to vector<16x128xf32>
    %140 = arith.addf %137, %139 : vector<16x128xf32>
    %c0_94 = arith.constant 0 : index
    %c0_95 = arith.constant 0 : index
    %141 = vector.load %arg11[%c0_94, %c0_95] : memref<128x128xf32, #tpu.memory_space<vmem>>, vector<128x128xf32>
    %142 = vector.extract_strided_slice %140 {offsets = [0, 0], sizes = [2, 128], strides = [1, 1]} : vector<16x128xf32> to vector<2x128xf32>
    %143 = math.tanh %142 : vector<2x128xf32>
    %c0_96 = arith.constant 0 : index
    %c0_97 = arith.constant 0 : index
    %144 = vector.load %arg41[%c0_96, %c0_97] : memref<16x128xf32, #tpu.memory_space<vmem>>, vector<2x128xf32>
    tpu.vector_store %arg41[%c0_96, %c0_97], %143 {strides = array<i32>} : memref<16x128xf32, #tpu.memory_space<vmem>>, vector<2x128xf32>,
    %145 = vector.extract_strided_slice %140 {offsets = [2, 0], sizes = [2, 128], strides = [1, 1]} : vector<16x128xf32> to vector<2x128xf32>
    %cst_98 = arith.constant dense<0.000000e+00> : vector<2x128xf32>
    %146 = tpu.matmul %143, %141, %cst_98 {dimension_numbers = #tpu.dot_dimension_numbers<[1], [0], [0], [1], [0, 0, 1, 1], [], []>} : vector<2x128xf32>, vector<128x128xf32>, vector<2x128xf32> -> vector<2x128xf32>
    %147 = arith.addf %145, %146 : vector<2x128xf32>
    %148 = math.tanh %147 : vector<2x128xf32>
    %c2_99 = arith.constant 2 : index
    %c0_100 = arith.constant 0 : index
    %149 = vector.load %arg41[%c2_99, %c0_100] : memref<16x128xf32, #tpu.memory_space<vmem>>, vector<2x128xf32>
    tpu.vector_store %arg41[%c2_99, %c0_100], %148 {strides = array<i32>} : memref<16x128xf32, #tpu.memory_space<vmem>>, vector<2x128xf32>,
    %150 = vector.extract_strided_slice %140 {offsets = [4, 0], sizes = [2, 128], strides = [1, 1]} : vector<16x128xf32> to vector<2x128xf32>
    %cst_101 = arith.constant dense<0.000000e+00> : vector<2x128xf32>
    %151 = tpu.matmul %148, %141, %cst_101 {dimension_numbers = #tpu.dot_dimension_numbers<[1], [0], [0], [1], [0, 0, 1, 1], [], []>} : vector<2x128xf32>, vector<128x128xf32>, vector<2x128xf32> -> vector<2x128xf32>
    %152 = arith.addf %150, %151 : vector<2x128xf32>
    %153 = math.tanh %152 : vector<2x128xf32>
    %c4_102 = arith.constant 4 : index
    %c0_103 = arith.constant 0 : index
    %154 = vector.load %arg41[%c4_102, %c0_103] : memref<16x128xf32, #tpu.memory_space<vmem>>, vector<2x128xf32>
    tpu.vector_store %arg41[%c4_102, %c0_103], %153 {strides = array<i32>} : memref<16x128xf32, #tpu.memory_space<vmem>>, vector<2x128xf32>,
    %155 = vector.extract_strided_slice %140 {offsets = [6, 0], sizes = [2, 128], strides = [1, 1]} : vector<16x128xf32> to vector<2x128xf32>
    %cst_104 = arith.constant dense<0.000000e+00> : vector<2x128xf32>
    %156 = tpu.matmul %153, %141, %cst_104 {dimension_numbers = #tpu.dot_dimension_numbers<[1], [0], [0], [1], [0, 0, 1, 1], [], []>} : vector<2x128xf32>, vector<128x128xf32>, vector<2x128xf32> -> vector<2x128xf32>
    %157 = arith.addf %155, %156 : vector<2x128xf32>
    %158 = math.tanh %157 : vector<2x128xf32>
    %c6_105 = arith.constant 6 : index
    %c0_106 = arith.constant 0 : index
    %159 = vector.load %arg41[%c6_105, %c0_106] : memref<16x128xf32, #tpu.memory_space<vmem>>, vector<2x128xf32>
    tpu.vector_store %arg41[%c6_105, %c0_106], %158 {strides = array<i32>} : memref<16x128xf32, #tpu.memory_space<vmem>>, vector<2x128xf32>,
    %160 = vector.extract_strided_slice %140 {offsets = [8, 0], sizes = [2, 128], strides = [1, 1]} : vector<16x128xf32> to vector<2x128xf32>
    %cst_107 = arith.constant dense<0.000000e+00> : vector<2x128xf32>
    %161 = tpu.matmul %158, %141, %cst_107 {dimension_numbers = #tpu.dot_dimension_numbers<[1], [0], [0], [1], [0, 0, 1, 1], [], []>} : vector<2x128xf32>, vector<128x128xf32>, vector<2x128xf32> -> vector<2x128xf32>
    %162 = arith.addf %160, %161 : vector<2x128xf32>
    %163 = math.tanh %162 : vector<2x128xf32>
    %c8_108 = arith.constant 8 : index
    %c0_109 = arith.constant 0 : index
    %164 = vector.load %arg41[%c8_108, %c0_109] : memref<16x128xf32, #tpu.memory_space<vmem>>, vector<2x128xf32>
    tpu.vector_store %arg41[%c8_108, %c0_109], %163 {strides = array<i32>} : memref<16x128xf32, #tpu.memory_space<vmem>>, vector<2x128xf32>,
    %165 = vector.extract_strided_slice %140 {offsets = [10, 0], sizes = [2, 128], strides = [1, 1]} : vector<16x128xf32> to vector<2x128xf32>
    %cst_110 = arith.constant dense<0.000000e+00> : vector<2x128xf32>
    %166 = tpu.matmul %163, %141, %cst_110 {dimension_numbers = #tpu.dot_dimension_numbers<[1], [0], [0], [1], [0, 0, 1, 1], [], []>} : vector<2x128xf32>, vector<128x128xf32>, vector<2x128xf32> -> vector<2x128xf32>
    %167 = arith.addf %165, %166 : vector<2x128xf32>
    %168 = math.tanh %167 : vector<2x128xf32>
    %c10_111 = arith.constant 10 : index
    %c0_112 = arith.constant 0 : index
    %169 = vector.load %arg41[%c10_111, %c0_112] : memref<16x128xf32, #tpu.memory_space<vmem>>, vector<2x128xf32>
    tpu.vector_store %arg41[%c10_111, %c0_112], %168 {strides = array<i32>} : memref<16x128xf32, #tpu.memory_space<vmem>>, vector<2x128xf32>,
    %170 = vector.extract_strided_slice %140 {offsets = [12, 0], sizes = [2, 128], strides = [1, 1]} : vector<16x128xf32> to vector<2x128xf32>
    %cst_113 = arith.constant dense<0.000000e+00> : vector<2x128xf32>
    %171 = tpu.matmul %168, %141, %cst_113 {dimension_numbers = #tpu.dot_dimension_numbers<[1], [0], [0], [1], [0, 0, 1, 1], [], []>} : vector<2x128xf32>, vector<128x128xf32>, vector<2x128xf32> -> vector<2x128xf32>
    %172 = arith.addf %170, %171 : vector<2x128xf32>
    %173 = math.tanh %172 : vector<2x128xf32>
    %c12_114 = arith.constant 12 : index
    %c0_115 = arith.constant 0 : index
    %174 = vector.load %arg41[%c12_114, %c0_115] : memref<16x128xf32, #tpu.memory_space<vmem>>, vector<2x128xf32>
    tpu.vector_store %arg41[%c12_114, %c0_115], %173 {strides = array<i32>} : memref<16x128xf32, #tpu.memory_space<vmem>>, vector<2x128xf32>,
    %175 = vector.extract_strided_slice %140 {offsets = [14, 0], sizes = [2, 128], strides = [1, 1]} : vector<16x128xf32> to vector<2x128xf32>
    %cst_116 = arith.constant dense<0.000000e+00> : vector<2x128xf32>
    %176 = tpu.matmul %173, %141, %cst_116 {dimension_numbers = #tpu.dot_dimension_numbers<[1], [0], [0], [1], [0, 0, 1, 1], [], []>} : vector<2x128xf32>, vector<128x128xf32>, vector<2x128xf32> -> vector<2x128xf32>
    %177 = arith.addf %175, %176 : vector<2x128xf32>
    %178 = math.tanh %177 : vector<2x128xf32>
    %c14_117 = arith.constant 14 : index
    %c0_118 = arith.constant 0 : index
    %179 = vector.load %arg41[%c14_117, %c0_118] : memref<16x128xf32, #tpu.memory_space<vmem>>, vector<2x128xf32>
    tpu.vector_store %arg41[%c14_117, %c0_118], %178 {strides = array<i32>} : memref<16x128xf32, #tpu.memory_space<vmem>>, vector<2x128xf32>,
    %c0_119 = arith.constant 0 : index
    %c0_120 = arith.constant 0 : index
    %180 = vector.load %arg41[%c0_119, %c0_120] : memref<16x128xf32, #tpu.memory_space<vmem>>, vector<16x128xf32>
    %c0_121 = arith.constant 0 : index
    %c0_122 = arith.constant 0 : index
    %181 = vector.load %arg13[%c0_121, %c0_122] : memref<128x128xf32, #tpu.memory_space<vmem>>, vector<128x128xf32>
    %cst_123 = arith.constant dense<0.000000e+00> : vector<16x128xf32>
    %182 = tpu.matmul %180, %181, %cst_123 {dimension_numbers = #tpu.dot_dimension_numbers<[1], [0], [0], [1], [0, 0, 1, 1], [], []>} : vector<16x128xf32>, vector<128x128xf32>, vector<16x128xf32> -> vector<16x128xf32>
    %c0_124 = arith.constant 0 : index
    %c0_125 = arith.constant 0 : index
    %183 = vector.load %arg15[%c0_124, %c0_125] : memref<1x128xf32, #tpu.memory_space<vmem>>, vector<1x128xf32>
    %184 = vector.broadcast %183 : vector<1x128xf32> to vector<16x128xf32>
    %185 = arith.addf %182, %184 : vector<16x128xf32>
    %c0_126 = arith.constant 0 : index
    %c0_127 = arith.constant 0 : index
    %186 = vector.load %arg14[%c0_126, %c0_127] : memref<128x128xf32, #tpu.memory_space<vmem>>, vector<128x128xf32>
    %187 = vector.extract_strided_slice %185 {offsets = [0, 0], sizes = [2, 128], strides = [1, 1]} : vector<16x128xf32> to vector<2x128xf32>
    %188 = math.tanh %187 : vector<2x128xf32>
    %c0_128 = arith.constant 0 : index
    %c0_129 = arith.constant 0 : index
    %189 = vector.load %arg41[%c0_128, %c0_129] : memref<16x128xf32, #tpu.memory_space<vmem>>, vector<2x128xf32>
    tpu.vector_store %arg41[%c0_128, %c0_129], %188 {strides = array<i32>} : memref<16x128xf32, #tpu.memory_space<vmem>>, vector<2x128xf32>,
    %190 = vector.extract_strided_slice %185 {offsets = [2, 0], sizes = [2, 128], strides = [1, 1]} : vector<16x128xf32> to vector<2x128xf32>
    %cst_130 = arith.constant dense<0.000000e+00> : vector<2x128xf32>
    %191 = tpu.matmul %188, %186, %cst_130 {dimension_numbers = #tpu.dot_dimension_numbers<[1], [0], [0], [1], [0, 0, 1, 1], [], []>} : vector<2x128xf32>, vector<128x128xf32>, vector<2x128xf32> -> vector<2x128xf32>
    %192 = arith.addf %190, %191 : vector<2x128xf32>
    %193 = math.tanh %192 : vector<2x128xf32>
    %c2_131 = arith.constant 2 : index
    %c0_132 = arith.constant 0 : index
    %194 = vector.load %arg41[%c2_131, %c0_132] : memref<16x128xf32, #tpu.memory_space<vmem>>, vector<2x128xf32>
    tpu.vector_store %arg41[%c2_131, %c0_132], %193 {strides = array<i32>} : memref<16x128xf32, #tpu.memory_space<vmem>>, vector<2x128xf32>,
    %195 = vector.extract_strided_slice %185 {offsets = [4, 0], sizes = [2, 128], strides = [1, 1]} : vector<16x128xf32> to vector<2x128xf32>
    %cst_133 = arith.constant dense<0.000000e+00> : vector<2x128xf32>
    %196 = tpu.matmul %193, %186, %cst_133 {dimension_numbers = #tpu.dot_dimension_numbers<[1], [0], [0], [1], [0, 0, 1, 1], [], []>} : vector<2x128xf32>, vector<128x128xf32>, vector<2x128xf32> -> vector<2x128xf32>
    %197 = arith.addf %195, %196 : vector<2x128xf32>
    %198 = math.tanh %197 : vector<2x128xf32>
    %c4_134 = arith.constant 4 : index
    %c0_135 = arith.constant 0 : index
    %199 = vector.load %arg41[%c4_134, %c0_135] : memref<16x128xf32, #tpu.memory_space<vmem>>, vector<2x128xf32>
    tpu.vector_store %arg41[%c4_134, %c0_135], %198 {strides = array<i32>} : memref<16x128xf32, #tpu.memory_space<vmem>>, vector<2x128xf32>,
    %200 = vector.extract_strided_slice %185 {offsets = [6, 0], sizes = [2, 128], strides = [1, 1]} : vector<16x128xf32> to vector<2x128xf32>
    %cst_136 = arith.constant dense<0.000000e+00> : vector<2x128xf32>
    %201 = tpu.matmul %198, %186, %cst_136 {dimension_numbers = #tpu.dot_dimension_numbers<[1], [0], [0], [1], [0, 0, 1, 1], [], []>} : vector<2x128xf32>, vector<128x128xf32>, vector<2x128xf32> -> vector<2x128xf32>
    %202 = arith.addf %200, %201 : vector<2x128xf32>
    %203 = math.tanh %202 : vector<2x128xf32>
    %c6_137 = arith.constant 6 : index
    %c0_138 = arith.constant 0 : index
    %204 = vector.load %arg41[%c6_137, %c0_138] : memref<16x128xf32, #tpu.memory_space<vmem>>, vector<2x128xf32>
    tpu.vector_store %arg41[%c6_137, %c0_138], %203 {strides = array<i32>} : memref<16x128xf32, #tpu.memory_space<vmem>>, vector<2x128xf32>,
    %205 = vector.extract_strided_slice %185 {offsets = [8, 0], sizes = [2, 128], strides = [1, 1]} : vector<16x128xf32> to vector<2x128xf32>
    %cst_139 = arith.constant dense<0.000000e+00> : vector<2x128xf32>
    %206 = tpu.matmul %203, %186, %cst_139 {dimension_numbers = #tpu.dot_dimension_numbers<[1], [0], [0], [1], [0, 0, 1, 1], [], []>} : vector<2x128xf32>, vector<128x128xf32>, vector<2x128xf32> -> vector<2x128xf32>
    %207 = arith.addf %205, %206 : vector<2x128xf32>
    %208 = math.tanh %207 : vector<2x128xf32>
    %c8_140 = arith.constant 8 : index
    %c0_141 = arith.constant 0 : index
    %209 = vector.load %arg41[%c8_140, %c0_141] : memref<16x128xf32, #tpu.memory_space<vmem>>, vector<2x128xf32>
    tpu.vector_store %arg41[%c8_140, %c0_141], %208 {strides = array<i32>} : memref<16x128xf32, #tpu.memory_space<vmem>>, vector<2x128xf32>,
    %210 = vector.extract_strided_slice %185 {offsets = [10, 0], sizes = [2, 128], strides = [1, 1]} : vector<16x128xf32> to vector<2x128xf32>
    %cst_142 = arith.constant dense<0.000000e+00> : vector<2x128xf32>
    %211 = tpu.matmul %208, %186, %cst_142 {dimension_numbers = #tpu.dot_dimension_numbers<[1], [0], [0], [1], [0, 0, 1, 1], [], []>} : vector<2x128xf32>, vector<128x128xf32>, vector<2x128xf32> -> vector<2x128xf32>
    %212 = arith.addf %210, %211 : vector<2x128xf32>
    %213 = math.tanh %212 : vector<2x128xf32>
    %c10_143 = arith.constant 10 : index
    %c0_144 = arith.constant 0 : index
    %214 = vector.load %arg41[%c10_143, %c0_144] : memref<16x128xf32, #tpu.memory_space<vmem>>, vector<2x128xf32>
    tpu.vector_store %arg41[%c10_143, %c0_144], %213 {strides = array<i32>} : memref<16x128xf32, #tpu.memory_space<vmem>>, vector<2x128xf32>,
    %215 = vector.extract_strided_slice %185 {offsets = [12, 0], sizes = [2, 128], strides = [1, 1]} : vector<16x128xf32> to vector<2x128xf32>
    %cst_145 = arith.constant dense<0.000000e+00> : vector<2x128xf32>
    %216 = tpu.matmul %213, %186, %cst_145 {dimension_numbers = #tpu.dot_dimension_numbers<[1], [0], [0], [1], [0, 0, 1, 1], [], []>} : vector<2x128xf32>, vector<128x128xf32>, vector<2x128xf32> -> vector<2x128xf32>
    %217 = arith.addf %215, %216 : vector<2x128xf32>
    %218 = math.tanh %217 : vector<2x128xf32>
    %c12_146 = arith.constant 12 : index
    %c0_147 = arith.constant 0 : index
    %219 = vector.load %arg41[%c12_146, %c0_147] : memref<16x128xf32, #tpu.memory_space<vmem>>, vector<2x128xf32>
    tpu.vector_store %arg41[%c12_146, %c0_147], %218 {strides = array<i32>} : memref<16x128xf32, #tpu.memory_space<vmem>>, vector<2x128xf32>,
    %220 = vector.extract_strided_slice %185 {offsets = [14, 0], sizes = [2, 128], strides = [1, 1]} : vector<16x128xf32> to vector<2x128xf32>
    %cst_148 = arith.constant dense<0.000000e+00> : vector<2x128xf32>
    %221 = tpu.matmul %218, %186, %cst_148 {dimension_numbers = #tpu.dot_dimension_numbers<[1], [0], [0], [1], [0, 0, 1, 1], [], []>} : vector<2x128xf32>, vector<128x128xf32>, vector<2x128xf32> -> vector<2x128xf32>
    %222 = arith.addf %220, %221 : vector<2x128xf32>
    %223 = math.tanh %222 : vector<2x128xf32>
    %c14_149 = arith.constant 14 : index
    %c0_150 = arith.constant 0 : index
    %224 = vector.load %arg41[%c14_149, %c0_150] : memref<16x128xf32, #tpu.memory_space<vmem>>, vector<2x128xf32>
    tpu.vector_store %arg41[%c14_149, %c0_150], %223 {strides = array<i32>} : memref<16x128xf32, #tpu.memory_space<vmem>>, vector<2x128xf32>,
    %c0_151 = arith.constant 0 : index
    %c0_152 = arith.constant 0 : index
    %225 = vector.load %arg41[%c0_151, %c0_152] : memref<16x128xf32, #tpu.memory_space<vmem>>, vector<16x128xf32>
    %c0_153 = arith.constant 0 : index
    %c0_154 = arith.constant 0 : index
    %226 = vector.load %arg16[%c0_153, %c0_154] : memref<128x128xf32, #tpu.memory_space<vmem>>, vector<128x128xf32>
    %cst_155 = arith.constant dense<0.000000e+00> : vector<16x128xf32>
    %227 = tpu.matmul %225, %226, %cst_155 {dimension_numbers = #tpu.dot_dimension_numbers<[1], [0], [0], [1], [0, 0, 1, 1], [], []>} : vector<16x128xf32>, vector<128x128xf32>, vector<16x128xf32> -> vector<16x128xf32>
    %c0_156 = arith.constant 0 : index
    %c0_157 = arith.constant 0 : index
    %228 = vector.load %arg18[%c0_156, %c0_157] : memref<1x128xf32, #tpu.memory_space<vmem>>, vector<1x128xf32>
    %229 = vector.broadcast %228 : vector<1x128xf32> to vector<16x128xf32>
    %230 = arith.addf %227, %229 : vector<16x128xf32>
    %c0_158 = arith.constant 0 : index
    %c0_159 = arith.constant 0 : index
    %231 = vector.load %arg17[%c0_158, %c0_159] : memref<128x128xf32, #tpu.memory_space<vmem>>, vector<128x128xf32>
    %232 = vector.extract_strided_slice %230 {offsets = [0, 0], sizes = [2, 128], strides = [1, 1]} : vector<16x128xf32> to vector<2x128xf32>
    %233 = math.tanh %232 : vector<2x128xf32>
    %c0_160 = arith.constant 0 : index
    %c0_161 = arith.constant 0 : index
    %234 = vector.load %arg41[%c0_160, %c0_161] : memref<16x128xf32, #tpu.memory_space<vmem>>, vector<2x128xf32>
    tpu.vector_store %arg41[%c0_160, %c0_161], %233 {strides = array<i32>} : memref<16x128xf32, #tpu.memory_space<vmem>>, vector<2x128xf32>,
    %235 = vector.extract_strided_slice %230 {offsets = [2, 0], sizes = [2, 128], strides = [1, 1]} : vector<16x128xf32> to vector<2x128xf32>
    %cst_162 = arith.constant dense<0.000000e+00> : vector<2x128xf32>
    %236 = tpu.matmul %233, %231, %cst_162 {dimension_numbers = #tpu.dot_dimension_numbers<[1], [0], [0], [1], [0, 0, 1, 1], [], []>} : vector<2x128xf32>, vector<128x128xf32>, vector<2x128xf32> -> vector<2x128xf32>
    %237 = arith.addf %235, %236 : vector<2x128xf32>
    %238 = math.tanh %237 : vector<2x128xf32>
    %c2_163 = arith.constant 2 : index
    %c0_164 = arith.constant 0 : index
    %239 = vector.load %arg41[%c2_163, %c0_164] : memref<16x128xf32, #tpu.memory_space<vmem>>, vector<2x128xf32>
    tpu.vector_store %arg41[%c2_163, %c0_164], %238 {strides = array<i32>} : memref<16x128xf32, #tpu.memory_space<vmem>>, vector<2x128xf32>,
    %240 = vector.extract_strided_slice %230 {offsets = [4, 0], sizes = [2, 128], strides = [1, 1]} : vector<16x128xf32> to vector<2x128xf32>
    %cst_165 = arith.constant dense<0.000000e+00> : vector<2x128xf32>
    %241 = tpu.matmul %238, %231, %cst_165 {dimension_numbers = #tpu.dot_dimension_numbers<[1], [0], [0], [1], [0, 0, 1, 1], [], []>} : vector<2x128xf32>, vector<128x128xf32>, vector<2x128xf32> -> vector<2x128xf32>
    %242 = arith.addf %240, %241 : vector<2x128xf32>
    %243 = math.tanh %242 : vector<2x128xf32>
    %c4_166 = arith.constant 4 : index
    %c0_167 = arith.constant 0 : index
    %244 = vector.load %arg41[%c4_166, %c0_167] : memref<16x128xf32, #tpu.memory_space<vmem>>, vector<2x128xf32>
    tpu.vector_store %arg41[%c4_166, %c0_167], %243 {strides = array<i32>} : memref<16x128xf32, #tpu.memory_space<vmem>>, vector<2x128xf32>,
    %245 = vector.extract_strided_slice %230 {offsets = [6, 0], sizes = [2, 128], strides = [1, 1]} : vector<16x128xf32> to vector<2x128xf32>
    %cst_168 = arith.constant dense<0.000000e+00> : vector<2x128xf32>
    %246 = tpu.matmul %243, %231, %cst_168 {dimension_numbers = #tpu.dot_dimension_numbers<[1], [0], [0], [1], [0, 0, 1, 1], [], []>} : vector<2x128xf32>, vector<128x128xf32>, vector<2x128xf32> -> vector<2x128xf32>
    %247 = arith.addf %245, %246 : vector<2x128xf32>
    %248 = math.tanh %247 : vector<2x128xf32>
    %c6_169 = arith.constant 6 : index
    %c0_170 = arith.constant 0 : index
    %249 = vector.load %arg41[%c6_169, %c0_170] : memref<16x128xf32, #tpu.memory_space<vmem>>, vector<2x128xf32>
    tpu.vector_store %arg41[%c6_169, %c0_170], %248 {strides = array<i32>} : memref<16x128xf32, #tpu.memory_space<vmem>>, vector<2x128xf32>,
    %250 = vector.extract_strided_slice %230 {offsets = [8, 0], sizes = [2, 128], strides = [1, 1]} : vector<16x128xf32> to vector<2x128xf32>
    %cst_171 = arith.constant dense<0.000000e+00> : vector<2x128xf32>
    %251 = tpu.matmul %248, %231, %cst_171 {dimension_numbers = #tpu.dot_dimension_numbers<[1], [0], [0], [1], [0, 0, 1, 1], [], []>} : vector<2x128xf32>, vector<128x128xf32>, vector<2x128xf32> -> vector<2x128xf32>
    %252 = arith.addf %250, %251 : vector<2x128xf32>
    %253 = math.tanh %252 : vector<2x128xf32>
    %c8_172 = arith.constant 8 : index
    %c0_173 = arith.constant 0 : index
    %254 = vector.load %arg41[%c8_172, %c0_173] : memref<16x128xf32, #tpu.memory_space<vmem>>, vector<2x128xf32>
    tpu.vector_store %arg41[%c8_172, %c0_173], %253 {strides = array<i32>} : memref<16x128xf32, #tpu.memory_space<vmem>>, vector<2x128xf32>,
    %255 = vector.extract_strided_slice %230 {offsets = [10, 0], sizes = [2, 128], strides = [1, 1]} : vector<16x128xf32> to vector<2x128xf32>
    %cst_174 = arith.constant dense<0.000000e+00> : vector<2x128xf32>
    %256 = tpu.matmul %253, %231, %cst_174 {dimension_numbers = #tpu.dot_dimension_numbers<[1], [0], [0], [1], [0, 0, 1, 1], [], []>} : vector<2x128xf32>, vector<128x128xf32>, vector<2x128xf32> -> vector<2x128xf32>
    %257 = arith.addf %255, %256 : vector<2x128xf32>
    %258 = math.tanh %257 : vector<2x128xf32>
    %c10_175 = arith.constant 10 : index
    %c0_176 = arith.constant 0 : index
    %259 = vector.load %arg41[%c10_175, %c0_176] : memref<16x128xf32, #tpu.memory_space<vmem>>, vector<2x128xf32>
    tpu.vector_store %arg41[%c10_175, %c0_176], %258 {strides = array<i32>} : memref<16x128xf32, #tpu.memory_space<vmem>>, vector<2x128xf32>,
    %260 = vector.extract_strided_slice %230 {offsets = [12, 0], sizes = [2, 128], strides = [1, 1]} : vector<16x128xf32> to vector<2x128xf32>
    %cst_177 = arith.constant dense<0.000000e+00> : vector<2x128xf32>
    %261 = tpu.matmul %258, %231, %cst_177 {dimension_numbers = #tpu.dot_dimension_numbers<[1], [0], [0], [1], [0, 0, 1, 1], [], []>} : vector<2x128xf32>, vector<128x128xf32>, vector<2x128xf32> -> vector<2x128xf32>
    %262 = arith.addf %260, %261 : vector<2x128xf32>
    %263 = math.tanh %262 : vector<2x128xf32>
    %c12_178 = arith.constant 12 : index
    %c0_179 = arith.constant 0 : index
    %264 = vector.load %arg41[%c12_178, %c0_179] : memref<16x128xf32, #tpu.memory_space<vmem>>, vector<2x128xf32>
    tpu.vector_store %arg41[%c12_178, %c0_179], %263 {strides = array<i32>} : memref<16x128xf32, #tpu.memory_space<vmem>>, vector<2x128xf32>,
    %265 = vector.extract_strided_slice %230 {offsets = [14, 0], sizes = [2, 128], strides = [1, 1]} : vector<16x128xf32> to vector<2x128xf32>
    %cst_180 = arith.constant dense<0.000000e+00> : vector<2x128xf32>
    %266 = tpu.matmul %263, %231, %cst_180 {dimension_numbers = #tpu.dot_dimension_numbers<[1], [0], [0], [1], [0, 0, 1, 1], [], []>} : vector<2x128xf32>, vector<128x128xf32>, vector<2x128xf32> -> vector<2x128xf32>
    %267 = arith.addf %265, %266 : vector<2x128xf32>
    %268 = math.tanh %267 : vector<2x128xf32>
    %c14_181 = arith.constant 14 : index
    %c0_182 = arith.constant 0 : index
    %269 = vector.load %arg41[%c14_181, %c0_182] : memref<16x128xf32, #tpu.memory_space<vmem>>, vector<2x128xf32>
    tpu.vector_store %arg41[%c14_181, %c0_182], %268 {strides = array<i32>} : memref<16x128xf32, #tpu.memory_space<vmem>>, vector<2x128xf32>,
    %c0_183 = arith.constant 0 : index
    %c0_184 = arith.constant 0 : index
    %270 = vector.load %arg41[%c0_183, %c0_184] : memref<16x128xf32, #tpu.memory_space<vmem>>, vector<16x128xf32>
    %271 = arith.addf %135, %270 : vector<16x128xf32>
    %c0_185 = arith.constant 0 : index
    %c0_186 = arith.constant 0 : index
    %272 = vector.load %arg19[%c0_185, %c0_186] : memref<128x128xf32, #tpu.memory_space<vmem>>, vector<128x128xf32>
    %cst_187 = arith.constant dense<0.000000e+00> : vector<16x128xf32>
    %273 = tpu.matmul %271, %272, %cst_187 {dimension_numbers = #tpu.dot_dimension_numbers<[1], [0], [0], [1], [0, 0, 1, 1], [], []>} : vector<16x128xf32>, vector<128x128xf32>, vector<16x128xf32> -> vector<16x128xf32>
    %c0_188 = arith.constant 0 : index
    %c0_189 = arith.constant 0 : index
    %274 = vector.load %arg21[%c0_188, %c0_189] : memref<1x128xf32, #tpu.memory_space<vmem>>, vector<1x128xf32>
    %275 = vector.broadcast %274 : vector<1x128xf32> to vector<16x128xf32>
    %276 = arith.addf %273, %275 : vector<16x128xf32>
    %c0_190 = arith.constant 0 : index
    %c0_191 = arith.constant 0 : index
    %277 = vector.load %arg20[%c0_190, %c0_191] : memref<128x128xf32, #tpu.memory_space<vmem>>, vector<128x128xf32>
    %278 = vector.extract_strided_slice %276 {offsets = [0, 0], sizes = [2, 128], strides = [1, 1]} : vector<16x128xf32> to vector<2x128xf32>
    %279 = math.tanh %278 : vector<2x128xf32>
    %c0_192 = arith.constant 0 : index
    %c0_193 = arith.constant 0 : index
    %280 = vector.load %arg41[%c0_192, %c0_193] : memref<16x128xf32, #tpu.memory_space<vmem>>, vector<2x128xf32>
    tpu.vector_store %arg41[%c0_192, %c0_193], %279 {strides = array<i32>} : memref<16x128xf32, #tpu.memory_space<vmem>>, vector<2x128xf32>,
    %281 = vector.extract_strided_slice %276 {offsets = [2, 0], sizes = [2, 128], strides = [1, 1]} : vector<16x128xf32> to vector<2x128xf32>
    %cst_194 = arith.constant dense<0.000000e+00> : vector<2x128xf32>
    %282 = tpu.matmul %279, %277, %cst_194 {dimension_numbers = #tpu.dot_dimension_numbers<[1], [0], [0], [1], [0, 0, 1, 1], [], []>} : vector<2x128xf32>, vector<128x128xf32>, vector<2x128xf32> -> vector<2x128xf32>
    %283 = arith.addf %281, %282 : vector<2x128xf32>
    %284 = math.tanh %283 : vector<2x128xf32>
    %c2_195 = arith.constant 2 : index
    %c0_196 = arith.constant 0 : index
    %285 = vector.load %arg41[%c2_195, %c0_196] : memref<16x128xf32, #tpu.memory_space<vmem>>, vector<2x128xf32>
    tpu.vector_store %arg41[%c2_195, %c0_196], %284 {strides = array<i32>} : memref<16x128xf32, #tpu.memory_space<vmem>>, vector<2x128xf32>,
    %286 = vector.extract_strided_slice %276 {offsets = [4, 0], sizes = [2, 128], strides = [1, 1]} : vector<16x128xf32> to vector<2x128xf32>
    %cst_197 = arith.constant dense<0.000000e+00> : vector<2x128xf32>
    %287 = tpu.matmul %284, %277, %cst_197 {dimension_numbers = #tpu.dot_dimension_numbers<[1], [0], [0], [1], [0, 0, 1, 1], [], []>} : vector<2x128xf32>, vector<128x128xf32>, vector<2x128xf32> -> vector<2x128xf32>
    %288 = arith.addf %286, %287 : vector<2x128xf32>
    %289 = math.tanh %288 : vector<2x128xf32>
    %c4_198 = arith.constant 4 : index
    %c0_199 = arith.constant 0 : index
    %290 = vector.load %arg41[%c4_198, %c0_199] : memref<16x128xf32, #tpu.memory_space<vmem>>, vector<2x128xf32>
    tpu.vector_store %arg41[%c4_198, %c0_199], %289 {strides = array<i32>} : memref<16x128xf32, #tpu.memory_space<vmem>>, vector<2x128xf32>,
    %291 = vector.extract_strided_slice %276 {offsets = [6, 0], sizes = [2, 128], strides = [1, 1]} : vector<16x128xf32> to vector<2x128xf32>
    %cst_200 = arith.constant dense<0.000000e+00> : vector<2x128xf32>
    %292 = tpu.matmul %289, %277, %cst_200 {dimension_numbers = #tpu.dot_dimension_numbers<[1], [0], [0], [1], [0, 0, 1, 1], [], []>} : vector<2x128xf32>, vector<128x128xf32>, vector<2x128xf32> -> vector<2x128xf32>
    %293 = arith.addf %291, %292 : vector<2x128xf32>
    %294 = math.tanh %293 : vector<2x128xf32>
    %c6_201 = arith.constant 6 : index
    %c0_202 = arith.constant 0 : index
    %295 = vector.load %arg41[%c6_201, %c0_202] : memref<16x128xf32, #tpu.memory_space<vmem>>, vector<2x128xf32>
    tpu.vector_store %arg41[%c6_201, %c0_202], %294 {strides = array<i32>} : memref<16x128xf32, #tpu.memory_space<vmem>>, vector<2x128xf32>,
    %296 = vector.extract_strided_slice %276 {offsets = [8, 0], sizes = [2, 128], strides = [1, 1]} : vector<16x128xf32> to vector<2x128xf32>
    %cst_203 = arith.constant dense<0.000000e+00> : vector<2x128xf32>
    %297 = tpu.matmul %294, %277, %cst_203 {dimension_numbers = #tpu.dot_dimension_numbers<[1], [0], [0], [1], [0, 0, 1, 1], [], []>} : vector<2x128xf32>, vector<128x128xf32>, vector<2x128xf32> -> vector<2x128xf32>
    %298 = arith.addf %296, %297 : vector<2x128xf32>
    %299 = math.tanh %298 : vector<2x128xf32>
    %c8_204 = arith.constant 8 : index
    %c0_205 = arith.constant 0 : index
    %300 = vector.load %arg41[%c8_204, %c0_205] : memref<16x128xf32, #tpu.memory_space<vmem>>, vector<2x128xf32>
    tpu.vector_store %arg41[%c8_204, %c0_205], %299 {strides = array<i32>} : memref<16x128xf32, #tpu.memory_space<vmem>>, vector<2x128xf32>,
    %301 = vector.extract_strided_slice %276 {offsets = [10, 0], sizes = [2, 128], strides = [1, 1]} : vector<16x128xf32> to vector<2x128xf32>
    %cst_206 = arith.constant dense<0.000000e+00> : vector<2x128xf32>
    %302 = tpu.matmul %299, %277, %cst_206 {dimension_numbers = #tpu.dot_dimension_numbers<[1], [0], [0], [1], [0, 0, 1, 1], [], []>} : vector<2x128xf32>, vector<128x128xf32>, vector<2x128xf32> -> vector<2x128xf32>
    %303 = arith.addf %301, %302 : vector<2x128xf32>
    %304 = math.tanh %303 : vector<2x128xf32>
    %c10_207 = arith.constant 10 : index
    %c0_208 = arith.constant 0 : index
    %305 = vector.load %arg41[%c10_207, %c0_208] : memref<16x128xf32, #tpu.memory_space<vmem>>, vector<2x128xf32>
    tpu.vector_store %arg41[%c10_207, %c0_208], %304 {strides = array<i32>} : memref<16x128xf32, #tpu.memory_space<vmem>>, vector<2x128xf32>,
    %306 = vector.extract_strided_slice %276 {offsets = [12, 0], sizes = [2, 128], strides = [1, 1]} : vector<16x128xf32> to vector<2x128xf32>
    %cst_209 = arith.constant dense<0.000000e+00> : vector<2x128xf32>
    %307 = tpu.matmul %304, %277, %cst_209 {dimension_numbers = #tpu.dot_dimension_numbers<[1], [0], [0], [1], [0, 0, 1, 1], [], []>} : vector<2x128xf32>, vector<128x128xf32>, vector<2x128xf32> -> vector<2x128xf32>
    %308 = arith.addf %306, %307 : vector<2x128xf32>
    %309 = math.tanh %308 : vector<2x128xf32>
    %c12_210 = arith.constant 12 : index
    %c0_211 = arith.constant 0 : index
    %310 = vector.load %arg41[%c12_210, %c0_211] : memref<16x128xf32, #tpu.memory_space<vmem>>, vector<2x128xf32>
    tpu.vector_store %arg41[%c12_210, %c0_211], %309 {strides = array<i32>} : memref<16x128xf32, #tpu.memory_space<vmem>>, vector<2x128xf32>,
    %311 = vector.extract_strided_slice %276 {offsets = [14, 0], sizes = [2, 128], strides = [1, 1]} : vector<16x128xf32> to vector<2x128xf32>
    %cst_212 = arith.constant dense<0.000000e+00> : vector<2x128xf32>
    %312 = tpu.matmul %309, %277, %cst_212 {dimension_numbers = #tpu.dot_dimension_numbers<[1], [0], [0], [1], [0, 0, 1, 1], [], []>} : vector<2x128xf32>, vector<128x128xf32>, vector<2x128xf32> -> vector<2x128xf32>
    %313 = arith.addf %311, %312 : vector<2x128xf32>
    %314 = math.tanh %313 : vector<2x128xf32>
    %c14_213 = arith.constant 14 : index
    %c0_214 = arith.constant 0 : index
    %315 = vector.load %arg41[%c14_213, %c0_214] : memref<16x128xf32, #tpu.memory_space<vmem>>, vector<2x128xf32>
    tpu.vector_store %arg41[%c14_213, %c0_214], %314 {strides = array<i32>} : memref<16x128xf32, #tpu.memory_space<vmem>>, vector<2x128xf32>,
    %c0_215 = arith.constant 0 : index
    %c0_216 = arith.constant 0 : index
    %316 = vector.load %arg41[%c0_215, %c0_216] : memref<16x128xf32, #tpu.memory_space<vmem>>, vector<16x128xf32>
    %c0_217 = arith.constant 0 : index
    %c0_218 = arith.constant 0 : index
    %317 = vector.load %arg22[%c0_217, %c0_218] : memref<128x128xf32, #tpu.memory_space<vmem>>, vector<128x128xf32>
    %cst_219 = arith.constant dense<0.000000e+00> : vector<16x128xf32>
    %318 = tpu.matmul %316, %317, %cst_219 {dimension_numbers = #tpu.dot_dimension_numbers<[1], [0], [0], [1], [0, 0, 1, 1], [], []>} : vector<16x128xf32>, vector<128x128xf32>, vector<16x128xf32> -> vector<16x128xf32>
    %c0_220 = arith.constant 0 : index
    %c0_221 = arith.constant 0 : index
    %319 = vector.load %arg24[%c0_220, %c0_221] : memref<1x128xf32, #tpu.memory_space<vmem>>, vector<1x128xf32>
    %320 = vector.broadcast %319 : vector<1x128xf32> to vector<16x128xf32>
    %321 = arith.addf %318, %320 : vector<16x128xf32>
    %c0_222 = arith.constant 0 : index
    %c0_223 = arith.constant 0 : index
    %322 = vector.load %arg23[%c0_222, %c0_223] : memref<128x128xf32, #tpu.memory_space<vmem>>, vector<128x128xf32>
    %323 = vector.extract_strided_slice %321 {offsets = [0, 0], sizes = [2, 128], strides = [1, 1]} : vector<16x128xf32> to vector<2x128xf32>
    %324 = math.tanh %323 : vector<2x128xf32>
    %c0_224 = arith.constant 0 : index
    %c0_225 = arith.constant 0 : index
    %325 = vector.load %arg41[%c0_224, %c0_225] : memref<16x128xf32, #tpu.memory_space<vmem>>, vector<2x128xf32>
    tpu.vector_store %arg41[%c0_224, %c0_225], %324 {strides = array<i32>} : memref<16x128xf32, #tpu.memory_space<vmem>>, vector<2x128xf32>,
    %326 = vector.extract_strided_slice %321 {offsets = [2, 0], sizes = [2, 128], strides = [1, 1]} : vector<16x128xf32> to vector<2x128xf32>
    %cst_226 = arith.constant dense<0.000000e+00> : vector<2x128xf32>
    %327 = tpu.matmul %324, %322, %cst_226 {dimension_numbers = #tpu.dot_dimension_numbers<[1], [0], [0], [1], [0, 0, 1, 1], [], []>} : vector<2x128xf32>, vector<128x128xf32>, vector<2x128xf32> -> vector<2x128xf32>
    %328 = arith.addf %326, %327 : vector<2x128xf32>
    %329 = math.tanh %328 : vector<2x128xf32>
    %c2_227 = arith.constant 2 : index
    %c0_228 = arith.constant 0 : index
    %330 = vector.load %arg41[%c2_227, %c0_228] : memref<16x128xf32, #tpu.memory_space<vmem>>, vector<2x128xf32>
    tpu.vector_store %arg41[%c2_227, %c0_228], %329 {strides = array<i32>} : memref<16x128xf32, #tpu.memory_space<vmem>>, vector<2x128xf32>,
    %331 = vector.extract_strided_slice %321 {offsets = [4, 0], sizes = [2, 128], strides = [1, 1]} : vector<16x128xf32> to vector<2x128xf32>
    %cst_229 = arith.constant dense<0.000000e+00> : vector<2x128xf32>
    %332 = tpu.matmul %329, %322, %cst_229 {dimension_numbers = #tpu.dot_dimension_numbers<[1], [0], [0], [1], [0, 0, 1, 1], [], []>} : vector<2x128xf32>, vector<128x128xf32>, vector<2x128xf32> -> vector<2x128xf32>
    %333 = arith.addf %331, %332 : vector<2x128xf32>
    %334 = math.tanh %333 : vector<2x128xf32>
    %c4_230 = arith.constant 4 : index
    %c0_231 = arith.constant 0 : index
    %335 = vector.load %arg41[%c4_230, %c0_231] : memref<16x128xf32, #tpu.memory_space<vmem>>, vector<2x128xf32>
    tpu.vector_store %arg41[%c4_230, %c0_231], %334 {strides = array<i32>} : memref<16x128xf32, #tpu.memory_space<vmem>>, vector<2x128xf32>,
    %336 = vector.extract_strided_slice %321 {offsets = [6, 0], sizes = [2, 128], strides = [1, 1]} : vector<16x128xf32> to vector<2x128xf32>
    %cst_232 = arith.constant dense<0.000000e+00> : vector<2x128xf32>
    %337 = tpu.matmul %334, %322, %cst_232 {dimension_numbers = #tpu.dot_dimension_numbers<[1], [0], [0], [1], [0, 0, 1, 1], [], []>} : vector<2x128xf32>, vector<128x128xf32>, vector<2x128xf32> -> vector<2x128xf32>
    %338 = arith.addf %336, %337 : vector<2x128xf32>
    %339 = math.tanh %338 : vector<2x128xf32>
    %c6_233 = arith.constant 6 : index
    %c0_234 = arith.constant 0 : index
    %340 = vector.load %arg41[%c6_233, %c0_234] : memref<16x128xf32, #tpu.memory_space<vmem>>, vector<2x128xf32>
    tpu.vector_store %arg41[%c6_233, %c0_234], %339 {strides = array<i32>} : memref<16x128xf32, #tpu.memory_space<vmem>>, vector<2x128xf32>,
    %341 = vector.extract_strided_slice %321 {offsets = [8, 0], sizes = [2, 128], strides = [1, 1]} : vector<16x128xf32> to vector<2x128xf32>
    %cst_235 = arith.constant dense<0.000000e+00> : vector<2x128xf32>
    %342 = tpu.matmul %339, %322, %cst_235 {dimension_numbers = #tpu.dot_dimension_numbers<[1], [0], [0], [1], [0, 0, 1, 1], [], []>} : vector<2x128xf32>, vector<128x128xf32>, vector<2x128xf32> -> vector<2x128xf32>
    %343 = arith.addf %341, %342 : vector<2x128xf32>
    %344 = math.tanh %343 : vector<2x128xf32>
    %c8_236 = arith.constant 8 : index
    %c0_237 = arith.constant 0 : index
    %345 = vector.load %arg41[%c8_236, %c0_237] : memref<16x128xf32, #tpu.memory_space<vmem>>, vector<2x128xf32>
    tpu.vector_store %arg41[%c8_236, %c0_237], %344 {strides = array<i32>} : memref<16x128xf32, #tpu.memory_space<vmem>>, vector<2x128xf32>,
    %346 = vector.extract_strided_slice %321 {offsets = [10, 0], sizes = [2, 128], strides = [1, 1]} : vector<16x128xf32> to vector<2x128xf32>
    %cst_238 = arith.constant dense<0.000000e+00> : vector<2x128xf32>
    %347 = tpu.matmul %344, %322, %cst_238 {dimension_numbers = #tpu.dot_dimension_numbers<[1], [0], [0], [1], [0, 0, 1, 1], [], []>} : vector<2x128xf32>, vector<128x128xf32>, vector<2x128xf32> -> vector<2x128xf32>
    %348 = arith.addf %346, %347 : vector<2x128xf32>
    %349 = math.tanh %348 : vector<2x128xf32>
    %c10_239 = arith.constant 10 : index
    %c0_240 = arith.constant 0 : index
    %350 = vector.load %arg41[%c10_239, %c0_240] : memref<16x128xf32, #tpu.memory_space<vmem>>, vector<2x128xf32>
    tpu.vector_store %arg41[%c10_239, %c0_240], %349 {strides = array<i32>} : memref<16x128xf32, #tpu.memory_space<vmem>>, vector<2x128xf32>,
    %351 = vector.extract_strided_slice %321 {offsets = [12, 0], sizes = [2, 128], strides = [1, 1]} : vector<16x128xf32> to vector<2x128xf32>
    %cst_241 = arith.constant dense<0.000000e+00> : vector<2x128xf32>
    %352 = tpu.matmul %349, %322, %cst_241 {dimension_numbers = #tpu.dot_dimension_numbers<[1], [0], [0], [1], [0, 0, 1, 1], [], []>} : vector<2x128xf32>, vector<128x128xf32>, vector<2x128xf32> -> vector<2x128xf32>
    %353 = arith.addf %351, %352 : vector<2x128xf32>
    %354 = math.tanh %353 : vector<2x128xf32>
    %c12_242 = arith.constant 12 : index
    %c0_243 = arith.constant 0 : index
    %355 = vector.load %arg41[%c12_242, %c0_243] : memref<16x128xf32, #tpu.memory_space<vmem>>, vector<2x128xf32>
    tpu.vector_store %arg41[%c12_242, %c0_243], %354 {strides = array<i32>} : memref<16x128xf32, #tpu.memory_space<vmem>>, vector<2x128xf32>,
    %356 = vector.extract_strided_slice %321 {offsets = [14, 0], sizes = [2, 128], strides = [1, 1]} : vector<16x128xf32> to vector<2x128xf32>
    %cst_244 = arith.constant dense<0.000000e+00> : vector<2x128xf32>
    %357 = tpu.matmul %354, %322, %cst_244 {dimension_numbers = #tpu.dot_dimension_numbers<[1], [0], [0], [1], [0, 0, 1, 1], [], []>} : vector<2x128xf32>, vector<128x128xf32>, vector<2x128xf32> -> vector<2x128xf32>
    %358 = arith.addf %356, %357 : vector<2x128xf32>
    %359 = math.tanh %358 : vector<2x128xf32>
    %c14_245 = arith.constant 14 : index
    %c0_246 = arith.constant 0 : index
    %360 = vector.load %arg41[%c14_245, %c0_246] : memref<16x128xf32, #tpu.memory_space<vmem>>, vector<2x128xf32>
    tpu.vector_store %arg41[%c14_245, %c0_246], %359 {strides = array<i32>} : memref<16x128xf32, #tpu.memory_space<vmem>>, vector<2x128xf32>,
    %c0_247 = arith.constant 0 : index
    %c0_248 = arith.constant 0 : index
    %361 = vector.load %arg41[%c0_247, %c0_248] : memref<16x128xf32, #tpu.memory_space<vmem>>, vector<16x128xf32>
    %c0_249 = arith.constant 0 : index
    %c0_250 = arith.constant 0 : index
    %362 = vector.load %arg25[%c0_249, %c0_250] : memref<128x128xf32, #tpu.memory_space<vmem>>, vector<128x128xf32>
    %cst_251 = arith.constant dense<0.000000e+00> : vector<16x128xf32>
    %363 = tpu.matmul %361, %362, %cst_251 {dimension_numbers = #tpu.dot_dimension_numbers<[1], [0], [0], [1], [0, 0, 1, 1], [], []>} : vector<16x128xf32>, vector<128x128xf32>, vector<16x128xf32> -> vector<16x128xf32>
    %c0_252 = arith.constant 0 : index
    %c0_253 = arith.constant 0 : index
    %364 = vector.load %arg27[%c0_252, %c0_253] : memref<1x128xf32, #tpu.memory_space<vmem>>, vector<1x128xf32>
    %365 = vector.broadcast %364 : vector<1x128xf32> to vector<16x128xf32>
    %366 = arith.addf %363, %365 : vector<16x128xf32>
    %c0_254 = arith.constant 0 : index
    %c0_255 = arith.constant 0 : index
    %367 = vector.load %arg26[%c0_254, %c0_255] : memref<128x128xf32, #tpu.memory_space<vmem>>, vector<128x128xf32>
    %368 = vector.extract_strided_slice %366 {offsets = [0, 0], sizes = [2, 128], strides = [1, 1]} : vector<16x128xf32> to vector<2x128xf32>
    %369 = math.tanh %368 : vector<2x128xf32>
    %c0_256 = arith.constant 0 : index
    %c0_257 = arith.constant 0 : index
    %370 = vector.load %arg41[%c0_256, %c0_257] : memref<16x128xf32, #tpu.memory_space<vmem>>, vector<2x128xf32>
    tpu.vector_store %arg41[%c0_256, %c0_257], %369 {strides = array<i32>} : memref<16x128xf32, #tpu.memory_space<vmem>>, vector<2x128xf32>,
    %371 = vector.extract_strided_slice %366 {offsets = [2, 0], sizes = [2, 128], strides = [1, 1]} : vector<16x128xf32> to vector<2x128xf32>
    %cst_258 = arith.constant dense<0.000000e+00> : vector<2x128xf32>
    %372 = tpu.matmul %369, %367, %cst_258 {dimension_numbers = #tpu.dot_dimension_numbers<[1], [0], [0], [1], [0, 0, 1, 1], [], []>} : vector<2x128xf32>, vector<128x128xf32>, vector<2x128xf32> -> vector<2x128xf32>
    %373 = arith.addf %371, %372 : vector<2x128xf32>
    %374 = math.tanh %373 : vector<2x128xf32>
    %c2_259 = arith.constant 2 : index
    %c0_260 = arith.constant 0 : index
    %375 = vector.load %arg41[%c2_259, %c0_260] : memref<16x128xf32, #tpu.memory_space<vmem>>, vector<2x128xf32>
    tpu.vector_store %arg41[%c2_259, %c0_260], %374 {strides = array<i32>} : memref<16x128xf32, #tpu.memory_space<vmem>>, vector<2x128xf32>,
    %376 = vector.extract_strided_slice %366 {offsets = [4, 0], sizes = [2, 128], strides = [1, 1]} : vector<16x128xf32> to vector<2x128xf32>
    %cst_261 = arith.constant dense<0.000000e+00> : vector<2x128xf32>
    %377 = tpu.matmul %374, %367, %cst_261 {dimension_numbers = #tpu.dot_dimension_numbers<[1], [0], [0], [1], [0, 0, 1, 1], [], []>} : vector<2x128xf32>, vector<128x128xf32>, vector<2x128xf32> -> vector<2x128xf32>
    %378 = arith.addf %376, %377 : vector<2x128xf32>
    %379 = math.tanh %378 : vector<2x128xf32>
    %c4_262 = arith.constant 4 : index
    %c0_263 = arith.constant 0 : index
    %380 = vector.load %arg41[%c4_262, %c0_263] : memref<16x128xf32, #tpu.memory_space<vmem>>, vector<2x128xf32>
    tpu.vector_store %arg41[%c4_262, %c0_263], %379 {strides = array<i32>} : memref<16x128xf32, #tpu.memory_space<vmem>>, vector<2x128xf32>,
    %381 = vector.extract_strided_slice %366 {offsets = [6, 0], sizes = [2, 128], strides = [1, 1]} : vector<16x128xf32> to vector<2x128xf32>
    %cst_264 = arith.constant dense<0.000000e+00> : vector<2x128xf32>
    %382 = tpu.matmul %379, %367, %cst_264 {dimension_numbers = #tpu.dot_dimension_numbers<[1], [0], [0], [1], [0, 0, 1, 1], [], []>} : vector<2x128xf32>, vector<128x128xf32>, vector<2x128xf32> -> vector<2x128xf32>
    %383 = arith.addf %381, %382 : vector<2x128xf32>
    %384 = math.tanh %383 : vector<2x128xf32>
    %c6_265 = arith.constant 6 : index
    %c0_266 = arith.constant 0 : index
    %385 = vector.load %arg41[%c6_265, %c0_266] : memref<16x128xf32, #tpu.memory_space<vmem>>, vector<2x128xf32>
    tpu.vector_store %arg41[%c6_265, %c0_266], %384 {strides = array<i32>} : memref<16x128xf32, #tpu.memory_space<vmem>>, vector<2x128xf32>,
    %386 = vector.extract_strided_slice %366 {offsets = [8, 0], sizes = [2, 128], strides = [1, 1]} : vector<16x128xf32> to vector<2x128xf32>
    %cst_267 = arith.constant dense<0.000000e+00> : vector<2x128xf32>
    %387 = tpu.matmul %384, %367, %cst_267 {dimension_numbers = #tpu.dot_dimension_numbers<[1], [0], [0], [1], [0, 0, 1, 1], [], []>} : vector<2x128xf32>, vector<128x128xf32>, vector<2x128xf32> -> vector<2x128xf32>
    %388 = arith.addf %386, %387 : vector<2x128xf32>
    %389 = math.tanh %388 : vector<2x128xf32>
    %c8_268 = arith.constant 8 : index
    %c0_269 = arith.constant 0 : index
    %390 = vector.load %arg41[%c8_268, %c0_269] : memref<16x128xf32, #tpu.memory_space<vmem>>, vector<2x128xf32>
    tpu.vector_store %arg41[%c8_268, %c0_269], %389 {strides = array<i32>} : memref<16x128xf32, #tpu.memory_space<vmem>>, vector<2x128xf32>,
    %391 = vector.extract_strided_slice %366 {offsets = [10, 0], sizes = [2, 128], strides = [1, 1]} : vector<16x128xf32> to vector<2x128xf32>
    %cst_270 = arith.constant dense<0.000000e+00> : vector<2x128xf32>
    %392 = tpu.matmul %389, %367, %cst_270 {dimension_numbers = #tpu.dot_dimension_numbers<[1], [0], [0], [1], [0, 0, 1, 1], [], []>} : vector<2x128xf32>, vector<128x128xf32>, vector<2x128xf32> -> vector<2x128xf32>
    %393 = arith.addf %391, %392 : vector<2x128xf32>
    %394 = math.tanh %393 : vector<2x128xf32>
    %c10_271 = arith.constant 10 : index
    %c0_272 = arith.constant 0 : index
    %395 = vector.load %arg41[%c10_271, %c0_272] : memref<16x128xf32, #tpu.memory_space<vmem>>, vector<2x128xf32>
    tpu.vector_store %arg41[%c10_271, %c0_272], %394 {strides = array<i32>} : memref<16x128xf32, #tpu.memory_space<vmem>>, vector<2x128xf32>,
    %396 = vector.extract_strided_slice %366 {offsets = [12, 0], sizes = [2, 128], strides = [1, 1]} : vector<16x128xf32> to vector<2x128xf32>
    %cst_273 = arith.constant dense<0.000000e+00> : vector<2x128xf32>
    %397 = tpu.matmul %394, %367, %cst_273 {dimension_numbers = #tpu.dot_dimension_numbers<[1], [0], [0], [1], [0, 0, 1, 1], [], []>} : vector<2x128xf32>, vector<128x128xf32>, vector<2x128xf32> -> vector<2x128xf32>
    %398 = arith.addf %396, %397 : vector<2x128xf32>
    %399 = math.tanh %398 : vector<2x128xf32>
    %c12_274 = arith.constant 12 : index
    %c0_275 = arith.constant 0 : index
    %400 = vector.load %arg41[%c12_274, %c0_275] : memref<16x128xf32, #tpu.memory_space<vmem>>, vector<2x128xf32>
    tpu.vector_store %arg41[%c12_274, %c0_275], %399 {strides = array<i32>} : memref<16x128xf32, #tpu.memory_space<vmem>>, vector<2x128xf32>,
    %401 = vector.extract_strided_slice %366 {offsets = [14, 0], sizes = [2, 128], strides = [1, 1]} : vector<16x128xf32> to vector<2x128xf32>
    %cst_276 = arith.constant dense<0.000000e+00> : vector<2x128xf32>
    %402 = tpu.matmul %399, %367, %cst_276 {dimension_numbers = #tpu.dot_dimension_numbers<[1], [0], [0], [1], [0, 0, 1, 1], [], []>} : vector<2x128xf32>, vector<128x128xf32>, vector<2x128xf32> -> vector<2x128xf32>
    %403 = arith.addf %401, %402 : vector<2x128xf32>
    %404 = math.tanh %403 : vector<2x128xf32>
    %c14_277 = arith.constant 14 : index
    %c0_278 = arith.constant 0 : index
    %405 = vector.load %arg41[%c14_277, %c0_278] : memref<16x128xf32, #tpu.memory_space<vmem>>, vector<2x128xf32>
    tpu.vector_store %arg41[%c14_277, %c0_278], %404 {strides = array<i32>} : memref<16x128xf32, #tpu.memory_space<vmem>>, vector<2x128xf32>,
    %c0_279 = arith.constant 0 : index
    %c0_280 = arith.constant 0 : index
    %406 = vector.load %arg41[%c0_279, %c0_280] : memref<16x128xf32, #tpu.memory_space<vmem>>, vector<16x128xf32>
    %407 = arith.addf %135, %270 : vector<16x128xf32>
    %408 = arith.addf %407, %406 : vector<16x128xf32>
    %c0_281 = arith.constant 0 : index
    %c0_282 = arith.constant 0 : index
    %409 = vector.load %arg28[%c0_281, %c0_282] : memref<128x128xf32, #tpu.memory_space<vmem>>, vector<128x128xf32>
    %cst_283 = arith.constant dense<0.000000e+00> : vector<16x128xf32>
    %410 = tpu.matmul %408, %409, %cst_283 {dimension_numbers = #tpu.dot_dimension_numbers<[1], [0], [0], [1], [0, 0, 1, 1], [], []>} : vector<16x128xf32>, vector<128x128xf32>, vector<16x128xf32> -> vector<16x128xf32>
    %c0_284 = arith.constant 0 : index
    %c0_285 = arith.constant 0 : index
    %411 = vector.load %arg29[%c0_284, %c0_285] : memref<1x128xf32, #tpu.memory_space<vmem>>, vector<1x128xf32>
    %412 = vector.broadcast %411 : vector<1x128xf32> to vector<16x128xf32>
    %413 = arith.addf %410, %412 : vector<16x128xf32>
    %414 = math.tanh %413 : vector<16x128xf32>
    %c0_286 = arith.constant 0 : index
    %c0_287 = arith.constant 0 : index
    %415 = vector.load %arg30[%c0_286, %c0_287] : memref<128x128xf32, #tpu.memory_space<vmem>>, vector<128x128xf32>
    %cst_288 = arith.constant dense<0.000000e+00> : vector<16x128xf32>
    %416 = tpu.matmul %414, %415, %cst_288 {dimension_numbers = #tpu.dot_dimension_numbers<[1], [0], [0], [1], [0, 0, 1, 1], [], []>} : vector<16x128xf32>, vector<128x128xf32>, vector<16x128xf32> -> vector<16x128xf32>
    %c0_289 = arith.constant 0 : index
    %c0_290 = arith.constant 0 : index
    %417 = vector.load %arg31[%c0_289, %c0_290] : memref<1x128xf32, #tpu.memory_space<vmem>>, vector<1x128xf32>
    %418 = vector.broadcast %417 : vector<1x128xf32> to vector<16x128xf32>
    %419 = arith.addf %416, %418 : vector<16x128xf32>
    %420 = math.tanh %419 : vector<16x128xf32>
    %c0_291 = arith.constant 0 : index
    %c0_292 = arith.constant 0 : index
    %421 = vector.load %arg32[%c0_291, %c0_292] : memref<128x128xf32, #tpu.memory_space<vmem>>, vector<128x128xf32>
    %cst_293 = arith.constant dense<0.000000e+00> : vector<16x128xf32>
    %422 = tpu.matmul %420, %421, %cst_293 {dimension_numbers = #tpu.dot_dimension_numbers<[1], [0], [0], [1], [0, 0, 1, 1], [], []>} : vector<16x128xf32>, vector<128x128xf32>, vector<16x128xf32> -> vector<16x128xf32>
    %c0_294 = arith.constant 0 : index
    %c0_295 = arith.constant 0 : index
    %423 = vector.load %arg33[%c0_294, %c0_295] : memref<1x128xf32, #tpu.memory_space<vmem>>, vector<1x128xf32>
    %424 = vector.broadcast %423 : vector<1x128xf32> to vector<16x128xf32>
    %425 = arith.addf %422, %424 : vector<16x128xf32>
    %426 = math.tanh %425 : vector<16x128xf32>
    %c0_296 = arith.constant 0 : index
    %c0_297 = arith.constant 0 : index
    %427 = vector.load %arg34[%c0_296, %c0_297] : memref<128x128xf32, #tpu.memory_space<vmem>>, vector<128x128xf32>
    %cst_298 = arith.constant dense<0.000000e+00> : vector<16x128xf32>
    %428 = tpu.matmul %426, %427, %cst_298 {dimension_numbers = #tpu.dot_dimension_numbers<[1], [0], [0], [1], [0, 0, 1, 1], [], []>} : vector<16x128xf32>, vector<128x128xf32>, vector<16x128xf32> -> vector<16x128xf32>
    %c0_299 = arith.constant 0 : index
    %c0_300 = arith.constant 0 : index
    %429 = vector.load %arg35[%c0_299, %c0_300] : memref<1x128xf32, #tpu.memory_space<vmem>>, vector<1x128xf32>
    %430 = vector.broadcast %429 : vector<1x128xf32> to vector<16x128xf32>
    %431 = arith.addf %428, %430 : vector<16x128xf32>
    %432 = math.tanh %431 : vector<16x128xf32>
    %c0_301 = arith.constant 0 : index
    %c0_302 = arith.constant 0 : index
    %433 = vector.load %arg36[%c0_301, %c0_302] : memref<128x128xf32, #tpu.memory_space<vmem>>, vector<128x128xf32>
    %cst_303 = arith.constant dense<0.000000e+00> : vector<16x128xf32>
    %434 = tpu.matmul %432, %433, %cst_303 {dimension_numbers = #tpu.dot_dimension_numbers<[1], [0], [0], [1], [0, 0, 1, 1], [], []>} : vector<16x128xf32>, vector<128x128xf32>, vector<16x128xf32> -> vector<16x128xf32>
    %c0_304 = arith.constant 0 : index
    %c0_305 = arith.constant 0 : index
    %435 = vector.load %arg37[%c0_304, %c0_305] : memref<1x128xf32, #tpu.memory_space<vmem>>, vector<1x128xf32>
    %436 = vector.broadcast %435 : vector<1x128xf32> to vector<16x128xf32>
    %437 = arith.addf %434, %436 : vector<16x128xf32>
    %c0_306 = arith.constant 0 : index
    %c0_307 = arith.constant 0 : index
    %438 = vector.load %arg38[%c0_306, %c0_307] : memref<128x128xf32, #tpu.memory_space<vmem>>, vector<128x128xf32>
    %cst_308 = arith.constant dense<0.000000e+00> : vector<16x128xf32>
    %439 = tpu.matmul %437, %438, %cst_308 {dimension_numbers = #tpu.dot_dimension_numbers<[1], [0], [0], [1], [0, 0, 1, 1], [], []>} : vector<16x128xf32>, vector<128x128xf32>, vector<16x128xf32> -> vector<16x128xf32>
    %c0_309 = arith.constant 0 : index
    %c0_310 = arith.constant 0 : index
    %440 = vector.load %arg39[%c0_309, %c0_310] : memref<1x128xf32, #tpu.memory_space<vmem>>, vector<1x128xf32>
    %441 = vector.broadcast %440 : vector<1x128xf32> to vector<16x128xf32>
    %442 = arith.addf %439, %441 : vector<16x128xf32>
    %c0_311 = arith.constant 0 : index
    %c0_312 = arith.constant 0 : index
    %443 = vector.load %arg40[%c0_311, %c0_312] : memref<16x128xf32, #tpu.memory_space<vmem>>, vector<16x128xf32>
    tpu.vector_store %arg40[%c0_311, %c0_312], %442 {strides = array<i32>} : memref<16x128xf32, #tpu.memory_space<vmem>>, vector<16x128xf32>,
    return
  }
}

</mosaic_0001>

<llo_original>
// kernel: nnfunc_forward.1
$region0: #{nnfunc_forward.1}
  #allocation0 [shape = 'u32[]', space=smem, size = 0x4, offset = 0x4, fixed_abs, tag = 'smem constant byte address 0x4 - core index']
  #allocation1 [shape = 'u32[144,128]{1,0:T(1,128)}', space=vmem, size = 0x12000, scoped, tag = 'internal scratch']
  #allocation2 [shape = 'f32[16,128]{1,0:T(8,128)}', space=vmem, size = 0x2000, scoped, tag = 'scratch operand']
  %s0 = inlined_call_operand.smem [shape: u32[41], index: -1, kind: input, shape index: {}]
  %s1 = sld [smem:[%s0]]
  %s2 = scalar_lea.smem %s0, 1
  %s3 = sld [smem:[%s2]]
  %s4 = scalar_lea.smem %s0, 2
  %s5 = sld [smem:[%s4]]
  %s6 = scalar_lea.smem %s0, 3
  %s7 = sld [smem:[%s6]]
  %s8 = scalar_lea.smem %s0, 4
  %s9 = sld [smem:[%s8]]
  %s10 = scalar_lea.smem %s0, 5
  %s11 = sld [smem:[%s10]]
  %s12 = scalar_lea.smem %s0, 6
  %s13 = sld [smem:[%s12]]
  %s14 = scalar_lea.smem %s0, 7
  %s15 = sld [smem:[%s14]]
  %s16 = scalar_lea.smem %s0, 8
  %s17 = sld [smem:[%s16]]
  %s18 = scalar_lea.smem %s0, 9
  %s19 = sld [smem:[%s18]]
  %s20 = scalar_lea.smem %s0, 10
  %s21 = sld [smem:[%s20]]
  %s22 = scalar_lea.smem %s0, 11
  %s23 = sld [smem:[%s22]]
  %s24 = scalar_lea.smem %s0, 12
  %s25 = sld [smem:[%s24]]
  %s26 = scalar_lea.smem %s0, 13
  %s27 = sld [smem:[%s26]]
  %s28 = scalar_lea.smem %s0, 14
  %s29 = sld [smem:[%s28]]
  %s30 = scalar_lea.smem %s0, 15
  %s31 = sld [smem:[%s30]]
  %s32 = scalar_lea.smem %s0, 16
  %s33 = sld [smem:[%s32]]
  %s34 = scalar_lea.smem %s0, 17
  %s35 = sld [smem:[%s34]]
  %s36 = scalar_lea.smem %s0, 18
  %s37 = sld [smem:[%s36]]
  %s38 = scalar_lea.smem %s0, 19
  %s39 = sld [smem:[%s38]]
  %s40 = scalar_lea.smem %s0, 20
  %s41 = sld [smem:[%s40]]
  %s42 = scalar_lea.smem %s0, 21
  %s43 = sld [smem:[%s42]]
  %s44 = scalar_lea.smem %s0, 22
  %s45 = sld [smem:[%s44]]
  %s46 = scalar_lea.smem %s0, 23
  %s47 = sld [smem:[%s46]]
  %s48 = scalar_lea.smem %s0, 24
  %s49 = sld [smem:[%s48]]
  %s50 = scalar_lea.smem %s0, 25
  %s51 = sld [smem:[%s50]]
  %s52 = scalar_lea.smem %s0, 26
  %s53 = sld [smem:[%s52]]
  %s54 = scalar_lea.smem %s0, 27
  %s55 = sld [smem:[%s54]]
  %s56 = scalar_lea.smem %s0, 28
  %s57 = sld [smem:[%s56]]
  %s58 = scalar_lea.smem %s0, 29
  %s59 = sld [smem:[%s58]]
  %s60 = scalar_lea.smem %s0, 30
  %s61 = sld [smem:[%s60]]
  %s62 = scalar_lea.smem %s0, 31
  %s63 = sld [smem:[%s62]]
  %s64 = scalar_lea.smem %s0, 32
  %s65 = sld [smem:[%s64]]
  %s66 = scalar_lea.smem %s0, 33
  %s67 = sld [smem:[%s66]]
  %s68 = scalar_lea.smem %s0, 34
  %s69 = sld [smem:[%s68]]
  %s70 = scalar_lea.smem %s0, 35
  %s71 = sld [smem:[%s70]]
  %s72 = scalar_lea.smem %s0, 36
  %s73 = sld [smem:[%s72]]
  %s74 = scalar_lea.smem %s0, 37
  %s75 = sld [smem:[%s74]]
  %s76 = scalar_lea.smem %s0, 38
  %s77 = sld [smem:[%s76]]
  %s78 = scalar_lea.smem %s0, 39
  %s79 = sld [smem:[%s78]]
  %s80 = scalar_lea.smem %s0, 40
  %s81 = sld [smem:[%s80]]
  %s82 = sld [smem:[#allocation0]]
  $region262: #{nnfunc_forward.1} parent=0
    _
  %s84 = ssub.s32 1, %s82
  %s85 = scalar_select 0, %s84, %s82
  $region1: #{nnfunc_forward.1} parent=0
    #allocation3 [shape = 'u8[65536]{0}', space=vmem, size = 0x10000, scoped, tag = 'input window, operand 2, single buffered']
    #allocation4 [shape = 's32[1]{0}', space=sflag, size = 0x4, scoped, tag = 'scoped memory for nnfunc_forward.1']
    #allocation5 [shape = 'u8[65536]{0}', space=vmem, size = 0x10000, scoped, tag = 'input window, operand 4, single buffered']
    #allocation6 [shape = 's32[1]{0}', space=sflag, size = 0x4, scoped, tag = 'scoped memory for nnfunc_forward.1']
    #allocation7 [shape = 'u8[65536]{0}', space=vmem, size = 0x10000, scoped, tag = 'input window, operand 5, single buffered']
    #allocation8 [shape = 'u8[65536]{0}', space=vmem, size = 0x10000, scoped, tag = 'input window, operand 7, single buffered']
    #allocation9 [shape = 's32[1]{0}', space=sflag, size = 0x4, scoped, tag = 'scoped memory for nnfunc_forward.1']
    #allocation10 [shape = 'u8[65536]{0}', space=vmem, size = 0x10000, scoped, tag = 'input window, operand 8, single buffered']
    #allocation11 [shape = 'u8[65536]{0}', space=vmem, size = 0x10000, scoped, tag = 'input window, operand 10, single buffered']
    #allocation12 [shape = 's32[1]{0}', space=sflag, size = 0x4, scoped, tag = 'scoped memory for nnfunc_forward.1']
    #allocation13 [shape = 'u8[65536]{0}', space=vmem, size = 0x10000, scoped, tag = 'input window, operand 11, single buffered']
    #allocation14 [shape = 'u8[65536]{0}', space=vmem, size = 0x10000, scoped, tag = 'input window, operand 13, single buffered']
    #allocation15 [shape = 's32[1]{0}', space=sflag, size = 0x4, scoped, tag = 'scoped memory for nnfunc_forward.1']
    #allocation16 [shape = 'u8[65536]{0}', space=vmem, size = 0x10000, scoped, tag = 'input window, operand 14, single buffered']
    #allocation17 [shape = 'u8[65536]{0}', space=vmem, size = 0x10000, scoped, tag = 'input window, operand 16, single buffered']
    #allocation18 [shape = 's32[1]{0}', space=sflag, size = 0x4, scoped, tag = 'scoped memory for nnfunc_forward.1']
    #allocation19 [shape = 'u8[65536]{0}', space=vmem, size = 0x10000, scoped, tag = 'input window, operand 17, single buffered']
    #allocation20 [shape = 'u8[65536]{0}', space=vmem, size = 0x10000, scoped, tag = 'input window, operand 19, single buffered']
    #allocation21 [shape = 's32[1]{0}', space=sflag, size = 0x4, scoped, tag = 'scoped memory for nnfunc_forward.1']
    #allocation22 [shape = 'u8[65536]{0}', space=vmem, size = 0x10000, scoped, tag = 'input window, operand 20, single buffered']
    #allocation23 [shape = 'u8[65536]{0}', space=vmem, size = 0x10000, scoped, tag = 'input window, operand 22, single buffered']
    #allocation24 [shape = 's32[1]{0}', space=sflag, size = 0x4, scoped, tag = 'scoped memory for nnfunc_forward.1']
    #allocation25 [shape = 'u8[65536]{0}', space=vmem, size = 0x10000, scoped, tag = 'input window, operand 23, single buffered']
    #allocation26 [shape = 'u8[65536]{0}', space=vmem, size = 0x10000, scoped, tag = 'input window, operand 25, single buffered']
    #allocation27 [shape = 's32[1]{0}', space=sflag, size = 0x4, scoped, tag = 'scoped memory for nnfunc_forward.1']
    #allocation28 [shape = 'u8[65536]{0}', space=vmem, size = 0x10000, scoped, tag = 'input window, operand 26, single buffered']
    #allocation29 [shape = 'u8[65536]{0}', space=vmem, size = 0x10000, scoped, tag = 'input window, operand 28, single buffered']
    #allocation30 [shape = 's32[1]{0}', space=sflag, size = 0x4, scoped, tag = 'scoped memory for nnfunc_forward.1']
    #allocation31 [shape = 'u8[65536]{0}', space=vmem, size = 0x10000, scoped, tag = 'input window, operand 30, single buffered']
    #allocation32 [shape = 'u8[65536]{0}', space=vmem, size = 0x10000, scoped, tag = 'input window, operand 32, single buffered']
    #allocation33 [shape = 's32[1]{0}', space=sflag, size = 0x4, scoped, tag = 'scoped memory for nnfunc_forward.1']
    #allocation34 [shape = 'u8[65536]{0}', space=vmem, size = 0x10000, scoped, tag = 'input window, operand 34, single buffered']
    #allocation35 [shape = 'u8[65536]{0}', space=vmem, size = 0x10000, scoped, tag = 'input window, operand 36, single buffered']
    #allocation36 [shape = 's32[1]{0}', space=sflag, size = 0x4, scoped, tag = 'scoped memory for nnfunc_forward.1']
    #allocation37 [shape = 'u8[65536]{0}', space=vmem, size = 0x10000, scoped, tag = 'input window, operand 38, single buffered']
    %86 = vsyncpa [#allocation4], 0
    %87 = vsyncpa [#allocation6], 0
    %88 = vsyncpa [#allocation9], 0
    %89 = vsyncpa [#allocation12], 0
    %90 = vsyncpa [#allocation15], 0
    %91 = vsyncpa [#allocation18], 0
    %92 = vsyncpa [#allocation21], 0
    %93 = vsyncpa [#allocation24], 0
    %94 = vsyncpa [#allocation27], 0
    %95 = vsyncpa [#allocation30], 0
    %96 = vsyncpa [#allocation33], 0
    %97 = vsyncpa [#allocation36], 0
    // Predicated region
    $region2: #{nnfunc_forward.1} parent=1 // pred_check
      _
    $region3: #{nnfunc_forward.1} parent=1 // pred_check_branch
      %99 = sbr.rel (0) target = $region5
    $region4: #{nnfunc_forward.1} parent=1 // pred_region
      _
    $region5: #{nnfunc_forward.1} parent=1 // pred_fallthru
      _
    // Predicated region
    $region6: #{nnfunc_forward.1} parent=1 // pred_check
      _
    $region7: #{nnfunc_forward.1} parent=1 // pred_check_branch
      %101 = sbr.rel (0) target = $region9
    $region8: #{nnfunc_forward.1} parent=1 // pred_region
      _
    $region9: #{nnfunc_forward.1} parent=1 // pred_fallthru
      _
    // Predicated region
    $region10: #{nnfunc_forward.1} parent=1 // pred_check
      _
    $region11: #{nnfunc_forward.1} parent=1 // pred_check_branch
      %103 = sbr.rel (0) target = $region13
    $region12: #{nnfunc_forward.1} parent=1 // pred_region
      %s105 = ssub.s32 2048, 2048
      %106 = vsyncadd [#allocation4], %s105
      %s107 = sshll.u32 [#allocation3], 4
      %s108 = int_to_ptr.vmem [resolvable:$true] %s107
      %113 = dma.hbm_to_vmem [thread:$0]  %s5, 2048, %s108, [#allocation4], 128, 128, 8
    $region13: #{nnfunc_forward.1} parent=1 // pred_fallthru
      _
    // Predicated region
    $region14: #{nnfunc_forward.1} parent=1 // pred_check
      _
    $region15: #{nnfunc_forward.1} parent=1 // pred_check_branch
      %115 = sbr.rel (0) target = $region17
    $region16: #{nnfunc_forward.1} parent=1 // pred_region
      _
    $region17: #{nnfunc_forward.1} parent=1 // pred_fallthru
      _
    // Predicated region
    $region18: #{nnfunc_forward.1} parent=1 // pred_check
      _
    $region19: #{nnfunc_forward.1} parent=1 // pred_check_branch
      %117 = sbr.rel (0) target = $region21
    $region20: #{nnfunc_forward.1} parent=1 // pred_region
      %s119 = ssub.s32 2048, 2048
      %120 = vsyncadd [#allocation6], %s119
      %s121 = sshll.u32 [#allocation5], 4
      %s122 = int_to_ptr.vmem [resolvable:$true] %s121
      %127 = dma.hbm_to_vmem [thread:$0]  %s9, 2048, %s122, [#allocation6], 128, 128, 8
    $region21: #{nnfunc_forward.1} parent=1 // pred_fallthru
      _
    // Predicated region
    $region22: #{nnfunc_forward.1} parent=1 // pred_check
      _
    $region23: #{nnfunc_forward.1} parent=1 // pred_check_branch
      %129 = sbr.rel (0) target = $region25
    $region24: #{nnfunc_forward.1} parent=1 // pred_region
      %s131 = ssub.s32 2048, 2048
      %132 = vsyncadd [#allocation6], %s131
      %s133 = sshll.u32 [#allocation7], 4
      %s134 = int_to_ptr.vmem [resolvable:$true] %s133
      %139 = dma.hbm_to_vmem [thread:$0]  %s11, 2048, %s134, [#allocation6], 128, 128, 8
    $region25: #{nnfunc_forward.1} parent=1 // pred_fallthru
      _
    // Predicated region
    $region26: #{nnfunc_forward.1} parent=1 // pred_check
      _
    $region27: #{nnfunc_forward.1} parent=1 // pred_check_branch
      %141 = sbr.rel (0) target = $region29
    $region28: #{nnfunc_forward.1} parent=1 // pred_region
      _
    $region29: #{nnfunc_forward.1} parent=1 // pred_fallthru
      _
    // Predicated region
    $region30: #{nnfunc_forward.1} parent=1 // pred_check
      _
    $region31: #{nnfunc_forward.1} parent=1 // pred_check_branch
      %143 = sbr.rel (0) target = $region33
    $region32: #{nnfunc_forward.1} parent=1 // pred_region
      %s145 = ssub.s32 2048, 2048
      %146 = vsyncadd [#allocation9], %s145
      %s147 = sshll.u32 [#allocation8], 4
      %s148 = int_to_ptr.vmem [resolvable:$true] %s147
      %153 = dma.hbm_to_vmem [thread:$0]  %s15, 2048, %s148, [#allocation9], 128, 128, 8
    $region33: #{nnfunc_forward.1} parent=1 // pred_fallthru
      _
    // Predicated region
    $region34: #{nnfunc_forward.1} parent=1 // pred_check
      _
    $region35: #{nnfunc_forward.1} parent=1 // pred_check_branch
      %155 = sbr.rel (0) target = $region37
    $region36: #{nnfunc_forward.1} parent=1 // pred_region
      %s157 = ssub.s32 2048, 2048
      %158 = vsyncadd [#allocation9], %s157
      %s159 = sshll.u32 [#allocation10], 4
      %s160 = int_to_ptr.vmem [resolvable:$true] %s159
      %165 = dma.hbm_to_vmem [thread:$0]  %s17, 2048, %s160, [#allocation9], 128, 128, 8
    $region37: #{nnfunc_forward.1} parent=1 // pred_fallthru
      _
    // Predicated region
    $region38: #{nnfunc_forward.1} parent=1 // pred_check
      _
    $region39: #{nnfunc_forward.1} parent=1 // pred_check_branch
      %167 = sbr.rel (0) target = $region41
    $region40: #{nnfunc_forward.1} parent=1 // pred_region
      _
    $region41: #{nnfunc_forward.1} parent=1 // pred_fallthru
      _
    // Predicated region
    $region42: #{nnfunc_forward.1} parent=1 // pred_check
      _
    $region43: #{nnfunc_forward.1} parent=1 // pred_check_branch
      %169 = sbr.rel (0) target = $region45
    $region44: #{nnfunc_forward.1} parent=1 // pred_region
      %s171 = ssub.s32 2048, 2048
      %172 = vsyncadd [#allocation12], %s171
      %s173 = sshll.u32 [#allocation11], 4
      %s174 = int_to_ptr.vmem [resolvable:$true] %s173
      %179 = dma.hbm_to_vmem [thread:$0]  %s21, 2048, %s174, [#allocation12], 128, 128, 8
    $region45: #{nnfunc_forward.1} parent=1 // pred_fallthru
      _
    // Predicated region
    $region46: #{nnfunc_forward.1} parent=1 // pred_check
      _
    $region47: #{nnfunc_forward.1} parent=1 // pred_check_branch
      %181 = sbr.rel (0) target = $region49
    $region48: #{nnfunc_forward.1} parent=1 // pred_region
      %s183 = ssub.s32 2048, 2048
      %184 = vsyncadd [#allocation12], %s183
      %s185 = sshll.u32 [#allocation13], 4
      %s186 = int_to_ptr.vmem [resolvable:$true] %s185
      %191 = dma.hbm_to_vmem [thread:$0]  %s23, 2048, %s186, [#allocation12], 128, 128, 8
    $region49: #{nnfunc_forward.1} parent=1 // pred_fallthru
      _
    // Predicated region
    $region50: #{nnfunc_forward.1} parent=1 // pred_check
      _
    $region51: #{nnfunc_forward.1} parent=1 // pred_check_branch
      %193 = sbr.rel (0) target = $region53
    $region52: #{nnfunc_forward.1} parent=1 // pred_region
      _
    $region53: #{nnfunc_forward.1} parent=1 // pred_fallthru
      _
    // Predicated region
    $region54: #{nnfunc_forward.1} parent=1 // pred_check
      _
    $region55: #{nnfunc_forward.1} parent=1 // pred_check_branch
      %195 = sbr.rel (0) target = $region57
    $region56: #{nnfunc_forward.1} parent=1 // pred_region
      %s197 = ssub.s32 2048, 2048
      %198 = vsyncadd [#allocation15], %s197
      %s199 = sshll.u32 [#allocation14], 4
      %s200 = int_to_ptr.vmem [resolvable:$true] %s199
      %205 = dma.hbm_to_vmem [thread:$0]  %s27, 2048, %s200, [#allocation15], 128, 128, 8
    $region57: #{nnfunc_forward.1} parent=1 // pred_fallthru
      _
    // Predicated region
    $region58: #{nnfunc_forward.1} parent=1 // pred_check
      _
    $region59: #{nnfunc_forward.1} parent=1 // pred_check_branch
      %207 = sbr.rel (0) target = $region61
    $region60: #{nnfunc_forward.1} parent=1 // pred_region
      %s209 = ssub.s32 2048, 2048
      %210 = vsyncadd [#allocation15], %s209
      %s211 = sshll.u32 [#allocation16], 4
      %s212 = int_to_ptr.vmem [resolvable:$true] %s211
      %217 = dma.hbm_to_vmem [thread:$0]  %s29, 2048, %s212, [#allocation15], 128, 128, 8
    $region61: #{nnfunc_forward.1} parent=1 // pred_fallthru
      _
    // Predicated region
    $region62: #{nnfunc_forward.1} parent=1 // pred_check
      _
    $region63: #{nnfunc_forward.1} parent=1 // pred_check_branch
      %219 = sbr.rel (0) target = $region65
    $region64: #{nnfunc_forward.1} parent=1 // pred_region
      _
    $region65: #{nnfunc_forward.1} parent=1 // pred_fallthru
      _
    // Predicated region
    $region66: #{nnfunc_forward.1} parent=1 // pred_check
      _
    $region67: #{nnfunc_forward.1} parent=1 // pred_check_branch
      %221 = sbr.rel (0) target = $region69
    $region68: #{nnfunc_forward.1} parent=1 // pred_region
      %s223 = ssub.s32 2048, 2048
      %224 = vsyncadd [#allocation18], %s223
      %s225 = sshll.u32 [#allocation17], 4
      %s226 = int_to_ptr.vmem [resolvable:$true] %s225
      %231 = dma.hbm_to_vmem [thread:$0]  %s33, 2048, %s226, [#allocation18], 128, 128, 8
    $region69: #{nnfunc_forward.1} parent=1 // pred_fallthru
      _
    // Predicated region
    $region70: #{nnfunc_forward.1} parent=1 // pred_check
      _
    $region71: #{nnfunc_forward.1} parent=1 // pred_check_branch
      %233 = sbr.rel (0) target = $region73
    $region72: #{nnfunc_forward.1} parent=1 // pred_region
      %s235 = ssub.s32 2048, 2048
      %236 = vsyncadd [#allocation18], %s235
      %s237 = sshll.u32 [#allocation19], 4
      %s238 = int_to_ptr.vmem [resolvable:$true] %s237
      %243 = dma.hbm_to_vmem [thread:$0]  %s35, 2048, %s238, [#allocation18], 128, 128, 8
    $region73: #{nnfunc_forward.1} parent=1 // pred_fallthru
      _
    // Predicated region
    $region74: #{nnfunc_forward.1} parent=1 // pred_check
      _
    $region75: #{nnfunc_forward.1} parent=1 // pred_check_branch
      %245 = sbr.rel (0) target = $region77
    $region76: #{nnfunc_forward.1} parent=1 // pred_region
      _
    $region77: #{nnfunc_forward.1} parent=1 // pred_fallthru
      _
    // Predicated region
    $region78: #{nnfunc_forward.1} parent=1 // pred_check
      _
    $region79: #{nnfunc_forward.1} parent=1 // pred_check_branch
      %247 = sbr.rel (0) target = $region81
    $region80: #{nnfunc_forward.1} parent=1 // pred_region
      %s249 = ssub.s32 2048, 2048
      %250 = vsyncadd [#allocation21], %s249
      %s251 = sshll.u32 [#allocation20], 4
      %s252 = int_to_ptr.vmem [resolvable:$true] %s251
      %257 = dma.hbm_to_vmem [thread:$0]  %s39, 2048, %s252, [#allocation21], 128, 128, 8
    $region81: #{nnfunc_forward.1} parent=1 // pred_fallthru
      _
    // Predicated region
    $region82: #{nnfunc_forward.1} parent=1 // pred_check
      _
    $region83: #{nnfunc_forward.1} parent=1 // pred_check_branch
      %259 = sbr.rel (0) target = $region85
    $region84: #{nnfunc_forward.1} parent=1 // pred_region
      %s261 = ssub.s32 2048, 2048
      %262 = vsyncadd [#allocation21], %s261
      %s263 = sshll.u32 [#allocation22], 4
      %s264 = int_to_ptr.vmem [resolvable:$true] %s263
      %269 = dma.hbm_to_vmem [thread:$0]  %s41, 2048, %s264, [#allocation21], 128, 128, 8
    $region85: #{nnfunc_forward.1} parent=1 // pred_fallthru
      _
    // Predicated region
    $region86: #{nnfunc_forward.1} parent=1 // pred_check
      _
    $region87: #{nnfunc_forward.1} parent=1 // pred_check_branch
      %271 = sbr.rel (0) target = $region89
    $region88: #{nnfunc_forward.1} parent=1 // pred_region
      _
    $region89: #{nnfunc_forward.1} parent=1 // pred_fallthru
      _
    // Predicated region
    $region90: #{nnfunc_forward.1} parent=1 // pred_check
      _
    $region91: #{nnfunc_forward.1} parent=1 // pred_check_branch
      %273 = sbr.rel (0) target = $region93
    $region92: #{nnfunc_forward.1} parent=1 // pred_region
      %s275 = ssub.s32 2048, 2048
      %276 = vsyncadd [#allocation24], %s275
      %s277 = sshll.u32 [#allocation23], 4
      %s278 = int_to_ptr.vmem [resolvable:$true] %s277
      %283 = dma.hbm_to_vmem [thread:$0]  %s45, 2048, %s278, [#allocation24], 128, 128, 8
    $region93: #{nnfunc_forward.1} parent=1 // pred_fallthru
      _
    // Predicated region
    $region94: #{nnfunc_forward.1} parent=1 // pred_check
      _
    $region95: #{nnfunc_forward.1} parent=1 // pred_check_branch
      %285 = sbr.rel (0) target = $region97
    $region96: #{nnfunc_forward.1} parent=1 // pred_region
      %s287 = ssub.s32 2048, 2048
      %288 = vsyncadd [#allocation24], %s287
      %s289 = sshll.u32 [#allocation25], 4
      %s290 = int_to_ptr.vmem [resolvable:$true] %s289
      %295 = dma.hbm_to_vmem [thread:$0]  %s47, 2048, %s290, [#allocation24], 128, 128, 8
    $region97: #{nnfunc_forward.1} parent=1 // pred_fallthru
      _
    // Predicated region
    $region98: #{nnfunc_forward.1} parent=1 // pred_check
      _
    $region99: #{nnfunc_forward.1} parent=1 // pred_check_branch
      %297 = sbr.rel (0) target = $region101
    $region100: #{nnfunc_forward.1} parent=1 // pred_region
      _
    $region101: #{nnfunc_forward.1} parent=1 // pred_fallthru
      _
    // Predicated region
    $region102: #{nnfunc_forward.1} parent=1 // pred_check
      _
    $region103: #{nnfunc_forward.1} parent=1 // pred_check_branch
      %299 = sbr.rel (0) target = $region105
    $region104: #{nnfunc_forward.1} parent=1 // pred_region
      %s301 = ssub.s32 2048, 2048
      %302 = vsyncadd [#allocation27], %s301
      %s303 = sshll.u32 [#allocation26], 4
      %s304 = int_to_ptr.vmem [resolvable:$true] %s303
      %309 = dma.hbm_to_vmem [thread:$0]  %s51, 2048, %s304, [#allocation27], 128, 128, 8
    $region105: #{nnfunc_forward.1} parent=1 // pred_fallthru
      _
    // Predicated region
    $region106: #{nnfunc_forward.1} parent=1 // pred_check
      _
    $region107: #{nnfunc_forward.1} parent=1 // pred_check_branch
      %311 = sbr.rel (0) target = $region109
    $region108: #{nnfunc_forward.1} parent=1 // pred_region
      %s313 = ssub.s32 2048, 2048
      %314 = vsyncadd [#allocation27], %s313
      %s315 = sshll.u32 [#allocation28], 4
      %s316 = int_to_ptr.vmem [resolvable:$true] %s315
      %321 = dma.hbm_to_vmem [thread:$0]  %s53, 2048, %s316, [#allocation27], 128, 128, 8
    $region109: #{nnfunc_forward.1} parent=1 // pred_fallthru
      _
    // Predicated region
    $region110: #{nnfunc_forward.1} parent=1 // pred_check
      _
    $region111: #{nnfunc_forward.1} parent=1 // pred_check_branch
      %323 = sbr.rel (0) target = $region113
    $region112: #{nnfunc_forward.1} parent=1 // pred_region
      _
    $region113: #{nnfunc_forward.1} parent=1 // pred_fallthru
      _
    // Predicated region
    $region114: #{nnfunc_forward.1} parent=1 // pred_check
      _
    $region115: #{nnfunc_forward.1} parent=1 // pred_check_branch
      %325 = sbr.rel (0) target = $region117
    $region116: #{nnfunc_forward.1} parent=1 // pred_region
      %s327 = ssub.s32 2048, 2048
      %328 = vsyncadd [#allocation30], %s327
      %s329 = sshll.u32 [#allocation29], 4
      %s330 = int_to_ptr.vmem [resolvable:$true] %s329
      %335 = dma.hbm_to_vmem [thread:$0]  %s57, 2048, %s330, [#allocation30], 128, 128, 8
    $region117: #{nnfunc_forward.1} parent=1 // pred_fallthru
      _
    // Predicated region
    $region118: #{nnfunc_forward.1} parent=1 // pred_check
      _
    $region119: #{nnfunc_forward.1} parent=1 // pred_check_branch
      %337 = sbr.rel (0) target = $region121
    $region120: #{nnfunc_forward.1} parent=1 // pred_region
      _
    $region121: #{nnfunc_forward.1} parent=1 // pred_fallthru
      _
    // Predicated region
    $region122: #{nnfunc_forward.1} parent=1 // pred_check
      _
    $region123: #{nnfunc_forward.1} parent=1 // pred_check_branch
      %339 = sbr.rel (0) target = $region125
    $region124: #{nnfunc_forward.1} parent=1 // pred_region
      %s341 = ssub.s32 2048, 2048
      %342 = vsyncadd [#allocation30], %s341
      %s343 = sshll.u32 [#allocation31], 4
      %s344 = int_to_ptr.vmem [resolvable:$true] %s343
      %349 = dma.hbm_to_vmem [thread:$0]  %s61, 2048, %s344, [#allocation30], 128, 128, 8
    $region125: #{nnfunc_forward.1} parent=1 // pred_fallthru
      _
    // Predicated region
    $region126: #{nnfunc_forward.1} parent=1 // pred_check
      _
    $region127: #{nnfunc_forward.1} parent=1 // pred_check_branch
      %351 = sbr.rel (0) target = $region129
    $region128: #{nnfunc_forward.1} parent=1 // pred_region
      _
    $region129: #{nnfunc_forward.1} parent=1 // pred_fallthru
      _
    // Predicated region
    $region130: #{nnfunc_forward.1} parent=1 // pred_check
      _
    $region131: #{nnfunc_forward.1} parent=1 // pred_check_branch
      %353 = sbr.rel (0) target = $region133
    $region132: #{nnfunc_forward.1} parent=1 // pred_region
      %s355 = ssub.s32 2048, 2048
      %356 = vsyncadd [#allocation33], %s355
      %s357 = sshll.u32 [#allocation32], 4
      %s358 = int_to_ptr.vmem [resolvable:$true] %s357
      %363 = dma.hbm_to_vmem [thread:$0]  %s65, 2048, %s358, [#allocation33], 128, 128, 8
    $region133: #{nnfunc_forward.1} parent=1 // pred_fallthru
      _
    // Predicated region
    $region134: #{nnfunc_forward.1} parent=1 // pred_check
      _
    $region135: #{nnfunc_forward.1} parent=1 // pred_check_branch
      %365 = sbr.rel (0) target = $region137
    $region136: #{nnfunc_forward.1} parent=1 // pred_region
      _
    $region137: #{nnfunc_forward.1} parent=1 // pred_fallthru
      _
    // Predicated region
    $region138: #{nnfunc_forward.1} parent=1 // pred_check
      _
    $region139: #{nnfunc_forward.1} parent=1 // pred_check_branch
      %367 = sbr.rel (0) target = $region141
    $region140: #{nnfunc_forward.1} parent=1 // pred_region
      %s369 = ssub.s32 2048, 2048
      %370 = vsyncadd [#allocation33], %s369
      %s371 = sshll.u32 [#allocation34], 4
      %s372 = int_to_ptr.vmem [resolvable:$true] %s371
      %377 = dma.hbm_to_vmem [thread:$0]  %s69, 2048, %s372, [#allocation33], 128, 128, 8
    $region141: #{nnfunc_forward.1} parent=1 // pred_fallthru
      _
    // Predicated region
    $region142: #{nnfunc_forward.1} parent=1 // pred_check
      _
    $region143: #{nnfunc_forward.1} parent=1 // pred_check_branch
      %379 = sbr.rel (0) target = $region145
    $region144: #{nnfunc_forward.1} parent=1 // pred_region
      _
    $region145: #{nnfunc_forward.1} parent=1 // pred_fallthru
      _
    // Predicated region
    $region146: #{nnfunc_forward.1} parent=1 // pred_check
      _
    $region147: #{nnfunc_forward.1} parent=1 // pred_check_branch
      %381 = sbr.rel (0) target = $region149
    $region148: #{nnfunc_forward.1} parent=1 // pred_region
      %s383 = ssub.s32 2048, 2048
      %384 = vsyncadd [#allocation36], %s383
      %s385 = sshll.u32 [#allocation35], 4
      %s386 = int_to_ptr.vmem [resolvable:$true] %s385
      %391 = dma.hbm_to_vmem [thread:$0]  %s73, 2048, %s386, [#allocation36], 128, 128, 8
    $region149: #{nnfunc_forward.1} parent=1 // pred_fallthru
      _
    // Predicated region
    $region150: #{nnfunc_forward.1} parent=1 // pred_check
      _
    $region151: #{nnfunc_forward.1} parent=1 // pred_check_branch
      %393 = sbr.rel (0) target = $region153
    $region152: #{nnfunc_forward.1} parent=1 // pred_region
      _
    $region153: #{nnfunc_forward.1} parent=1 // pred_fallthru
      _
    // Predicated region
    $region154: #{nnfunc_forward.1} parent=1 // pred_check
      _
    $region155: #{nnfunc_forward.1} parent=1 // pred_check_branch
      %395 = sbr.rel (0) target = $region157
    $region156: #{nnfunc_forward.1} parent=1 // pred_region
      %s397 = ssub.s32 2048, 2048
      %398 = vsyncadd [#allocation36], %s397
      %s399 = sshll.u32 [#allocation37], 4
      %s400 = int_to_ptr.vmem [resolvable:$true] %s399
      %405 = dma.hbm_to_vmem [thread:$0]  %s77, 2048, %s400, [#allocation36], 128, 128, 8
    $region157: #{nnfunc_forward.1} parent=1 // pred_fallthru
      _
    // Predicated region
    $region158: #{nnfunc_forward.1} parent=1 // pred_check
      _
    $region159: #{nnfunc_forward.1} parent=1 // pred_check_branch
      %407 = sbr.rel (0) target = $region161
    $region160: #{nnfunc_forward.1} parent=1 // pred_region
      _
    $region161: #{nnfunc_forward.1} parent=1 // pred_fallthru
      _
    // Predicated region
    $region162: #{nnfunc_forward.1} parent=1 // pred_check
      _
    $region163: #{nnfunc_forward.1} parent=1 // pred_check_branch
      %409 = sbr.rel (0) target = $region165
    $region164: #{nnfunc_forward.1} parent=1 // pred_region
      %410 = dma.done [#allocation4], 2048
    $region165: #{nnfunc_forward.1} parent=1 // pred_fallthru
      _
    // Predicated region
    $region166: #{nnfunc_forward.1} parent=1 // pred_check
      _
    $region167: #{nnfunc_forward.1} parent=1 // pred_check_branch
      %412 = sbr.rel (0) target = $region169
    $region168: #{nnfunc_forward.1} parent=1 // pred_region
      %413 = dma.done [#allocation6], 2048
    $region169: #{nnfunc_forward.1} parent=1 // pred_fallthru
      _
    // Predicated region
    $region170: #{nnfunc_forward.1} parent=1 // pred_check
      _
    $region171: #{nnfunc_forward.1} parent=1 // pred_check_branch
      %415 = sbr.rel (0) target = $region173
    $region172: #{nnfunc_forward.1} parent=1 // pred_region
      %416 = dma.done [#allocation6], 2048
    $region173: #{nnfunc_forward.1} parent=1 // pred_fallthru
      _
    // Predicated region
    $region174: #{nnfunc_forward.1} parent=1 // pred_check
      _
    $region175: #{nnfunc_forward.1} parent=1 // pred_check_branch
      %418 = sbr.rel (0) target = $region177
    $region176: #{nnfunc_forward.1} parent=1 // pred_region
      %419 = dma.done [#allocation9], 2048
    $region177: #{nnfunc_forward.1} parent=1 // pred_fallthru
      _
    // Predicated region
    $region178: #{nnfunc_forward.1} parent=1 // pred_check
      _
    $region179: #{nnfunc_forward.1} parent=1 // pred_check_branch
      %421 = sbr.rel (0) target = $region181
    $region180: #{nnfunc_forward.1} parent=1 // pred_region
      %422 = dma.done [#allocation9], 2048
    $region181: #{nnfunc_forward.1} parent=1 // pred_fallthru
      _
    // Predicated region
    $region182: #{nnfunc_forward.1} parent=1 // pred_check
      _
    $region183: #{nnfunc_forward.1} parent=1 // pred_check_branch
      %424 = sbr.rel (0) target = $region185
    $region184: #{nnfunc_forward.1} parent=1 // pred_region
      %425 = dma.done [#allocation12], 2048
    $region185: #{nnfunc_forward.1} parent=1 // pred_fallthru
      _
    // Predicated region
    $region186: #{nnfunc_forward.1} parent=1 // pred_check
      _
    $region187: #{nnfunc_forward.1} parent=1 // pred_check_branch
      %427 = sbr.rel (0) target = $region189
    $region188: #{nnfunc_forward.1} parent=1 // pred_region
      %428 = dma.done [#allocation12], 2048
    $region189: #{nnfunc_forward.1} parent=1 // pred_fallthru
      _
    // Predicated region
    $region190: #{nnfunc_forward.1} parent=1 // pred_check
      _
    $region191: #{nnfunc_forward.1} parent=1 // pred_check_branch
      %430 = sbr.rel (0) target = $region193
    $region192: #{nnfunc_forward.1} parent=1 // pred_region
      %431 = dma.done [#allocation15], 2048
    $region193: #{nnfunc_forward.1} parent=1 // pred_fallthru
      _
    // Predicated region
    $region194: #{nnfunc_forward.1} parent=1 // pred_check
      _
    $region195: #{nnfunc_forward.1} parent=1 // pred_check_branch
      %433 = sbr.rel (0) target = $region197
    $region196: #{nnfunc_forward.1} parent=1 // pred_region
      %434 = dma.done [#allocation15], 2048
    $region197: #{nnfunc_forward.1} parent=1 // pred_fallthru
      _
    // Predicated region
    $region198: #{nnfunc_forward.1} parent=1 // pred_check
      _
    $region199: #{nnfunc_forward.1} parent=1 // pred_check_branch
      %436 = sbr.rel (0) target = $region201
    $region200: #{nnfunc_forward.1} parent=1 // pred_region
      %437 = dma.done [#allocation18], 2048
    $region201: #{nnfunc_forward.1} parent=1 // pred_fallthru
      _
    // Predicated region
    $region202: #{nnfunc_forward.1} parent=1 // pred_check
      _
    $region203: #{nnfunc_forward.1} parent=1 // pred_check_branch
      %439 = sbr.rel (0) target = $region205
    $region204: #{nnfunc_forward.1} parent=1 // pred_region
      %440 = dma.done [#allocation18], 2048
    $region205: #{nnfunc_forward.1} parent=1 // pred_fallthru
      _
    // Predicated region
    $region206: #{nnfunc_forward.1} parent=1 // pred_check
      _
    $region207: #{nnfunc_forward.1} parent=1 // pred_check_branch
      %442 = sbr.rel (0) target = $region209
    $region208: #{nnfunc_forward.1} parent=1 // pred_region
      %443 = dma.done [#allocation21], 2048
    $region209: #{nnfunc_forward.1} parent=1 // pred_fallthru
      _
    // Predicated region
    $region210: #{nnfunc_forward.1} parent=1 // pred_check
      _
    $region211: #{nnfunc_forward.1} parent=1 // pred_check_branch
      %445 = sbr.rel (0) target = $region213
    $region212: #{nnfunc_forward.1} parent=1 // pred_region
      %446 = dma.done [#allocation21], 2048
    $region213: #{nnfunc_forward.1} parent=1 // pred_fallthru
      _
    // Predicated region
    $region214: #{nnfunc_forward.1} parent=1 // pred_check
      _
    $region215: #{nnfunc_forward.1} parent=1 // pred_check_branch
      %448 = sbr.rel (0) target = $region217
    $region216: #{nnfunc_forward.1} parent=1 // pred_region
      %449 = dma.done [#allocation24], 2048
    $region217: #{nnfunc_forward.1} parent=1 // pred_fallthru
      _
    // Predicated region
    $region218: #{nnfunc_forward.1} parent=1 // pred_check
      _
    $region219: #{nnfunc_forward.1} parent=1 // pred_check_branch
      %451 = sbr.rel (0) target = $region221
    $region220: #{nnfunc_forward.1} parent=1 // pred_region
      %452 = dma.done [#allocation24], 2048
    $region221: #{nnfunc_forward.1} parent=1 // pred_fallthru
      _
    // Predicated region
    $region222: #{nnfunc_forward.1} parent=1 // pred_check
      _
    $region223: #{nnfunc_forward.1} parent=1 // pred_check_branch
      %454 = sbr.rel (0) target = $region225
    $region224: #{nnfunc_forward.1} parent=1 // pred_region
      %455 = dma.done [#allocation27], 2048
    $region225: #{nnfunc_forward.1} parent=1 // pred_fallthru
      _
    // Predicated region
    $region226: #{nnfunc_forward.1} parent=1 // pred_check
      _
    $region227: #{nnfunc_forward.1} parent=1 // pred_check_branch
      %457 = sbr.rel (0) target = $region229
    $region228: #{nnfunc_forward.1} parent=1 // pred_region
      %458 = dma.done [#allocation27], 2048
    $region229: #{nnfunc_forward.1} parent=1 // pred_fallthru
      _
    // Predicated region
    $region230: #{nnfunc_forward.1} parent=1 // pred_check
      _
    $region231: #{nnfunc_forward.1} parent=1 // pred_check_branch
      %460 = sbr.rel (0) target = $region233
    $region232: #{nnfunc_forward.1} parent=1 // pred_region
      %461 = dma.done [#allocation30], 2048
    $region233: #{nnfunc_forward.1} parent=1 // pred_fallthru
      _
    // Predicated region
    $region234: #{nnfunc_forward.1} parent=1 // pred_check
      _
    $region235: #{nnfunc_forward.1} parent=1 // pred_check_branch
      %463 = sbr.rel (0) target = $region237
    $region236: #{nnfunc_forward.1} parent=1 // pred_region
      %464 = dma.done [#allocation30], 2048
    $region237: #{nnfunc_forward.1} parent=1 // pred_fallthru
      _
    // Predicated region
    $region238: #{nnfunc_forward.1} parent=1 // pred_check
      _
    $region239: #{nnfunc_forward.1} parent=1 // pred_check_branch
      %466 = sbr.rel (0) target = $region241
    $region240: #{nnfunc_forward.1} parent=1 // pred_region
      %467 = dma.done [#allocation33], 2048
    $region241: #{nnfunc_forward.1} parent=1 // pred_fallthru
      _
    // Predicated region
    $region242: #{nnfunc_forward.1} parent=1 // pred_check
      _
    $region243: #{nnfunc_forward.1} parent=1 // pred_check_branch
      %469 = sbr.rel (0) target = $region245
    $region244: #{nnfunc_forward.1} parent=1 // pred_region
      %470 = dma.done [#allocation33], 2048
    $region245: #{nnfunc_forward.1} parent=1 // pred_fallthru
      _
    // Predicated region
    $region246: #{nnfunc_forward.1} parent=1 // pred_check
      _
    $region247: #{nnfunc_forward.1} parent=1 // pred_check_branch
      %472 = sbr.rel (0) target = $region249
    $region248: #{nnfunc_forward.1} parent=1 // pred_region
      %473 = dma.done [#allocation36], 2048
    $region249: #{nnfunc_forward.1} parent=1 // pred_fallthru
      _
    // Predicated region
    $region250: #{nnfunc_forward.1} parent=1 // pred_check
      _
    $region251: #{nnfunc_forward.1} parent=1 // pred_check_branch
      %475 = sbr.rel (0) target = $region253
    $region252: #{nnfunc_forward.1} parent=1 // pred_region
      %476 = dma.done [#allocation36], 2048
    $region253: #{nnfunc_forward.1} parent=1 // pred_fallthru
      _
    %v477 = vld [vmem:[%s1] sm:$0xff]
    %v478 = vld [vmem:[%s1 + $0x8] sm:$0xff]
    %v479 = vld [vmem:[%s3] sm:$0x7f]
    %v480 = vld [vmem:[%s7] sm:$0x1]
    %v482 = vlaneseq
    %v483 = vshrl.u32 %v482, 7
    %v484 = vsub.s32 0, %v483
    %v485 = vrot.slane %v480, %v484
    %vm487 = vcmask 56320
    %v489 = vsel %vm487, %v477, 0
    %v492 = vsel %vm487, %v478, 0
    %vm494 = vcmask 1046528
    %v496 = vsel %vm494, %v479, 0
    %498 = vmatprep.subr.mxu0 0.0
    %499 = vmatpush1.msra.mxu0 0.0
    %500 = vmatprep.subr.mxu0 0.0
    %501 = vmatpush1.msra.mxu0 0.0
    %502 = vmatprep.subr.mxu0 0.0
    %503 = vmatpush1.msra.mxu0 0.0
    %504 = vmatprep.subr.mxu0 0.0
    %505 = vmatpush1.msra.mxu0 0.0
    %506 = vmatprep.subr.mxu0 0.0
    %507 = vmatpush1.msra.mxu0 0.0
    %508 = vmatprep.subr.mxu0 0.0
    %509 = vmatpush1.msra.mxu0 0.0
    %510 = vmatprep.subr.mxu0 0.0
    %511 = vmatpush1.msra.mxu0 0.0
    %512 = vmatprep.subr.mxu0 0.0
    %513 = vmatpush1.msra.mxu0 0.0
    %514 = vmatprep.subr.mxu0 0.0
    %515 = vmatpush1.msra.mxu0 0.0
    %516 = vmatprep.subr.mxu0 0.0
    %517 = vmatpush1.msra.mxu0 0.0
    %518 = vmatprep.subr.mxu0 0.0
    %519 = vmatpush1.msra.mxu0 0.0
    %520 = vmatprep.subr.mxu0 0.0
    %521 = vmatpush1.msra.mxu0 0.0
    %522 = vmatprep.subr.mxu0 0.0
    %523 = vmatpush1.msra.mxu0 0.0
    %524 = vmatprep.subr.mxu0 0.0
    %525 = vmatpush1.msra.mxu0 0.0
    %526 = vmatprep.subr.mxu0 0.0
    %527 = vmatpush1.msra.mxu0 0.0
    %528 = vmatprep.subr.mxu0 0.0
    %529 = vmatpush1.msra.mxu0 %v496
    %530 = vmatprep.subr.mxu0 0.0
    %531 = vmatpush2.msra.mxu0 0.0
    %532 = vmatprep.subr.mxu0 0.0
    %533 = vmatpush2.msra.mxu0 0.0
    %534 = vmatprep.subr.mxu0 0.0
    %535 = vmatpush2.msra.mxu0 0.0
    %536 = vmatprep.subr.mxu0 0.0
    %537 = vmatpush2.msra.mxu0 0.0
    %538 = vmatprep.subr.mxu0 0.0
    %539 = vmatpush2.msra.mxu0 0.0
    %540 = vmatprep.subr.mxu0 0.0
    %541 = vmatpush2.msra.mxu0 0.0
    %542 = vmatprep.subr.mxu0 0.0
    %543 = vmatpush2.msra.mxu0 0.0
    %544 = vmatprep.subr.mxu0 0.0
    %545 = vmatpush2.msra.mxu0 0.0
    %546 = vmatprep.subr.mxu0 0.0
    %547 = vmatpush2.msra.mxu0 0.0
    %548 = vmatprep.subr.mxu0 0.0
    %549 = vmatpush2.msra.mxu0 0.0
    %550 = vmatprep.subr.mxu0 0.0
    %551 = vmatpush2.msra.mxu0 0.0
    %552 = vmatprep.subr.mxu0 0.0
    %553 = vmatpush2.msra.mxu0 0.0
    %554 = vmatprep.subr.mxu0 0.0
    %555 = vmatpush2.msra.mxu0 0.0
    %556 = vmatprep.subr.mxu0 0.0
    %557 = vmatpush2.msra.mxu0 0.0
    %558 = vmatprep.subr.mxu0 0.0
    %559 = vmatpush2.msra.mxu0 0.0
    %560 = vmatprep.subr.mxu0 0.0
    %561 = vmatpush2.msra.mxu0 0.0
    %562 = vmatprep.mubr.f32.mxu0 0.0
    %563 = vmatmul.mubr.f32.gmra.mxu0 %v489
    %v564 = vpop.f32.mrf.mxu0
    %v565 = vadd.f32 %v485, %v564
    %v566 = vpop.f32.mrf.mxu0
    %567 = vmatprep.mubr.f32.mxu0 0.0
    %568 = vmatmul.mubr.f32.gmra.mxu0 %v492
    %v569 = vpop.f32.mrf.mxu0
    %v570 = vadd.f32 %v485, %v569
    %v571 = vpop.f32.mrf.mxu0
    %572 = vdwg.mxu0
    %v573 = vld [vmem:[#allocation3] sm:$0xff]
    %v574 = vld [vmem:[#allocation3 + $0x8] sm:$0xff]
    %v575 = vld [vmem:[#allocation3 + $0x10] sm:$0xff]
    %v576 = vld [vmem:[#allocation3 + $0x18] sm:$0xff]
    %v577 = vld [vmem:[#allocation3 + $0x20] sm:$0xff]
    %v578 = vld [vmem:[#allocation3 + $0x28] sm:$0xff]
    %v579 = vld [vmem:[#allocation3 + $0x30] sm:$0xff]
    %v580 = vld [vmem:[#allocation3 + $0x38] sm:$0xff]
    %v581 = vld [vmem:[#allocation3 + $0x40] sm:$0xff]
    %v582 = vld [vmem:[#allocation3 + $0x48] sm:$0xff]
    %v583 = vld [vmem:[#allocation3 + $0x50] sm:$0xff]
    %v584 = vld [vmem:[#allocation3 + $0x58] sm:$0xff]
    %v585 = vld [vmem:[#allocation3 + $0x60] sm:$0xff]
    %v586 = vld [vmem:[#allocation3 + $0x68] sm:$0xff]
    %v587 = vld [vmem:[#allocation3 + $0x70] sm:$0xff]
    %v588 = vld [vmem:[#allocation3 + $0x78] sm:$0xff]
    %v589 = vtanh.pop %v565
    %590 = vst [vmem:[#allocation2] sm:$0x3] %v589
    %591 = vmatprep.subr.mxu0 0.0
    %592 = vmatpush1.msra.mxu0 %v588
    %593 = vmatprep.subr.mxu0 0.0
    %594 = vmatpush1.msra.mxu0 %v587
    %595 = vmatprep.subr.mxu0 0.0
    %596 = vmatpush1.msra.mxu0 %v586
    %597 = vmatprep.subr.mxu0 0.0
    %598 = vmatpush1.msra.mxu0 %v585
    %599 = vmatprep.subr.mxu0 0.0
    %600 = vmatpush1.msra.mxu0 %v584
    %601 = vmatprep.subr.mxu0 0.0
    %602 = vmatpush1.msra.mxu0 %v583
    %603 = vmatprep.subr.mxu0 0.0
    %604 = vmatpush1.msra.mxu0 %v582
    %605 = vmatprep.subr.mxu0 0.0
    %606 = vmatpush1.msra.mxu0 %v581
    %607 = vmatprep.subr.mxu0 0.0
    %608 = vmatpush1.msra.mxu0 %v580
    %609 = vmatprep.subr.mxu0 0.0
    %610 = vmatpush1.msra.mxu0 %v579
    %611 = vmatprep.subr.mxu0 0.0
    %612 = vmatpush1.msra.mxu0 %v578
    %613 = vmatprep.subr.mxu0 0.0
    %614 = vmatpush1.msra.mxu0 %v577
    %615 = vmatprep.subr.mxu0 0.0
    %616 = vmatpush1.msra.mxu0 %v576
    %617 = vmatprep.subr.mxu0 0.0
    %618 = vmatpush1.msra.mxu0 %v575
    %619 = vmatprep.subr.mxu0 0.0
    %620 = vmatpush1.msra.mxu0 %v574
    %621 = vmatprep.subr.mxu0 0.0
    %622 = vmatpush1.msra.mxu0 %v573
    %623 = vmatprep.subr.mxu0 0.0
    %624 = vmatpush2.msra.mxu0 0.0
    %625 = vmatprep.subr.mxu0 0.0
    %626 = vmatpush2.msra.mxu0 0.0
    %627 = vmatprep.subr.mxu0 0.0
    %628 = vmatpush2.msra.mxu0 0.0
    %629 = vmatprep.subr.mxu0 0.0
    %630 = vmatpush2.msra.mxu0 0.0
    %631 = vmatprep.subr.mxu0 0.0
    %632 = vmatpush2.msra.mxu0 0.0
    %633 = vmatprep.subr.mxu0 0.0
    %634 = vmatpush2.msra.mxu0 0.0
    %635 = vmatprep.subr.mxu0 0.0
    %636 = vmatpush2.msra.mxu0 0.0
    %637 = vmatprep.subr.mxu0 0.0
    %638 = vmatpush2.msra.mxu0 0.0
    %639 = vmatprep.subr.mxu0 0.0
    %640 = vmatpush2.msra.mxu0 0.0
    %641 = vmatprep.subr.mxu0 0.0
    %642 = vmatpush2.msra.mxu0 0.0
    %643 = vmatprep.subr.mxu0 0.0
    %644 = vmatpush2.msra.mxu0 0.0
    %645 = vmatprep.subr.mxu0 0.0
    %646 = vmatpush2.msra.mxu0 0.0
    %647 = vmatprep.subr.mxu0 0.0
    %648 = vmatpush2.msra.mxu0 0.0
    %649 = vmatprep.subr.mxu0 0.0
    %650 = vmatpush2.msra.mxu0 0.0
    %651 = vmatprep.subr.mxu0 0.0
    %652 = vmatpush2.msra.mxu0 0.0
    %653 = vmatprep.subr.mxu0 0.0
    %654 = vmatpush2.msra.mxu0 0.0
    %655 = vmatprep.mubr.f32.mxu0 0.0
    %656 = vmatmul.mubr.f32.gmra.mxu0 %v589
    %v657 = vpop.f32.mrf.mxu0
    %v658 = vadd.f32 0.0, %v657
    %v659 = vpop.f32.mrf.mxu0
    %660 = vdwg.mxu0
    %v662 = vrot.slane %v658, 6
    %v664 = vadd.f32 %v565, %v662
    %v665 = vtanh.pop %v664
    %666 = vst [vmem:[#allocation2] sm:$0xc] %v665
    %v668 = vrot.slane %v665, 2
    %670 = vmatprep.subr.mxu0 0.0
    %671 = vmatpush1.msra.mxu0 %v588
    %672 = vmatprep.subr.mxu0 0.0
    %673 = vmatpush1.msra.mxu0 %v587
    %674 = vmatprep.subr.mxu0 0.0
    %675 = vmatpush1.msra.mxu0 %v586
    %676 = vmatprep.subr.mxu0 0.0
    %677 = vmatpush1.msra.mxu0 %v585
    %678 = vmatprep.subr.mxu0 0.0
    %679 = vmatpush1.msra.mxu0 %v584
    %680 = vmatprep.subr.mxu0 0.0
    %681 = vmatpush1.msra.mxu0 %v583
    %682 = vmatprep.subr.mxu0 0.0
    %683 = vmatpush1.msra.mxu0 %v582
    %684 = vmatprep.subr.mxu0 0.0
    %685 = vmatpush1.msra.mxu0 %v581
    %686 = vmatprep.subr.mxu0 0.0
    %687 = vmatpush1.msra.mxu0 %v580
    %688 = vmatprep.subr.mxu0 0.0
    %689 = vmatpush1.msra.mxu0 %v579
    %690 = vmatprep.subr.mxu0 0.0
    %691 = vmatpush1.msra.mxu0 %v578
    %692 = vmatprep.subr.mxu0 0.0
    %693 = vmatpush1.msra.mxu0 %v577
    %694 = vmatprep.subr.mxu0 0.0
    %695 = vmatpush1.msra.mxu0 %v576
    %696 = vmatprep.subr.mxu0 0.0
    %697 = vmatpush1.msra.mxu0 %v575
    %698 = vmatprep.subr.mxu0 0.0
    %699 = vmatpush1.msra.mxu0 %v574
    %700 = vmatprep.subr.mxu0 0.0
    %701 = vmatpush1.msra.mxu0 %v573
    %702 = vmatprep.subr.mxu0 0.0
    %703 = vmatpush2.msra.mxu0 0.0
    %704 = vmatprep.subr.mxu0 0.0
    %705 = vmatpush2.msra.mxu0 0.0
    %706 = vmatprep.subr.mxu0 0.0
    %707 = vmatpush2.msra.mxu0 0.0
    %708 = vmatprep.subr.mxu0 0.0
    %709 = vmatpush2.msra.mxu0 0.0
    %710 = vmatprep.subr.mxu0 0.0
    %711 = vmatpush2.msra.mxu0 0.0
    %712 = vmatprep.subr.mxu0 0.0
    %713 = vmatpush2.msra.mxu0 0.0
    %714 = vmatprep.subr.mxu0 0.0
    %715 = vmatpush2.msra.mxu0 0.0
    %716 = vmatprep.subr.mxu0 0.0
    %717 = vmatpush2.msra.mxu0 0.0
    %718 = vmatprep.subr.mxu0 0.0
    %719 = vmatpush2.msra.mxu0 0.0
    %720 = vmatprep.subr.mxu0 0.0
    %721 = vmatpush2.msra.mxu0 0.0
    %722 = vmatprep.subr.mxu0 0.0
    %723 = vmatpush2.msra.mxu0 0.0
    %724 = vmatprep.subr.mxu0 0.0
    %725 = vmatpush2.msra.mxu0 0.0
    %726 = vmatprep.subr.mxu0 0.0
    %727 = vmatpush2.msra.mxu0 0.0
    %728 = vmatprep.subr.mxu0 0.0
    %729 = vmatpush2.msra.mxu0 0.0
    %730 = vmatprep.subr.mxu0 0.0
    %731 = vmatpush2.msra.mxu0 0.0
    %732 = vmatprep.subr.mxu0 0.0
    %733 = vmatpush2.msra.mxu0 0.0
    %734 = vmatprep.mubr.f32.mxu0 0.0
    %735 = vmatmul.mubr.f32.gmra.mxu0 %v668
    %v736 = vpop.f32.mrf.mxu0
    %v737 = vadd.f32 0.0, %v736
    %v738 = vpop.f32.mrf.mxu0
    %739 = vdwg.mxu0
    %v741 = vrot.slane %v737, 4
    %v743 = vadd.f32 %v565, %v741
    %v744 = vtanh.pop %v743
    %745 = vst [vmem:[#allocation2] sm:$0x30] %v744
    %v747 = vrot.slane %v744, 4
    %749 = vmatprep.subr.mxu0 0.0
    %750 = vmatpush1.msra.mxu0 %v588
    %751 = vmatprep.subr.mxu0 0.0
    %752 = vmatpush1.msra.mxu0 %v587
    %753 = vmatprep.subr.mxu0 0.0
    %754 = vmatpush1.msra.mxu0 %v586
    %755 = vmatprep.subr.mxu0 0.0
    %756 = vmatpush1.msra.mxu0 %v585
    %757 = vmatprep.subr.mxu0 0.0
    %758 = vmatpush1.msra.mxu0 %v584
    %759 = vmatprep.subr.mxu0 0.0
    %760 = vmatpush1.msra.mxu0 %v583
    %761 = vmatprep.subr.mxu0 0.0
    %762 = vmatpush1.msra.mxu0 %v582
    %763 = vmatprep.subr.mxu0 0.0
    %764 = vmatpush1.msra.mxu0 %v581
    %765 = vmatprep.subr.mxu0 0.0
    %766 = vmatpush1.msra.mxu0 %v580
    %767 = vmatprep.subr.mxu0 0.0
    %768 = vmatpush1.msra.mxu0 %v579
    %769 = vmatprep.subr.mxu0 0.0
    %770 = vmatpush1.msra.mxu0 %v578
    %771 = vmatprep.subr.mxu0 0.0
    %772 = vmatpush1.msra.mxu0 %v577
    %773 = vmatprep.subr.mxu0 0.0
    %774 = vmatpush1.msra.mxu0 %v576
    %775 = vmatprep.subr.mxu0 0.0
    %776 = vmatpush1.msra.mxu0 %v575
    %777 = vmatprep.subr.mxu0 0.0
    %778 = vmatpush1.msra.mxu0 %v574
    %779 = vmatprep.subr.mxu0 0.0
    %780 = vmatpush1.msra.mxu0 %v573
    %781 = vmatprep.subr.mxu0 0.0
    %782 = vmatpush2.msra.mxu0 0.0
    %783 = vmatprep.subr.mxu0 0.0
    %784 = vmatpush2.msra.mxu0 0.0
    %785 = vmatprep.subr.mxu0 0.0
    %786 = vmatpush2.msra.mxu0 0.0
    %787 = vmatprep.subr.mxu0 0.0
    %788 = vmatpush2.msra.mxu0 0.0
    %789 = vmatprep.subr.mxu0 0.0
    %790 = vmatpush2.msra.mxu0 0.0
    %791 = vmatprep.subr.mxu0 0.0
    %792 = vmatpush2.msra.mxu0 0.0
    %793 = vmatprep.subr.mxu0 0.0
    %794 = vmatpush2.msra.mxu0 0.0
    %795 = vmatprep.subr.mxu0 0.0
    %796 = vmatpush2.msra.mxu0 0.0
    %797 = vmatprep.subr.mxu0 0.0
    %798 = vmatpush2.msra.mxu0 0.0
    %799 = vmatprep.subr.mxu0 0.0
    %800 = vmatpush2.msra.mxu0 0.0
    %801 = vmatprep.subr.mxu0 0.0
    %802 = vmatpush2.msra.mxu0 0.0
    %803 = vmatprep.subr.mxu0 0.0
    %804 = vmatpush2.msra.mxu0 0.0
    %805 = vmatprep.subr.mxu0 0.0
    %806 = vmatpush2.msra.mxu0 0.0
    %807 = vmatprep.subr.mxu0 0.0
    %808 = vmatpush2.msra.mxu0 0.0
    %809 = vmatprep.subr.mxu0 0.0
    %810 = vmatpush2.msra.mxu0 0.0
    %811 = vmatprep.subr.mxu0 0.0
    %812 = vmatpush2.msra.mxu0 0.0
    %813 = vmatprep.mubr.f32.mxu0 0.0
    %814 = vmatmul.mubr.f32.gmra.mxu0 %v747
    %v815 = vpop.f32.mrf.mxu0
    %v816 = vadd.f32 0.0, %v815
    %v817 = vpop.f32.mrf.mxu0
    %818 = vdwg.mxu0
    %v820 = vrot.slane %v816, 2
    %v822 = vadd.f32 %v565, %v820
    %v823 = vtanh.pop %v822
    %824 = vst [vmem:[#allocation2] sm:$0xc0] %v823
    %v826 = vrot.slane %v823, 6
    %828 = vmatprep.subr.mxu0 0.0
    %829 = vmatpush1.msra.mxu0 %v588
    %830 = vmatprep.subr.mxu0 0.0
    %831 = vmatpush1.msra.mxu0 %v587
    %832 = vmatprep.subr.mxu0 0.0
    %833 = vmatpush1.msra.mxu0 %v586
    %834 = vmatprep.subr.mxu0 0.0
    %835 = vmatpush1.msra.mxu0 %v585
    %836 = vmatprep.subr.mxu0 0.0
    %837 = vmatpush1.msra.mxu0 %v584
    %838 = vmatprep.subr.mxu0 0.0
    %839 = vmatpush1.msra.mxu0 %v583
    %840 = vmatprep.subr.mxu0 0.0
    %841 = vmatpush1.msra.mxu0 %v582
    %842 = vmatprep.subr.mxu0 0.0
    %843 = vmatpush1.msra.mxu0 %v581
    %844 = vmatprep.subr.mxu0 0.0
    %845 = vmatpush1.msra.mxu0 %v580
    %846 = vmatprep.subr.mxu0 0.0
    %847 = vmatpush1.msra.mxu0 %v579
    %848 = vmatprep.subr.mxu0 0.0
    %849 = vmatpush1.msra.mxu0 %v578
    %850 = vmatprep.subr.mxu0 0.0
    %851 = vmatpush1.msra.mxu0 %v577
    %852 = vmatprep.subr.mxu0 0.0
    %853 = vmatpush1.msra.mxu0 %v576
    %854 = vmatprep.subr.mxu0 0.0
    %855 = vmatpush1.msra.mxu0 %v575
    %856 = vmatprep.subr.mxu0 0.0
    %857 = vmatpush1.msra.mxu0 %v574
    %858 = vmatprep.subr.mxu0 0.0
    %859 = vmatpush1.msra.mxu0 %v573
    %860 = vmatprep.subr.mxu0 0.0
    %861 = vmatpush2.msra.mxu0 0.0
    %862 = vmatprep.subr.mxu0 0.0
    %863 = vmatpush2.msra.mxu0 0.0
    %864 = vmatprep.subr.mxu0 0.0
    %865 = vmatpush2.msra.mxu0 0.0
    %866 = vmatprep.subr.mxu0 0.0
    %867 = vmatpush2.msra.mxu0 0.0
    %868 = vmatprep.subr.mxu0 0.0
    %869 = vmatpush2.msra.mxu0 0.0
    %870 = vmatprep.subr.mxu0 0.0
    %871 = vmatpush2.msra.mxu0 0.0
    %872 = vmatprep.subr.mxu0 0.0
    %873 = vmatpush2.msra.mxu0 0.0
    %874 = vmatprep.subr.mxu0 0.0
    %875 = vmatpush2.msra.mxu0 0.0
    %876 = vmatprep.subr.mxu0 0.0
    %877 = vmatpush2.msra.mxu0 0.0
    %878 = vmatprep.subr.mxu0 0.0
    %879 = vmatpush2.msra.mxu0 0.0
    %880 = vmatprep.subr.mxu0 0.0
    %881 = vmatpush2.msra.mxu0 0.0
    %882 = vmatprep.subr.mxu0 0.0
    %883 = vmatpush2.msra.mxu0 0.0
    %884 = vmatprep.subr.mxu0 0.0
    %885 = vmatpush2.msra.mxu0 0.0
    %886 = vmatprep.subr.mxu0 0.0
    %887 = vmatpush2.msra.mxu0 0.0
    %888 = vmatprep.subr.mxu0 0.0
    %889 = vmatpush2.msra.mxu0 0.0
    %890 = vmatprep.subr.mxu0 0.0
    %891 = vmatpush2.msra.mxu0 0.0
    %892 = vmatprep.mubr.f32.mxu0 0.0
    %893 = vmatmul.mubr.f32.gmra.mxu0 %v826
    %v894 = vpop.f32.mrf.mxu0
    %v895 = vadd.f32 0.0, %v894
    %v896 = vpop.f32.mrf.mxu0
    %897 = vdwg.mxu0
    %v898 = vadd.f32 %v570, %v895
    %v899 = vtanh.pop %v898
    %900 = vst [vmem:[#allocation2 + $0x8] sm:$0x3] %v899
    %901 = vmatprep.subr.mxu0 0.0
    %902 = vmatpush1.msra.mxu0 %v588
    %903 = vmatprep.subr.mxu0 0.0
    %904 = vmatpush1.msra.mxu0 %v587
    %905 = vmatprep.subr.mxu0 0.0
    %906 = vmatpush1.msra.mxu0 %v586
    %907 = vmatprep.subr.mxu0 0.0
    %908 = vmatpush1.msra.mxu0 %v585
    %909 = vmatprep.subr.mxu0 0.0
    %910 = vmatpush1.msra.mxu0 %v584
    %911 = vmatprep.subr.mxu0 0.0
    %912 = vmatpush1.msra.mxu0 %v583
    %913 = vmatprep.subr.mxu0 0.0
    %914 = vmatpush1.msra.mxu0 %v582
    %915 = vmatprep.subr.mxu0 0.0
    %916 = vmatpush1.msra.mxu0 %v581
    %917 = vmatprep.subr.mxu0 0.0
    %918 = vmatpush1.msra.mxu0 %v580
    %919 = vmatprep.subr.mxu0 0.0
    %920 = vmatpush1.msra.mxu0 %v579
    %921 = vmatprep.subr.mxu0 0.0
    %922 = vmatpush1.msra.mxu0 %v578
    %923 = vmatprep.subr.mxu0 0.0
    %924 = vmatpush1.msra.mxu0 %v577
    %925 = vmatprep.subr.mxu0 0.0
    %926 = vmatpush1.msra.mxu0 %v576
    %927 = vmatprep.subr.mxu0 0.0
    %928 = vmatpush1.msra.mxu0 %v575
    %929 = vmatprep.subr.mxu0 0.0
    %930 = vmatpush1.msra.mxu0 %v574
    %931 = vmatprep.subr.mxu0 0.0
    %932 = vmatpush1.msra.mxu0 %v573
    %933 = vmatprep.subr.mxu0 0.0
    %934 = vmatpush2.msra.mxu0 0.0
    %935 = vmatprep.subr.mxu0 0.0
    %936 = vmatpush2.msra.mxu0 0.0
    %937 = vmatprep.subr.mxu0 0.0
    %938 = vmatpush2.msra.mxu0 0.0
    %939 = vmatprep.subr.mxu0 0.0
    %940 = vmatpush2.msra.mxu0 0.0
    %941 = vmatprep.subr.mxu0 0.0
    %942 = vmatpush2.msra.mxu0 0.0
    %943 = vmatprep.subr.mxu0 0.0
    %944 = vmatpush2.msra.mxu0 0.0
    %945 = vmatprep.subr.mxu0 0.0
    %946 = vmatpush2.msra.mxu0 0.0
    %947 = vmatprep.subr.mxu0 0.0
    %948 = vmatpush2.msra.mxu0 0.0
    %949 = vmatprep.subr.mxu0 0.0
    %950 = vmatpush2.msra.mxu0 0.0
    %951 = vmatprep.subr.mxu0 0.0
    %952 = vmatpush2.msra.mxu0 0.0
    %953 = vmatprep.subr.mxu0 0.0
    %954 = vmatpush2.msra.mxu0 0.0
    %955 = vmatprep.subr.mxu0 0.0
    %956 = vmatpush2.msra.mxu0 0.0
    %957 = vmatprep.subr.mxu0 0.0
    %958 = vmatpush2.msra.mxu0 0.0
    %959 = vmatprep.subr.mxu0 0.0
    %960 = vmatpush2.msra.mxu0 0.0
    %961 = vmatprep.subr.mxu0 0.0
    %962 = vmatpush2.msra.mxu0 0.0
    %963 = vmatprep.subr.mxu0 0.0
    %964 = vmatpush2.msra.mxu0 0.0
    %965 = vmatprep.mubr.f32.mxu0 0.0
    %966 = vmatmul.mubr.f32.gmra.mxu0 %v899
    %v967 = vpop.f32.mrf.mxu0
    %v968 = vadd.f32 0.0, %v967
    %v969 = vpop.f32.mrf.mxu0
    %970 = vdwg.mxu0
    %v972 = vrot.slane %v968, 6
    %v974 = vadd.f32 %v570, %v972
    %v975 = vtanh.pop %v974
    %976 = vst [vmem:[#allocation2 + $0x8] sm:$0xc] %v975
    %v978 = vrot.slane %v975, 2
    %980 = vmatprep.subr.mxu0 0.0
    %981 = vmatpush1.msra.mxu0 %v588
    %982 = vmatprep.subr.mxu0 0.0
    %983 = vmatpush1.msra.mxu0 %v587
    %984 = vmatprep.subr.mxu0 0.0
    %985 = vmatpush1.msra.mxu0 %v586
    %986 = vmatprep.subr.mxu0 0.0
    %987 = vmatpush1.msra.mxu0 %v585
    %988 = vmatprep.subr.mxu0 0.0
    %989 = vmatpush1.msra.mxu0 %v584
    %990 = vmatprep.subr.mxu0 0.0
    %991 = vmatpush1.msra.mxu0 %v583
    %992 = vmatprep.subr.mxu0 0.0
    %993 = vmatpush1.msra.mxu0 %v582
    %994 = vmatprep.subr.mxu0 0.0
    %995 = vmatpush1.msra.mxu0 %v581
    %996 = vmatprep.subr.mxu0 0.0
    %997 = vmatpush1.msra.mxu0 %v580
    %998 = vmatprep.subr.mxu0 0.0
    %999 = vmatpush1.msra.mxu0 %v579
    %1000 = vmatprep.subr.mxu0 0.0
    %1001 = vmatpush1.msra.mxu0 %v578
    %1002 = vmatprep.subr.mxu0 0.0
    %1003 = vmatpush1.msra.mxu0 %v577
    %1004 = vmatprep.subr.mxu0 0.0
    %1005 = vmatpush1.msra.mxu0 %v576
    %1006 = vmatprep.subr.mxu0 0.0
    %1007 = vmatpush1.msra.mxu0 %v575
    %1008 = vmatprep.subr.mxu0 0.0
    %1009 = vmatpush1.msra.mxu0 %v574
    %1010 = vmatprep.subr.mxu0 0.0
    %1011 = vmatpush1.msra.mxu0 %v573
    %1012 = vmatprep.subr.mxu0 0.0
    %1013 = vmatpush2.msra.mxu0 0.0
    %1014 = vmatprep.subr.mxu0 0.0
    %1015 = vmatpush2.msra.mxu0 0.0
    %1016 = vmatprep.subr.mxu0 0.0
    %1017 = vmatpush2.msra.mxu0 0.0
    %1018 = vmatprep.subr.mxu0 0.0
    %1019 = vmatpush2.msra.mxu0 0.0
    %1020 = vmatprep.subr.mxu0 0.0
    %1021 = vmatpush2.msra.mxu0 0.0
    %1022 = vmatprep.subr.mxu0 0.0
    %1023 = vmatpush2.msra.mxu0 0.0
    %1024 = vmatprep.subr.mxu0 0.0
    %1025 = vmatpush2.msra.mxu0 0.0
    %1026 = vmatprep.subr.mxu0 0.0
    %1027 = vmatpush2.msra.mxu0 0.0
    %1028 = vmatprep.subr.mxu0 0.0
    %1029 = vmatpush2.msra.mxu0 0.0
    %1030 = vmatprep.subr.mxu0 0.0
    %1031 = vmatpush2.msra.mxu0 0.0
    %1032 = vmatprep.subr.mxu0 0.0
    %1033 = vmatpush2.msra.mxu0 0.0
    %1034 = vmatprep.subr.mxu0 0.0
    %1035 = vmatpush2.msra.mxu0 0.0
    %1036 = vmatprep.subr.mxu0 0.0
    %1037 = vmatpush2.msra.mxu0 0.0
    %1038 = vmatprep.subr.mxu0 0.0
    %1039 = vmatpush2.msra.mxu0 0.0
    %1040 = vmatprep.subr.mxu0 0.0
    %1041 = vmatpush2.msra.mxu0 0.0
    %1042 = vmatprep.subr.mxu0 0.0
    %1043 = vmatpush2.msra.mxu0 0.0
    %1044 = vmatprep.mubr.f32.mxu0 0.0
    %1045 = vmatmul.mubr.f32.gmra.mxu0 %v978
    %v1046 = vpop.f32.mrf.mxu0
    %v1047 = vadd.f32 0.0, %v1046
    %v1048 = vpop.f32.mrf.mxu0
    %1049 = vdwg.mxu0
    %v1051 = vrot.slane %v1047, 4
    %v1053 = vadd.f32 %v570, %v1051
    %v1054 = vtanh.pop %v1053
    %1055 = vst [vmem:[#allocation2 + $0x8] sm:$0x30] %v1054
    %v1057 = vrot.slane %v1054, 4
    %1059 = vmatprep.subr.mxu0 0.0
    %1060 = vmatpush1.msra.mxu0 %v588
    %1061 = vmatprep.subr.mxu0 0.0
    %1062 = vmatpush1.msra.mxu0 %v587
    %1063 = vmatprep.subr.mxu0 0.0
    %1064 = vmatpush1.msra.mxu0 %v586
    %1065 = vmatprep.subr.mxu0 0.0
    %1066 = vmatpush1.msra.mxu0 %v585
    %1067 = vmatprep.subr.mxu0 0.0
    %1068 = vmatpush1.msra.mxu0 %v584
    %1069 = vmatprep.subr.mxu0 0.0
    %1070 = vmatpush1.msra.mxu0 %v583
    %1071 = vmatprep.subr.mxu0 0.0
    %1072 = vmatpush1.msra.mxu0 %v582
    %1073 = vmatprep.subr.mxu0 0.0
    %1074 = vmatpush1.msra.mxu0 %v581
    %1075 = vmatprep.subr.mxu0 0.0
    %1076 = vmatpush1.msra.mxu0 %v580
    %1077 = vmatprep.subr.mxu0 0.0
    %1078 = vmatpush1.msra.mxu0 %v579
    %1079 = vmatprep.subr.mxu0 0.0
    %1080 = vmatpush1.msra.mxu0 %v578
    %1081 = vmatprep.subr.mxu0 0.0
    %1082 = vmatpush1.msra.mxu0 %v577
    %1083 = vmatprep.subr.mxu0 0.0
    %1084 = vmatpush1.msra.mxu0 %v576
    %1085 = vmatprep.subr.mxu0 0.0
    %1086 = vmatpush1.msra.mxu0 %v575
    %1087 = vmatprep.subr.mxu0 0.0
    %1088 = vmatpush1.msra.mxu0 %v574
    %1089 = vmatprep.subr.mxu0 0.0
    %1090 = vmatpush1.msra.mxu0 %v573
    %1091 = vmatprep.subr.mxu0 0.0
    %1092 = vmatpush2.msra.mxu0 0.0
    %1093 = vmatprep.subr.mxu0 0.0
    %1094 = vmatpush2.msra.mxu0 0.0
    %1095 = vmatprep.subr.mxu0 0.0
    %1096 = vmatpush2.msra.mxu0 0.0
    %1097 = vmatprep.subr.mxu0 0.0
    %1098 = vmatpush2.msra.mxu0 0.0
    %1099 = vmatprep.subr.mxu0 0.0
    %1100 = vmatpush2.msra.mxu0 0.0
    %1101 = vmatprep.subr.mxu0 0.0
    %1102 = vmatpush2.msra.mxu0 0.0
    %1103 = vmatprep.subr.mxu0 0.0
    %1104 = vmatpush2.msra.mxu0 0.0
    %1105 = vmatprep.subr.mxu0 0.0
    %1106 = vmatpush2.msra.mxu0 0.0
    %1107 = vmatprep.subr.mxu0 0.0
    %1108 = vmatpush2.msra.mxu0 0.0
    %1109 = vmatprep.subr.mxu0 0.0
    %1110 = vmatpush2.msra.mxu0 0.0
    %1111 = vmatprep.subr.mxu0 0.0
    %1112 = vmatpush2.msra.mxu0 0.0
    %1113 = vmatprep.subr.mxu0 0.0
    %1114 = vmatpush2.msra.mxu0 0.0
    %1115 = vmatprep.subr.mxu0 0.0
    %1116 = vmatpush2.msra.mxu0 0.0
    %1117 = vmatprep.subr.mxu0 0.0
    %1118 = vmatpush2.msra.mxu0 0.0
    %1119 = vmatprep.subr.mxu0 0.0
    %1120 = vmatpush2.msra.mxu0 0.0
    %1121 = vmatprep.subr.mxu0 0.0
    %1122 = vmatpush2.msra.mxu0 0.0
    %1123 = vmatprep.mubr.f32.mxu0 0.0
    %1124 = vmatmul.mubr.f32.gmra.mxu0 %v1057
    %v1125 = vpop.f32.mrf.mxu0
    %v1126 = vadd.f32 0.0, %v1125
    %v1127 = vpop.f32.mrf.mxu0
    %1128 = vdwg.mxu0
    %v1130 = vrot.slane %v1126, 2
    %v1132 = vadd.f32 %v570, %v1130
    %v1133 = vtanh.pop %v1132
    %1134 = vst [vmem:[#allocation2 + $0x8] sm:$0xc0] %v1133
    %v1135 = vld [vmem:[#allocation2] sm:$0xff]
    %v1136 = vld [vmem:[#allocation2 + $0x8] sm:$0xff]
    %v1137 = vld [vmem:[#allocation5] sm:$0xff]
    %v1138 = vld [vmem:[#allocation5 + $0x8] sm:$0xff]
    %v1139 = vld [vmem:[#allocation5 + $0x10] sm:$0xff]
    %v1140 = vld [vmem:[#allocation5 + $0x18] sm:$0xff]
    %v1141 = vld [vmem:[#allocation5 + $0x20] sm:$0xff]
    %v1142 = vld [vmem:[#allocation5 + $0x28] sm:$0xff]
    %v1143 = vld [vmem:[#allocation5 + $0x30] sm:$0xff]
    %v1144 = vld [vmem:[#allocation5 + $0x38] sm:$0xff]
    %v1145 = vld [vmem:[#allocation5 + $0x40] sm:$0xff]
    %v1146 = vld [vmem:[#allocation5 + $0x48] sm:$0xff]
    %v1147 = vld [vmem:[#allocation5 + $0x50] sm:$0xff]
    %v1148 = vld [vmem:[#allocation5 + $0x58] sm:$0xff]
    %v1149 = vld [vmem:[#allocation5 + $0x60] sm:$0xff]
    %v1150 = vld [vmem:[#allocation5 + $0x68] sm:$0xff]
    %v1151 = vld [vmem:[#allocation5 + $0x70] sm:$0xff]
    %v1152 = vld [vmem:[#allocation5 + $0x78] sm:$0xff]
    %v1153 = vld [vmem:[%s13] sm:$0x1]
    %v1155 = vlaneseq
    %v1156 = vshrl.u32 %v1155, 7
    %v1157 = vsub.s32 0, %v1156
    %v1158 = vrot.slane %v1153, %v1157
    %1160 = vmatprep.subr.mxu0 0.0
    %1161 = vmatpush1.msra.mxu0 %v1152
    %1162 = vmatprep.subr.mxu0 0.0
    %1163 = vmatpush1.msra.mxu0 %v1151
    %1164 = vmatprep.subr.mxu0 0.0
    %1165 = vmatpush1.msra.mxu0 %v1150
    %1166 = vmatprep.subr.mxu0 0.0
    %1167 = vmatpush1.msra.mxu0 %v1149
    %1168 = vmatprep.subr.mxu0 0.0
    %1169 = vmatpush1.msra.mxu0 %v1148
    %1170 = vmatprep.subr.mxu0 0.0
    %1171 = vmatpush1.msra.mxu0 %v1147
    %1172 = vmatprep.subr.mxu0 0.0
    %1173 = vmatpush1.msra.mxu0 %v1146
    %1174 = vmatprep.subr.mxu0 0.0
    %1175 = vmatpush1.msra.mxu0 %v1145
    %1176 = vmatprep.subr.mxu0 0.0
    %1177 = vmatpush1.msra.mxu0 %v1144
    %1178 = vmatprep.subr.mxu0 0.0
    %1179 = vmatpush1.msra.mxu0 %v1143
    %1180 = vmatprep.subr.mxu0 0.0
    %1181 = vmatpush1.msra.mxu0 %v1142
    %1182 = vmatprep.subr.mxu0 0.0
    %1183 = vmatpush1.msra.mxu0 %v1141
    %1184 = vmatprep.subr.mxu0 0.0
    %1185 = vmatpush1.msra.mxu0 %v1140
    %1186 = vmatprep.subr.mxu0 0.0
    %1187 = vmatpush1.msra.mxu0 %v1139
    %1188 = vmatprep.subr.mxu0 0.0
    %1189 = vmatpush1.msra.mxu0 %v1138
    %1190 = vmatprep.subr.mxu0 0.0
    %1191 = vmatpush1.msra.mxu0 %v1137
    %1192 = vmatprep.subr.mxu0 0.0
    %1193 = vmatpush2.msra.mxu0 0.0
    %1194 = vmatprep.subr.mxu0 0.0
    %1195 = vmatpush2.msra.mxu0 0.0
    %1196 = vmatprep.subr.mxu0 0.0
    %1197 = vmatpush2.msra.mxu0 0.0
    %1198 = vmatprep.subr.mxu0 0.0
    %1199 = vmatpush2.msra.mxu0 0.0
    %1200 = vmatprep.subr.mxu0 0.0
    %1201 = vmatpush2.msra.mxu0 0.0
    %1202 = vmatprep.subr.mxu0 0.0
    %1203 = vmatpush2.msra.mxu0 0.0
    %1204 = vmatprep.subr.mxu0 0.0
    %1205 = vmatpush2.msra.mxu0 0.0
    %1206 = vmatprep.subr.mxu0 0.0
    %1207 = vmatpush2.msra.mxu0 0.0
    %1208 = vmatprep.subr.mxu0 0.0
    %1209 = vmatpush2.msra.mxu0 0.0
    %1210 = vmatprep.subr.mxu0 0.0
    %1211 = vmatpush2.msra.mxu0 0.0
    %1212 = vmatprep.subr.mxu0 0.0
    %1213 = vmatpush2.msra.mxu0 0.0
    %1214 = vmatprep.subr.mxu0 0.0
    %1215 = vmatpush2.msra.mxu0 0.0
    %1216 = vmatprep.subr.mxu0 0.0
    %1217 = vmatpush2.msra.mxu0 0.0
    %1218 = vmatprep.subr.mxu0 0.0
    %1219 = vmatpush2.msra.mxu0 0.0
    %1220 = vmatprep.subr.mxu0 0.0
    %1221 = vmatpush2.msra.mxu0 0.0
    %1222 = vmatprep.subr.mxu0 0.0
    %1223 = vmatpush2.msra.mxu0 0.0
    %1224 = vmatprep.mubr.f32.mxu0 0.0
    %1225 = vmatmul.mubr.f32.gmra.mxu0 %v1135
    %v1226 = vpop.f32.mrf.mxu0
    %v1227 = vadd.f32 %v1158, %v1226
    %v1228 = vpop.f32.mrf.mxu0
    %1229 = vmatprep.mubr.f32.mxu0 0.0
    %1230 = vmatmul.mubr.f32.gmra.mxu0 %v1136
    %v1231 = vpop.f32.mrf.mxu0
    %v1232 = vadd.f32 %v1158, %v1231
    %v1233 = vpop.f32.mrf.mxu0
    %1234 = vdwg.mxu0
    %v1235 = vld [vmem:[#allocation7] sm:$0xff]
    %v1236 = vld [vmem:[#allocation7 + $0x8] sm:$0xff]
    %v1237 = vld [vmem:[#allocation7 + $0x10] sm:$0xff]
    %v1238 = vld [vmem:[#allocation7 + $0x18] sm:$0xff]
    %v1239 = vld [vmem:[#allocation7 + $0x20] sm:$0xff]
    %v1240 = vld [vmem:[#allocation7 + $0x28] sm:$0xff]
    %v1241 = vld [vmem:[#allocation7 + $0x30] sm:$0xff]
    %v1242 = vld [vmem:[#allocation7 + $0x38] sm:$0xff]
    %v1243 = vld [vmem:[#allocation7 + $0x40] sm:$0xff]
    %v1244 = vld [vmem:[#allocation7 + $0x48] sm:$0xff]
    %v1245 = vld [vmem:[#allocation7 + $0x50] sm:$0xff]
    %v1246 = vld [vmem:[#allocation7 + $0x58] sm:$0xff]
    %v1247 = vld [vmem:[#allocation7 + $0x60] sm:$0xff]
    %v1248 = vld [vmem:[#allocation7 + $0x68] sm:$0xff]
    %v1249 = vld [vmem:[#allocation7 + $0x70] sm:$0xff]
    %v1250 = vld [vmem:[#allocation7 + $0x78] sm:$0xff]
    %v1251 = vtanh.pop %v1227
    %1252 = vst [vmem:[#allocation2] sm:$0x3] %v1251
    %1253 = vmatprep.subr.mxu0 0.0
    %1254 = vmatpush1.msra.mxu0 %v1250
    %1255 = vmatprep.subr.mxu0 0.0
    %1256 = vmatpush1.msra.mxu0 %v1249
    %1257 = vmatprep.subr.mxu0 0.0
    %1258 = vmatpush1.msra.mxu0 %v1248
    %1259 = vmatprep.subr.mxu0 0.0
    %1260 = vmatpush1.msra.mxu0 %v1247
    %1261 = vmatprep.subr.mxu0 0.0
    %1262 = vmatpush1.msra.mxu0 %v1246
    %1263 = vmatprep.subr.mxu0 0.0
    %1264 = vmatpush1.msra.mxu0 %v1245
    %1265 = vmatprep.subr.mxu0 0.0
    %1266 = vmatpush1.msra.mxu0 %v1244
    %1267 = vmatprep.subr.mxu0 0.0
    %1268 = vmatpush1.msra.mxu0 %v1243
    %1269 = vmatprep.subr.mxu0 0.0
    %1270 = vmatpush1.msra.mxu0 %v1242
    %1271 = vmatprep.subr.mxu0 0.0
    %1272 = vmatpush1.msra.mxu0 %v1241
    %1273 = vmatprep.subr.mxu0 0.0
    %1274 = vmatpush1.msra.mxu0 %v1240
    %1275 = vmatprep.subr.mxu0 0.0
    %1276 = vmatpush1.msra.mxu0 %v1239
    %1277 = vmatprep.subr.mxu0 0.0
    %1278 = vmatpush1.msra.mxu0 %v1238
    %1279 = vmatprep.subr.mxu0 0.0
    %1280 = vmatpush1.msra.mxu0 %v1237
    %1281 = vmatprep.subr.mxu0 0.0
    %1282 = vmatpush1.msra.mxu0 %v1236
    %1283 = vmatprep.subr.mxu0 0.0
    %1284 = vmatpush1.msra.mxu0 %v1235
    %1285 = vmatprep.subr.mxu0 0.0
    %1286 = vmatpush2.msra.mxu0 0.0
    %1287 = vmatprep.subr.mxu0 0.0
    %1288 = vmatpush2.msra.mxu0 0.0
    %1289 = vmatprep.subr.mxu0 0.0
    %1290 = vmatpush2.msra.mxu0 0.0
    %1291 = vmatprep.subr.mxu0 0.0
    %1292 = vmatpush2.msra.mxu0 0.0
    %1293 = vmatprep.subr.mxu0 0.0
    %1294 = vmatpush2.msra.mxu0 0.0
    %1295 = vmatprep.subr.mxu0 0.0
    %1296 = vmatpush2.msra.mxu0 0.0
    %1297 = vmatprep.subr.mxu0 0.0
    %1298 = vmatpush2.msra.mxu0 0.0
    %1299 = vmatprep.subr.mxu0 0.0
    %1300 = vmatpush2.msra.mxu0 0.0
    %1301 = vmatprep.subr.mxu0 0.0
    %1302 = vmatpush2.msra.mxu0 0.0
    %1303 = vmatprep.subr.mxu0 0.0
    %1304 = vmatpush2.msra.mxu0 0.0
    %1305 = vmatprep.subr.mxu0 0.0
    %1306 = vmatpush2.msra.mxu0 0.0
    %1307 = vmatprep.subr.mxu0 0.0
    %1308 = vmatpush2.msra.mxu0 0.0
    %1309 = vmatprep.subr.mxu0 0.0
    %1310 = vmatpush2.msra.mxu0 0.0
    %1311 = vmatprep.subr.mxu0 0.0
    %1312 = vmatpush2.msra.mxu0 0.0
    %1313 = vmatprep.subr.mxu0 0.0
    %1314 = vmatpush2.msra.mxu0 0.0
    %1315 = vmatprep.subr.mxu0 0.0
    %1316 = vmatpush2.msra.mxu0 0.0
    %1317 = vmatprep.mubr.f32.mxu0 0.0
    %1318 = vmatmul.mubr.f32.gmra.mxu0 %v1251
    %v1319 = vpop.f32.mrf.mxu0
    %v1320 = vadd.f32 0.0, %v1319
    %v1321 = vpop.f32.mrf.mxu0
    %1322 = vdwg.mxu0
    %v1324 = vrot.slane %v1320, 6
    %v1326 = vadd.f32 %v1227, %v1324
    %v1327 = vtanh.pop %v1326
    %1328 = vst [vmem:[#allocation2] sm:$0xc] %v1327
    %v1330 = vrot.slane %v1327, 2
    %1332 = vmatprep.subr.mxu0 0.0
    %1333 = vmatpush1.msra.mxu0 %v1250
    %1334 = vmatprep.subr.mxu0 0.0
    %1335 = vmatpush1.msra.mxu0 %v1249
    %1336 = vmatprep.subr.mxu0 0.0
    %1337 = vmatpush1.msra.mxu0 %v1248
    %1338 = vmatprep.subr.mxu0 0.0
    %1339 = vmatpush1.msra.mxu0 %v1247
    %1340 = vmatprep.subr.mxu0 0.0
    %1341 = vmatpush1.msra.mxu0 %v1246
    %1342 = vmatprep.subr.mxu0 0.0
    %1343 = vmatpush1.msra.mxu0 %v1245
    %1344 = vmatprep.subr.mxu0 0.0
    %1345 = vmatpush1.msra.mxu0 %v1244
    %1346 = vmatprep.subr.mxu0 0.0
    %1347 = vmatpush1.msra.mxu0 %v1243
    %1348 = vmatprep.subr.mxu0 0.0
    %1349 = vmatpush1.msra.mxu0 %v1242
    %1350 = vmatprep.subr.mxu0 0.0
    %1351 = vmatpush1.msra.mxu0 %v1241
    %1352 = vmatprep.subr.mxu0 0.0
    %1353 = vmatpush1.msra.mxu0 %v1240
    %1354 = vmatprep.subr.mxu0 0.0
    %1355 = vmatpush1.msra.mxu0 %v1239
    %1356 = vmatprep.subr.mxu0 0.0
    %1357 = vmatpush1.msra.mxu0 %v1238
    %1358 = vmatprep.subr.mxu0 0.0
    %1359 = vmatpush1.msra.mxu0 %v1237
    %1360 = vmatprep.subr.mxu0 0.0
    %1361 = vmatpush1.msra.mxu0 %v1236
    %1362 = vmatprep.subr.mxu0 0.0
    %1363 = vmatpush1.msra.mxu0 %v1235
    %1364 = vmatprep.subr.mxu0 0.0
    %1365 = vmatpush2.msra.mxu0 0.0
    %1366 = vmatprep.subr.mxu0 0.0
    %1367 = vmatpush2.msra.mxu0 0.0
    %1368 = vmatprep.subr.mxu0 0.0
    %1369 = vmatpush2.msra.mxu0 0.0
    %1370 = vmatprep.subr.mxu0 0.0
    %1371 = vmatpush2.msra.mxu0 0.0
    %1372 = vmatprep.subr.mxu0 0.0
    %1373 = vmatpush2.msra.mxu0 0.0
    %1374 = vmatprep.subr.mxu0 0.0
    %1375 = vmatpush2.msra.mxu0 0.0
    %1376 = vmatprep.subr.mxu0 0.0
    %1377 = vmatpush2.msra.mxu0 0.0
    %1378 = vmatprep.subr.mxu0 0.0
    %1379 = vmatpush2.msra.mxu0 0.0
    %1380 = vmatprep.subr.mxu0 0.0
    %1381 = vmatpush2.msra.mxu0 0.0
    %1382 = vmatprep.subr.mxu0 0.0
    %1383 = vmatpush2.msra.mxu0 0.0
    %1384 = vmatprep.subr.mxu0 0.0
    %1385 = vmatpush2.msra.mxu0 0.0
    %1386 = vmatprep.subr.mxu0 0.0
    %1387 = vmatpush2.msra.mxu0 0.0
    %1388 = vmatprep.subr.mxu0 0.0
    %1389 = vmatpush2.msra.mxu0 0.0
    %1390 = vmatprep.subr.mxu0 0.0
    %1391 = vmatpush2.msra.mxu0 0.0
    %1392 = vmatprep.subr.mxu0 0.0
    %1393 = vmatpush2.msra.mxu0 0.0
    %1394 = vmatprep.subr.mxu0 0.0
    %1395 = vmatpush2.msra.mxu0 0.0
    %1396 = vmatprep.mubr.f32.mxu0 0.0
    %1397 = vmatmul.mubr.f32.gmra.mxu0 %v1330
    %v1398 = vpop.f32.mrf.mxu0
    %v1399 = vadd.f32 0.0, %v1398
    %v1400 = vpop.f32.mrf.mxu0
    %1401 = vdwg.mxu0
    %v1403 = vrot.slane %v1399, 4
    %v1405 = vadd.f32 %v1227, %v1403
    %v1406 = vtanh.pop %v1405
    %1407 = vst [vmem:[#allocation2] sm:$0x30] %v1406
    %v1409 = vrot.slane %v1406, 4
    %1411 = vmatprep.subr.mxu0 0.0
    %1412 = vmatpush1.msra.mxu0 %v1250
    %1413 = vmatprep.subr.mxu0 0.0
    %1414 = vmatpush1.msra.mxu0 %v1249
    %1415 = vmatprep.subr.mxu0 0.0
    %1416 = vmatpush1.msra.mxu0 %v1248
    %1417 = vmatprep.subr.mxu0 0.0
    %1418 = vmatpush1.msra.mxu0 %v1247
    %1419 = vmatprep.subr.mxu0 0.0
    %1420 = vmatpush1.msra.mxu0 %v1246
    %1421 = vmatprep.subr.mxu0 0.0
    %1422 = vmatpush1.msra.mxu0 %v1245
    %1423 = vmatprep.subr.mxu0 0.0
    %1424 = vmatpush1.msra.mxu0 %v1244
    %1425 = vmatprep.subr.mxu0 0.0
    %1426 = vmatpush1.msra.mxu0 %v1243
    %1427 = vmatprep.subr.mxu0 0.0
    %1428 = vmatpush1.msra.mxu0 %v1242
    %1429 = vmatprep.subr.mxu0 0.0
    %1430 = vmatpush1.msra.mxu0 %v1241
    %1431 = vmatprep.subr.mxu0 0.0
    %1432 = vmatpush1.msra.mxu0 %v1240
    %1433 = vmatprep.subr.mxu0 0.0
    %1434 = vmatpush1.msra.mxu0 %v1239
    %1435 = vmatprep.subr.mxu0 0.0
    %1436 = vmatpush1.msra.mxu0 %v1238
    %1437 = vmatprep.subr.mxu0 0.0
    %1438 = vmatpush1.msra.mxu0 %v1237
    %1439 = vmatprep.subr.mxu0 0.0
    %1440 = vmatpush1.msra.mxu0 %v1236
    %1441 = vmatprep.subr.mxu0 0.0
    %1442 = vmatpush1.msra.mxu0 %v1235
    %1443 = vmatprep.subr.mxu0 0.0
    %1444 = vmatpush2.msra.mxu0 0.0
    %1445 = vmatprep.subr.mxu0 0.0
    %1446 = vmatpush2.msra.mxu0 0.0
    %1447 = vmatprep.subr.mxu0 0.0
    %1448 = vmatpush2.msra.mxu0 0.0
    %1449 = vmatprep.subr.mxu0 0.0
    %1450 = vmatpush2.msra.mxu0 0.0
    %1451 = vmatprep.subr.mxu0 0.0
    %1452 = vmatpush2.msra.mxu0 0.0
    %1453 = vmatprep.subr.mxu0 0.0
    %1454 = vmatpush2.msra.mxu0 0.0
    %1455 = vmatprep.subr.mxu0 0.0
    %1456 = vmatpush2.msra.mxu0 0.0
    %1457 = vmatprep.subr.mxu0 0.0
    %1458 = vmatpush2.msra.mxu0 0.0
    %1459 = vmatprep.subr.mxu0 0.0
    %1460 = vmatpush2.msra.mxu0 0.0
    %1461 = vmatprep.subr.mxu0 0.0
    %1462 = vmatpush2.msra.mxu0 0.0
    %1463 = vmatprep.subr.mxu0 0.0
    %1464 = vmatpush2.msra.mxu0 0.0
    %1465 = vmatprep.subr.mxu0 0.0
    %1466 = vmatpush2.msra.mxu0 0.0
    %1467 = vmatprep.subr.mxu0 0.0
    %1468 = vmatpush2.msra.mxu0 0.0
    %1469 = vmatprep.subr.mxu0 0.0
    %1470 = vmatpush2.msra.mxu0 0.0
    %1471 = vmatprep.subr.mxu0 0.0
    %1472 = vmatpush2.msra.mxu0 0.0
    %1473 = vmatprep.subr.mxu0 0.0
    %1474 = vmatpush2.msra.mxu0 0.0
    %1475 = vmatprep.mubr.f32.mxu0 0.0
    %1476 = vmatmul.mubr.f32.gmra.mxu0 %v1409
    %v1477 = vpop.f32.mrf.mxu0
    %v1478 = vadd.f32 0.0, %v1477
    %v1479 = vpop.f32.mrf.mxu0
    %1480 = vdwg.mxu0
    %v1482 = vrot.slane %v1478, 2
    %v1484 = vadd.f32 %v1227, %v1482
    %v1485 = vtanh.pop %v1484
    %1486 = vst [vmem:[#allocation2] sm:$0xc0] %v1485
    %v1488 = vrot.slane %v1485, 6
    %1490 = vmatprep.subr.mxu0 0.0
    %1491 = vmatpush1.msra.mxu0 %v1250
    %1492 = vmatprep.subr.mxu0 0.0
    %1493 = vmatpush1.msra.mxu0 %v1249
    %1494 = vmatprep.subr.mxu0 0.0
    %1495 = vmatpush1.msra.mxu0 %v1248
    %1496 = vmatprep.subr.mxu0 0.0
    %1497 = vmatpush1.msra.mxu0 %v1247
    %1498 = vmatprep.subr.mxu0 0.0
    %1499 = vmatpush1.msra.mxu0 %v1246
    %1500 = vmatprep.subr.mxu0 0.0
    %1501 = vmatpush1.msra.mxu0 %v1245
    %1502 = vmatprep.subr.mxu0 0.0
    %1503 = vmatpush1.msra.mxu0 %v1244
    %1504 = vmatprep.subr.mxu0 0.0
    %1505 = vmatpush1.msra.mxu0 %v1243
    %1506 = vmatprep.subr.mxu0 0.0
    %1507 = vmatpush1.msra.mxu0 %v1242
    %1508 = vmatprep.subr.mxu0 0.0
    %1509 = vmatpush1.msra.mxu0 %v1241
    %1510 = vmatprep.subr.mxu0 0.0
    %1511 = vmatpush1.msra.mxu0 %v1240
    %1512 = vmatprep.subr.mxu0 0.0
    %1513 = vmatpush1.msra.mxu0 %v1239
    %1514 = vmatprep.subr.mxu0 0.0
    %1515 = vmatpush1.msra.mxu0 %v1238
    %1516 = vmatprep.subr.mxu0 0.0
    %1517 = vmatpush1.msra.mxu0 %v1237
    %1518 = vmatprep.subr.mxu0 0.0
    %1519 = vmatpush1.msra.mxu0 %v1236
    %1520 = vmatprep.subr.mxu0 0.0
    %1521 = vmatpush1.msra.mxu0 %v1235
    %1522 = vmatprep.subr.mxu0 0.0
    %1523 = vmatpush2.msra.mxu0 0.0
    %1524 = vmatprep.subr.mxu0 0.0
    %1525 = vmatpush2.msra.mxu0 0.0
    %1526 = vmatprep.subr.mxu0 0.0
    %1527 = vmatpush2.msra.mxu0 0.0
    %1528 = vmatprep.subr.mxu0 0.0
    %1529 = vmatpush2.msra.mxu0 0.0
    %1530 = vmatprep.subr.mxu0 0.0
    %1531 = vmatpush2.msra.mxu0 0.0
    %1532 = vmatprep.subr.mxu0 0.0
    %1533 = vmatpush2.msra.mxu0 0.0
    %1534 = vmatprep.subr.mxu0 0.0
    %1535 = vmatpush2.msra.mxu0 0.0
    %1536 = vmatprep.subr.mxu0 0.0
    %1537 = vmatpush2.msra.mxu0 0.0
    %1538 = vmatprep.subr.mxu0 0.0
    %1539 = vmatpush2.msra.mxu0 0.0
    %1540 = vmatprep.subr.mxu0 0.0
    %1541 = vmatpush2.msra.mxu0 0.0
    %1542 = vmatprep.subr.mxu0 0.0
    %1543 = vmatpush2.msra.mxu0 0.0
    %1544 = vmatprep.subr.mxu0 0.0
    %1545 = vmatpush2.msra.mxu0 0.0
    %1546 = vmatprep.subr.mxu0 0.0
    %1547 = vmatpush2.msra.mxu0 0.0
    %1548 = vmatprep.subr.mxu0 0.0
    %1549 = vmatpush2.msra.mxu0 0.0
    %1550 = vmatprep.subr.mxu0 0.0
    %1551 = vmatpush2.msra.mxu0 0.0
    %1552 = vmatprep.subr.mxu0 0.0
    %1553 = vmatpush2.msra.mxu0 0.0
    %1554 = vmatprep.mubr.f32.mxu0 0.0
    %1555 = vmatmul.mubr.f32.gmra.mxu0 %v1488
    %v1556 = vpop.f32.mrf.mxu0
    %v1557 = vadd.f32 0.0, %v1556
    %v1558 = vpop.f32.mrf.mxu0
    %1559 = vdwg.mxu0
    %v1560 = vadd.f32 %v1232, %v1557
    %v1561 = vtanh.pop %v1560
    %1562 = vst [vmem:[#allocation2 + $0x8] sm:$0x3] %v1561
    %1563 = vmatprep.subr.mxu0 0.0
    %1564 = vmatpush1.msra.mxu0 %v1250
    %1565 = vmatprep.subr.mxu0 0.0
    %1566 = vmatpush1.msra.mxu0 %v1249
    %1567 = vmatprep.subr.mxu0 0.0
    %1568 = vmatpush1.msra.mxu0 %v1248
    %1569 = vmatprep.subr.mxu0 0.0
    %1570 = vmatpush1.msra.mxu0 %v1247
    %1571 = vmatprep.subr.mxu0 0.0
    %1572 = vmatpush1.msra.mxu0 %v1246
    %1573 = vmatprep.subr.mxu0 0.0
    %1574 = vmatpush1.msra.mxu0 %v1245
    %1575 = vmatprep.subr.mxu0 0.0
    %1576 = vmatpush1.msra.mxu0 %v1244
    %1577 = vmatprep.subr.mxu0 0.0
    %1578 = vmatpush1.msra.mxu0 %v1243
    %1579 = vmatprep.subr.mxu0 0.0
    %1580 = vmatpush1.msra.mxu0 %v1242
    %1581 = vmatprep.subr.mxu0 0.0
    %1582 = vmatpush1.msra.mxu0 %v1241
    %1583 = vmatprep.subr.mxu0 0.0
    %1584 = vmatpush1.msra.mxu0 %v1240
    %1585 = vmatprep.subr.mxu0 0.0
    %1586 = vmatpush1.msra.mxu0 %v1239
    %1587 = vmatprep.subr.mxu0 0.0
    %1588 = vmatpush1.msra.mxu0 %v1238
    %1589 = vmatprep.subr.mxu0 0.0
    %1590 = vmatpush1.msra.mxu0 %v1237
    %1591 = vmatprep.subr.mxu0 0.0
    %1592 = vmatpush1.msra.mxu0 %v1236
    %1593 = vmatprep.subr.mxu0 0.0
    %1594 = vmatpush1.msra.mxu0 %v1235
    %1595 = vmatprep.subr.mxu0 0.0
    %1596 = vmatpush2.msra.mxu0 0.0
    %1597 = vmatprep.subr.mxu0 0.0
    %1598 = vmatpush2.msra.mxu0 0.0
    %1599 = vmatprep.subr.mxu0 0.0
    %1600 = vmatpush2.msra.mxu0 0.0
    %1601 = vmatprep.subr.mxu0 0.0
    %1602 = vmatpush2.msra.mxu0 0.0
    %1603 = vmatprep.subr.mxu0 0.0
    %1604 = vmatpush2.msra.mxu0 0.0
    %1605 = vmatprep.subr.mxu0 0.0
    %1606 = vmatpush2.msra.mxu0 0.0
    %1607 = vmatprep.subr.mxu0 0.0
    %1608 = vmatpush2.msra.mxu0 0.0
    %1609 = vmatprep.subr.mxu0 0.0
    %1610 = vmatpush2.msra.mxu0 0.0
    %1611 = vmatprep.subr.mxu0 0.0
    %1612 = vmatpush2.msra.mxu0 0.0
    %1613 = vmatprep.subr.mxu0 0.0
    %1614 = vmatpush2.msra.mxu0 0.0
    %1615 = vmatprep.subr.mxu0 0.0
    %1616 = vmatpush2.msra.mxu0 0.0
    %1617 = vmatprep.subr.mxu0 0.0
    %1618 = vmatpush2.msra.mxu0 0.0
    %1619 = vmatprep.subr.mxu0 0.0
    %1620 = vmatpush2.msra.mxu0 0.0
    %1621 = vmatprep.subr.mxu0 0.0
    %1622 = vmatpush2.msra.mxu0 0.0
    %1623 = vmatprep.subr.mxu0 0.0
    %1624 = vmatpush2.msra.mxu0 0.0
    %1625 = vmatprep.subr.mxu0 0.0
    %1626 = vmatpush2.msra.mxu0 0.0
    %1627 = vmatprep.mubr.f32.mxu0 0.0
    %1628 = vmatmul.mubr.f32.gmra.mxu0 %v1561
    %v1629 = vpop.f32.mrf.mxu0
    %v1630 = vadd.f32 0.0, %v1629
    %v1631 = vpop.f32.mrf.mxu0
    %1632 = vdwg.mxu0
    %v1634 = vrot.slane %v1630, 6
    %v1636 = vadd.f32 %v1232, %v1634
    %v1637 = vtanh.pop %v1636
    %1638 = vst [vmem:[#allocation2 + $0x8] sm:$0xc] %v1637
    %v1640 = vrot.slane %v1637, 2
    %1642 = vmatprep.subr.mxu0 0.0
    %1643 = vmatpush1.msra.mxu0 %v1250
    %1644 = vmatprep.subr.mxu0 0.0
    %1645 = vmatpush1.msra.mxu0 %v1249
    %1646 = vmatprep.subr.mxu0 0.0
    %1647 = vmatpush1.msra.mxu0 %v1248
    %1648 = vmatprep.subr.mxu0 0.0
    %1649 = vmatpush1.msra.mxu0 %v1247
    %1650 = vmatprep.subr.mxu0 0.0
    %1651 = vmatpush1.msra.mxu0 %v1246
    %1652 = vmatprep.subr.mxu0 0.0
    %1653 = vmatpush1.msra.mxu0 %v1245
    %1654 = vmatprep.subr.mxu0 0.0
    %1655 = vmatpush1.msra.mxu0 %v1244
    %1656 = vmatprep.subr.mxu0 0.0
    %1657 = vmatpush1.msra.mxu0 %v1243
    %1658 = vmatprep.subr.mxu0 0.0
    %1659 = vmatpush1.msra.mxu0 %v1242
    %1660 = vmatprep.subr.mxu0 0.0
    %1661 = vmatpush1.msra.mxu0 %v1241
    %1662 = vmatprep.subr.mxu0 0.0
    %1663 = vmatpush1.msra.mxu0 %v1240
    %1664 = vmatprep.subr.mxu0 0.0
    %1665 = vmatpush1.msra.mxu0 %v1239
    %1666 = vmatprep.subr.mxu0 0.0
    %1667 = vmatpush1.msra.mxu0 %v1238
    %1668 = vmatprep.subr.mxu0 0.0
    %1669 = vmatpush1.msra.mxu0 %v1237
    %1670 = vmatprep.subr.mxu0 0.0
    %1671 = vmatpush1.msra.mxu0 %v1236
    %1672 = vmatprep.subr.mxu0 0.0
    %1673 = vmatpush1.msra.mxu0 %v1235
    %1674 = vmatprep.subr.mxu0 0.0
    %1675 = vmatpush2.msra.mxu0 0.0
    %1676 = vmatprep.subr.mxu0 0.0
    %1677 = vmatpush2.msra.mxu0 0.0
    %1678 = vmatprep.subr.mxu0 0.0
    %1679 = vmatpush2.msra.mxu0 0.0
    %1680 = vmatprep.subr.mxu0 0.0
    %1681 = vmatpush2.msra.mxu0 0.0
    %1682 = vmatprep.subr.mxu0 0.0
    %1683 = vmatpush2.msra.mxu0 0.0
    %1684 = vmatprep.subr.mxu0 0.0
    %1685 = vmatpush2.msra.mxu0 0.0
    %1686 = vmatprep.subr.mxu0 0.0
    %1687 = vmatpush2.msra.mxu0 0.0
    %1688 = vmatprep.subr.mxu0 0.0
    %1689 = vmatpush2.msra.mxu0 0.0
    %1690 = vmatprep.subr.mxu0 0.0
    %1691 = vmatpush2.msra.mxu0 0.0
    %1692 = vmatprep.subr.mxu0 0.0
    %1693 = vmatpush2.msra.mxu0 0.0
    %1694 = vmatprep.subr.mxu0 0.0
    %1695 = vmatpush2.msra.mxu0 0.0
    %1696 = vmatprep.subr.mxu0 0.0
    %1697 = vmatpush2.msra.mxu0 0.0
    %1698 = vmatprep.subr.mxu0 0.0
    %1699 = vmatpush2.msra.mxu0 0.0
    %1700 = vmatprep.subr.mxu0 0.0
    %1701 = vmatpush2.msra.mxu0 0.0
    %1702 = vmatprep.subr.mxu0 0.0
    %1703 = vmatpush2.msra.mxu0 0.0
    %1704 = vmatprep.subr.mxu0 0.0
    %1705 = vmatpush2.msra.mxu0 0.0
    %1706 = vmatprep.mubr.f32.mxu0 0.0
    %1707 = vmatmul.mubr.f32.gmra.mxu0 %v1640
    %v1708 = vpop.f32.mrf.mxu0
    %v1709 = vadd.f32 0.0, %v1708
    %v1710 = vpop.f32.mrf.mxu0
    %1711 = vdwg.mxu0
    %v1713 = vrot.slane %v1709, 4
    %v1715 = vadd.f32 %v1232, %v1713
    %v1716 = vtanh.pop %v1715
    %1717 = vst [vmem:[#allocation2 + $0x8] sm:$0x30] %v1716
    %v1719 = vrot.slane %v1716, 4
    %1721 = vmatprep.subr.mxu0 0.0
    %1722 = vmatpush1.msra.mxu0 %v1250
    %1723 = vmatprep.subr.mxu0 0.0
    %1724 = vmatpush1.msra.mxu0 %v1249
    %1725 = vmatprep.subr.mxu0 0.0
    %1726 = vmatpush1.msra.mxu0 %v1248
    %1727 = vmatprep.subr.mxu0 0.0
    %1728 = vmatpush1.msra.mxu0 %v1247
    %1729 = vmatprep.subr.mxu0 0.0
    %1730 = vmatpush1.msra.mxu0 %v1246
    %1731 = vmatprep.subr.mxu0 0.0
    %1732 = vmatpush1.msra.mxu0 %v1245
    %1733 = vmatprep.subr.mxu0 0.0
    %1734 = vmatpush1.msra.mxu0 %v1244
    %1735 = vmatprep.subr.mxu0 0.0
    %1736 = vmatpush1.msra.mxu0 %v1243
    %1737 = vmatprep.subr.mxu0 0.0
    %1738 = vmatpush1.msra.mxu0 %v1242
    %1739 = vmatprep.subr.mxu0 0.0
    %1740 = vmatpush1.msra.mxu0 %v1241
    %1741 = vmatprep.subr.mxu0 0.0
    %1742 = vmatpush1.msra.mxu0 %v1240
    %1743 = vmatprep.subr.mxu0 0.0
    %1744 = vmatpush1.msra.mxu0 %v1239
    %1745 = vmatprep.subr.mxu0 0.0
    %1746 = vmatpush1.msra.mxu0 %v1238
    %1747 = vmatprep.subr.mxu0 0.0
    %1748 = vmatpush1.msra.mxu0 %v1237
    %1749 = vmatprep.subr.mxu0 0.0
    %1750 = vmatpush1.msra.mxu0 %v1236
    %1751 = vmatprep.subr.mxu0 0.0
    %1752 = vmatpush1.msra.mxu0 %v1235
    %1753 = vmatprep.subr.mxu0 0.0
    %1754 = vmatpush2.msra.mxu0 0.0
    %1755 = vmatprep.subr.mxu0 0.0
    %1756 = vmatpush2.msra.mxu0 0.0
    %1757 = vmatprep.subr.mxu0 0.0
    %1758 = vmatpush2.msra.mxu0 0.0
    %1759 = vmatprep.subr.mxu0 0.0
    %1760 = vmatpush2.msra.mxu0 0.0
    %1761 = vmatprep.subr.mxu0 0.0
    %1762 = vmatpush2.msra.mxu0 0.0
    %1763 = vmatprep.subr.mxu0 0.0
    %1764 = vmatpush2.msra.mxu0 0.0
    %1765 = vmatprep.subr.mxu0 0.0
    %1766 = vmatpush2.msra.mxu0 0.0
    %1767 = vmatprep.subr.mxu0 0.0
    %1768 = vmatpush2.msra.mxu0 0.0
    %1769 = vmatprep.subr.mxu0 0.0
    %1770 = vmatpush2.msra.mxu0 0.0
    %1771 = vmatprep.subr.mxu0 0.0
    %1772 = vmatpush2.msra.mxu0 0.0
    %1773 = vmatprep.subr.mxu0 0.0
    %1774 = vmatpush2.msra.mxu0 0.0
    %1775 = vmatprep.subr.mxu0 0.0
    %1776 = vmatpush2.msra.mxu0 0.0
    %1777 = vmatprep.subr.mxu0 0.0
    %1778 = vmatpush2.msra.mxu0 0.0
    %1779 = vmatprep.subr.mxu0 0.0
    %1780 = vmatpush2.msra.mxu0 0.0
    %1781 = vmatprep.subr.mxu0 0.0
    %1782 = vmatpush2.msra.mxu0 0.0
    %1783 = vmatprep.subr.mxu0 0.0
    %1784 = vmatpush2.msra.mxu0 0.0
    %1785 = vmatprep.mubr.f32.mxu0 0.0
    %1786 = vmatmul.mubr.f32.gmra.mxu0 %v1719
    %v1787 = vpop.f32.mrf.mxu0
    %v1788 = vadd.f32 0.0, %v1787
    %v1789 = vpop.f32.mrf.mxu0
    %1790 = vdwg.mxu0
    %v1792 = vrot.slane %v1788, 2
    %v1794 = vadd.f32 %v1232, %v1792
    %v1795 = vtanh.pop %v1794
    %1796 = vst [vmem:[#allocation2 + $0x8] sm:$0xc0] %v1795
    %v1797 = vld [vmem:[#allocation2] sm:$0xff]
    %v1798 = vld [vmem:[#allocation2 + $0x8] sm:$0xff]
    %v1799 = vld [vmem:[#allocation8] sm:$0xff]
    %v1800 = vld [vmem:[#allocation8 + $0x8] sm:$0xff]
    %v1801 = vld [vmem:[#allocation8 + $0x10] sm:$0xff]
    %v1802 = vld [vmem:[#allocation8 + $0x18] sm:$0xff]
    %v1803 = vld [vmem:[#allocation8 + $0x20] sm:$0xff]
    %v1804 = vld [vmem:[#allocation8 + $0x28] sm:$0xff]
    %v1805 = vld [vmem:[#allocation8 + $0x30] sm:$0xff]
    %v1806 = vld [vmem:[#allocation8 + $0x38] sm:$0xff]
    %v1807 = vld [vmem:[#allocation8 + $0x40] sm:$0xff]
    %v1808 = vld [vmem:[#allocation8 + $0x48] sm:$0xff]
    %v1809 = vld [vmem:[#allocation8 + $0x50] sm:$0xff]
    %v1810 = vld [vmem:[#allocation8 + $0x58] sm:$0xff]
    %v1811 = vld [vmem:[#allocation8 + $0x60] sm:$0xff]
    %v1812 = vld [vmem:[#allocation8 + $0x68] sm:$0xff]
    %v1813 = vld [vmem:[#allocation8 + $0x70] sm:$0xff]
    %v1814 = vld [vmem:[#allocation8 + $0x78] sm:$0xff]
    %v1815 = vld [vmem:[%s19] sm:$0x1]
    %v1817 = vlaneseq
    %v1818 = vshrl.u32 %v1817, 7
    %v1819 = vsub.s32 0, %v1818
    %v1820 = vrot.slane %v1815, %v1819
    %1822 = vmatprep.subr.mxu0 0.0
    %1823 = vmatpush1.msra.mxu0 %v1814
    %1824 = vmatprep.subr.mxu0 0.0
    %1825 = vmatpush1.msra.mxu0 %v1813
    %1826 = vmatprep.subr.mxu0 0.0
    %1827 = vmatpush1.msra.mxu0 %v1812
    %1828 = vmatprep.subr.mxu0 0.0
    %1829 = vmatpush1.msra.mxu0 %v1811
    %1830 = vmatprep.subr.mxu0 0.0
    %1831 = vmatpush1.msra.mxu0 %v1810
    %1832 = vmatprep.subr.mxu0 0.0
    %1833 = vmatpush1.msra.mxu0 %v1809
    %1834 = vmatprep.subr.mxu0 0.0
    %1835 = vmatpush1.msra.mxu0 %v1808
    %1836 = vmatprep.subr.mxu0 0.0
    %1837 = vmatpush1.msra.mxu0 %v1807
    %1838 = vmatprep.subr.mxu0 0.0
    %1839 = vmatpush1.msra.mxu0 %v1806
    %1840 = vmatprep.subr.mxu0 0.0
    %1841 = vmatpush1.msra.mxu0 %v1805
    %1842 = vmatprep.subr.mxu0 0.0
    %1843 = vmatpush1.msra.mxu0 %v1804
    %1844 = vmatprep.subr.mxu0 0.0
    %1845 = vmatpush1.msra.mxu0 %v1803
    %1846 = vmatprep.subr.mxu0 0.0
    %1847 = vmatpush1.msra.mxu0 %v1802
    %1848 = vmatprep.subr.mxu0 0.0
    %1849 = vmatpush1.msra.mxu0 %v1801
    %1850 = vmatprep.subr.mxu0 0.0
    %1851 = vmatpush1.msra.mxu0 %v1800
    %1852 = vmatprep.subr.mxu0 0.0
    %1853 = vmatpush1.msra.mxu0 %v1799
    %1854 = vmatprep.subr.mxu0 0.0
    %1855 = vmatpush2.msra.mxu0 0.0
    %1856 = vmatprep.subr.mxu0 0.0
    %1857 = vmatpush2.msra.mxu0 0.0
    %1858 = vmatprep.subr.mxu0 0.0
    %1859 = vmatpush2.msra.mxu0 0.0
    %1860 = vmatprep.subr.mxu0 0.0
    %1861 = vmatpush2.msra.mxu0 0.0
    %1862 = vmatprep.subr.mxu0 0.0
    %1863 = vmatpush2.msra.mxu0 0.0
    %1864 = vmatprep.subr.mxu0 0.0
    %1865 = vmatpush2.msra.mxu0 0.0
    %1866 = vmatprep.subr.mxu0 0.0
    %1867 = vmatpush2.msra.mxu0 0.0
    %1868 = vmatprep.subr.mxu0 0.0
    %1869 = vmatpush2.msra.mxu0 0.0
    %1870 = vmatprep.subr.mxu0 0.0
    %1871 = vmatpush2.msra.mxu0 0.0
    %1872 = vmatprep.subr.mxu0 0.0
    %1873 = vmatpush2.msra.mxu0 0.0
    %1874 = vmatprep.subr.mxu0 0.0
    %1875 = vmatpush2.msra.mxu0 0.0
    %1876 = vmatprep.subr.mxu0 0.0
    %1877 = vmatpush2.msra.mxu0 0.0
    %1878 = vmatprep.subr.mxu0 0.0
    %1879 = vmatpush2.msra.mxu0 0.0
    %1880 = vmatprep.subr.mxu0 0.0
    %1881 = vmatpush2.msra.mxu0 0.0
    %1882 = vmatprep.subr.mxu0 0.0
    %1883 = vmatpush2.msra.mxu0 0.0
    %1884 = vmatprep.subr.mxu0 0.0
    %1885 = vmatpush2.msra.mxu0 0.0
    %1886 = vmatprep.mubr.f32.mxu0 0.0
    %1887 = vmatmul.mubr.f32.gmra.mxu0 %v1797
    %v1888 = vpop.f32.mrf.mxu0
    %v1889 = vadd.f32 %v1820, %v1888
    %v1890 = vpop.f32.mrf.mxu0
    %1891 = vmatprep.mubr.f32.mxu0 0.0
    %1892 = vmatmul.mubr.f32.gmra.mxu0 %v1798
    %v1893 = vpop.f32.mrf.mxu0
    %v1894 = vadd.f32 %v1820, %v1893
    %v1895 = vpop.f32.mrf.mxu0
    %1896 = vdwg.mxu0
    %v1897 = vld [vmem:[#allocation10] sm:$0xff]
    %v1898 = vld [vmem:[#allocation10 + $0x8] sm:$0xff]
    %v1899 = vld [vmem:[#allocation10 + $0x10] sm:$0xff]
    %v1900 = vld [vmem:[#allocation10 + $0x18] sm:$0xff]
    %v1901 = vld [vmem:[#allocation10 + $0x20] sm:$0xff]
    %v1902 = vld [vmem:[#allocation10 + $0x28] sm:$0xff]
    %v1903 = vld [vmem:[#allocation10 + $0x30] sm:$0xff]
    %v1904 = vld [vmem:[#allocation10 + $0x38] sm:$0xff]
    %v1905 = vld [vmem:[#allocation10 + $0x40] sm:$0xff]
    %v1906 = vld [vmem:[#allocation10 + $0x48] sm:$0xff]
    %v1907 = vld [vmem:[#allocation10 + $0x50] sm:$0xff]
    %v1908 = vld [vmem:[#allocation10 + $0x58] sm:$0xff]
    %v1909 = vld [vmem:[#allocation10 + $0x60] sm:$0xff]
    %v1910 = vld [vmem:[#allocation10 + $0x68] sm:$0xff]
    %v1911 = vld [vmem:[#allocation10 + $0x70] sm:$0xff]
    %v1912 = vld [vmem:[#allocation10 + $0x78] sm:$0xff]
    %v1913 = vtanh.pop %v1889
    %1914 = vst [vmem:[#allocation2] sm:$0x3] %v1913
    %1915 = vmatprep.subr.mxu0 0.0
    %1916 = vmatpush1.msra.mxu0 %v1912
    %1917 = vmatprep.subr.mxu0 0.0
    %1918 = vmatpush1.msra.mxu0 %v1911
    %1919 = vmatprep.subr.mxu0 0.0
    %1920 = vmatpush1.msra.mxu0 %v1910
    %1921 = vmatprep.subr.mxu0 0.0
    %1922 = vmatpush1.msra.mxu0 %v1909
    %1923 = vmatprep.subr.mxu0 0.0
    %1924 = vmatpush1.msra.mxu0 %v1908
    %1925 = vmatprep.subr.mxu0 0.0
    %1926 = vmatpush1.msra.mxu0 %v1907
    %1927 = vmatprep.subr.mxu0 0.0
    %1928 = vmatpush1.msra.mxu0 %v1906
    %1929 = vmatprep.subr.mxu0 0.0
    %1930 = vmatpush1.msra.mxu0 %v1905
    %1931 = vmatprep.subr.mxu0 0.0
    %1932 = vmatpush1.msra.mxu0 %v1904
    %1933 = vmatprep.subr.mxu0 0.0
    %1934 = vmatpush1.msra.mxu0 %v1903
    %1935 = vmatprep.subr.mxu0 0.0
    %1936 = vmatpush1.msra.mxu0 %v1902
    %1937 = vmatprep.subr.mxu0 0.0
    %1938 = vmatpush1.msra.mxu0 %v1901
    %1939 = vmatprep.subr.mxu0 0.0
    %1940 = vmatpush1.msra.mxu0 %v1900
    %1941 = vmatprep.subr.mxu0 0.0
    %1942 = vmatpush1.msra.mxu0 %v1899
    %1943 = vmatprep.subr.mxu0 0.0
    %1944 = vmatpush1.msra.mxu0 %v1898
    %1945 = vmatprep.subr.mxu0 0.0
    %1946 = vmatpush1.msra.mxu0 %v1897
    %1947 = vmatprep.subr.mxu0 0.0
    %1948 = vmatpush2.msra.mxu0 0.0
    %1949 = vmatprep.subr.mxu0 0.0
    %1950 = vmatpush2.msra.mxu0 0.0
    %1951 = vmatprep.subr.mxu0 0.0
    %1952 = vmatpush2.msra.mxu0 0.0
    %1953 = vmatprep.subr.mxu0 0.0
    %1954 = vmatpush2.msra.mxu0 0.0
    %1955 = vmatprep.subr.mxu0 0.0
    %1956 = vmatpush2.msra.mxu0 0.0
    %1957 = vmatprep.subr.mxu0 0.0
    %1958 = vmatpush2.msra.mxu0 0.0
    %1959 = vmatprep.subr.mxu0 0.0
    %1960 = vmatpush2.msra.mxu0 0.0
    %1961 = vmatprep.subr.mxu0 0.0
    %1962 = vmatpush2.msra.mxu0 0.0
    %1963 = vmatprep.subr.mxu0 0.0
    %1964 = vmatpush2.msra.mxu0 0.0
    %1965 = vmatprep.subr.mxu0 0.0
    %1966 = vmatpush2.msra.mxu0 0.0
    %1967 = vmatprep.subr.mxu0 0.0
    %1968 = vmatpush2.msra.mxu0 0.0
    %1969 = vmatprep.subr.mxu0 0.0
    %1970 = vmatpush2.msra.mxu0 0.0
    %1971 = vmatprep.subr.mxu0 0.0
    %1972 = vmatpush2.msra.mxu0 0.0
    %1973 = vmatprep.subr.mxu0 0.0
    %1974 = vmatpush2.msra.mxu0 0.0
    %1975 = vmatprep.subr.mxu0 0.0
    %1976 = vmatpush2.msra.mxu0 0.0
    %1977 = vmatprep.subr.mxu0 0.0
    %1978 = vmatpush2.msra.mxu0 0.0
    %1979 = vmatprep.mubr.f32.mxu0 0.0
    %1980 = vmatmul.mubr.f32.gmra.mxu0 %v1913
    %v1981 = vpop.f32.mrf.mxu0
    %v1982 = vadd.f32 0.0, %v1981
    %v1983 = vpop.f32.mrf.mxu0
    %1984 = vdwg.mxu0
    %v1986 = vrot.slane %v1982, 6
    %v1988 = vadd.f32 %v1889, %v1986
    %v1989 = vtanh.pop %v1988
    %1990 = vst [vmem:[#allocation2] sm:$0xc] %v1989
    %v1992 = vrot.slane %v1989, 2
    %1994 = vmatprep.subr.mxu0 0.0
    %1995 = vmatpush1.msra.mxu0 %v1912
    %1996 = vmatprep.subr.mxu0 0.0
    %1997 = vmatpush1.msra.mxu0 %v1911
    %1998 = vmatprep.subr.mxu0 0.0
    %1999 = vmatpush1.msra.mxu0 %v1910
    %2000 = vmatprep.subr.mxu0 0.0
    %2001 = vmatpush1.msra.mxu0 %v1909
    %2002 = vmatprep.subr.mxu0 0.0
    %2003 = vmatpush1.msra.mxu0 %v1908
    %2004 = vmatprep.subr.mxu0 0.0
    %2005 = vmatpush1.msra.mxu0 %v1907
    %2006 = vmatprep.subr.mxu0 0.0
    %2007 = vmatpush1.msra.mxu0 %v1906
    %2008 = vmatprep.subr.mxu0 0.0
    %2009 = vmatpush1.msra.mxu0 %v1905
    %2010 = vmatprep.subr.mxu0 0.0
    %2011 = vmatpush1.msra.mxu0 %v1904
    %2012 = vmatprep.subr.mxu0 0.0
    %2013 = vmatpush1.msra.mxu0 %v1903
    %2014 = vmatprep.subr.mxu0 0.0
    %2015 = vmatpush1.msra.mxu0 %v1902
    %2016 = vmatprep.subr.mxu0 0.0
    %2017 = vmatpush1.msra.mxu0 %v1901
    %2018 = vmatprep.subr.mxu0 0.0
    %2019 = vmatpush1.msra.mxu0 %v1900
    %2020 = vmatprep.subr.mxu0 0.0
    %2021 = vmatpush1.msra.mxu0 %v1899
    %2022 = vmatprep.subr.mxu0 0.0
    %2023 = vmatpush1.msra.mxu0 %v1898
    %2024 = vmatprep.subr.mxu0 0.0
    %2025 = vmatpush1.msra.mxu0 %v1897
    %2026 = vmatprep.subr.mxu0 0.0
    %2027 = vmatpush2.msra.mxu0 0.0
    %2028 = vmatprep.subr.mxu0 0.0
    %2029 = vmatpush2.msra.mxu0 0.0
    %2030 = vmatprep.subr.mxu0 0.0
    %2031 = vmatpush2.msra.mxu0 0.0
    %2032 = vmatprep.subr.mxu0 0.0
    %2033 = vmatpush2.msra.mxu0 0.0
    %2034 = vmatprep.subr.mxu0 0.0
    %2035 = vmatpush2.msra.mxu0 0.0
    %2036 = vmatprep.subr.mxu0 0.0
    %2037 = vmatpush2.msra.mxu0 0.0
    %2038 = vmatprep.subr.mxu0 0.0
    %2039 = vmatpush2.msra.mxu0 0.0
    %2040 = vmatprep.subr.mxu0 0.0
    %2041 = vmatpush2.msra.mxu0 0.0
    %2042 = vmatprep.subr.mxu0 0.0
    %2043 = vmatpush2.msra.mxu0 0.0
    %2044 = vmatprep.subr.mxu0 0.0
    %2045 = vmatpush2.msra.mxu0 0.0
    %2046 = vmatprep.subr.mxu0 0.0
    %2047 = vmatpush2.msra.mxu0 0.0
    %2048 = vmatprep.subr.mxu0 0.0
    %2049 = vmatpush2.msra.mxu0 0.0
    %2050 = vmatprep.subr.mxu0 0.0
    %2051 = vmatpush2.msra.mxu0 0.0
    %2052 = vmatprep.subr.mxu0 0.0
    %2053 = vmatpush2.msra.mxu0 0.0
    %2054 = vmatprep.subr.mxu0 0.0
    %2055 = vmatpush2.msra.mxu0 0.0
    %2056 = vmatprep.subr.mxu0 0.0
    %2057 = vmatpush2.msra.mxu0 0.0
    %2058 = vmatprep.mubr.f32.mxu0 0.0
    %2059 = vmatmul.mubr.f32.gmra.mxu0 %v1992
    %v2060 = vpop.f32.mrf.mxu0
    %v2061 = vadd.f32 0.0, %v2060
    %v2062 = vpop.f32.mrf.mxu0
    %2063 = vdwg.mxu0
    %v2065 = vrot.slane %v2061, 4
    %v2067 = vadd.f32 %v1889, %v2065
    %v2068 = vtanh.pop %v2067
    %2069 = vst [vmem:[#allocation2] sm:$0x30] %v2068
    %v2071 = vrot.slane %v2068, 4
    %2073 = vmatprep.subr.mxu0 0.0
    %2074 = vmatpush1.msra.mxu0 %v1912
    %2075 = vmatprep.subr.mxu0 0.0
    %2076 = vmatpush1.msra.mxu0 %v1911
    %2077 = vmatprep.subr.mxu0 0.0
    %2078 = vmatpush1.msra.mxu0 %v1910
    %2079 = vmatprep.subr.mxu0 0.0
    %2080 = vmatpush1.msra.mxu0 %v1909
    %2081 = vmatprep.subr.mxu0 0.0
    %2082 = vmatpush1.msra.mxu0 %v1908
    %2083 = vmatprep.subr.mxu0 0.0
    %2084 = vmatpush1.msra.mxu0 %v1907
    %2085 = vmatprep.subr.mxu0 0.0
    %2086 = vmatpush1.msra.mxu0 %v1906
    %2087 = vmatprep.subr.mxu0 0.0
    %2088 = vmatpush1.msra.mxu0 %v1905
    %2089 = vmatprep.subr.mxu0 0.0
    %2090 = vmatpush1.msra.mxu0 %v1904
    %2091 = vmatprep.subr.mxu0 0.0
    %2092 = vmatpush1.msra.mxu0 %v1903
    %2093 = vmatprep.subr.mxu0 0.0
    %2094 = vmatpush1.msra.mxu0 %v1902
    %2095 = vmatprep.subr.mxu0 0.0
    %2096 = vmatpush1.msra.mxu0 %v1901
    %2097 = vmatprep.subr.mxu0 0.0
    %2098 = vmatpush1.msra.mxu0 %v1900
    %2099 = vmatprep.subr.mxu0 0.0
    %2100 = vmatpush1.msra.mxu0 %v1899
    %2101 = vmatprep.subr.mxu0 0.0
    %2102 = vmatpush1.msra.mxu0 %v1898
    %2103 = vmatprep.subr.mxu0 0.0
    %2104 = vmatpush1.msra.mxu0 %v1897
    %2105 = vmatprep.subr.mxu0 0.0
    %2106 = vmatpush2.msra.mxu0 0.0
    %2107 = vmatprep.subr.mxu0 0.0
    %2108 = vmatpush2.msra.mxu0 0.0
    %2109 = vmatprep.subr.mxu0 0.0
    %2110 = vmatpush2.msra.mxu0 0.0
    %2111 = vmatprep.subr.mxu0 0.0
    %2112 = vmatpush2.msra.mxu0 0.0
    %2113 = vmatprep.subr.mxu0 0.0
    %2114 = vmatpush2.msra.mxu0 0.0
    %2115 = vmatprep.subr.mxu0 0.0
    %2116 = vmatpush2.msra.mxu0 0.0
    %2117 = vmatprep.subr.mxu0 0.0
    %2118 = vmatpush2.msra.mxu0 0.0
    %2119 = vmatprep.subr.mxu0 0.0
    %2120 = vmatpush2.msra.mxu0 0.0
    %2121 = vmatprep.subr.mxu0 0.0
    %2122 = vmatpush2.msra.mxu0 0.0
    %2123 = vmatprep.subr.mxu0 0.0
    %2124 = vmatpush2.msra.mxu0 0.0
    %2125 = vmatprep.subr.mxu0 0.0
    %2126 = vmatpush2.msra.mxu0 0.0
    %2127 = vmatprep.subr.mxu0 0.0
    %2128 = vmatpush2.msra.mxu0 0.0
    %2129 = vmatprep.subr.mxu0 0.0
    %2130 = vmatpush2.msra.mxu0 0.0
    %2131 = vmatprep.subr.mxu0 0.0
    %2132 = vmatpush2.msra.mxu0 0.0
    %2133 = vmatprep.subr.mxu0 0.0
    %2134 = vmatpush2.msra.mxu0 0.0
    %2135 = vmatprep.subr.mxu0 0.0
    %2136 = vmatpush2.msra.mxu0 0.0
    %2137 = vmatprep.mubr.f32.mxu0 0.0
    %2138 = vmatmul.mubr.f32.gmra.mxu0 %v2071
    %v2139 = vpop.f32.mrf.mxu0
    %v2140 = vadd.f32 0.0, %v2139
    %v2141 = vpop.f32.mrf.mxu0
    %2142 = vdwg.mxu0
    %v2144 = vrot.slane %v2140, 2
    %v2146 = vadd.f32 %v1889, %v2144
    %v2147 = vtanh.pop %v2146
    %2148 = vst [vmem:[#allocation2] sm:$0xc0] %v2147
    %v2150 = vrot.slane %v2147, 6
    %2152 = vmatprep.subr.mxu0 0.0
    %2153 = vmatpush1.msra.mxu0 %v1912
    %2154 = vmatprep.subr.mxu0 0.0
    %2155 = vmatpush1.msra.mxu0 %v1911
    %2156 = vmatprep.subr.mxu0 0.0
    %2157 = vmatpush1.msra.mxu0 %v1910
    %2158 = vmatprep.subr.mxu0 0.0
    %2159 = vmatpush1.msra.mxu0 %v1909
    %2160 = vmatprep.subr.mxu0 0.0
    %2161 = vmatpush1.msra.mxu0 %v1908
    %2162 = vmatprep.subr.mxu0 0.0
    %2163 = vmatpush1.msra.mxu0 %v1907
    %2164 = vmatprep.subr.mxu0 0.0
    %2165 = vmatpush1.msra.mxu0 %v1906
    %2166 = vmatprep.subr.mxu0 0.0
    %2167 = vmatpush1.msra.mxu0 %v1905
    %2168 = vmatprep.subr.mxu0 0.0
    %2169 = vmatpush1.msra.mxu0 %v1904
    %2170 = vmatprep.subr.mxu0 0.0
    %2171 = vmatpush1.msra.mxu0 %v1903
    %2172 = vmatprep.subr.mxu0 0.0
    %2173 = vmatpush1.msra.mxu0 %v1902
    %2174 = vmatprep.subr.mxu0 0.0
    %2175 = vmatpush1.msra.mxu0 %v1901
    %2176 = vmatprep.subr.mxu0 0.0
    %2177 = vmatpush1.msra.mxu0 %v1900
    %2178 = vmatprep.subr.mxu0 0.0
    %2179 = vmatpush1.msra.mxu0 %v1899
    %2180 = vmatprep.subr.mxu0 0.0
    %2181 = vmatpush1.msra.mxu0 %v1898
    %2182 = vmatprep.subr.mxu0 0.0
    %2183 = vmatpush1.msra.mxu0 %v1897
    %2184 = vmatprep.subr.mxu0 0.0
    %2185 = vmatpush2.msra.mxu0 0.0
    %2186 = vmatprep.subr.mxu0 0.0
    %2187 = vmatpush2.msra.mxu0 0.0
    %2188 = vmatprep.subr.mxu0 0.0
    %2189 = vmatpush2.msra.mxu0 0.0
    %2190 = vmatprep.subr.mxu0 0.0
    %2191 = vmatpush2.msra.mxu0 0.0
    %2192 = vmatprep.subr.mxu0 0.0
    %2193 = vmatpush2.msra.mxu0 0.0
    %2194 = vmatprep.subr.mxu0 0.0
    %2195 = vmatpush2.msra.mxu0 0.0
    %2196 = vmatprep.subr.mxu0 0.0
    %2197 = vmatpush2.msra.mxu0 0.0
    %2198 = vmatprep.subr.mxu0 0.0
    %2199 = vmatpush2.msra.mxu0 0.0
    %2200 = vmatprep.subr.mxu0 0.0
    %2201 = vmatpush2.msra.mxu0 0.0
    %2202 = vmatprep.subr.mxu0 0.0
    %2203 = vmatpush2.msra.mxu0 0.0
    %2204 = vmatprep.subr.mxu0 0.0
    %2205 = vmatpush2.msra.mxu0 0.0
    %2206 = vmatprep.subr.mxu0 0.0
    %2207 = vmatpush2.msra.mxu0 0.0
    %2208 = vmatprep.subr.mxu0 0.0
    %2209 = vmatpush2.msra.mxu0 0.0
    %2210 = vmatprep.subr.mxu0 0.0
    %2211 = vmatpush2.msra.mxu0 0.0
    %2212 = vmatprep.subr.mxu0 0.0
    %2213 = vmatpush2.msra.mxu0 0.0
    %2214 = vmatprep.subr.mxu0 0.0
    %2215 = vmatpush2.msra.mxu0 0.0
    %2216 = vmatprep.mubr.f32.mxu0 0.0
    %2217 = vmatmul.mubr.f32.gmra.mxu0 %v2150
    %v2218 = vpop.f32.mrf.mxu0
    %v2219 = vadd.f32 0.0, %v2218
    %v2220 = vpop.f32.mrf.mxu0
    %2221 = vdwg.mxu0
    %v2222 = vadd.f32 %v1894, %v2219
    %v2223 = vtanh.pop %v2222
    %2224 = vst [vmem:[#allocation2 + $0x8] sm:$0x3] %v2223
    %2225 = vmatprep.subr.mxu0 0.0
    %2226 = vmatpush1.msra.mxu0 %v1912
    %2227 = vmatprep.subr.mxu0 0.0
    %2228 = vmatpush1.msra.mxu0 %v1911
    %2229 = vmatprep.subr.mxu0 0.0
    %2230 = vmatpush1.msra.mxu0 %v1910
    %2231 = vmatprep.subr.mxu0 0.0
    %2232 = vmatpush1.msra.mxu0 %v1909
    %2233 = vmatprep.subr.mxu0 0.0
    %2234 = vmatpush1.msra.mxu0 %v1908
    %2235 = vmatprep.subr.mxu0 0.0
    %2236 = vmatpush1.msra.mxu0 %v1907
    %2237 = vmatprep.subr.mxu0 0.0
    %2238 = vmatpush1.msra.mxu0 %v1906
    %2239 = vmatprep.subr.mxu0 0.0
    %2240 = vmatpush1.msra.mxu0 %v1905
    %2241 = vmatprep.subr.mxu0 0.0
    %2242 = vmatpush1.msra.mxu0 %v1904
    %2243 = vmatprep.subr.mxu0 0.0
    %2244 = vmatpush1.msra.mxu0 %v1903
    %2245 = vmatprep.subr.mxu0 0.0
    %2246 = vmatpush1.msra.mxu0 %v1902
    %2247 = vmatprep.subr.mxu0 0.0
    %2248 = vmatpush1.msra.mxu0 %v1901
    %2249 = vmatprep.subr.mxu0 0.0
    %2250 = vmatpush1.msra.mxu0 %v1900
    %2251 = vmatprep.subr.mxu0 0.0
    %2252 = vmatpush1.msra.mxu0 %v1899
    %2253 = vmatprep.subr.mxu0 0.0
    %2254 = vmatpush1.msra.mxu0 %v1898
    %2255 = vmatprep.subr.mxu0 0.0
    %2256 = vmatpush1.msra.mxu0 %v1897
    %2257 = vmatprep.subr.mxu0 0.0
    %2258 = vmatpush2.msra.mxu0 0.0
    %2259 = vmatprep.subr.mxu0 0.0
    %2260 = vmatpush2.msra.mxu0 0.0
    %2261 = vmatprep.subr.mxu0 0.0
    %2262 = vmatpush2.msra.mxu0 0.0
    %2263 = vmatprep.subr.mxu0 0.0
    %2264 = vmatpush2.msra.mxu0 0.0
    %2265 = vmatprep.subr.mxu0 0.0
    %2266 = vmatpush2.msra.mxu0 0.0
    %2267 = vmatprep.subr.mxu0 0.0
    %2268 = vmatpush2.msra.mxu0 0.0
    %2269 = vmatprep.subr.mxu0 0.0
    %2270 = vmatpush2.msra.mxu0 0.0
    %2271 = vmatprep.subr.mxu0 0.0
    %2272 = vmatpush2.msra.mxu0 0.0
    %2273 = vmatprep.subr.mxu0 0.0
    %2274 = vmatpush2.msra.mxu0 0.0
    %2275 = vmatprep.subr.mxu0 0.0
    %2276 = vmatpush2.msra.mxu0 0.0
    %2277 = vmatprep.subr.mxu0 0.0
    %2278 = vmatpush2.msra.mxu0 0.0
    %2279 = vmatprep.subr.mxu0 0.0
    %2280 = vmatpush2.msra.mxu0 0.0
    %2281 = vmatprep.subr.mxu0 0.0
    %2282 = vmatpush2.msra.mxu0 0.0
    %2283 = vmatprep.subr.mxu0 0.0
    %2284 = vmatpush2.msra.mxu0 0.0
    %2285 = vmatprep.subr.mxu0 0.0
    %2286 = vmatpush2.msra.mxu0 0.0
    %2287 = vmatprep.subr.mxu0 0.0
    %2288 = vmatpush2.msra.mxu0 0.0
    %2289 = vmatprep.mubr.f32.mxu0 0.0
    %2290 = vmatmul.mubr.f32.gmra.mxu0 %v2223
    %v2291 = vpop.f32.mrf.mxu0
    %v2292 = vadd.f32 0.0, %v2291
    %v2293 = vpop.f32.mrf.mxu0
    %2294 = vdwg.mxu0
    %v2296 = vrot.slane %v2292, 6
    %v2298 = vadd.f32 %v1894, %v2296
    %v2299 = vtanh.pop %v2298
    %2300 = vst [vmem:[#allocation2 + $0x8] sm:$0xc] %v2299
    %v2302 = vrot.slane %v2299, 2
    %2304 = vmatprep.subr.mxu0 0.0
    %2305 = vmatpush1.msra.mxu0 %v1912
    %2306 = vmatprep.subr.mxu0 0.0
    %2307 = vmatpush1.msra.mxu0 %v1911
    %2308 = vmatprep.subr.mxu0 0.0
    %2309 = vmatpush1.msra.mxu0 %v1910
    %2310 = vmatprep.subr.mxu0 0.0
    %2311 = vmatpush1.msra.mxu0 %v1909
    %2312 = vmatprep.subr.mxu0 0.0
    %2313 = vmatpush1.msra.mxu0 %v1908
    %2314 = vmatprep.subr.mxu0 0.0
    %2315 = vmatpush1.msra.mxu0 %v1907
    %2316 = vmatprep.subr.mxu0 0.0
    %2317 = vmatpush1.msra.mxu0 %v1906
    %2318 = vmatprep.subr.mxu0 0.0
    %2319 = vmatpush1.msra.mxu0 %v1905
    %2320 = vmatprep.subr.mxu0 0.0
    %2321 = vmatpush1.msra.mxu0 %v1904
    %2322 = vmatprep.subr.mxu0 0.0
    %2323 = vmatpush1.msra.mxu0 %v1903
    %2324 = vmatprep.subr.mxu0 0.0
    %2325 = vmatpush1.msra.mxu0 %v1902
    %2326 = vmatprep.subr.mxu0 0.0
    %2327 = vmatpush1.msra.mxu0 %v1901
    %2328 = vmatprep.subr.mxu0 0.0
    %2329 = vmatpush1.msra.mxu0 %v1900
    %2330 = vmatprep.subr.mxu0 0.0
    %2331 = vmatpush1.msra.mxu0 %v1899
    %2332 = vmatprep.subr.mxu0 0.0
    %2333 = vmatpush1.msra.mxu0 %v1898
    %2334 = vmatprep.subr.mxu0 0.0
    %2335 = vmatpush1.msra.mxu0 %v1897
    %2336 = vmatprep.subr.mxu0 0.0
    %2337 = vmatpush2.msra.mxu0 0.0
    %2338 = vmatprep.subr.mxu0 0.0
    %2339 = vmatpush2.msra.mxu0 0.0
    %2340 = vmatprep.subr.mxu0 0.0
    %2341 = vmatpush2.msra.mxu0 0.0
    %2342 = vmatprep.subr.mxu0 0.0
    %2343 = vmatpush2.msra.mxu0 0.0
    %2344 = vmatprep.subr.mxu0 0.0
    %2345 = vmatpush2.msra.mxu0 0.0
    %2346 = vmatprep.subr.mxu0 0.0
    %2347 = vmatpush2.msra.mxu0 0.0
    %2348 = vmatprep.subr.mxu0 0.0
    %2349 = vmatpush2.msra.mxu0 0.0
    %2350 = vmatprep.subr.mxu0 0.0
    %2351 = vmatpush2.msra.mxu0 0.0
    %2352 = vmatprep.subr.mxu0 0.0
    %2353 = vmatpush2.msra.mxu0 0.0
    %2354 = vmatprep.subr.mxu0 0.0
    %2355 = vmatpush2.msra.mxu0 0.0
    %2356 = vmatprep.subr.mxu0 0.0
    %2357 = vmatpush2.msra.mxu0 0.0
    %2358 = vmatprep.subr.mxu0 0.0
    %2359 = vmatpush2.msra.mxu0 0.0
    %2360 = vmatprep.subr.mxu0 0.0
    %2361 = vmatpush2.msra.mxu0 0.0
    %2362 = vmatprep.subr.mxu0 0.0
    %2363 = vmatpush2.msra.mxu0 0.0
    %2364 = vmatprep.subr.mxu0 0.0
    %2365 = vmatpush2.msra.mxu0 0.0
    %2366 = vmatprep.subr.mxu0 0.0
    %2367 = vmatpush2.msra.mxu0 0.0
    %2368 = vmatprep.mubr.f32.mxu0 0.0
    %2369 = vmatmul.mubr.f32.gmra.mxu0 %v2302
    %v2370 = vpop.f32.mrf.mxu0
    %v2371 = vadd.f32 0.0, %v2370
    %v2372 = vpop.f32.mrf.mxu0
    %2373 = vdwg.mxu0
    %v2375 = vrot.slane %v2371, 4
    %v2377 = vadd.f32 %v1894, %v2375
    %v2378 = vtanh.pop %v2377
    %2379 = vst [vmem:[#allocation2 + $0x8] sm:$0x30] %v2378
    %v2381 = vrot.slane %v2378, 4
    %2383 = vmatprep.subr.mxu0 0.0
    %2384 = vmatpush1.msra.mxu0 %v1912
    %2385 = vmatprep.subr.mxu0 0.0
    %2386 = vmatpush1.msra.mxu0 %v1911
    %2387 = vmatprep.subr.mxu0 0.0
    %2388 = vmatpush1.msra.mxu0 %v1910
    %2389 = vmatprep.subr.mxu0 0.0
    %2390 = vmatpush1.msra.mxu0 %v1909
    %2391 = vmatprep.subr.mxu0 0.0
    %2392 = vmatpush1.msra.mxu0 %v1908
    %2393 = vmatprep.subr.mxu0 0.0
    %2394 = vmatpush1.msra.mxu0 %v1907
    %2395 = vmatprep.subr.mxu0 0.0
    %2396 = vmatpush1.msra.mxu0 %v1906
    %2397 = vmatprep.subr.mxu0 0.0
    %2398 = vmatpush1.msra.mxu0 %v1905
    %2399 = vmatprep.subr.mxu0 0.0
    %2400 = vmatpush1.msra.mxu0 %v1904
    %2401 = vmatprep.subr.mxu0 0.0
    %2402 = vmatpush1.msra.mxu0 %v1903
    %2403 = vmatprep.subr.mxu0 0.0
    %2404 = vmatpush1.msra.mxu0 %v1902
    %2405 = vmatprep.subr.mxu0 0.0
    %2406 = vmatpush1.msra.mxu0 %v1901
    %2407 = vmatprep.subr.mxu0 0.0
    %2408 = vmatpush1.msra.mxu0 %v1900
    %2409 = vmatprep.subr.mxu0 0.0
    %2410 = vmatpush1.msra.mxu0 %v1899
    %2411 = vmatprep.subr.mxu0 0.0
    %2412 = vmatpush1.msra.mxu0 %v1898
    %2413 = vmatprep.subr.mxu0 0.0
    %2414 = vmatpush1.msra.mxu0 %v1897
    %2415 = vmatprep.subr.mxu0 0.0
    %2416 = vmatpush2.msra.mxu0 0.0
    %2417 = vmatprep.subr.mxu0 0.0
    %2418 = vmatpush2.msra.mxu0 0.0
    %2419 = vmatprep.subr.mxu0 0.0
    %2420 = vmatpush2.msra.mxu0 0.0
    %2421 = vmatprep.subr.mxu0 0.0
    %2422 = vmatpush2.msra.mxu0 0.0
    %2423 = vmatprep.subr.mxu0 0.0
    %2424 = vmatpush2.msra.mxu0 0.0
    %2425 = vmatprep.subr.mxu0 0.0
    %2426 = vmatpush2.msra.mxu0 0.0
    %2427 = vmatprep.subr.mxu0 0.0
    %2428 = vmatpush2.msra.mxu0 0.0
    %2429 = vmatprep.subr.mxu0 0.0
    %2430 = vmatpush2.msra.mxu0 0.0
    %2431 = vmatprep.subr.mxu0 0.0
    %2432 = vmatpush2.msra.mxu0 0.0
    %2433 = vmatprep.subr.mxu0 0.0
    %2434 = vmatpush2.msra.mxu0 0.0
    %2435 = vmatprep.subr.mxu0 0.0
    %2436 = vmatpush2.msra.mxu0 0.0
    %2437 = vmatprep.subr.mxu0 0.0
    %2438 = vmatpush2.msra.mxu0 0.0
    %2439 = vmatprep.subr.mxu0 0.0
    %2440 = vmatpush2.msra.mxu0 0.0
    %2441 = vmatprep.subr.mxu0 0.0
    %2442 = vmatpush2.msra.mxu0 0.0
    %2443 = vmatprep.subr.mxu0 0.0
    %2444 = vmatpush2.msra.mxu0 0.0
    %2445 = vmatprep.subr.mxu0 0.0
    %2446 = vmatpush2.msra.mxu0 0.0
    %2447 = vmatprep.mubr.f32.mxu0 0.0
    %2448 = vmatmul.mubr.f32.gmra.mxu0 %v2381
    %v2449 = vpop.f32.mrf.mxu0
    %v2450 = vadd.f32 0.0, %v2449
    %v2451 = vpop.f32.mrf.mxu0
    %2452 = vdwg.mxu0
    %v2454 = vrot.slane %v2450, 2
    %v2456 = vadd.f32 %v1894, %v2454
    %v2457 = vtanh.pop %v2456
    %2458 = vst [vmem:[#allocation2 + $0x8] sm:$0xc0] %v2457
    %v2459 = vld [vmem:[#allocation2] sm:$0xff]
    %v2460 = vld [vmem:[#allocation2 + $0x8] sm:$0xff]
    %v2461 = vld [vmem:[#allocation11] sm:$0xff]
    %v2462 = vld [vmem:[#allocation11 + $0x8] sm:$0xff]
    %v2463 = vld [vmem:[#allocation11 + $0x10] sm:$0xff]
    %v2464 = vld [vmem:[#allocation11 + $0x18] sm:$0xff]
    %v2465 = vld [vmem:[#allocation11 + $0x20] sm:$0xff]
    %v2466 = vld [vmem:[#allocation11 + $0x28] sm:$0xff]
    %v2467 = vld [vmem:[#allocation11 + $0x30] sm:$0xff]
    %v2468 = vld [vmem:[#allocation11 + $0x38] sm:$0xff]
    %v2469 = vld [vmem:[#allocation11 + $0x40] sm:$0xff]
    %v2470 = vld [vmem:[#allocation11 + $0x48] sm:$0xff]
    %v2471 = vld [vmem:[#allocation11 + $0x50] sm:$0xff]
    %v2472 = vld [vmem:[#allocation11 + $0x58] sm:$0xff]
    %v2473 = vld [vmem:[#allocation11 + $0x60] sm:$0xff]
    %v2474 = vld [vmem:[#allocation11 + $0x68] sm:$0xff]
    %v2475 = vld [vmem:[#allocation11 + $0x70] sm:$0xff]
    %v2476 = vld [vmem:[#allocation11 + $0x78] sm:$0xff]
    %v2477 = vld [vmem:[%s25] sm:$0x1]
    %v2479 = vlaneseq
    %v2480 = vshrl.u32 %v2479, 7
    %v2481 = vsub.s32 0, %v2480
    %v2482 = vrot.slane %v2477, %v2481
    %2484 = vmatprep.subr.mxu0 0.0
    %2485 = vmatpush1.msra.mxu0 %v2476
    %2486 = vmatprep.subr.mxu0 0.0
    %2487 = vmatpush1.msra.mxu0 %v2475
    %2488 = vmatprep.subr.mxu0 0.0
    %2489 = vmatpush1.msra.mxu0 %v2474
    %2490 = vmatprep.subr.mxu0 0.0
    %2491 = vmatpush1.msra.mxu0 %v2473
    %2492 = vmatprep.subr.mxu0 0.0
    %2493 = vmatpush1.msra.mxu0 %v2472
    %2494 = vmatprep.subr.mxu0 0.0
    %2495 = vmatpush1.msra.mxu0 %v2471
    %2496 = vmatprep.subr.mxu0 0.0
    %2497 = vmatpush1.msra.mxu0 %v2470
    %2498 = vmatprep.subr.mxu0 0.0
    %2499 = vmatpush1.msra.mxu0 %v2469
    %2500 = vmatprep.subr.mxu0 0.0
    %2501 = vmatpush1.msra.mxu0 %v2468
    %2502 = vmatprep.subr.mxu0 0.0
    %2503 = vmatpush1.msra.mxu0 %v2467
    %2504 = vmatprep.subr.mxu0 0.0
    %2505 = vmatpush1.msra.mxu0 %v2466
    %2506 = vmatprep.subr.mxu0 0.0
    %2507 = vmatpush1.msra.mxu0 %v2465
    %2508 = vmatprep.subr.mxu0 0.0
    %2509 = vmatpush1.msra.mxu0 %v2464
    %2510 = vmatprep.subr.mxu0 0.0
    %2511 = vmatpush1.msra.mxu0 %v2463
    %2512 = vmatprep.subr.mxu0 0.0
    %2513 = vmatpush1.msra.mxu0 %v2462
    %2514 = vmatprep.subr.mxu0 0.0
    %2515 = vmatpush1.msra.mxu0 %v2461
    %2516 = vmatprep.subr.mxu0 0.0
    %2517 = vmatpush2.msra.mxu0 0.0
    %2518 = vmatprep.subr.mxu0 0.0
    %2519 = vmatpush2.msra.mxu0 0.0
    %2520 = vmatprep.subr.mxu0 0.0
    %2521 = vmatpush2.msra.mxu0 0.0
    %2522 = vmatprep.subr.mxu0 0.0
    %2523 = vmatpush2.msra.mxu0 0.0
    %2524 = vmatprep.subr.mxu0 0.0
    %2525 = vmatpush2.msra.mxu0 0.0
    %2526 = vmatprep.subr.mxu0 0.0
    %2527 = vmatpush2.msra.mxu0 0.0
    %2528 = vmatprep.subr.mxu0 0.0
    %2529 = vmatpush2.msra.mxu0 0.0
    %2530 = vmatprep.subr.mxu0 0.0
    %2531 = vmatpush2.msra.mxu0 0.0
    %2532 = vmatprep.subr.mxu0 0.0
    %2533 = vmatpush2.msra.mxu0 0.0
    %2534 = vmatprep.subr.mxu0 0.0
    %2535 = vmatpush2.msra.mxu0 0.0
    %2536 = vmatprep.subr.mxu0 0.0
    %2537 = vmatpush2.msra.mxu0 0.0
    %2538 = vmatprep.subr.mxu0 0.0
    %2539 = vmatpush2.msra.mxu0 0.0
    %2540 = vmatprep.subr.mxu0 0.0
    %2541 = vmatpush2.msra.mxu0 0.0
    %2542 = vmatprep.subr.mxu0 0.0
    %2543 = vmatpush2.msra.mxu0 0.0
    %2544 = vmatprep.subr.mxu0 0.0
    %2545 = vmatpush2.msra.mxu0 0.0
    %2546 = vmatprep.subr.mxu0 0.0
    %2547 = vmatpush2.msra.mxu0 0.0
    %2548 = vmatprep.mubr.f32.mxu0 0.0
    %2549 = vmatmul.mubr.f32.gmra.mxu0 %v2459
    %v2550 = vpop.f32.mrf.mxu0
    %v2551 = vadd.f32 %v2482, %v2550
    %v2552 = vpop.f32.mrf.mxu0
    %2553 = vmatprep.mubr.f32.mxu0 0.0
    %2554 = vmatmul.mubr.f32.gmra.mxu0 %v2460
    %v2555 = vpop.f32.mrf.mxu0
    %v2556 = vadd.f32 %v2482, %v2555
    %v2557 = vpop.f32.mrf.mxu0
    %2558 = vdwg.mxu0
    %v2559 = vld [vmem:[#allocation13] sm:$0xff]
    %v2560 = vld [vmem:[#allocation13 + $0x8] sm:$0xff]
    %v2561 = vld [vmem:[#allocation13 + $0x10] sm:$0xff]
    %v2562 = vld [vmem:[#allocation13 + $0x18] sm:$0xff]
    %v2563 = vld [vmem:[#allocation13 + $0x20] sm:$0xff]
    %v2564 = vld [vmem:[#allocation13 + $0x28] sm:$0xff]
    %v2565 = vld [vmem:[#allocation13 + $0x30] sm:$0xff]
    %v2566 = vld [vmem:[#allocation13 + $0x38] sm:$0xff]
    %v2567 = vld [vmem:[#allocation13 + $0x40] sm:$0xff]
    %v2568 = vld [vmem:[#allocation13 + $0x48] sm:$0xff]
    %v2569 = vld [vmem:[#allocation13 + $0x50] sm:$0xff]
    %v2570 = vld [vmem:[#allocation13 + $0x58] sm:$0xff]
    %v2571 = vld [vmem:[#allocation13 + $0x60] sm:$0xff]
    %v2572 = vld [vmem:[#allocation13 + $0x68] sm:$0xff]
    %v2573 = vld [vmem:[#allocation13 + $0x70] sm:$0xff]
    %v2574 = vld [vmem:[#allocation13 + $0x78] sm:$0xff]
    %v2575 = vtanh.pop %v2551
    %2576 = vst [vmem:[#allocation2] sm:$0x3] %v2575
    %2577 = vmatprep.subr.mxu0 0.0
    %2578 = vmatpush1.msra.mxu0 %v2574
    %2579 = vmatprep.subr.mxu0 0.0
    %2580 = vmatpush1.msra.mxu0 %v2573
    %2581 = vmatprep.subr.mxu0 0.0
    %2582 = vmatpush1.msra.mxu0 %v2572
    %2583 = vmatprep.subr.mxu0 0.0
    %2584 = vmatpush1.msra.mxu0 %v2571
    %2585 = vmatprep.subr.mxu0 0.0
    %2586 = vmatpush1.msra.mxu0 %v2570
    %2587 = vmatprep.subr.mxu0 0.0
    %2588 = vmatpush1.msra.mxu0 %v2569
    %2589 = vmatprep.subr.mxu0 0.0
    %2590 = vmatpush1.msra.mxu0 %v2568
    %2591 = vmatprep.subr.mxu0 0.0
    %2592 = vmatpush1.msra.mxu0 %v2567
    %2593 = vmatprep.subr.mxu0 0.0
    %2594 = vmatpush1.msra.mxu0 %v2566
    %2595 = vmatprep.subr.mxu0 0.0
    %2596 = vmatpush1.msra.mxu0 %v2565
    %2597 = vmatprep.subr.mxu0 0.0
    %2598 = vmatpush1.msra.mxu0 %v2564
    %2599 = vmatprep.subr.mxu0 0.0
    %2600 = vmatpush1.msra.mxu0 %v2563
    %2601 = vmatprep.subr.mxu0 0.0
    %2602 = vmatpush1.msra.mxu0 %v2562
    %2603 = vmatprep.subr.mxu0 0.0
    %2604 = vmatpush1.msra.mxu0 %v2561
    %2605 = vmatprep.subr.mxu0 0.0
    %2606 = vmatpush1.msra.mxu0 %v2560
    %2607 = vmatprep.subr.mxu0 0.0
    %2608 = vmatpush1.msra.mxu0 %v2559
    %2609 = vmatprep.subr.mxu0 0.0
    %2610 = vmatpush2.msra.mxu0 0.0
    %2611 = vmatprep.subr.mxu0 0.0
    %2612 = vmatpush2.msra.mxu0 0.0
    %2613 = vmatprep.subr.mxu0 0.0
    %2614 = vmatpush2.msra.mxu0 0.0
    %2615 = vmatprep.subr.mxu0 0.0
    %2616 = vmatpush2.msra.mxu0 0.0
    %2617 = vmatprep.subr.mxu0 0.0
    %2618 = vmatpush2.msra.mxu0 0.0
    %2619 = vmatprep.subr.mxu0 0.0
    %2620 = vmatpush2.msra.mxu0 0.0
    %2621 = vmatprep.subr.mxu0 0.0
    %2622 = vmatpush2.msra.mxu0 0.0
    %2623 = vmatprep.subr.mxu0 0.0
    %2624 = vmatpush2.msra.mxu0 0.0
    %2625 = vmatprep.subr.mxu0 0.0
    %2626 = vmatpush2.msra.mxu0 0.0
    %2627 = vmatprep.subr.mxu0 0.0
    %2628 = vmatpush2.msra.mxu0 0.0
    %2629 = vmatprep.subr.mxu0 0.0
    %2630 = vmatpush2.msra.mxu0 0.0
    %2631 = vmatprep.subr.mxu0 0.0
    %2632 = vmatpush2.msra.mxu0 0.0
    %2633 = vmatprep.subr.mxu0 0.0
    %2634 = vmatpush2.msra.mxu0 0.0
    %2635 = vmatprep.subr.mxu0 0.0
    %2636 = vmatpush2.msra.mxu0 0.0
    %2637 = vmatprep.subr.mxu0 0.0
    %2638 = vmatpush2.msra.mxu0 0.0
    %2639 = vmatprep.subr.mxu0 0.0
    %2640 = vmatpush2.msra.mxu0 0.0
    %2641 = vmatprep.mubr.f32.mxu0 0.0
    %2642 = vmatmul.mubr.f32.gmra.mxu0 %v2575
    %v2643 = vpop.f32.mrf.mxu0
    %v2644 = vadd.f32 0.0, %v2643
    %v2645 = vpop.f32.mrf.mxu0
    %2646 = vdwg.mxu0
    %v2648 = vrot.slane %v2644, 6
    %v2650 = vadd.f32 %v2551, %v2648
    %v2651 = vtanh.pop %v2650
    %2652 = vst [vmem:[#allocation2] sm:$0xc] %v2651
    %v2654 = vrot.slane %v2651, 2
    %2656 = vmatprep.subr.mxu0 0.0
    %2657 = vmatpush1.msra.mxu0 %v2574
    %2658 = vmatprep.subr.mxu0 0.0
    %2659 = vmatpush1.msra.mxu0 %v2573
    %2660 = vmatprep.subr.mxu0 0.0
    %2661 = vmatpush1.msra.mxu0 %v2572
    %2662 = vmatprep.subr.mxu0 0.0
    %2663 = vmatpush1.msra.mxu0 %v2571
    %2664 = vmatprep.subr.mxu0 0.0
    %2665 = vmatpush1.msra.mxu0 %v2570
    %2666 = vmatprep.subr.mxu0 0.0
    %2667 = vmatpush1.msra.mxu0 %v2569
    %2668 = vmatprep.subr.mxu0 0.0
    %2669 = vmatpush1.msra.mxu0 %v2568
    %2670 = vmatprep.subr.mxu0 0.0
    %2671 = vmatpush1.msra.mxu0 %v2567
    %2672 = vmatprep.subr.mxu0 0.0
    %2673 = vmatpush1.msra.mxu0 %v2566
    %2674 = vmatprep.subr.mxu0 0.0
    %2675 = vmatpush1.msra.mxu0 %v2565
    %2676 = vmatprep.subr.mxu0 0.0
    %2677 = vmatpush1.msra.mxu0 %v2564
    %2678 = vmatprep.subr.mxu0 0.0
    %2679 = vmatpush1.msra.mxu0 %v2563
    %2680 = vmatprep.subr.mxu0 0.0
    %2681 = vmatpush1.msra.mxu0 %v2562
    %2682 = vmatprep.subr.mxu0 0.0
    %2683 = vmatpush1.msra.mxu0 %v2561
    %2684 = vmatprep.subr.mxu0 0.0
    %2685 = vmatpush1.msra.mxu0 %v2560
    %2686 = vmatprep.subr.mxu0 0.0
    %2687 = vmatpush1.msra.mxu0 %v2559
    %2688 = vmatprep.subr.mxu0 0.0
    %2689 = vmatpush2.msra.mxu0 0.0
    %2690 = vmatprep.subr.mxu0 0.0
    %2691 = vmatpush2.msra.mxu0 0.0
    %2692 = vmatprep.subr.mxu0 0.0
    %2693 = vmatpush2.msra.mxu0 0.0
    %2694 = vmatprep.subr.mxu0 0.0
    %2695 = vmatpush2.msra.mxu0 0.0
    %2696 = vmatprep.subr.mxu0 0.0
    %2697 = vmatpush2.msra.mxu0 0.0
    %2698 = vmatprep.subr.mxu0 0.0
    %2699 = vmatpush2.msra.mxu0 0.0
    %2700 = vmatprep.subr.mxu0 0.0
    %2701 = vmatpush2.msra.mxu0 0.0
    %2702 = vmatprep.subr.mxu0 0.0
    %2703 = vmatpush2.msra.mxu0 0.0
    %2704 = vmatprep.subr.mxu0 0.0
    %2705 = vmatpush2.msra.mxu0 0.0
    %2706 = vmatprep.subr.mxu0 0.0
    %2707 = vmatpush2.msra.mxu0 0.0
    %2708 = vmatprep.subr.mxu0 0.0
    %2709 = vmatpush2.msra.mxu0 0.0
    %2710 = vmatprep.subr.mxu0 0.0
    %2711 = vmatpush2.msra.mxu0 0.0
    %2712 = vmatprep.subr.mxu0 0.0
    %2713 = vmatpush2.msra.mxu0 0.0
    %2714 = vmatprep.subr.mxu0 0.0
    %2715 = vmatpush2.msra.mxu0 0.0
    %2716 = vmatprep.subr.mxu0 0.0
    %2717 = vmatpush2.msra.mxu0 0.0
    %2718 = vmatprep.subr.mxu0 0.0
    %2719 = vmatpush2.msra.mxu0 0.0
    %2720 = vmatprep.mubr.f32.mxu0 0.0
    %2721 = vmatmul.mubr.f32.gmra.mxu0 %v2654
    %v2722 = vpop.f32.mrf.mxu0
    %v2723 = vadd.f32 0.0, %v2722
    %v2724 = vpop.f32.mrf.mxu0
    %2725 = vdwg.mxu0
    %v2727 = vrot.slane %v2723, 4
    %v2729 = vadd.f32 %v2551, %v2727
    %v2730 = vtanh.pop %v2729
    %2731 = vst [vmem:[#allocation2] sm:$0x30] %v2730
    %v2733 = vrot.slane %v2730, 4
    %2735 = vmatprep.subr.mxu0 0.0
    %2736 = vmatpush1.msra.mxu0 %v2574
    %2737 = vmatprep.subr.mxu0 0.0
    %2738 = vmatpush1.msra.mxu0 %v2573
    %2739 = vmatprep.subr.mxu0 0.0
    %2740 = vmatpush1.msra.mxu0 %v2572
    %2741 = vmatprep.subr.mxu0 0.0
    %2742 = vmatpush1.msra.mxu0 %v2571
    %2743 = vmatprep.subr.mxu0 0.0
    %2744 = vmatpush1.msra.mxu0 %v2570
    %2745 = vmatprep.subr.mxu0 0.0
    %2746 = vmatpush1.msra.mxu0 %v2569
    %2747 = vmatprep.subr.mxu0 0.0
    %2748 = vmatpush1.msra.mxu0 %v2568
    %2749 = vmatprep.subr.mxu0 0.0
    %2750 = vmatpush1.msra.mxu0 %v2567
    %2751 = vmatprep.subr.mxu0 0.0
    %2752 = vmatpush1.msra.mxu0 %v2566
    %2753 = vmatprep.subr.mxu0 0.0
    %2754 = vmatpush1.msra.mxu0 %v2565
    %2755 = vmatprep.subr.mxu0 0.0
    %2756 = vmatpush1.msra.mxu0 %v2564
    %2757 = vmatprep.subr.mxu0 0.0
    %2758 = vmatpush1.msra.mxu0 %v2563
    %2759 = vmatprep.subr.mxu0 0.0
    %2760 = vmatpush1.msra.mxu0 %v2562
    %2761 = vmatprep.subr.mxu0 0.0
    %2762 = vmatpush1.msra.mxu0 %v2561
    %2763 = vmatprep.subr.mxu0 0.0
    %2764 = vmatpush1.msra.mxu0 %v2560
    %2765 = vmatprep.subr.mxu0 0.0
    %2766 = vmatpush1.msra.mxu0 %v2559
    %2767 = vmatprep.subr.mxu0 0.0
    %2768 = vmatpush2.msra.mxu0 0.0
    %2769 = vmatprep.subr.mxu0 0.0
    %2770 = vmatpush2.msra.mxu0 0.0
    %2771 = vmatprep.subr.mxu0 0.0
    %2772 = vmatpush2.msra.mxu0 0.0
    %2773 = vmatprep.subr.mxu0 0.0
    %2774 = vmatpush2.msra.mxu0 0.0
    %2775 = vmatprep.subr.mxu0 0.0
    %2776 = vmatpush2.msra.mxu0 0.0
    %2777 = vmatprep.subr.mxu0 0.0
    %2778 = vmatpush2.msra.mxu0 0.0
    %2779 = vmatprep.subr.mxu0 0.0
    %2780 = vmatpush2.msra.mxu0 0.0
    %2781 = vmatprep.subr.mxu0 0.0
    %2782 = vmatpush2.msra.mxu0 0.0
    %2783 = vmatprep.subr.mxu0 0.0
    %2784 = vmatpush2.msra.mxu0 0.0
    %2785 = vmatprep.subr.mxu0 0.0
    %2786 = vmatpush2.msra.mxu0 0.0
    %2787 = vmatprep.subr.mxu0 0.0
    %2788 = vmatpush2.msra.mxu0 0.0
    %2789 = vmatprep.subr.mxu0 0.0
    %2790 = vmatpush2.msra.mxu0 0.0
    %2791 = vmatprep.subr.mxu0 0.0
    %2792 = vmatpush2.msra.mxu0 0.0
    %2793 = vmatprep.subr.mxu0 0.0
    %2794 = vmatpush2.msra.mxu0 0.0
    %2795 = vmatprep.subr.mxu0 0.0
    %2796 = vmatpush2.msra.mxu0 0.0
    %2797 = vmatprep.subr.mxu0 0.0
    %2798 = vmatpush2.msra.mxu0 0.0
    %2799 = vmatprep.mubr.f32.mxu0 0.0
    %2800 = vmatmul.mubr.f32.gmra.mxu0 %v2733
    %v2801 = vpop.f32.mrf.mxu0
    %v2802 = vadd.f32 0.0, %v2801
    %v2803 = vpop.f32.mrf.mxu0
    %2804 = vdwg.mxu0
    %v2806 = vrot.slane %v2802, 2
    %v2808 = vadd.f32 %v2551, %v2806
    %v2809 = vtanh.pop %v2808
    %2810 = vst [vmem:[#allocation2] sm:$0xc0] %v2809
    %v2812 = vrot.slane %v2809, 6
    %2814 = vmatprep.subr.mxu0 0.0
    %2815 = vmatpush1.msra.mxu0 %v2574
    %2816 = vmatprep.subr.mxu0 0.0
    %2817 = vmatpush1.msra.mxu0 %v2573
    %2818 = vmatprep.subr.mxu0 0.0
    %2819 = vmatpush1.msra.mxu0 %v2572
    %2820 = vmatprep.subr.mxu0 0.0
    %2821 = vmatpush1.msra.mxu0 %v2571
    %2822 = vmatprep.subr.mxu0 0.0
    %2823 = vmatpush1.msra.mxu0 %v2570
    %2824 = vmatprep.subr.mxu0 0.0
    %2825 = vmatpush1.msra.mxu0 %v2569
    %2826 = vmatprep.subr.mxu0 0.0
    %2827 = vmatpush1.msra.mxu0 %v2568
    %2828 = vmatprep.subr.mxu0 0.0
    %2829 = vmatpush1.msra.mxu0 %v2567
    %2830 = vmatprep.subr.mxu0 0.0
    %2831 = vmatpush1.msra.mxu0 %v2566
    %2832 = vmatprep.subr.mxu0 0.0
    %2833 = vmatpush1.msra.mxu0 %v2565
    %2834 = vmatprep.subr.mxu0 0.0
    %2835 = vmatpush1.msra.mxu0 %v2564
    %2836 = vmatprep.subr.mxu0 0.0
    %2837 = vmatpush1.msra.mxu0 %v2563
    %2838 = vmatprep.subr.mxu0 0.0
    %2839 = vmatpush1.msra.mxu0 %v2562
    %2840 = vmatprep.subr.mxu0 0.0
    %2841 = vmatpush1.msra.mxu0 %v2561
    %2842 = vmatprep.subr.mxu0 0.0
    %2843 = vmatpush1.msra.mxu0 %v2560
    %2844 = vmatprep.subr.mxu0 0.0
    %2845 = vmatpush1.msra.mxu0 %v2559
    %2846 = vmatprep.subr.mxu0 0.0
    %2847 = vmatpush2.msra.mxu0 0.0
    %2848 = vmatprep.subr.mxu0 0.0
    %2849 = vmatpush2.msra.mxu0 0.0
    %2850 = vmatprep.subr.mxu0 0.0
    %2851 = vmatpush2.msra.mxu0 0.0
    %2852 = vmatprep.subr.mxu0 0.0
    %2853 = vmatpush2.msra.mxu0 0.0
    %2854 = vmatprep.subr.mxu0 0.0
    %2855 = vmatpush2.msra.mxu0 0.0
    %2856 = vmatprep.subr.mxu0 0.0
    %2857 = vmatpush2.msra.mxu0 0.0
    %2858 = vmatprep.subr.mxu0 0.0
    %2859 = vmatpush2.msra.mxu0 0.0
    %2860 = vmatprep.subr.mxu0 0.0
    %2861 = vmatpush2.msra.mxu0 0.0
    %2862 = vmatprep.subr.mxu0 0.0
    %2863 = vmatpush2.msra.mxu0 0.0
    %2864 = vmatprep.subr.mxu0 0.0
    %2865 = vmatpush2.msra.mxu0 0.0
    %2866 = vmatprep.subr.mxu0 0.0
    %2867 = vmatpush2.msra.mxu0 0.0
    %2868 = vmatprep.subr.mxu0 0.0
    %2869 = vmatpush2.msra.mxu0 0.0
    %2870 = vmatprep.subr.mxu0 0.0
    %2871 = vmatpush2.msra.mxu0 0.0
    %2872 = vmatprep.subr.mxu0 0.0
    %2873 = vmatpush2.msra.mxu0 0.0
    %2874 = vmatprep.subr.mxu0 0.0
    %2875 = vmatpush2.msra.mxu0 0.0
    %2876 = vmatprep.subr.mxu0 0.0
    %2877 = vmatpush2.msra.mxu0 0.0
    %2878 = vmatprep.mubr.f32.mxu0 0.0
    %2879 = vmatmul.mubr.f32.gmra.mxu0 %v2812
    %v2880 = vpop.f32.mrf.mxu0
    %v2881 = vadd.f32 0.0, %v2880
    %v2882 = vpop.f32.mrf.mxu0
    %2883 = vdwg.mxu0
    %v2884 = vadd.f32 %v2556, %v2881
    %v2885 = vtanh.pop %v2884
    %2886 = vst [vmem:[#allocation2 + $0x8] sm:$0x3] %v2885
    %2887 = vmatprep.subr.mxu0 0.0
    %2888 = vmatpush1.msra.mxu0 %v2574
    %2889 = vmatprep.subr.mxu0 0.0
    %2890 = vmatpush1.msra.mxu0 %v2573
    %2891 = vmatprep.subr.mxu0 0.0
    %2892 = vmatpush1.msra.mxu0 %v2572
    %2893 = vmatprep.subr.mxu0 0.0
    %2894 = vmatpush1.msra.mxu0 %v2571
    %2895 = vmatprep.subr.mxu0 0.0
    %2896 = vmatpush1.msra.mxu0 %v2570
    %2897 = vmatprep.subr.mxu0 0.0
    %2898 = vmatpush1.msra.mxu0 %v2569
    %2899 = vmatprep.subr.mxu0 0.0
    %2900 = vmatpush1.msra.mxu0 %v2568
    %2901 = vmatprep.subr.mxu0 0.0
    %2902 = vmatpush1.msra.mxu0 %v2567
    %2903 = vmatprep.subr.mxu0 0.0
    %2904 = vmatpush1.msra.mxu0 %v2566
    %2905 = vmatprep.subr.mxu0 0.0
    %2906 = vmatpush1.msra.mxu0 %v2565
    %2907 = vmatprep.subr.mxu0 0.0
    %2908 = vmatpush1.msra.mxu0 %v2564
    %2909 = vmatprep.subr.mxu0 0.0
    %2910 = vmatpush1.msra.mxu0 %v2563
    %2911 = vmatprep.subr.mxu0 0.0
    %2912 = vmatpush1.msra.mxu0 %v2562
    %2913 = vmatprep.subr.mxu0 0.0
    %2914 = vmatpush1.msra.mxu0 %v2561
    %2915 = vmatprep.subr.mxu0 0.0
    %2916 = vmatpush1.msra.mxu0 %v2560
    %2917 = vmatprep.subr.mxu0 0.0
    %2918 = vmatpush1.msra.mxu0 %v2559
    %2919 = vmatprep.subr.mxu0 0.0
    %2920 = vmatpush2.msra.mxu0 0.0
    %2921 = vmatprep.subr.mxu0 0.0
    %2922 = vmatpush2.msra.mxu0 0.0
    %2923 = vmatprep.subr.mxu0 0.0
    %2924 = vmatpush2.msra.mxu0 0.0
    %2925 = vmatprep.subr.mxu0 0.0
    %2926 = vmatpush2.msra.mxu0 0.0
    %2927 = vmatprep.subr.mxu0 0.0
    %2928 = vmatpush2.msra.mxu0 0.0
    %2929 = vmatprep.subr.mxu0 0.0
    %2930 = vmatpush2.msra.mxu0 0.0
    %2931 = vmatprep.subr.mxu0 0.0
    %2932 = vmatpush2.msra.mxu0 0.0
    %2933 = vmatprep.subr.mxu0 0.0
    %2934 = vmatpush2.msra.mxu0 0.0
    %2935 = vmatprep.subr.mxu0 0.0
    %2936 = vmatpush2.msra.mxu0 0.0
    %2937 = vmatprep.subr.mxu0 0.0
    %2938 = vmatpush2.msra.mxu0 0.0
    %2939 = vmatprep.subr.mxu0 0.0
    %2940 = vmatpush2.msra.mxu0 0.0
    %2941 = vmatprep.subr.mxu0 0.0
    %2942 = vmatpush2.msra.mxu0 0.0
    %2943 = vmatprep.subr.mxu0 0.0
    %2944 = vmatpush2.msra.mxu0 0.0
    %2945 = vmatprep.subr.mxu0 0.0
    %2946 = vmatpush2.msra.mxu0 0.0
    %2947 = vmatprep.subr.mxu0 0.0
    %2948 = vmatpush2.msra.mxu0 0.0
    %2949 = vmatprep.subr.mxu0 0.0
    %2950 = vmatpush2.msra.mxu0 0.0
    %2951 = vmatprep.mubr.f32.mxu0 0.0
    %2952 = vmatmul.mubr.f32.gmra.mxu0 %v2885
    %v2953 = vpop.f32.mrf.mxu0
    %v2954 = vadd.f32 0.0, %v2953
    %v2955 = vpop.f32.mrf.mxu0
    %2956 = vdwg.mxu0
    %v2958 = vrot.slane %v2954, 6
    %v2960 = vadd.f32 %v2556, %v2958
    %v2961 = vtanh.pop %v2960
    %2962 = vst [vmem:[#allocation2 + $0x8] sm:$0xc] %v2961
    %v2964 = vrot.slane %v2961, 2
    %2966 = vmatprep.subr.mxu0 0.0
    %2967 = vmatpush1.msra.mxu0 %v2574
    %2968 = vmatprep.subr.mxu0 0.0
    %2969 = vmatpush1.msra.mxu0 %v2573
    %2970 = vmatprep.subr.mxu0 0.0
    %2971 = vmatpush1.msra.mxu0 %v2572
    %2972 = vmatprep.subr.mxu0 0.0
    %2973 = vmatpush1.msra.mxu0 %v2571
    %2974 = vmatprep.subr.mxu0 0.0
    %2975 = vmatpush1.msra.mxu0 %v2570
    %2976 = vmatprep.subr.mxu0 0.0
    %2977 = vmatpush1.msra.mxu0 %v2569
    %2978 = vmatprep.subr.mxu0 0.0
    %2979 = vmatpush1.msra.mxu0 %v2568
    %2980 = vmatprep.subr.mxu0 0.0
    %2981 = vmatpush1.msra.mxu0 %v2567
    %2982 = vmatprep.subr.mxu0 0.0
    %2983 = vmatpush1.msra.mxu0 %v2566
    %2984 = vmatprep.subr.mxu0 0.0
    %2985 = vmatpush1.msra.mxu0 %v2565
    %2986 = vmatprep.subr.mxu0 0.0
    %2987 = vmatpush1.msra.mxu0 %v2564
    %2988 = vmatprep.subr.mxu0 0.0
    %2989 = vmatpush1.msra.mxu0 %v2563
    %2990 = vmatprep.subr.mxu0 0.0
    %2991 = vmatpush1.msra.mxu0 %v2562
    %2992 = vmatprep.subr.mxu0 0.0
    %2993 = vmatpush1.msra.mxu0 %v2561
    %2994 = vmatprep.subr.mxu0 0.0
    %2995 = vmatpush1.msra.mxu0 %v2560
    %2996 = vmatprep.subr.mxu0 0.0
    %2997 = vmatpush1.msra.mxu0 %v2559
    %2998 = vmatprep.subr.mxu0 0.0
    %2999 = vmatpush2.msra.mxu0 0.0
    %3000 = vmatprep.subr.mxu0 0.0
    %3001 = vmatpush2.msra.mxu0 0.0
    %3002 = vmatprep.subr.mxu0 0.0
    %3003 = vmatpush2.msra.mxu0 0.0
    %3004 = vmatprep.subr.mxu0 0.0
    %3005 = vmatpush2.msra.mxu0 0.0
    %3006 = vmatprep.subr.mxu0 0.0
    %3007 = vmatpush2.msra.mxu0 0.0
    %3008 = vmatprep.subr.mxu0 0.0
    %3009 = vmatpush2.msra.mxu0 0.0
    %3010 = vmatprep.subr.mxu0 0.0
    %3011 = vmatpush2.msra.mxu0 0.0
    %3012 = vmatprep.subr.mxu0 0.0
    %3013 = vmatpush2.msra.mxu0 0.0
    %3014 = vmatprep.subr.mxu0 0.0
    %3015 = vmatpush2.msra.mxu0 0.0
    %3016 = vmatprep.subr.mxu0 0.0
    %3017 = vmatpush2.msra.mxu0 0.0
    %3018 = vmatprep.subr.mxu0 0.0
    %3019 = vmatpush2.msra.mxu0 0.0
    %3020 = vmatprep.subr.mxu0 0.0
    %3021 = vmatpush2.msra.mxu0 0.0
    %3022 = vmatprep.subr.mxu0 0.0
    %3023 = vmatpush2.msra.mxu0 0.0
    %3024 = vmatprep.subr.mxu0 0.0
    %3025 = vmatpush2.msra.mxu0 0.0
    %3026 = vmatprep.subr.mxu0 0.0
    %3027 = vmatpush2.msra.mxu0 0.0
    %3028 = vmatprep.subr.mxu0 0.0
    %3029 = vmatpush2.msra.mxu0 0.0
    %3030 = vmatprep.mubr.f32.mxu0 0.0
    %3031 = vmatmul.mubr.f32.gmra.mxu0 %v2964
    %v3032 = vpop.f32.mrf.mxu0
    %v3033 = vadd.f32 0.0, %v3032
    %v3034 = vpop.f32.mrf.mxu0
    %3035 = vdwg.mxu0
    %v3037 = vrot.slane %v3033, 4
    %v3039 = vadd.f32 %v2556, %v3037
    %v3040 = vtanh.pop %v3039
    %3041 = vst [vmem:[#allocation2 + $0x8] sm:$0x30] %v3040
    %v3043 = vrot.slane %v3040, 4
    %3045 = vmatprep.subr.mxu0 0.0
    %3046 = vmatpush1.msra.mxu0 %v2574
    %3047 = vmatprep.subr.mxu0 0.0
    %3048 = vmatpush1.msra.mxu0 %v2573
    %3049 = vmatprep.subr.mxu0 0.0
    %3050 = vmatpush1.msra.mxu0 %v2572
    %3051 = vmatprep.subr.mxu0 0.0
    %3052 = vmatpush1.msra.mxu0 %v2571
    %3053 = vmatprep.subr.mxu0 0.0
    %3054 = vmatpush1.msra.mxu0 %v2570
    %3055 = vmatprep.subr.mxu0 0.0
    %3056 = vmatpush1.msra.mxu0 %v2569
    %3057 = vmatprep.subr.mxu0 0.0
    %3058 = vmatpush1.msra.mxu0 %v2568
    %3059 = vmatprep.subr.mxu0 0.0
    %3060 = vmatpush1.msra.mxu0 %v2567
    %3061 = vmatprep.subr.mxu0 0.0
    %3062 = vmatpush1.msra.mxu0 %v2566
    %3063 = vmatprep.subr.mxu0 0.0
    %3064 = vmatpush1.msra.mxu0 %v2565
    %3065 = vmatprep.subr.mxu0 0.0
    %3066 = vmatpush1.msra.mxu0 %v2564
    %3067 = vmatprep.subr.mxu0 0.0
    %3068 = vmatpush1.msra.mxu0 %v2563
    %3069 = vmatprep.subr.mxu0 0.0
    %3070 = vmatpush1.msra.mxu0 %v2562
    %3071 = vmatprep.subr.mxu0 0.0
    %3072 = vmatpush1.msra.mxu0 %v2561
    %3073 = vmatprep.subr.mxu0 0.0
    %3074 = vmatpush1.msra.mxu0 %v2560
    %3075 = vmatprep.subr.mxu0 0.0
    %3076 = vmatpush1.msra.mxu0 %v2559
    %3077 = vmatprep.subr.mxu0 0.0
    %3078 = vmatpush2.msra.mxu0 0.0
    %3079 = vmatprep.subr.mxu0 0.0
    %3080 = vmatpush2.msra.mxu0 0.0
    %3081 = vmatprep.subr.mxu0 0.0
    %3082 = vmatpush2.msra.mxu0 0.0
    %3083 = vmatprep.subr.mxu0 0.0
    %3084 = vmatpush2.msra.mxu0 0.0
    %3085 = vmatprep.subr.mxu0 0.0
    %3086 = vmatpush2.msra.mxu0 0.0
    %3087 = vmatprep.subr.mxu0 0.0
    %3088 = vmatpush2.msra.mxu0 0.0
    %3089 = vmatprep.subr.mxu0 0.0
    %3090 = vmatpush2.msra.mxu0 0.0
    %3091 = vmatprep.subr.mxu0 0.0
    %3092 = vmatpush2.msra.mxu0 0.0
    %3093 = vmatprep.subr.mxu0 0.0
    %3094 = vmatpush2.msra.mxu0 0.0
    %3095 = vmatprep.subr.mxu0 0.0
    %3096 = vmatpush2.msra.mxu0 0.0
    %3097 = vmatprep.subr.mxu0 0.0
    %3098 = vmatpush2.msra.mxu0 0.0
    %3099 = vmatprep.subr.mxu0 0.0
    %3100 = vmatpush2.msra.mxu0 0.0
    %3101 = vmatprep.subr.mxu0 0.0
    %3102 = vmatpush2.msra.mxu0 0.0
    %3103 = vmatprep.subr.mxu0 0.0
    %3104 = vmatpush2.msra.mxu0 0.0
    %3105 = vmatprep.subr.mxu0 0.0
    %3106 = vmatpush2.msra.mxu0 0.0
    %3107 = vmatprep.subr.mxu0 0.0
    %3108 = vmatpush2.msra.mxu0 0.0
    %3109 = vmatprep.mubr.f32.mxu0 0.0
    %3110 = vmatmul.mubr.f32.gmra.mxu0 %v3043
    %v3111 = vpop.f32.mrf.mxu0
    %v3112 = vadd.f32 0.0, %v3111
    %v3113 = vpop.f32.mrf.mxu0
    %3114 = vdwg.mxu0
    %v3116 = vrot.slane %v3112, 2
    %v3118 = vadd.f32 %v2556, %v3116
    %v3119 = vtanh.pop %v3118
    %3120 = vst [vmem:[#allocation2 + $0x8] sm:$0xc0] %v3119
    %v3121 = vld [vmem:[#allocation2] sm:$0xff]
    %v3122 = vld [vmem:[#allocation2 + $0x8] sm:$0xff]
    %v3123 = vld [vmem:[#allocation14] sm:$0xff]
    %v3124 = vld [vmem:[#allocation14 + $0x8] sm:$0xff]
    %v3125 = vld [vmem:[#allocation14 + $0x10] sm:$0xff]
    %v3126 = vld [vmem:[#allocation14 + $0x18] sm:$0xff]
    %v3127 = vld [vmem:[#allocation14 + $0x20] sm:$0xff]
    %v3128 = vld [vmem:[#allocation14 + $0x28] sm:$0xff]
    %v3129 = vld [vmem:[#allocation14 + $0x30] sm:$0xff]
    %v3130 = vld [vmem:[#allocation14 + $0x38] sm:$0xff]
    %v3131 = vld [vmem:[#allocation14 + $0x40] sm:$0xff]
    %v3132 = vld [vmem:[#allocation14 + $0x48] sm:$0xff]
    %v3133 = vld [vmem:[#allocation14 + $0x50] sm:$0xff]
    %v3134 = vld [vmem:[#allocation14 + $0x58] sm:$0xff]
    %v3135 = vld [vmem:[#allocation14 + $0x60] sm:$0xff]
    %v3136 = vld [vmem:[#allocation14 + $0x68] sm:$0xff]
    %v3137 = vld [vmem:[#allocation14 + $0x70] sm:$0xff]
    %v3138 = vld [vmem:[#allocation14 + $0x78] sm:$0xff]
    %v3139 = vld [vmem:[%s31] sm:$0x1]
    %v3141 = vlaneseq
    %v3142 = vshrl.u32 %v3141, 7
    %v3143 = vsub.s32 0, %v3142
    %v3144 = vrot.slane %v3139, %v3143
    %3146 = vmatprep.subr.mxu0 0.0
    %3147 = vmatpush1.msra.mxu0 %v3138
    %3148 = vmatprep.subr.mxu0 0.0
    %3149 = vmatpush1.msra.mxu0 %v3137
    %3150 = vmatprep.subr.mxu0 0.0
    %3151 = vmatpush1.msra.mxu0 %v3136
    %3152 = vmatprep.subr.mxu0 0.0
    %3153 = vmatpush1.msra.mxu0 %v3135
    %3154 = vmatprep.subr.mxu0 0.0
    %3155 = vmatpush1.msra.mxu0 %v3134
    %3156 = vmatprep.subr.mxu0 0.0
    %3157 = vmatpush1.msra.mxu0 %v3133
    %3158 = vmatprep.subr.mxu0 0.0
    %3159 = vmatpush1.msra.mxu0 %v3132
    %3160 = vmatprep.subr.mxu0 0.0
    %3161 = vmatpush1.msra.mxu0 %v3131
    %3162 = vmatprep.subr.mxu0 0.0
    %3163 = vmatpush1.msra.mxu0 %v3130
    %3164 = vmatprep.subr.mxu0 0.0
    %3165 = vmatpush1.msra.mxu0 %v3129
    %3166 = vmatprep.subr.mxu0 0.0
    %3167 = vmatpush1.msra.mxu0 %v3128
    %3168 = vmatprep.subr.mxu0 0.0
    %3169 = vmatpush1.msra.mxu0 %v3127
    %3170 = vmatprep.subr.mxu0 0.0
    %3171 = vmatpush1.msra.mxu0 %v3126
    %3172 = vmatprep.subr.mxu0 0.0
    %3173 = vmatpush1.msra.mxu0 %v3125
    %3174 = vmatprep.subr.mxu0 0.0
    %3175 = vmatpush1.msra.mxu0 %v3124
    %3176 = vmatprep.subr.mxu0 0.0
    %3177 = vmatpush1.msra.mxu0 %v3123
    %3178 = vmatprep.subr.mxu0 0.0
    %3179 = vmatpush2.msra.mxu0 0.0
    %3180 = vmatprep.subr.mxu0 0.0
    %3181 = vmatpush2.msra.mxu0 0.0
    %3182 = vmatprep.subr.mxu0 0.0
    %3183 = vmatpush2.msra.mxu0 0.0
    %3184 = vmatprep.subr.mxu0 0.0
    %3185 = vmatpush2.msra.mxu0 0.0
    %3186 = vmatprep.subr.mxu0 0.0
    %3187 = vmatpush2.msra.mxu0 0.0
    %3188 = vmatprep.subr.mxu0 0.0
    %3189 = vmatpush2.msra.mxu0 0.0
    %3190 = vmatprep.subr.mxu0 0.0
    %3191 = vmatpush2.msra.mxu0 0.0
    %3192 = vmatprep.subr.mxu0 0.0
    %3193 = vmatpush2.msra.mxu0 0.0
    %3194 = vmatprep.subr.mxu0 0.0
    %3195 = vmatpush2.msra.mxu0 0.0
    %3196 = vmatprep.subr.mxu0 0.0
    %3197 = vmatpush2.msra.mxu0 0.0
    %3198 = vmatprep.subr.mxu0 0.0
    %3199 = vmatpush2.msra.mxu0 0.0
    %3200 = vmatprep.subr.mxu0 0.0
    %3201 = vmatpush2.msra.mxu0 0.0
    %3202 = vmatprep.subr.mxu0 0.0
    %3203 = vmatpush2.msra.mxu0 0.0
    %3204 = vmatprep.subr.mxu0 0.0
    %3205 = vmatpush2.msra.mxu0 0.0
    %3206 = vmatprep.subr.mxu0 0.0
    %3207 = vmatpush2.msra.mxu0 0.0
    %3208 = vmatprep.subr.mxu0 0.0
    %3209 = vmatpush2.msra.mxu0 0.0
    %3210 = vmatprep.mubr.f32.mxu0 0.0
    %3211 = vmatmul.mubr.f32.gmra.mxu0 %v3121
    %v3212 = vpop.f32.mrf.mxu0
    %v3213 = vadd.f32 %v3144, %v3212
    %v3214 = vpop.f32.mrf.mxu0
    %3215 = vmatprep.mubr.f32.mxu0 0.0
    %3216 = vmatmul.mubr.f32.gmra.mxu0 %v3122
    %v3217 = vpop.f32.mrf.mxu0
    %v3218 = vadd.f32 %v3144, %v3217
    %v3219 = vpop.f32.mrf.mxu0
    %3220 = vdwg.mxu0
    %v3221 = vld [vmem:[#allocation16] sm:$0xff]
    %v3222 = vld [vmem:[#allocation16 + $0x8] sm:$0xff]
    %v3223 = vld [vmem:[#allocation16 + $0x10] sm:$0xff]
    %v3224 = vld [vmem:[#allocation16 + $0x18] sm:$0xff]
    %v3225 = vld [vmem:[#allocation16 + $0x20] sm:$0xff]
    %v3226 = vld [vmem:[#allocation16 + $0x28] sm:$0xff]
    %v3227 = vld [vmem:[#allocation16 + $0x30] sm:$0xff]
    %v3228 = vld [vmem:[#allocation16 + $0x38] sm:$0xff]
    %v3229 = vld [vmem:[#allocation16 + $0x40] sm:$0xff]
    %v3230 = vld [vmem:[#allocation16 + $0x48] sm:$0xff]
    %v3231 = vld [vmem:[#allocation16 + $0x50] sm:$0xff]
    %v3232 = vld [vmem:[#allocation16 + $0x58] sm:$0xff]
    %v3233 = vld [vmem:[#allocation16 + $0x60] sm:$0xff]
    %v3234 = vld [vmem:[#allocation16 + $0x68] sm:$0xff]
    %v3235 = vld [vmem:[#allocation16 + $0x70] sm:$0xff]
    %v3236 = vld [vmem:[#allocation16 + $0x78] sm:$0xff]
    %v3237 = vtanh.pop %v3213
    %3238 = vst [vmem:[#allocation2] sm:$0x3] %v3237
    %3239 = vmatprep.subr.mxu0 0.0
    %3240 = vmatpush1.msra.mxu0 %v3236
    %3241 = vmatprep.subr.mxu0 0.0
    %3242 = vmatpush1.msra.mxu0 %v3235
    %3243 = vmatprep.subr.mxu0 0.0
    %3244 = vmatpush1.msra.mxu0 %v3234
    %3245 = vmatprep.subr.mxu0 0.0
    %3246 = vmatpush1.msra.mxu0 %v3233
    %3247 = vmatprep.subr.mxu0 0.0
    %3248 = vmatpush1.msra.mxu0 %v3232
    %3249 = vmatprep.subr.mxu0 0.0
    %3250 = vmatpush1.msra.mxu0 %v3231
    %3251 = vmatprep.subr.mxu0 0.0
    %3252 = vmatpush1.msra.mxu0 %v3230
    %3253 = vmatprep.subr.mxu0 0.0
    %3254 = vmatpush1.msra.mxu0 %v3229
    %3255 = vmatprep.subr.mxu0 0.0
    %3256 = vmatpush1.msra.mxu0 %v3228
    %3257 = vmatprep.subr.mxu0 0.0
    %3258 = vmatpush1.msra.mxu0 %v3227
    %3259 = vmatprep.subr.mxu0 0.0
    %3260 = vmatpush1.msra.mxu0 %v3226
    %3261 = vmatprep.subr.mxu0 0.0
    %3262 = vmatpush1.msra.mxu0 %v3225
    %3263 = vmatprep.subr.mxu0 0.0
    %3264 = vmatpush1.msra.mxu0 %v3224
    %3265 = vmatprep.subr.mxu0 0.0
    %3266 = vmatpush1.msra.mxu0 %v3223
    %3267 = vmatprep.subr.mxu0 0.0
    %3268 = vmatpush1.msra.mxu0 %v3222
    %3269 = vmatprep.subr.mxu0 0.0
    %3270 = vmatpush1.msra.mxu0 %v3221
    %3271 = vmatprep.subr.mxu0 0.0
    %3272 = vmatpush2.msra.mxu0 0.0
    %3273 = vmatprep.subr.mxu0 0.0
    %3274 = vmatpush2.msra.mxu0 0.0
    %3275 = vmatprep.subr.mxu0 0.0
    %3276 = vmatpush2.msra.mxu0 0.0
    %3277 = vmatprep.subr.mxu0 0.0
    %3278 = vmatpush2.msra.mxu0 0.0
    %3279 = vmatprep.subr.mxu0 0.0
    %3280 = vmatpush2.msra.mxu0 0.0
    %3281 = vmatprep.subr.mxu0 0.0
    %3282 = vmatpush2.msra.mxu0 0.0
    %3283 = vmatprep.subr.mxu0 0.0
    %3284 = vmatpush2.msra.mxu0 0.0
    %3285 = vmatprep.subr.mxu0 0.0
    %3286 = vmatpush2.msra.mxu0 0.0
    %3287 = vmatprep.subr.mxu0 0.0
    %3288 = vmatpush2.msra.mxu0 0.0
    %3289 = vmatprep.subr.mxu0 0.0
    %3290 = vmatpush2.msra.mxu0 0.0
    %3291 = vmatprep.subr.mxu0 0.0
    %3292 = vmatpush2.msra.mxu0 0.0
    %3293 = vmatprep.subr.mxu0 0.0
    %3294 = vmatpush2.msra.mxu0 0.0
    %3295 = vmatprep.subr.mxu0 0.0
    %3296 = vmatpush2.msra.mxu0 0.0
    %3297 = vmatprep.subr.mxu0 0.0
    %3298 = vmatpush2.msra.mxu0 0.0
    %3299 = vmatprep.subr.mxu0 0.0
    %3300 = vmatpush2.msra.mxu0 0.0
    %3301 = vmatprep.subr.mxu0 0.0
    %3302 = vmatpush2.msra.mxu0 0.0
    %3303 = vmatprep.mubr.f32.mxu0 0.0
    %3304 = vmatmul.mubr.f32.gmra.mxu0 %v3237
    %v3305 = vpop.f32.mrf.mxu0
    %v3306 = vadd.f32 0.0, %v3305
    %v3307 = vpop.f32.mrf.mxu0
    %3308 = vdwg.mxu0
    %v3310 = vrot.slane %v3306, 6
    %v3312 = vadd.f32 %v3213, %v3310
    %v3313 = vtanh.pop %v3312
    %3314 = vst [vmem:[#allocation2] sm:$0xc] %v3313
    %v3316 = vrot.slane %v3313, 2
    %3318 = vmatprep.subr.mxu0 0.0
    %3319 = vmatpush1.msra.mxu0 %v3236
    %3320 = vmatprep.subr.mxu0 0.0
    %3321 = vmatpush1.msra.mxu0 %v3235
    %3322 = vmatprep.subr.mxu0 0.0
    %3323 = vmatpush1.msra.mxu0 %v3234
    %3324 = vmatprep.subr.mxu0 0.0
    %3325 = vmatpush1.msra.mxu0 %v3233
    %3326 = vmatprep.subr.mxu0 0.0
    %3327 = vmatpush1.msra.mxu0 %v3232
    %3328 = vmatprep.subr.mxu0 0.0
    %3329 = vmatpush1.msra.mxu0 %v3231
    %3330 = vmatprep.subr.mxu0 0.0
    %3331 = vmatpush1.msra.mxu0 %v3230
    %3332 = vmatprep.subr.mxu0 0.0
    %3333 = vmatpush1.msra.mxu0 %v3229
    %3334 = vmatprep.subr.mxu0 0.0
    %3335 = vmatpush1.msra.mxu0 %v3228
    %3336 = vmatprep.subr.mxu0 0.0
    %3337 = vmatpush1.msra.mxu0 %v3227
    %3338 = vmatprep.subr.mxu0 0.0
    %3339 = vmatpush1.msra.mxu0 %v3226
    %3340 = vmatprep.subr.mxu0 0.0
    %3341 = vmatpush1.msra.mxu0 %v3225
    %3342 = vmatprep.subr.mxu0 0.0
    %3343 = vmatpush1.msra.mxu0 %v3224
    %3344 = vmatprep.subr.mxu0 0.0
    %3345 = vmatpush1.msra.mxu0 %v3223
    %3346 = vmatprep.subr.mxu0 0.0
    %3347 = vmatpush1.msra.mxu0 %v3222
    %3348 = vmatprep.subr.mxu0 0.0
    %3349 = vmatpush1.msra.mxu0 %v3221
    %3350 = vmatprep.subr.mxu0 0.0
    %3351 = vmatpush2.msra.mxu0 0.0
    %3352 = vmatprep.subr.mxu0 0.0
    %3353 = vmatpush2.msra.mxu0 0.0
    %3354 = vmatprep.subr.mxu0 0.0
    %3355 = vmatpush2.msra.mxu0 0.0
    %3356 = vmatprep.subr.mxu0 0.0
    %3357 = vmatpush2.msra.mxu0 0.0
    %3358 = vmatprep.subr.mxu0 0.0
    %3359 = vmatpush2.msra.mxu0 0.0
    %3360 = vmatprep.subr.mxu0 0.0
    %3361 = vmatpush2.msra.mxu0 0.0
    %3362 = vmatprep.subr.mxu0 0.0
    %3363 = vmatpush2.msra.mxu0 0.0
    %3364 = vmatprep.subr.mxu0 0.0
    %3365 = vmatpush2.msra.mxu0 0.0
    %3366 = vmatprep.subr.mxu0 0.0
    %3367 = vmatpush2.msra.mxu0 0.0
    %3368 = vmatprep.subr.mxu0 0.0
    %3369 = vmatpush2.msra.mxu0 0.0
    %3370 = vmatprep.subr.mxu0 0.0
    %3371 = vmatpush2.msra.mxu0 0.0
    %3372 = vmatprep.subr.mxu0 0.0
    %3373 = vmatpush2.msra.mxu0 0.0
    %3374 = vmatprep.subr.mxu0 0.0
    %3375 = vmatpush2.msra.mxu0 0.0
    %3376 = vmatprep.subr.mxu0 0.0
    %3377 = vmatpush2.msra.mxu0 0.0
    %3378 = vmatprep.subr.mxu0 0.0
    %3379 = vmatpush2.msra.mxu0 0.0
    %3380 = vmatprep.subr.mxu0 0.0
    %3381 = vmatpush2.msra.mxu0 0.0
    %3382 = vmatprep.mubr.f32.mxu0 0.0
    %3383 = vmatmul.mubr.f32.gmra.mxu0 %v3316
    %v3384 = vpop.f32.mrf.mxu0
    %v3385 = vadd.f32 0.0, %v3384
    %v3386 = vpop.f32.mrf.mxu0
    %3387 = vdwg.mxu0
    %v3389 = vrot.slane %v3385, 4
    %v3391 = vadd.f32 %v3213, %v3389
    %v3392 = vtanh.pop %v3391
    %3393 = vst [vmem:[#allocation2] sm:$0x30] %v3392
    %v3395 = vrot.slane %v3392, 4
    %3397 = vmatprep.subr.mxu0 0.0
    %3398 = vmatpush1.msra.mxu0 %v3236
    %3399 = vmatprep.subr.mxu0 0.0
    %3400 = vmatpush1.msra.mxu0 %v3235
    %3401 = vmatprep.subr.mxu0 0.0
    %3402 = vmatpush1.msra.mxu0 %v3234
    %3403 = vmatprep.subr.mxu0 0.0
    %3404 = vmatpush1.msra.mxu0 %v3233
    %3405 = vmatprep.subr.mxu0 0.0
    %3406 = vmatpush1.msra.mxu0 %v3232
    %3407 = vmatprep.subr.mxu0 0.0
    %3408 = vmatpush1.msra.mxu0 %v3231
    %3409 = vmatprep.subr.mxu0 0.0
    %3410 = vmatpush1.msra.mxu0 %v3230
    %3411 = vmatprep.subr.mxu0 0.0
    %3412 = vmatpush1.msra.mxu0 %v3229
    %3413 = vmatprep.subr.mxu0 0.0
    %3414 = vmatpush1.msra.mxu0 %v3228
    %3415 = vmatprep.subr.mxu0 0.0
    %3416 = vmatpush1.msra.mxu0 %v3227
    %3417 = vmatprep.subr.mxu0 0.0
    %3418 = vmatpush1.msra.mxu0 %v3226
    %3419 = vmatprep.subr.mxu0 0.0
    %3420 = vmatpush1.msra.mxu0 %v3225
    %3421 = vmatprep.subr.mxu0 0.0
    %3422 = vmatpush1.msra.mxu0 %v3224
    %3423 = vmatprep.subr.mxu0 0.0
    %3424 = vmatpush1.msra.mxu0 %v3223
    %3425 = vmatprep.subr.mxu0 0.0
    %3426 = vmatpush1.msra.mxu0 %v3222
    %3427 = vmatprep.subr.mxu0 0.0
    %3428 = vmatpush1.msra.mxu0 %v3221
    %3429 = vmatprep.subr.mxu0 0.0
    %3430 = vmatpush2.msra.mxu0 0.0
    %3431 = vmatprep.subr.mxu0 0.0
    %3432 = vmatpush2.msra.mxu0 0.0
    %3433 = vmatprep.subr.mxu0 0.0
    %3434 = vmatpush2.msra.mxu0 0.0
    %3435 = vmatprep.subr.mxu0 0.0
    %3436 = vmatpush2.msra.mxu0 0.0
    %3437 = vmatprep.subr.mxu0 0.0
    %3438 = vmatpush2.msra.mxu0 0.0
    %3439 = vmatprep.subr.mxu0 0.0
    %3440 = vmatpush2.msra.mxu0 0.0
    %3441 = vmatprep.subr.mxu0 0.0
    %3442 = vmatpush2.msra.mxu0 0.0
    %3443 = vmatprep.subr.mxu0 0.0
    %3444 = vmatpush2.msra.mxu0 0.0
    %3445 = vmatprep.subr.mxu0 0.0
    %3446 = vmatpush2.msra.mxu0 0.0
    %3447 = vmatprep.subr.mxu0 0.0
    %3448 = vmatpush2.msra.mxu0 0.0
    %3449 = vmatprep.subr.mxu0 0.0
    %3450 = vmatpush2.msra.mxu0 0.0
    %3451 = vmatprep.subr.mxu0 0.0
    %3452 = vmatpush2.msra.mxu0 0.0
    %3453 = vmatprep.subr.mxu0 0.0
    %3454 = vmatpush2.msra.mxu0 0.0
    %3455 = vmatprep.subr.mxu0 0.0
    %3456 = vmatpush2.msra.mxu0 0.0
    %3457 = vmatprep.subr.mxu0 0.0
    %3458 = vmatpush2.msra.mxu0 0.0
    %3459 = vmatprep.subr.mxu0 0.0
    %3460 = vmatpush2.msra.mxu0 0.0
    %3461 = vmatprep.mubr.f32.mxu0 0.0
    %3462 = vmatmul.mubr.f32.gmra.mxu0 %v3395
    %v3463 = vpop.f32.mrf.mxu0
    %v3464 = vadd.f32 0.0, %v3463
    %v3465 = vpop.f32.mrf.mxu0
    %3466 = vdwg.mxu0
    %v3468 = vrot.slane %v3464, 2
    %v3470 = vadd.f32 %v3213, %v3468
    %v3471 = vtanh.pop %v3470
    %3472 = vst [vmem:[#allocation2] sm:$0xc0] %v3471
    %v3474 = vrot.slane %v3471, 6
    %3476 = vmatprep.subr.mxu0 0.0
    %3477 = vmatpush1.msra.mxu0 %v3236
    %3478 = vmatprep.subr.mxu0 0.0
    %3479 = vmatpush1.msra.mxu0 %v3235
    %3480 = vmatprep.subr.mxu0 0.0
    %3481 = vmatpush1.msra.mxu0 %v3234
    %3482 = vmatprep.subr.mxu0 0.0
    %3483 = vmatpush1.msra.mxu0 %v3233
    %3484 = vmatprep.subr.mxu0 0.0
    %3485 = vmatpush1.msra.mxu0 %v3232
    %3486 = vmatprep.subr.mxu0 0.0
    %3487 = vmatpush1.msra.mxu0 %v3231
    %3488 = vmatprep.subr.mxu0 0.0
    %3489 = vmatpush1.msra.mxu0 %v3230
    %3490 = vmatprep.subr.mxu0 0.0
    %3491 = vmatpush1.msra.mxu0 %v3229
    %3492 = vmatprep.subr.mxu0 0.0
    %3493 = vmatpush1.msra.mxu0 %v3228
    %3494 = vmatprep.subr.mxu0 0.0
    %3495 = vmatpush1.msra.mxu0 %v3227
    %3496 = vmatprep.subr.mxu0 0.0
    %3497 = vmatpush1.msra.mxu0 %v3226
    %3498 = vmatprep.subr.mxu0 0.0
    %3499 = vmatpush1.msra.mxu0 %v3225
    %3500 = vmatprep.subr.mxu0 0.0
    %3501 = vmatpush1.msra.mxu0 %v3224
    %3502 = vmatprep.subr.mxu0 0.0
    %3503 = vmatpush1.msra.mxu0 %v3223
    %3504 = vmatprep.subr.mxu0 0.0
    %3505 = vmatpush1.msra.mxu0 %v3222
    %3506 = vmatprep.subr.mxu0 0.0
    %3507 = vmatpush1.msra.mxu0 %v3221
    %3508 = vmatprep.subr.mxu0 0.0
    %3509 = vmatpush2.msra.mxu0 0.0
    %3510 = vmatprep.subr.mxu0 0.0
    %3511 = vmatpush2.msra.mxu0 0.0
    %3512 = vmatprep.subr.mxu0 0.0
    %3513 = vmatpush2.msra.mxu0 0.0
    %3514 = vmatprep.subr.mxu0 0.0
    %3515 = vmatpush2.msra.mxu0 0.0
    %3516 = vmatprep.subr.mxu0 0.0
    %3517 = vmatpush2.msra.mxu0 0.0
    %3518 = vmatprep.subr.mxu0 0.0
    %3519 = vmatpush2.msra.mxu0 0.0
    %3520 = vmatprep.subr.mxu0 0.0
    %3521 = vmatpush2.msra.mxu0 0.0
    %3522 = vmatprep.subr.mxu0 0.0
    %3523 = vmatpush2.msra.mxu0 0.0
    %3524 = vmatprep.subr.mxu0 0.0
    %3525 = vmatpush2.msra.mxu0 0.0
    %3526 = vmatprep.subr.mxu0 0.0
    %3527 = vmatpush2.msra.mxu0 0.0
    %3528 = vmatprep.subr.mxu0 0.0
    %3529 = vmatpush2.msra.mxu0 0.0
    %3530 = vmatprep.subr.mxu0 0.0
    %3531 = vmatpush2.msra.mxu0 0.0
    %3532 = vmatprep.subr.mxu0 0.0
    %3533 = vmatpush2.msra.mxu0 0.0
    %3534 = vmatprep.subr.mxu0 0.0
    %3535 = vmatpush2.msra.mxu0 0.0
    %3536 = vmatprep.subr.mxu0 0.0
    %3537 = vmatpush2.msra.mxu0 0.0
    %3538 = vmatprep.subr.mxu0 0.0
    %3539 = vmatpush2.msra.mxu0 0.0
    %3540 = vmatprep.mubr.f32.mxu0 0.0
    %3541 = vmatmul.mubr.f32.gmra.mxu0 %v3474
    %v3542 = vpop.f32.mrf.mxu0
    %v3543 = vadd.f32 0.0, %v3542
    %v3544 = vpop.f32.mrf.mxu0
    %3545 = vdwg.mxu0
    %v3546 = vadd.f32 %v3218, %v3543
    %v3547 = vtanh.pop %v3546
    %3548 = vst [vmem:[#allocation2 + $0x8] sm:$0x3] %v3547
    %3549 = vmatprep.subr.mxu0 0.0
    %3550 = vmatpush1.msra.mxu0 %v3236
    %3551 = vmatprep.subr.mxu0 0.0
    %3552 = vmatpush1.msra.mxu0 %v3235
    %3553 = vmatprep.subr.mxu0 0.0
    %3554 = vmatpush1.msra.mxu0 %v3234
    %3555 = vmatprep.subr.mxu0 0.0
    %3556 = vmatpush1.msra.mxu0 %v3233
    %3557 = vmatprep.subr.mxu0 0.0
    %3558 = vmatpush1.msra.mxu0 %v3232
    %3559 = vmatprep.subr.mxu0 0.0
    %3560 = vmatpush1.msra.mxu0 %v3231
    %3561 = vmatprep.subr.mxu0 0.0
    %3562 = vmatpush1.msra.mxu0 %v3230
    %3563 = vmatprep.subr.mxu0 0.0
    %3564 = vmatpush1.msra.mxu0 %v3229
    %3565 = vmatprep.subr.mxu0 0.0
    %3566 = vmatpush1.msra.mxu0 %v3228
    %3567 = vmatprep.subr.mxu0 0.0
    %3568 = vmatpush1.msra.mxu0 %v3227
    %3569 = vmatprep.subr.mxu0 0.0
    %3570 = vmatpush1.msra.mxu0 %v3226
    %3571 = vmatprep.subr.mxu0 0.0
    %3572 = vmatpush1.msra.mxu0 %v3225
    %3573 = vmatprep.subr.mxu0 0.0
    %3574 = vmatpush1.msra.mxu0 %v3224
    %3575 = vmatprep.subr.mxu0 0.0
    %3576 = vmatpush1.msra.mxu0 %v3223
    %3577 = vmatprep.subr.mxu0 0.0
    %3578 = vmatpush1.msra.mxu0 %v3222
    %3579 = vmatprep.subr.mxu0 0.0
    %3580 = vmatpush1.msra.mxu0 %v3221
    %3581 = vmatprep.subr.mxu0 0.0
    %3582 = vmatpush2.msra.mxu0 0.0
    %3583 = vmatprep.subr.mxu0 0.0
    %3584 = vmatpush2.msra.mxu0 0.0
    %3585 = vmatprep.subr.mxu0 0.0
    %3586 = vmatpush2.msra.mxu0 0.0
    %3587 = vmatprep.subr.mxu0 0.0
    %3588 = vmatpush2.msra.mxu0 0.0
    %3589 = vmatprep.subr.mxu0 0.0
    %3590 = vmatpush2.msra.mxu0 0.0
    %3591 = vmatprep.subr.mxu0 0.0
    %3592 = vmatpush2.msra.mxu0 0.0
    %3593 = vmatprep.subr.mxu0 0.0
    %3594 = vmatpush2.msra.mxu0 0.0
    %3595 = vmatprep.subr.mxu0 0.0
    %3596 = vmatpush2.msra.mxu0 0.0
    %3597 = vmatprep.subr.mxu0 0.0
    %3598 = vmatpush2.msra.mxu0 0.0
    %3599 = vmatprep.subr.mxu0 0.0
    %3600 = vmatpush2.msra.mxu0 0.0
    %3601 = vmatprep.subr.mxu0 0.0
    %3602 = vmatpush2.msra.mxu0 0.0
    %3603 = vmatprep.subr.mxu0 0.0
    %3604 = vmatpush2.msra.mxu0 0.0
    %3605 = vmatprep.subr.mxu0 0.0
    %3606 = vmatpush2.msra.mxu0 0.0
    %3607 = vmatprep.subr.mxu0 0.0
    %3608 = vmatpush2.msra.mxu0 0.0
    %3609 = vmatprep.subr.mxu0 0.0
    %3610 = vmatpush2.msra.mxu0 0.0
    %3611 = vmatprep.subr.mxu0 0.0
    %3612 = vmatpush2.msra.mxu0 0.0
    %3613 = vmatprep.mubr.f32.mxu0 0.0
    %3614 = vmatmul.mubr.f32.gmra.mxu0 %v3547
    %v3615 = vpop.f32.mrf.mxu0
    %v3616 = vadd.f32 0.0, %v3615
    %v3617 = vpop.f32.mrf.mxu0
    %3618 = vdwg.mxu0
    %v3620 = vrot.slane %v3616, 6
    %v3622 = vadd.f32 %v3218, %v3620
    %v3623 = vtanh.pop %v3622
    %3624 = vst [vmem:[#allocation2 + $0x8] sm:$0xc] %v3623
    %v3626 = vrot.slane %v3623, 2
    %3628 = vmatprep.subr.mxu0 0.0
    %3629 = vmatpush1.msra.mxu0 %v3236
    %3630 = vmatprep.subr.mxu0 0.0
    %3631 = vmatpush1.msra.mxu0 %v3235
    %3632 = vmatprep.subr.mxu0 0.0
    %3633 = vmatpush1.msra.mxu0 %v3234
    %3634 = vmatprep.subr.mxu0 0.0
    %3635 = vmatpush1.msra.mxu0 %v3233
    %3636 = vmatprep.subr.mxu0 0.0
    %3637 = vmatpush1.msra.mxu0 %v3232
    %3638 = vmatprep.subr.mxu0 0.0
    %3639 = vmatpush1.msra.mxu0 %v3231
    %3640 = vmatprep.subr.mxu0 0.0
    %3641 = vmatpush1.msra.mxu0 %v3230
    %3642 = vmatprep.subr.mxu0 0.0
    %3643 = vmatpush1.msra.mxu0 %v3229
    %3644 = vmatprep.subr.mxu0 0.0
    %3645 = vmatpush1.msra.mxu0 %v3228
    %3646 = vmatprep.subr.mxu0 0.0
    %3647 = vmatpush1.msra.mxu0 %v3227
    %3648 = vmatprep.subr.mxu0 0.0
    %3649 = vmatpush1.msra.mxu0 %v3226
    %3650 = vmatprep.subr.mxu0 0.0
    %3651 = vmatpush1.msra.mxu0 %v3225
    %3652 = vmatprep.subr.mxu0 0.0
    %3653 = vmatpush1.msra.mxu0 %v3224
    %3654 = vmatprep.subr.mxu0 0.0
    %3655 = vmatpush1.msra.mxu0 %v3223
    %3656 = vmatprep.subr.mxu0 0.0
    %3657 = vmatpush1.msra.mxu0 %v3222
    %3658 = vmatprep.subr.mxu0 0.0
    %3659 = vmatpush1.msra.mxu0 %v3221
    %3660 = vmatprep.subr.mxu0 0.0
    %3661 = vmatpush2.msra.mxu0 0.0
    %3662 = vmatprep.subr.mxu0 0.0
    %3663 = vmatpush2.msra.mxu0 0.0
    %3664 = vmatprep.subr.mxu0 0.0
    %3665 = vmatpush2.msra.mxu0 0.0
    %3666 = vmatprep.subr.mxu0 0.0
    %3667 = vmatpush2.msra.mxu0 0.0
    %3668 = vmatprep.subr.mxu0 0.0
    %3669 = vmatpush2.msra.mxu0 0.0
    %3670 = vmatprep.subr.mxu0 0.0
    %3671 = vmatpush2.msra.mxu0 0.0
    %3672 = vmatprep.subr.mxu0 0.0
    %3673 = vmatpush2.msra.mxu0 0.0
    %3674 = vmatprep.subr.mxu0 0.0
    %3675 = vmatpush2.msra.mxu0 0.0
    %3676 = vmatprep.subr.mxu0 0.0
    %3677 = vmatpush2.msra.mxu0 0.0
    %3678 = vmatprep.subr.mxu0 0.0
    %3679 = vmatpush2.msra.mxu0 0.0
    %3680 = vmatprep.subr.mxu0 0.0
    %3681 = vmatpush2.msra.mxu0 0.0
    %3682 = vmatprep.subr.mxu0 0.0
    %3683 = vmatpush2.msra.mxu0 0.0
    %3684 = vmatprep.subr.mxu0 0.0
    %3685 = vmatpush2.msra.mxu0 0.0
    %3686 = vmatprep.subr.mxu0 0.0
    %3687 = vmatpush2.msra.mxu0 0.0
    %3688 = vmatprep.subr.mxu0 0.0
    %3689 = vmatpush2.msra.mxu0 0.0
    %3690 = vmatprep.subr.mxu0 0.0
    %3691 = vmatpush2.msra.mxu0 0.0
    %3692 = vmatprep.mubr.f32.mxu0 0.0
    %3693 = vmatmul.mubr.f32.gmra.mxu0 %v3626
    %v3694 = vpop.f32.mrf.mxu0
    %v3695 = vadd.f32 0.0, %v3694
    %v3696 = vpop.f32.mrf.mxu0
    %3697 = vdwg.mxu0
    %v3699 = vrot.slane %v3695, 4
    %v3701 = vadd.f32 %v3218, %v3699
    %v3702 = vtanh.pop %v3701
    %3703 = vst [vmem:[#allocation2 + $0x8] sm:$0x30] %v3702
    %v3705 = vrot.slane %v3702, 4
    %3707 = vmatprep.subr.mxu0 0.0
    %3708 = vmatpush1.msra.mxu0 %v3236
    %3709 = vmatprep.subr.mxu0 0.0
    %3710 = vmatpush1.msra.mxu0 %v3235
    %3711 = vmatprep.subr.mxu0 0.0
    %3712 = vmatpush1.msra.mxu0 %v3234
    %3713 = vmatprep.subr.mxu0 0.0
    %3714 = vmatpush1.msra.mxu0 %v3233
    %3715 = vmatprep.subr.mxu0 0.0
    %3716 = vmatpush1.msra.mxu0 %v3232
    %3717 = vmatprep.subr.mxu0 0.0
    %3718 = vmatpush1.msra.mxu0 %v3231
    %3719 = vmatprep.subr.mxu0 0.0
    %3720 = vmatpush1.msra.mxu0 %v3230
    %3721 = vmatprep.subr.mxu0 0.0
    %3722 = vmatpush1.msra.mxu0 %v3229
    %3723 = vmatprep.subr.mxu0 0.0
    %3724 = vmatpush1.msra.mxu0 %v3228
    %3725 = vmatprep.subr.mxu0 0.0
    %3726 = vmatpush1.msra.mxu0 %v3227
    %3727 = vmatprep.subr.mxu0 0.0
    %3728 = vmatpush1.msra.mxu0 %v3226
    %3729 = vmatprep.subr.mxu0 0.0
    %3730 = vmatpush1.msra.mxu0 %v3225
    %3731 = vmatprep.subr.mxu0 0.0
    %3732 = vmatpush1.msra.mxu0 %v3224
    %3733 = vmatprep.subr.mxu0 0.0
    %3734 = vmatpush1.msra.mxu0 %v3223
    %3735 = vmatprep.subr.mxu0 0.0
    %3736 = vmatpush1.msra.mxu0 %v3222
    %3737 = vmatprep.subr.mxu0 0.0
    %3738 = vmatpush1.msra.mxu0 %v3221
    %3739 = vmatprep.subr.mxu0 0.0
    %3740 = vmatpush2.msra.mxu0 0.0
    %3741 = vmatprep.subr.mxu0 0.0
    %3742 = vmatpush2.msra.mxu0 0.0
    %3743 = vmatprep.subr.mxu0 0.0
    %3744 = vmatpush2.msra.mxu0 0.0
    %3745 = vmatprep.subr.mxu0 0.0
    %3746 = vmatpush2.msra.mxu0 0.0
    %3747 = vmatprep.subr.mxu0 0.0
    %3748 = vmatpush2.msra.mxu0 0.0
    %3749 = vmatprep.subr.mxu0 0.0
    %3750 = vmatpush2.msra.mxu0 0.0
    %3751 = vmatprep.subr.mxu0 0.0
    %3752 = vmatpush2.msra.mxu0 0.0
    %3753 = vmatprep.subr.mxu0 0.0
    %3754 = vmatpush2.msra.mxu0 0.0
    %3755 = vmatprep.subr.mxu0 0.0
    %3756 = vmatpush2.msra.mxu0 0.0
    %3757 = vmatprep.subr.mxu0 0.0
    %3758 = vmatpush2.msra.mxu0 0.0
    %3759 = vmatprep.subr.mxu0 0.0
    %3760 = vmatpush2.msra.mxu0 0.0
    %3761 = vmatprep.subr.mxu0 0.0
    %3762 = vmatpush2.msra.mxu0 0.0
    %3763 = vmatprep.subr.mxu0 0.0
    %3764 = vmatpush2.msra.mxu0 0.0
    %3765 = vmatprep.subr.mxu0 0.0
    %3766 = vmatpush2.msra.mxu0 0.0
    %3767 = vmatprep.subr.mxu0 0.0
    %3768 = vmatpush2.msra.mxu0 0.0
    %3769 = vmatprep.subr.mxu0 0.0
    %3770 = vmatpush2.msra.mxu0 0.0
    %3771 = vmatprep.mubr.f32.mxu0 0.0
    %3772 = vmatmul.mubr.f32.gmra.mxu0 %v3705
    %v3773 = vpop.f32.mrf.mxu0
    %v3774 = vadd.f32 0.0, %v3773
    %v3775 = vpop.f32.mrf.mxu0
    %3776 = vdwg.mxu0
    %v3778 = vrot.slane %v3774, 2
    %v3780 = vadd.f32 %v3218, %v3778
    %v3781 = vtanh.pop %v3780
    %3782 = vst [vmem:[#allocation2 + $0x8] sm:$0xc0] %v3781
    %v3783 = vld [vmem:[#allocation2] sm:$0xff]
    %v3784 = vld [vmem:[#allocation2 + $0x8] sm:$0xff]
    %v3785 = vld [vmem:[#allocation17] sm:$0xff]
    %v3786 = vld [vmem:[#allocation17 + $0x8] sm:$0xff]
    %v3787 = vld [vmem:[#allocation17 + $0x10] sm:$0xff]
    %v3788 = vld [vmem:[#allocation17 + $0x18] sm:$0xff]
    %v3789 = vld [vmem:[#allocation17 + $0x20] sm:$0xff]
    %v3790 = vld [vmem:[#allocation17 + $0x28] sm:$0xff]
    %v3791 = vld [vmem:[#allocation17 + $0x30] sm:$0xff]
    %v3792 = vld [vmem:[#allocation17 + $0x38] sm:$0xff]
    %v3793 = vld [vmem:[#allocation17 + $0x40] sm:$0xff]
    %v3794 = vld [vmem:[#allocation17 + $0x48] sm:$0xff]
    %v3795 = vld [vmem:[#allocation17 + $0x50] sm:$0xff]
    %v3796 = vld [vmem:[#allocation17 + $0x58] sm:$0xff]
    %v3797 = vld [vmem:[#allocation17 + $0x60] sm:$0xff]
    %v3798 = vld [vmem:[#allocation17 + $0x68] sm:$0xff]
    %v3799 = vld [vmem:[#allocation17 + $0x70] sm:$0xff]
    %v3800 = vld [vmem:[#allocation17 + $0x78] sm:$0xff]
    %v3801 = vld [vmem:[%s37] sm:$0x1]
    %v3803 = vlaneseq
    %v3804 = vshrl.u32 %v3803, 7
    %v3805 = vsub.s32 0, %v3804
    %v3806 = vrot.slane %v3801, %v3805
    %3808 = vmatprep.subr.mxu0 0.0
    %3809 = vmatpush1.msra.mxu0 %v3800
    %3810 = vmatprep.subr.mxu0 0.0
    %3811 = vmatpush1.msra.mxu0 %v3799
    %3812 = vmatprep.subr.mxu0 0.0
    %3813 = vmatpush1.msra.mxu0 %v3798
    %3814 = vmatprep.subr.mxu0 0.0
    %3815 = vmatpush1.msra.mxu0 %v3797
    %3816 = vmatprep.subr.mxu0 0.0
    %3817 = vmatpush1.msra.mxu0 %v3796
    %3818 = vmatprep.subr.mxu0 0.0
    %3819 = vmatpush1.msra.mxu0 %v3795
    %3820 = vmatprep.subr.mxu0 0.0
    %3821 = vmatpush1.msra.mxu0 %v3794
    %3822 = vmatprep.subr.mxu0 0.0
    %3823 = vmatpush1.msra.mxu0 %v3793
    %3824 = vmatprep.subr.mxu0 0.0
    %3825 = vmatpush1.msra.mxu0 %v3792
    %3826 = vmatprep.subr.mxu0 0.0
    %3827 = vmatpush1.msra.mxu0 %v3791
    %3828 = vmatprep.subr.mxu0 0.0
    %3829 = vmatpush1.msra.mxu0 %v3790
    %3830 = vmatprep.subr.mxu0 0.0
    %3831 = vmatpush1.msra.mxu0 %v3789
    %3832 = vmatprep.subr.mxu0 0.0
    %3833 = vmatpush1.msra.mxu0 %v3788
    %3834 = vmatprep.subr.mxu0 0.0
    %3835 = vmatpush1.msra.mxu0 %v3787
    %3836 = vmatprep.subr.mxu0 0.0
    %3837 = vmatpush1.msra.mxu0 %v3786
    %3838 = vmatprep.subr.mxu0 0.0
    %3839 = vmatpush1.msra.mxu0 %v3785
    %3840 = vmatprep.subr.mxu0 0.0
    %3841 = vmatpush2.msra.mxu0 0.0
    %3842 = vmatprep.subr.mxu0 0.0
    %3843 = vmatpush2.msra.mxu0 0.0
    %3844 = vmatprep.subr.mxu0 0.0
    %3845 = vmatpush2.msra.mxu0 0.0
    %3846 = vmatprep.subr.mxu0 0.0
    %3847 = vmatpush2.msra.mxu0 0.0
    %3848 = vmatprep.subr.mxu0 0.0
    %3849 = vmatpush2.msra.mxu0 0.0
    %3850 = vmatprep.subr.mxu0 0.0
    %3851 = vmatpush2.msra.mxu0 0.0
    %3852 = vmatprep.subr.mxu0 0.0
    %3853 = vmatpush2.msra.mxu0 0.0
    %3854 = vmatprep.subr.mxu0 0.0
    %3855 = vmatpush2.msra.mxu0 0.0
    %3856 = vmatprep.subr.mxu0 0.0
    %3857 = vmatpush2.msra.mxu0 0.0
    %3858 = vmatprep.subr.mxu0 0.0
    %3859 = vmatpush2.msra.mxu0 0.0
    %3860 = vmatprep.subr.mxu0 0.0
    %3861 = vmatpush2.msra.mxu0 0.0
    %3862 = vmatprep.subr.mxu0 0.0
    %3863 = vmatpush2.msra.mxu0 0.0
    %3864 = vmatprep.subr.mxu0 0.0
    %3865 = vmatpush2.msra.mxu0 0.0
    %3866 = vmatprep.subr.mxu0 0.0
    %3867 = vmatpush2.msra.mxu0 0.0
    %3868 = vmatprep.subr.mxu0 0.0
    %3869 = vmatpush2.msra.mxu0 0.0
    %3870 = vmatprep.subr.mxu0 0.0
    %3871 = vmatpush2.msra.mxu0 0.0
    %3872 = vmatprep.mubr.f32.mxu0 0.0
    %3873 = vmatmul.mubr.f32.gmra.mxu0 %v3783
    %v3874 = vpop.f32.mrf.mxu0
    %v3875 = vadd.f32 %v3806, %v3874
    %v3876 = vpop.f32.mrf.mxu0
    %3877 = vmatprep.mubr.f32.mxu0 0.0
    %3878 = vmatmul.mubr.f32.gmra.mxu0 %v3784
    %v3879 = vpop.f32.mrf.mxu0
    %v3880 = vadd.f32 %v3806, %v3879
    %v3881 = vpop.f32.mrf.mxu0
    %3882 = vdwg.mxu0
    %v3883 = vld [vmem:[#allocation19] sm:$0xff]
    %v3884 = vld [vmem:[#allocation19 + $0x8] sm:$0xff]
    %v3885 = vld [vmem:[#allocation19 + $0x10] sm:$0xff]
    %v3886 = vld [vmem:[#allocation19 + $0x18] sm:$0xff]
    %v3887 = vld [vmem:[#allocation19 + $0x20] sm:$0xff]
    %v3888 = vld [vmem:[#allocation19 + $0x28] sm:$0xff]
    %v3889 = vld [vmem:[#allocation19 + $0x30] sm:$0xff]
    %v3890 = vld [vmem:[#allocation19 + $0x38] sm:$0xff]
    %v3891 = vld [vmem:[#allocation19 + $0x40] sm:$0xff]
    %v3892 = vld [vmem:[#allocation19 + $0x48] sm:$0xff]
    %v3893 = vld [vmem:[#allocation19 + $0x50] sm:$0xff]
    %v3894 = vld [vmem:[#allocation19 + $0x58] sm:$0xff]
    %v3895 = vld [vmem:[#allocation19 + $0x60] sm:$0xff]
    %v3896 = vld [vmem:[#allocation19 + $0x68] sm:$0xff]
    %v3897 = vld [vmem:[#allocation19 + $0x70] sm:$0xff]
    %v3898 = vld [vmem:[#allocation19 + $0x78] sm:$0xff]
    %v3899 = vtanh.pop %v3875
    %3900 = vst [vmem:[#allocation2] sm:$0x3] %v3899
    %3901 = vmatprep.subr.mxu0 0.0
    %3902 = vmatpush1.msra.mxu0 %v3898
    %3903 = vmatprep.subr.mxu0 0.0
    %3904 = vmatpush1.msra.mxu0 %v3897
    %3905 = vmatprep.subr.mxu0 0.0
    %3906 = vmatpush1.msra.mxu0 %v3896
    %3907 = vmatprep.subr.mxu0 0.0
    %3908 = vmatpush1.msra.mxu0 %v3895
    %3909 = vmatprep.subr.mxu0 0.0
    %3910 = vmatpush1.msra.mxu0 %v3894
    %3911 = vmatprep.subr.mxu0 0.0
    %3912 = vmatpush1.msra.mxu0 %v3893
    %3913 = vmatprep.subr.mxu0 0.0
    %3914 = vmatpush1.msra.mxu0 %v3892
    %3915 = vmatprep.subr.mxu0 0.0
    %3916 = vmatpush1.msra.mxu0 %v3891
    %3917 = vmatprep.subr.mxu0 0.0
    %3918 = vmatpush1.msra.mxu0 %v3890
    %3919 = vmatprep.subr.mxu0 0.0
    %3920 = vmatpush1.msra.mxu0 %v3889
    %3921 = vmatprep.subr.mxu0 0.0
    %3922 = vmatpush1.msra.mxu0 %v3888
    %3923 = vmatprep.subr.mxu0 0.0
    %3924 = vmatpush1.msra.mxu0 %v3887
    %3925 = vmatprep.subr.mxu0 0.0
    %3926 = vmatpush1.msra.mxu0 %v3886
    %3927 = vmatprep.subr.mxu0 0.0
    %3928 = vmatpush1.msra.mxu0 %v3885
    %3929 = vmatprep.subr.mxu0 0.0
    %3930 = vmatpush1.msra.mxu0 %v3884
    %3931 = vmatprep.subr.mxu0 0.0
    %3932 = vmatpush1.msra.mxu0 %v3883
    %3933 = vmatprep.subr.mxu0 0.0
    %3934 = vmatpush2.msra.mxu0 0.0
    %3935 = vmatprep.subr.mxu0 0.0
    %3936 = vmatpush2.msra.mxu0 0.0
    %3937 = vmatprep.subr.mxu0 0.0
    %3938 = vmatpush2.msra.mxu0 0.0
    %3939 = vmatprep.subr.mxu0 0.0
    %3940 = vmatpush2.msra.mxu0 0.0
    %3941 = vmatprep.subr.mxu0 0.0
    %3942 = vmatpush2.msra.mxu0 0.0
    %3943 = vmatprep.subr.mxu0 0.0
    %3944 = vmatpush2.msra.mxu0 0.0
    %3945 = vmatprep.subr.mxu0 0.0
    %3946 = vmatpush2.msra.mxu0 0.0
    %3947 = vmatprep.subr.mxu0 0.0
    %3948 = vmatpush2.msra.mxu0 0.0
    %3949 = vmatprep.subr.mxu0 0.0
    %3950 = vmatpush2.msra.mxu0 0.0
    %3951 = vmatprep.subr.mxu0 0.0
    %3952 = vmatpush2.msra.mxu0 0.0
    %3953 = vmatprep.subr.mxu0 0.0
    %3954 = vmatpush2.msra.mxu0 0.0
    %3955 = vmatprep.subr.mxu0 0.0
    %3956 = vmatpush2.msra.mxu0 0.0
    %3957 = vmatprep.subr.mxu0 0.0
    %3958 = vmatpush2.msra.mxu0 0.0
    %3959 = vmatprep.subr.mxu0 0.0
    %3960 = vmatpush2.msra.mxu0 0.0
    %3961 = vmatprep.subr.mxu0 0.0
    %3962 = vmatpush2.msra.mxu0 0.0
    %3963 = vmatprep.subr.mxu0 0.0
    %3964 = vmatpush2.msra.mxu0 0.0
    %3965 = vmatprep.mubr.f32.mxu0 0.0
    %3966 = vmatmul.mubr.f32.gmra.mxu0 %v3899
    %v3967 = vpop.f32.mrf.mxu0
    %v3968 = vadd.f32 0.0, %v3967
    %v3969 = vpop.f32.mrf.mxu0
    %3970 = vdwg.mxu0
    %v3972 = vrot.slane %v3968, 6
    %v3974 = vadd.f32 %v3875, %v3972
    %v3975 = vtanh.pop %v3974
    %3976 = vst [vmem:[#allocation2] sm:$0xc] %v3975
    %v3978 = vrot.slane %v3975, 2
    %3980 = vmatprep.subr.mxu0 0.0
    %3981 = vmatpush1.msra.mxu0 %v3898
    %3982 = vmatprep.subr.mxu0 0.0
    %3983 = vmatpush1.msra.mxu0 %v3897
    %3984 = vmatprep.subr.mxu0 0.0
    %3985 = vmatpush1.msra.mxu0 %v3896
    %3986 = vmatprep.subr.mxu0 0.0
    %3987 = vmatpush1.msra.mxu0 %v3895
    %3988 = vmatprep.subr.mxu0 0.0
    %3989 = vmatpush1.msra.mxu0 %v3894
    %3990 = vmatprep.subr.mxu0 0.0
    %3991 = vmatpush1.msra.mxu0 %v3893
    %3992 = vmatprep.subr.mxu0 0.0
    %3993 = vmatpush1.msra.mxu0 %v3892
    %3994 = vmatprep.subr.mxu0 0.0
    %3995 = vmatpush1.msra.mxu0 %v3891
    %3996 = vmatprep.subr.mxu0 0.0
    %3997 = vmatpush1.msra.mxu0 %v3890
    %3998 = vmatprep.subr.mxu0 0.0
    %3999 = vmatpush1.msra.mxu0 %v3889
    %4000 = vmatprep.subr.mxu0 0.0
    %4001 = vmatpush1.msra.mxu0 %v3888
    %4002 = vmatprep.subr.mxu0 0.0
    %4003 = vmatpush1.msra.mxu0 %v3887
    %4004 = vmatprep.subr.mxu0 0.0
    %4005 = vmatpush1.msra.mxu0 %v3886
    %4006 = vmatprep.subr.mxu0 0.0
    %4007 = vmatpush1.msra.mxu0 %v3885
    %4008 = vmatprep.subr.mxu0 0.0
    %4009 = vmatpush1.msra.mxu0 %v3884
    %4010 = vmatprep.subr.mxu0 0.0
    %4011 = vmatpush1.msra.mxu0 %v3883
    %4012 = vmatprep.subr.mxu0 0.0
    %4013 = vmatpush2.msra.mxu0 0.0
    %4014 = vmatprep.subr.mxu0 0.0
    %4015 = vmatpush2.msra.mxu0 0.0
    %4016 = vmatprep.subr.mxu0 0.0
    %4017 = vmatpush2.msra.mxu0 0.0
    %4018 = vmatprep.subr.mxu0 0.0
    %4019 = vmatpush2.msra.mxu0 0.0
    %4020 = vmatprep.subr.mxu0 0.0
    %4021 = vmatpush2.msra.mxu0 0.0
    %4022 = vmatprep.subr.mxu0 0.0
    %4023 = vmatpush2.msra.mxu0 0.0
    %4024 = vmatprep.subr.mxu0 0.0
    %4025 = vmatpush2.msra.mxu0 0.0
    %4026 = vmatprep.subr.mxu0 0.0
    %4027 = vmatpush2.msra.mxu0 0.0
    %4028 = vmatprep.subr.mxu0 0.0
    %4029 = vmatpush2.msra.mxu0 0.0
    %4030 = vmatprep.subr.mxu0 0.0
    %4031 = vmatpush2.msra.mxu0 0.0
    %4032 = vmatprep.subr.mxu0 0.0
    %4033 = vmatpush2.msra.mxu0 0.0
    %4034 = vmatprep.subr.mxu0 0.0
    %4035 = vmatpush2.msra.mxu0 0.0
    %4036 = vmatprep.subr.mxu0 0.0
    %4037 = vmatpush2.msra.mxu0 0.0
    %4038 = vmatprep.subr.mxu0 0.0
    %4039 = vmatpush2.msra.mxu0 0.0
    %4040 = vmatprep.subr.mxu0 0.0
    %4041 = vmatpush2.msra.mxu0 0.0
    %4042 = vmatprep.subr.mxu0 0.0
    %4043 = vmatpush2.msra.mxu0 0.0
    %4044 = vmatprep.mubr.f32.mxu0 0.0
    %4045 = vmatmul.mubr.f32.gmra.mxu0 %v3978
    %v4046 = vpop.f32.mrf.mxu0
    %v4047 = vadd.f32 0.0, %v4046
    %v4048 = vpop.f32.mrf.mxu0
    %4049 = vdwg.mxu0
    %v4051 = vrot.slane %v4047, 4
    %v4053 = vadd.f32 %v3875, %v4051
    %v4054 = vtanh.pop %v4053
    %4055 = vst [vmem:[#allocation2] sm:$0x30] %v4054
    %v4057 = vrot.slane %v4054, 4
    %4059 = vmatprep.subr.mxu0 0.0
    %4060 = vmatpush1.msra.mxu0 %v3898
    %4061 = vmatprep.subr.mxu0 0.0
    %4062 = vmatpush1.msra.mxu0 %v3897
    %4063 = vmatprep.subr.mxu0 0.0
    %4064 = vmatpush1.msra.mxu0 %v3896
    %4065 = vmatprep.subr.mxu0 0.0
    %4066 = vmatpush1.msra.mxu0 %v3895
    %4067 = vmatprep.subr.mxu0 0.0
    %4068 = vmatpush1.msra.mxu0 %v3894
    %4069 = vmatprep.subr.mxu0 0.0
    %4070 = vmatpush1.msra.mxu0 %v3893
    %4071 = vmatprep.subr.mxu0 0.0
    %4072 = vmatpush1.msra.mxu0 %v3892
    %4073 = vmatprep.subr.mxu0 0.0
    %4074 = vmatpush1.msra.mxu0 %v3891
    %4075 = vmatprep.subr.mxu0 0.0
    %4076 = vmatpush1.msra.mxu0 %v3890
    %4077 = vmatprep.subr.mxu0 0.0
    %4078 = vmatpush1.msra.mxu0 %v3889
    %4079 = vmatprep.subr.mxu0 0.0
    %4080 = vmatpush1.msra.mxu0 %v3888
    %4081 = vmatprep.subr.mxu0 0.0
    %4082 = vmatpush1.msra.mxu0 %v3887
    %4083 = vmatprep.subr.mxu0 0.0
    %4084 = vmatpush1.msra.mxu0 %v3886
    %4085 = vmatprep.subr.mxu0 0.0
    %4086 = vmatpush1.msra.mxu0 %v3885
    %4087 = vmatprep.subr.mxu0 0.0
    %4088 = vmatpush1.msra.mxu0 %v3884
    %4089 = vmatprep.subr.mxu0 0.0
    %4090 = vmatpush1.msra.mxu0 %v3883
    %4091 = vmatprep.subr.mxu0 0.0
    %4092 = vmatpush2.msra.mxu0 0.0
    %4093 = vmatprep.subr.mxu0 0.0
    %4094 = vmatpush2.msra.mxu0 0.0
    %4095 = vmatprep.subr.mxu0 0.0
    %4096 = vmatpush2.msra.mxu0 0.0
    %4097 = vmatprep.subr.mxu0 0.0
    %4098 = vmatpush2.msra.mxu0 0.0
    %4099 = vmatprep.subr.mxu0 0.0
    %4100 = vmatpush2.msra.mxu0 0.0
    %4101 = vmatprep.subr.mxu0 0.0
    %4102 = vmatpush2.msra.mxu0 0.0
    %4103 = vmatprep.subr.mxu0 0.0
    %4104 = vmatpush2.msra.mxu0 0.0
    %4105 = vmatprep.subr.mxu0 0.0
    %4106 = vmatpush2.msra.mxu0 0.0
    %4107 = vmatprep.subr.mxu0 0.0
    %4108 = vmatpush2.msra.mxu0 0.0
    %4109 = vmatprep.subr.mxu0 0.0
    %4110 = vmatpush2.msra.mxu0 0.0
    %4111 = vmatprep.subr.mxu0 0.0
    %4112 = vmatpush2.msra.mxu0 0.0
    %4113 = vmatprep.subr.mxu0 0.0
    %4114 = vmatpush2.msra.mxu0 0.0
    %4115 = vmatprep.subr.mxu0 0.0
    %4116 = vmatpush2.msra.mxu0 0.0
    %4117 = vmatprep.subr.mxu0 0.0
    %4118 = vmatpush2.msra.mxu0 0.0
    %4119 = vmatprep.subr.mxu0 0.0
    %4120 = vmatpush2.msra.mxu0 0.0
    %4121 = vmatprep.subr.mxu0 0.0
    %4122 = vmatpush2.msra.mxu0 0.0
    %4123 = vmatprep.mubr.f32.mxu0 0.0
    %4124 = vmatmul.mubr.f32.gmra.mxu0 %v4057
    %v4125 = vpop.f32.mrf.mxu0
    %v4126 = vadd.f32 0.0, %v4125
    %v4127 = vpop.f32.mrf.mxu0
    %4128 = vdwg.mxu0
    %v4130 = vrot.slane %v4126, 2
    %v4132 = vadd.f32 %v3875, %v4130
    %v4133 = vtanh.pop %v4132
    %4134 = vst [vmem:[#allocation2] sm:$0xc0] %v4133
    %v4136 = vrot.slane %v4133, 6
    %4138 = vmatprep.subr.mxu0 0.0
    %4139 = vmatpush1.msra.mxu0 %v3898
    %4140 = vmatprep.subr.mxu0 0.0
    %4141 = vmatpush1.msra.mxu0 %v3897
    %4142 = vmatprep.subr.mxu0 0.0
    %4143 = vmatpush1.msra.mxu0 %v3896
    %4144 = vmatprep.subr.mxu0 0.0
    %4145 = vmatpush1.msra.mxu0 %v3895
    %4146 = vmatprep.subr.mxu0 0.0
    %4147 = vmatpush1.msra.mxu0 %v3894
    %4148 = vmatprep.subr.mxu0 0.0
    %4149 = vmatpush1.msra.mxu0 %v3893
    %4150 = vmatprep.subr.mxu0 0.0
    %4151 = vmatpush1.msra.mxu0 %v3892
    %4152 = vmatprep.subr.mxu0 0.0
    %4153 = vmatpush1.msra.mxu0 %v3891
    %4154 = vmatprep.subr.mxu0 0.0
    %4155 = vmatpush1.msra.mxu0 %v3890
    %4156 = vmatprep.subr.mxu0 0.0
    %4157 = vmatpush1.msra.mxu0 %v3889
    %4158 = vmatprep.subr.mxu0 0.0
    %4159 = vmatpush1.msra.mxu0 %v3888
    %4160 = vmatprep.subr.mxu0 0.0
    %4161 = vmatpush1.msra.mxu0 %v3887
    %4162 = vmatprep.subr.mxu0 0.0
    %4163 = vmatpush1.msra.mxu0 %v3886
    %4164 = vmatprep.subr.mxu0 0.0
    %4165 = vmatpush1.msra.mxu0 %v3885
    %4166 = vmatprep.subr.mxu0 0.0
    %4167 = vmatpush1.msra.mxu0 %v3884
    %4168 = vmatprep.subr.mxu0 0.0
    %4169 = vmatpush1.msra.mxu0 %v3883
    %4170 = vmatprep.subr.mxu0 0.0
    %4171 = vmatpush2.msra.mxu0 0.0
    %4172 = vmatprep.subr.mxu0 0.0
    %4173 = vmatpush2.msra.mxu0 0.0
    %4174 = vmatprep.subr.mxu0 0.0
    %4175 = vmatpush2.msra.mxu0 0.0
    %4176 = vmatprep.subr.mxu0 0.0
    %4177 = vmatpush2.msra.mxu0 0.0
    %4178 = vmatprep.subr.mxu0 0.0
    %4179 = vmatpush2.msra.mxu0 0.0
    %4180 = vmatprep.subr.mxu0 0.0
    %4181 = vmatpush2.msra.mxu0 0.0
    %4182 = vmatprep.subr.mxu0 0.0
    %4183 = vmatpush2.msra.mxu0 0.0
    %4184 = vmatprep.subr.mxu0 0.0
    %4185 = vmatpush2.msra.mxu0 0.0
    %4186 = vmatprep.subr.mxu0 0.0
    %4187 = vmatpush2.msra.mxu0 0.0
    %4188 = vmatprep.subr.mxu0 0.0
    %4189 = vmatpush2.msra.mxu0 0.0
    %4190 = vmatprep.subr.mxu0 0.0
    %4191 = vmatpush2.msra.mxu0 0.0
    %4192 = vmatprep.subr.mxu0 0.0
    %4193 = vmatpush2.msra.mxu0 0.0
    %4194 = vmatprep.subr.mxu0 0.0
    %4195 = vmatpush2.msra.mxu0 0.0
    %4196 = vmatprep.subr.mxu0 0.0
    %4197 = vmatpush2.msra.mxu0 0.0
    %4198 = vmatprep.subr.mxu0 0.0
    %4199 = vmatpush2.msra.mxu0 0.0
    %4200 = vmatprep.subr.mxu0 0.0
    %4201 = vmatpush2.msra.mxu0 0.0
    %4202 = vmatprep.mubr.f32.mxu0 0.0
    %4203 = vmatmul.mubr.f32.gmra.mxu0 %v4136
    %v4204 = vpop.f32.mrf.mxu0
    %v4205 = vadd.f32 0.0, %v4204
    %v4206 = vpop.f32.mrf.mxu0
    %4207 = vdwg.mxu0
    %v4208 = vadd.f32 %v3880, %v4205
    %v4209 = vtanh.pop %v4208
    %4210 = vst [vmem:[#allocation2 + $0x8] sm:$0x3] %v4209
    %4211 = vmatprep.subr.mxu0 0.0
    %4212 = vmatpush1.msra.mxu0 %v3898
    %4213 = vmatprep.subr.mxu0 0.0
    %4214 = vmatpush1.msra.mxu0 %v3897
    %4215 = vmatprep.subr.mxu0 0.0
    %4216 = vmatpush1.msra.mxu0 %v3896
    %4217 = vmatprep.subr.mxu0 0.0
    %4218 = vmatpush1.msra.mxu0 %v3895
    %4219 = vmatprep.subr.mxu0 0.0
    %4220 = vmatpush1.msra.mxu0 %v3894
    %4221 = vmatprep.subr.mxu0 0.0
    %4222 = vmatpush1.msra.mxu0 %v3893
    %4223 = vmatprep.subr.mxu0 0.0
    %4224 = vmatpush1.msra.mxu0 %v3892
    %4225 = vmatprep.subr.mxu0 0.0
    %4226 = vmatpush1.msra.mxu0 %v3891
    %4227 = vmatprep.subr.mxu0 0.0
    %4228 = vmatpush1.msra.mxu0 %v3890
    %4229 = vmatprep.subr.mxu0 0.0
    %4230 = vmatpush1.msra.mxu0 %v3889
    %4231 = vmatprep.subr.mxu0 0.0
    %4232 = vmatpush1.msra.mxu0 %v3888
    %4233 = vmatprep.subr.mxu0 0.0
    %4234 = vmatpush1.msra.mxu0 %v3887
    %4235 = vmatprep.subr.mxu0 0.0
    %4236 = vmatpush1.msra.mxu0 %v3886
    %4237 = vmatprep.subr.mxu0 0.0
    %4238 = vmatpush1.msra.mxu0 %v3885
    %4239 = vmatprep.subr.mxu0 0.0
    %4240 = vmatpush1.msra.mxu0 %v3884
    %4241 = vmatprep.subr.mxu0 0.0
    %4242 = vmatpush1.msra.mxu0 %v3883
    %4243 = vmatprep.subr.mxu0 0.0
    %4244 = vmatpush2.msra.mxu0 0.0
    %4245 = vmatprep.subr.mxu0 0.0
    %4246 = vmatpush2.msra.mxu0 0.0
    %4247 = vmatprep.subr.mxu0 0.0
    %4248 = vmatpush2.msra.mxu0 0.0
    %4249 = vmatprep.subr.mxu0 0.0
    %4250 = vmatpush2.msra.mxu0 0.0
    %4251 = vmatprep.subr.mxu0 0.0
    %4252 = vmatpush2.msra.mxu0 0.0
    %4253 = vmatprep.subr.mxu0 0.0
    %4254 = vmatpush2.msra.mxu0 0.0
    %4255 = vmatprep.subr.mxu0 0.0
    %4256 = vmatpush2.msra.mxu0 0.0
    %4257 = vmatprep.subr.mxu0 0.0
    %4258 = vmatpush2.msra.mxu0 0.0
    %4259 = vmatprep.subr.mxu0 0.0
    %4260 = vmatpush2.msra.mxu0 0.0
    %4261 = vmatprep.subr.mxu0 0.0
    %4262 = vmatpush2.msra.mxu0 0.0
    %4263 = vmatprep.subr.mxu0 0.0
    %4264 = vmatpush2.msra.mxu0 0.0
    %4265 = vmatprep.subr.mxu0 0.0
    %4266 = vmatpush2.msra.mxu0 0.0
    %4267 = vmatprep.subr.mxu0 0.0
    %4268 = vmatpush2.msra.mxu0 0.0
    %4269 = vmatprep.subr.mxu0 0.0
    %4270 = vmatpush2.msra.mxu0 0.0
    %4271 = vmatprep.subr.mxu0 0.0
    %4272 = vmatpush2.msra.mxu0 0.0
    %4273 = vmatprep.subr.mxu0 0.0
    %4274 = vmatpush2.msra.mxu0 0.0
    %4275 = vmatprep.mubr.f32.mxu0 0.0
    %4276 = vmatmul.mubr.f32.gmra.mxu0 %v4209
    %v4277 = vpop.f32.mrf.mxu0
    %v4278 = vadd.f32 0.0, %v4277
    %v4279 = vpop.f32.mrf.mxu0
    %4280 = vdwg.mxu0
    %v4282 = vrot.slane %v4278, 6
    %v4284 = vadd.f32 %v3880, %v4282
    %v4285 = vtanh.pop %v4284
    %4286 = vst [vmem:[#allocation2 + $0x8] sm:$0xc] %v4285
    %v4288 = vrot.slane %v4285, 2
    %4290 = vmatprep.subr.mxu0 0.0
    %4291 = vmatpush1.msra.mxu0 %v3898
    %4292 = vmatprep.subr.mxu0 0.0
    %4293 = vmatpush1.msra.mxu0 %v3897
    %4294 = vmatprep.subr.mxu0 0.0
    %4295 = vmatpush1.msra.mxu0 %v3896
    %4296 = vmatprep.subr.mxu0 0.0
    %4297 = vmatpush1.msra.mxu0 %v3895
    %4298 = vmatprep.subr.mxu0 0.0
    %4299 = vmatpush1.msra.mxu0 %v3894
    %4300 = vmatprep.subr.mxu0 0.0
    %4301 = vmatpush1.msra.mxu0 %v3893
    %4302 = vmatprep.subr.mxu0 0.0
    %4303 = vmatpush1.msra.mxu0 %v3892
    %4304 = vmatprep.subr.mxu0 0.0
    %4305 = vmatpush1.msra.mxu0 %v3891
    %4306 = vmatprep.subr.mxu0 0.0
    %4307 = vmatpush1.msra.mxu0 %v3890
    %4308 = vmatprep.subr.mxu0 0.0
    %4309 = vmatpush1.msra.mxu0 %v3889
    %4310 = vmatprep.subr.mxu0 0.0
    %4311 = vmatpush1.msra.mxu0 %v3888
    %4312 = vmatprep.subr.mxu0 0.0
    %4313 = vmatpush1.msra.mxu0 %v3887
    %4314 = vmatprep.subr.mxu0 0.0
    %4315 = vmatpush1.msra.mxu0 %v3886
    %4316 = vmatprep.subr.mxu0 0.0
    %4317 = vmatpush1.msra.mxu0 %v3885
    %4318 = vmatprep.subr.mxu0 0.0
    %4319 = vmatpush1.msra.mxu0 %v3884
    %4320 = vmatprep.subr.mxu0 0.0
    %4321 = vmatpush1.msra.mxu0 %v3883
    %4322 = vmatprep.subr.mxu0 0.0
    %4323 = vmatpush2.msra.mxu0 0.0
    %4324 = vmatprep.subr.mxu0 0.0
    %4325 = vmatpush2.msra.mxu0 0.0
    %4326 = vmatprep.subr.mxu0 0.0
    %4327 = vmatpush2.msra.mxu0 0.0
    %4328 = vmatprep.subr.mxu0 0.0
    %4329 = vmatpush2.msra.mxu0 0.0
    %4330 = vmatprep.subr.mxu0 0.0
    %4331 = vmatpush2.msra.mxu0 0.0
    %4332 = vmatprep.subr.mxu0 0.0
    %4333 = vmatpush2.msra.mxu0 0.0
    %4334 = vmatprep.subr.mxu0 0.0
    %4335 = vmatpush2.msra.mxu0 0.0
    %4336 = vmatprep.subr.mxu0 0.0
    %4337 = vmatpush2.msra.mxu0 0.0
    %4338 = vmatprep.subr.mxu0 0.0
    %4339 = vmatpush2.msra.mxu0 0.0
    %4340 = vmatprep.subr.mxu0 0.0
    %4341 = vmatpush2.msra.mxu0 0.0
    %4342 = vmatprep.subr.mxu0 0.0
    %4343 = vmatpush2.msra.mxu0 0.0
    %4344 = vmatprep.subr.mxu0 0.0
    %4345 = vmatpush2.msra.mxu0 0.0
    %4346 = vmatprep.subr.mxu0 0.0
    %4347 = vmatpush2.msra.mxu0 0.0
    %4348 = vmatprep.subr.mxu0 0.0
    %4349 = vmatpush2.msra.mxu0 0.0
    %4350 = vmatprep.subr.mxu0 0.0
    %4351 = vmatpush2.msra.mxu0 0.0
    %4352 = vmatprep.subr.mxu0 0.0
    %4353 = vmatpush2.msra.mxu0 0.0
    %4354 = vmatprep.mubr.f32.mxu0 0.0
    %4355 = vmatmul.mubr.f32.gmra.mxu0 %v4288
    %v4356 = vpop.f32.mrf.mxu0
    %v4357 = vadd.f32 0.0, %v4356
    %v4358 = vpop.f32.mrf.mxu0
    %4359 = vdwg.mxu0
    %v4361 = vrot.slane %v4357, 4
    %v4363 = vadd.f32 %v3880, %v4361
    %v4364 = vtanh.pop %v4363
    %4365 = vst [vmem:[#allocation2 + $0x8] sm:$0x30] %v4364
    %v4367 = vrot.slane %v4364, 4
    %4369 = vmatprep.subr.mxu0 0.0
    %4370 = vmatpush1.msra.mxu0 %v3898
    %4371 = vmatprep.subr.mxu0 0.0
    %4372 = vmatpush1.msra.mxu0 %v3897
    %4373 = vmatprep.subr.mxu0 0.0
    %4374 = vmatpush1.msra.mxu0 %v3896
    %4375 = vmatprep.subr.mxu0 0.0
    %4376 = vmatpush1.msra.mxu0 %v3895
    %4377 = vmatprep.subr.mxu0 0.0
    %4378 = vmatpush1.msra.mxu0 %v3894
    %4379 = vmatprep.subr.mxu0 0.0
    %4380 = vmatpush1.msra.mxu0 %v3893
    %4381 = vmatprep.subr.mxu0 0.0
    %4382 = vmatpush1.msra.mxu0 %v3892
    %4383 = vmatprep.subr.mxu0 0.0
    %4384 = vmatpush1.msra.mxu0 %v3891
    %4385 = vmatprep.subr.mxu0 0.0
    %4386 = vmatpush1.msra.mxu0 %v3890
    %4387 = vmatprep.subr.mxu0 0.0
    %4388 = vmatpush1.msra.mxu0 %v3889
    %4389 = vmatprep.subr.mxu0 0.0
    %4390 = vmatpush1.msra.mxu0 %v3888
    %4391 = vmatprep.subr.mxu0 0.0
    %4392 = vmatpush1.msra.mxu0 %v3887
    %4393 = vmatprep.subr.mxu0 0.0
    %4394 = vmatpush1.msra.mxu0 %v3886
    %4395 = vmatprep.subr.mxu0 0.0
    %4396 = vmatpush1.msra.mxu0 %v3885
    %4397 = vmatprep.subr.mxu0 0.0
    %4398 = vmatpush1.msra.mxu0 %v3884
    %4399 = vmatprep.subr.mxu0 0.0
    %4400 = vmatpush1.msra.mxu0 %v3883
    %4401 = vmatprep.subr.mxu0 0.0
    %4402 = vmatpush2.msra.mxu0 0.0
    %4403 = vmatprep.subr.mxu0 0.0
    %4404 = vmatpush2.msra.mxu0 0.0
    %4405 = vmatprep.subr.mxu0 0.0
    %4406 = vmatpush2.msra.mxu0 0.0
    %4407 = vmatprep.subr.mxu0 0.0
    %4408 = vmatpush2.msra.mxu0 0.0
    %4409 = vmatprep.subr.mxu0 0.0
    %4410 = vmatpush2.msra.mxu0 0.0
    %4411 = vmatprep.subr.mxu0 0.0
    %4412 = vmatpush2.msra.mxu0 0.0
    %4413 = vmatprep.subr.mxu0 0.0
    %4414 = vmatpush2.msra.mxu0 0.0
    %4415 = vmatprep.subr.mxu0 0.0
    %4416 = vmatpush2.msra.mxu0 0.0
    %4417 = vmatprep.subr.mxu0 0.0
    %4418 = vmatpush2.msra.mxu0 0.0
    %4419 = vmatprep.subr.mxu0 0.0
    %4420 = vmatpush2.msra.mxu0 0.0
    %4421 = vmatprep.subr.mxu0 0.0
    %4422 = vmatpush2.msra.mxu0 0.0
    %4423 = vmatprep.subr.mxu0 0.0
    %4424 = vmatpush2.msra.mxu0 0.0
    %4425 = vmatprep.subr.mxu0 0.0
    %4426 = vmatpush2.msra.mxu0 0.0
    %4427 = vmatprep.subr.mxu0 0.0
    %4428 = vmatpush2.msra.mxu0 0.0
    %4429 = vmatprep.subr.mxu0 0.0
    %4430 = vmatpush2.msra.mxu0 0.0
    %4431 = vmatprep.subr.mxu0 0.0
    %4432 = vmatpush2.msra.mxu0 0.0
    %4433 = vmatprep.mubr.f32.mxu0 0.0
    %4434 = vmatmul.mubr.f32.gmra.mxu0 %v4367
    %v4435 = vpop.f32.mrf.mxu0
    %v4436 = vadd.f32 0.0, %v4435
    %v4437 = vpop.f32.mrf.mxu0
    %4438 = vdwg.mxu0
    %v4440 = vrot.slane %v4436, 2
    %v4442 = vadd.f32 %v3880, %v4440
    %v4443 = vtanh.pop %v4442
    %4444 = vst [vmem:[#allocation2 + $0x8] sm:$0xc0] %v4443
    %v4445 = vld [vmem:[#allocation2] sm:$0xff]
    %v4446 = vld [vmem:[#allocation2 + $0x8] sm:$0xff]
    %v4447 = vadd.f32 %v2459, %v4445
    %v4448 = vadd.f32 %v2460, %v4446
    %v4449 = vld [vmem:[#allocation20] sm:$0xff]
    %v4450 = vld [vmem:[#allocation20 + $0x8] sm:$0xff]
    %v4451 = vld [vmem:[#allocation20 + $0x10] sm:$0xff]
    %v4452 = vld [vmem:[#allocation20 + $0x18] sm:$0xff]
    %v4453 = vld [vmem:[#allocation20 + $0x20] sm:$0xff]
    %v4454 = vld [vmem:[#allocation20 + $0x28] sm:$0xff]
    %v4455 = vld [vmem:[#allocation20 + $0x30] sm:$0xff]
    %v4456 = vld [vmem:[#allocation20 + $0x38] sm:$0xff]
    %v4457 = vld [vmem:[#allocation20 + $0x40] sm:$0xff]
    %v4458 = vld [vmem:[#allocation20 + $0x48] sm:$0xff]
    %v4459 = vld [vmem:[#allocation20 + $0x50] sm:$0xff]
    %v4460 = vld [vmem:[#allocation20 + $0x58] sm:$0xff]
    %v4461 = vld [vmem:[#allocation20 + $0x60] sm:$0xff]
    %v4462 = vld [vmem:[#allocation20 + $0x68] sm:$0xff]
    %v4463 = vld [vmem:[#allocation20 + $0x70] sm:$0xff]
    %v4464 = vld [vmem:[#allocation20 + $0x78] sm:$0xff]
    %v4465 = vld [vmem:[%s43] sm:$0x1]
    %v4467 = vlaneseq
    %v4468 = vshrl.u32 %v4467, 7
    %v4469 = vsub.s32 0, %v4468
    %v4470 = vrot.slane %v4465, %v4469
    %4472 = vmatprep.subr.mxu0 0.0
    %4473 = vmatpush1.msra.mxu0 %v4464
    %4474 = vmatprep.subr.mxu0 0.0
    %4475 = vmatpush1.msra.mxu0 %v4463
    %4476 = vmatprep.subr.mxu0 0.0
    %4477 = vmatpush1.msra.mxu0 %v4462
    %4478 = vmatprep.subr.mxu0 0.0
    %4479 = vmatpush1.msra.mxu0 %v4461
    %4480 = vmatprep.subr.mxu0 0.0
    %4481 = vmatpush1.msra.mxu0 %v4460
    %4482 = vmatprep.subr.mxu0 0.0
    %4483 = vmatpush1.msra.mxu0 %v4459
    %4484 = vmatprep.subr.mxu0 0.0
    %4485 = vmatpush1.msra.mxu0 %v4458
    %4486 = vmatprep.subr.mxu0 0.0
    %4487 = vmatpush1.msra.mxu0 %v4457
    %4488 = vmatprep.subr.mxu0 0.0
    %4489 = vmatpush1.msra.mxu0 %v4456
    %4490 = vmatprep.subr.mxu0 0.0
    %4491 = vmatpush1.msra.mxu0 %v4455
    %4492 = vmatprep.subr.mxu0 0.0
    %4493 = vmatpush1.msra.mxu0 %v4454
    %4494 = vmatprep.subr.mxu0 0.0
    %4495 = vmatpush1.msra.mxu0 %v4453
    %4496 = vmatprep.subr.mxu0 0.0
    %4497 = vmatpush1.msra.mxu0 %v4452
    %4498 = vmatprep.subr.mxu0 0.0
    %4499 = vmatpush1.msra.mxu0 %v4451
    %4500 = vmatprep.subr.mxu0 0.0
    %4501 = vmatpush1.msra.mxu0 %v4450
    %4502 = vmatprep.subr.mxu0 0.0
    %4503 = vmatpush1.msra.mxu0 %v4449
    %4504 = vmatprep.subr.mxu0 0.0
    %4505 = vmatpush2.msra.mxu0 0.0
    %4506 = vmatprep.subr.mxu0 0.0
    %4507 = vmatpush2.msra.mxu0 0.0
    %4508 = vmatprep.subr.mxu0 0.0
    %4509 = vmatpush2.msra.mxu0 0.0
    %4510 = vmatprep.subr.mxu0 0.0
    %4511 = vmatpush2.msra.mxu0 0.0
    %4512 = vmatprep.subr.mxu0 0.0
    %4513 = vmatpush2.msra.mxu0 0.0
    %4514 = vmatprep.subr.mxu0 0.0
    %4515 = vmatpush2.msra.mxu0 0.0
    %4516 = vmatprep.subr.mxu0 0.0
    %4517 = vmatpush2.msra.mxu0 0.0
    %4518 = vmatprep.subr.mxu0 0.0
    %4519 = vmatpush2.msra.mxu0 0.0
    %4520 = vmatprep.subr.mxu0 0.0
    %4521 = vmatpush2.msra.mxu0 0.0
    %4522 = vmatprep.subr.mxu0 0.0
    %4523 = vmatpush2.msra.mxu0 0.0
    %4524 = vmatprep.subr.mxu0 0.0
    %4525 = vmatpush2.msra.mxu0 0.0
    %4526 = vmatprep.subr.mxu0 0.0
    %4527 = vmatpush2.msra.mxu0 0.0
    %4528 = vmatprep.subr.mxu0 0.0
    %4529 = vmatpush2.msra.mxu0 0.0
    %4530 = vmatprep.subr.mxu0 0.0
    %4531 = vmatpush2.msra.mxu0 0.0
    %4532 = vmatprep.subr.mxu0 0.0
    %4533 = vmatpush2.msra.mxu0 0.0
    %4534 = vmatprep.subr.mxu0 0.0
    %4535 = vmatpush2.msra.mxu0 0.0
    %4536 = vmatprep.mubr.f32.mxu0 0.0
    %4537 = vmatmul.mubr.f32.gmra.mxu0 %v4447
    %v4538 = vpop.f32.mrf.mxu0
    %v4539 = vadd.f32 %v4470, %v4538
    %v4540 = vpop.f32.mrf.mxu0
    %4541 = vmatprep.mubr.f32.mxu0 0.0
    %4542 = vmatmul.mubr.f32.gmra.mxu0 %v4448
    %v4543 = vpop.f32.mrf.mxu0
    %v4544 = vadd.f32 %v4470, %v4543
    %v4545 = vpop.f32.mrf.mxu0
    %4546 = vdwg.mxu0
    %v4547 = vld [vmem:[#allocation22] sm:$0xff]
    %v4548 = vld [vmem:[#allocation22 + $0x8] sm:$0xff]
    %v4549 = vld [vmem:[#allocation22 + $0x10] sm:$0xff]
    %v4550 = vld [vmem:[#allocation22 + $0x18] sm:$0xff]
    %v4551 = vld [vmem:[#allocation22 + $0x20] sm:$0xff]
    %v4552 = vld [vmem:[#allocation22 + $0x28] sm:$0xff]
    %v4553 = vld [vmem:[#allocation22 + $0x30] sm:$0xff]
    %v4554 = vld [vmem:[#allocation22 + $0x38] sm:$0xff]
    %v4555 = vld [vmem:[#allocation22 + $0x40] sm:$0xff]
    %v4556 = vld [vmem:[#allocation22 + $0x48] sm:$0xff]
    %v4557 = vld [vmem:[#allocation22 + $0x50] sm:$0xff]
    %v4558 = vld [vmem:[#allocation22 + $0x58] sm:$0xff]
    %v4559 = vld [vmem:[#allocation22 + $0x60] sm:$0xff]
    %v4560 = vld [vmem:[#allocation22 + $0x68] sm:$0xff]
    %v4561 = vld [vmem:[#allocation22 + $0x70] sm:$0xff]
    %v4562 = vld [vmem:[#allocation22 + $0x78] sm:$0xff]
    %v4563 = vtanh.pop %v4539
    %4564 = vst [vmem:[#allocation2] sm:$0x3] %v4563
    %4565 = vmatprep.subr.mxu0 0.0
    %4566 = vmatpush1.msra.mxu0 %v4562
    %4567 = vmatprep.subr.mxu0 0.0
    %4568 = vmatpush1.msra.mxu0 %v4561
    %4569 = vmatprep.subr.mxu0 0.0
    %4570 = vmatpush1.msra.mxu0 %v4560
    %4571 = vmatprep.subr.mxu0 0.0
    %4572 = vmatpush1.msra.mxu0 %v4559
    %4573 = vmatprep.subr.mxu0 0.0
    %4574 = vmatpush1.msra.mxu0 %v4558
    %4575 = vmatprep.subr.mxu0 0.0
    %4576 = vmatpush1.msra.mxu0 %v4557
    %4577 = vmatprep.subr.mxu0 0.0
    %4578 = vmatpush1.msra.mxu0 %v4556
    %4579 = vmatprep.subr.mxu0 0.0
    %4580 = vmatpush1.msra.mxu0 %v4555
    %4581 = vmatprep.subr.mxu0 0.0
    %4582 = vmatpush1.msra.mxu0 %v4554
    %4583 = vmatprep.subr.mxu0 0.0
    %4584 = vmatpush1.msra.mxu0 %v4553
    %4585 = vmatprep.subr.mxu0 0.0
    %4586 = vmatpush1.msra.mxu0 %v4552
    %4587 = vmatprep.subr.mxu0 0.0
    %4588 = vmatpush1.msra.mxu0 %v4551
    %4589 = vmatprep.subr.mxu0 0.0
    %4590 = vmatpush1.msra.mxu0 %v4550
    %4591 = vmatprep.subr.mxu0 0.0
    %4592 = vmatpush1.msra.mxu0 %v4549
    %4593 = vmatprep.subr.mxu0 0.0
    %4594 = vmatpush1.msra.mxu0 %v4548
    %4595 = vmatprep.subr.mxu0 0.0
    %4596 = vmatpush1.msra.mxu0 %v4547
    %4597 = vmatprep.subr.mxu0 0.0
    %4598 = vmatpush2.msra.mxu0 0.0
    %4599 = vmatprep.subr.mxu0 0.0
    %4600 = vmatpush2.msra.mxu0 0.0
    %4601 = vmatprep.subr.mxu0 0.0
    %4602 = vmatpush2.msra.mxu0 0.0
    %4603 = vmatprep.subr.mxu0 0.0
    %4604 = vmatpush2.msra.mxu0 0.0
    %4605 = vmatprep.subr.mxu0 0.0
    %4606 = vmatpush2.msra.mxu0 0.0
    %4607 = vmatprep.subr.mxu0 0.0
    %4608 = vmatpush2.msra.mxu0 0.0
    %4609 = vmatprep.subr.mxu0 0.0
    %4610 = vmatpush2.msra.mxu0 0.0
    %4611 = vmatprep.subr.mxu0 0.0
    %4612 = vmatpush2.msra.mxu0 0.0
    %4613 = vmatprep.subr.mxu0 0.0
    %4614 = vmatpush2.msra.mxu0 0.0
    %4615 = vmatprep.subr.mxu0 0.0
    %4616 = vmatpush2.msra.mxu0 0.0
    %4617 = vmatprep.subr.mxu0 0.0
    %4618 = vmatpush2.msra.mxu0 0.0
    %4619 = vmatprep.subr.mxu0 0.0
    %4620 = vmatpush2.msra.mxu0 0.0
    %4621 = vmatprep.subr.mxu0 0.0
    %4622 = vmatpush2.msra.mxu0 0.0
    %4623 = vmatprep.subr.mxu0 0.0
    %4624 = vmatpush2.msra.mxu0 0.0
    %4625 = vmatprep.subr.mxu0 0.0
    %4626 = vmatpush2.msra.mxu0 0.0
    %4627 = vmatprep.subr.mxu0 0.0
    %4628 = vmatpush2.msra.mxu0 0.0
    %4629 = vmatprep.mubr.f32.mxu0 0.0
    %4630 = vmatmul.mubr.f32.gmra.mxu0 %v4563
    %v4631 = vpop.f32.mrf.mxu0
    %v4632 = vadd.f32 0.0, %v4631
    %v4633 = vpop.f32.mrf.mxu0
    %4634 = vdwg.mxu0
    %v4636 = vrot.slane %v4632, 6
    %v4638 = vadd.f32 %v4539, %v4636
    %v4639 = vtanh.pop %v4638
    %4640 = vst [vmem:[#allocation2] sm:$0xc] %v4639
    %v4642 = vrot.slane %v4639, 2
    %4644 = vmatprep.subr.mxu0 0.0
    %4645 = vmatpush1.msra.mxu0 %v4562
    %4646 = vmatprep.subr.mxu0 0.0
    %4647 = vmatpush1.msra.mxu0 %v4561
    %4648 = vmatprep.subr.mxu0 0.0
    %4649 = vmatpush1.msra.mxu0 %v4560
    %4650 = vmatprep.subr.mxu0 0.0
    %4651 = vmatpush1.msra.mxu0 %v4559
    %4652 = vmatprep.subr.mxu0 0.0
    %4653 = vmatpush1.msra.mxu0 %v4558
    %4654 = vmatprep.subr.mxu0 0.0
    %4655 = vmatpush1.msra.mxu0 %v4557
    %4656 = vmatprep.subr.mxu0 0.0
    %4657 = vmatpush1.msra.mxu0 %v4556
    %4658 = vmatprep.subr.mxu0 0.0
    %4659 = vmatpush1.msra.mxu0 %v4555
    %4660 = vmatprep.subr.mxu0 0.0
    %4661 = vmatpush1.msra.mxu0 %v4554
    %4662 = vmatprep.subr.mxu0 0.0
    %4663 = vmatpush1.msra.mxu0 %v4553
    %4664 = vmatprep.subr.mxu0 0.0
    %4665 = vmatpush1.msra.mxu0 %v4552
    %4666 = vmatprep.subr.mxu0 0.0
    %4667 = vmatpush1.msra.mxu0 %v4551
    %4668 = vmatprep.subr.mxu0 0.0
    %4669 = vmatpush1.msra.mxu0 %v4550
    %4670 = vmatprep.subr.mxu0 0.0
    %4671 = vmatpush1.msra.mxu0 %v4549
    %4672 = vmatprep.subr.mxu0 0.0
    %4673 = vmatpush1.msra.mxu0 %v4548
    %4674 = vmatprep.subr.mxu0 0.0
    %4675 = vmatpush1.msra.mxu0 %v4547
    %4676 = vmatprep.subr.mxu0 0.0
    %4677 = vmatpush2.msra.mxu0 0.0
    %4678 = vmatprep.subr.mxu0 0.0
    %4679 = vmatpush2.msra.mxu0 0.0
    %4680 = vmatprep.subr.mxu0 0.0
    %4681 = vmatpush2.msra.mxu0 0.0
    %4682 = vmatprep.subr.mxu0 0.0
    %4683 = vmatpush2.msra.mxu0 0.0
    %4684 = vmatprep.subr.mxu0 0.0
    %4685 = vmatpush2.msra.mxu0 0.0
    %4686 = vmatprep.subr.mxu0 0.0
    %4687 = vmatpush2.msra.mxu0 0.0
    %4688 = vmatprep.subr.mxu0 0.0
    %4689 = vmatpush2.msra.mxu0 0.0
    %4690 = vmatprep.subr.mxu0 0.0
    %4691 = vmatpush2.msra.mxu0 0.0
    %4692 = vmatprep.subr.mxu0 0.0
    %4693 = vmatpush2.msra.mxu0 0.0
    %4694 = vmatprep.subr.mxu0 0.0
    %4695 = vmatpush2.msra.mxu0 0.0
    %4696 = vmatprep.subr.mxu0 0.0
    %4697 = vmatpush2.msra.mxu0 0.0
    %4698 = vmatprep.subr.mxu0 0.0
    %4699 = vmatpush2.msra.mxu0 0.0
    %4700 = vmatprep.subr.mxu0 0.0
    %4701 = vmatpush2.msra.mxu0 0.0
    %4702 = vmatprep.subr.mxu0 0.0
    %4703 = vmatpush2.msra.mxu0 0.0
    %4704 = vmatprep.subr.mxu0 0.0
    %4705 = vmatpush2.msra.mxu0 0.0
    %4706 = vmatprep.subr.mxu0 0.0
    %4707 = vmatpush2.msra.mxu0 0.0
    %4708 = vmatprep.mubr.f32.mxu0 0.0
    %4709 = vmatmul.mubr.f32.gmra.mxu0 %v4642
    %v4710 = vpop.f32.mrf.mxu0
    %v4711 = vadd.f32 0.0, %v4710
    %v4712 = vpop.f32.mrf.mxu0
    %4713 = vdwg.mxu0
    %v4715 = vrot.slane %v4711, 4
    %v4717 = vadd.f32 %v4539, %v4715
    %v4718 = vtanh.pop %v4717
    %4719 = vst [vmem:[#allocation2] sm:$0x30] %v4718
    %v4721 = vrot.slane %v4718, 4
    %4723 = vmatprep.subr.mxu0 0.0
    %4724 = vmatpush1.msra.mxu0 %v4562
    %4725 = vmatprep.subr.mxu0 0.0
    %4726 = vmatpush1.msra.mxu0 %v4561
    %4727 = vmatprep.subr.mxu0 0.0
    %4728 = vmatpush1.msra.mxu0 %v4560
    %4729 = vmatprep.subr.mxu0 0.0
    %4730 = vmatpush1.msra.mxu0 %v4559
    %4731 = vmatprep.subr.mxu0 0.0
    %4732 = vmatpush1.msra.mxu0 %v4558
    %4733 = vmatprep.subr.mxu0 0.0
    %4734 = vmatpush1.msra.mxu0 %v4557
    %4735 = vmatprep.subr.mxu0 0.0
    %4736 = vmatpush1.msra.mxu0 %v4556
    %4737 = vmatprep.subr.mxu0 0.0
    %4738 = vmatpush1.msra.mxu0 %v4555
    %4739 = vmatprep.subr.mxu0 0.0
    %4740 = vmatpush1.msra.mxu0 %v4554
    %4741 = vmatprep.subr.mxu0 0.0
    %4742 = vmatpush1.msra.mxu0 %v4553
    %4743 = vmatprep.subr.mxu0 0.0
    %4744 = vmatpush1.msra.mxu0 %v4552
    %4745 = vmatprep.subr.mxu0 0.0
    %4746 = vmatpush1.msra.mxu0 %v4551
    %4747 = vmatprep.subr.mxu0 0.0
    %4748 = vmatpush1.msra.mxu0 %v4550
    %4749 = vmatprep.subr.mxu0 0.0
    %4750 = vmatpush1.msra.mxu0 %v4549
    %4751 = vmatprep.subr.mxu0 0.0
    %4752 = vmatpush1.msra.mxu0 %v4548
    %4753 = vmatprep.subr.mxu0 0.0
    %4754 = vmatpush1.msra.mxu0 %v4547
    %4755 = vmatprep.subr.mxu0 0.0
    %4756 = vmatpush2.msra.mxu0 0.0
    %4757 = vmatprep.subr.mxu0 0.0
    %4758 = vmatpush2.msra.mxu0 0.0
    %4759 = vmatprep.subr.mxu0 0.0
    %4760 = vmatpush2.msra.mxu0 0.0
    %4761 = vmatprep.subr.mxu0 0.0
    %4762 = vmatpush2.msra.mxu0 0.0
    %4763 = vmatprep.subr.mxu0 0.0
    %4764 = vmatpush2.msra.mxu0 0.0
    %4765 = vmatprep.subr.mxu0 0.0
    %4766 = vmatpush2.msra.mxu0 0.0
    %4767 = vmatprep.subr.mxu0 0.0
    %4768 = vmatpush2.msra.mxu0 0.0
    %4769 = vmatprep.subr.mxu0 0.0
    %4770 = vmatpush2.msra.mxu0 0.0
    %4771 = vmatprep.subr.mxu0 0.0
    %4772 = vmatpush2.msra.mxu0 0.0
    %4773 = vmatprep.subr.mxu0 0.0
    %4774 = vmatpush2.msra.mxu0 0.0
    %4775 = vmatprep.subr.mxu0 0.0
    %4776 = vmatpush2.msra.mxu0 0.0
    %4777 = vmatprep.subr.mxu0 0.0
    %4778 = vmatpush2.msra.mxu0 0.0
    %4779 = vmatprep.subr.mxu0 0.0
    %4780 = vmatpush2.msra.mxu0 0.0
    %4781 = vmatprep.subr.mxu0 0.0
    %4782 = vmatpush2.msra.mxu0 0.0
    %4783 = vmatprep.subr.mxu0 0.0
    %4784 = vmatpush2.msra.mxu0 0.0
    %4785 = vmatprep.subr.mxu0 0.0
    %4786 = vmatpush2.msra.mxu0 0.0
    %4787 = vmatprep.mubr.f32.mxu0 0.0
    %4788 = vmatmul.mubr.f32.gmra.mxu0 %v4721
    %v4789 = vpop.f32.mrf.mxu0
    %v4790 = vadd.f32 0.0, %v4789
    %v4791 = vpop.f32.mrf.mxu0
    %4792 = vdwg.mxu0
    %v4794 = vrot.slane %v4790, 2
    %v4796 = vadd.f32 %v4539, %v4794
    %v4797 = vtanh.pop %v4796
    %4798 = vst [vmem:[#allocation2] sm:$0xc0] %v4797
    %v4800 = vrot.slane %v4797, 6
    %4802 = vmatprep.subr.mxu0 0.0
    %4803 = vmatpush1.msra.mxu0 %v4562
    %4804 = vmatprep.subr.mxu0 0.0
    %4805 = vmatpush1.msra.mxu0 %v4561
    %4806 = vmatprep.subr.mxu0 0.0
    %4807 = vmatpush1.msra.mxu0 %v4560
    %4808 = vmatprep.subr.mxu0 0.0
    %4809 = vmatpush1.msra.mxu0 %v4559
    %4810 = vmatprep.subr.mxu0 0.0
    %4811 = vmatpush1.msra.mxu0 %v4558
    %4812 = vmatprep.subr.mxu0 0.0
    %4813 = vmatpush1.msra.mxu0 %v4557
    %4814 = vmatprep.subr.mxu0 0.0
    %4815 = vmatpush1.msra.mxu0 %v4556
    %4816 = vmatprep.subr.mxu0 0.0
    %4817 = vmatpush1.msra.mxu0 %v4555
    %4818 = vmatprep.subr.mxu0 0.0
    %4819 = vmatpush1.msra.mxu0 %v4554
    %4820 = vmatprep.subr.mxu0 0.0
    %4821 = vmatpush1.msra.mxu0 %v4553
    %4822 = vmatprep.subr.mxu0 0.0
    %4823 = vmatpush1.msra.mxu0 %v4552
    %4824 = vmatprep.subr.mxu0 0.0
    %4825 = vmatpush1.msra.mxu0 %v4551
    %4826 = vmatprep.subr.mxu0 0.0
    %4827 = vmatpush1.msra.mxu0 %v4550
    %4828 = vmatprep.subr.mxu0 0.0
    %4829 = vmatpush1.msra.mxu0 %v4549
    %4830 = vmatprep.subr.mxu0 0.0
    %4831 = vmatpush1.msra.mxu0 %v4548
    %4832 = vmatprep.subr.mxu0 0.0
    %4833 = vmatpush1.msra.mxu0 %v4547
    %4834 = vmatprep.subr.mxu0 0.0
    %4835 = vmatpush2.msra.mxu0 0.0
    %4836 = vmatprep.subr.mxu0 0.0
    %4837 = vmatpush2.msra.mxu0 0.0
    %4838 = vmatprep.subr.mxu0 0.0
    %4839 = vmatpush2.msra.mxu0 0.0
    %4840 = vmatprep.subr.mxu0 0.0
    %4841 = vmatpush2.msra.mxu0 0.0
    %4842 = vmatprep.subr.mxu0 0.0
    %4843 = vmatpush2.msra.mxu0 0.0
    %4844 = vmatprep.subr.mxu0 0.0
    %4845 = vmatpush2.msra.mxu0 0.0
    %4846 = vmatprep.subr.mxu0 0.0
    %4847 = vmatpush2.msra.mxu0 0.0
    %4848 = vmatprep.subr.mxu0 0.0
    %4849 = vmatpush2.msra.mxu0 0.0
    %4850 = vmatprep.subr.mxu0 0.0
    %4851 = vmatpush2.msra.mxu0 0.0
    %4852 = vmatprep.subr.mxu0 0.0
    %4853 = vmatpush2.msra.mxu0 0.0
    %4854 = vmatprep.subr.mxu0 0.0
    %4855 = vmatpush2.msra.mxu0 0.0
    %4856 = vmatprep.subr.mxu0 0.0
    %4857 = vmatpush2.msra.mxu0 0.0
    %4858 = vmatprep.subr.mxu0 0.0
    %4859 = vmatpush2.msra.mxu0 0.0
    %4860 = vmatprep.subr.mxu0 0.0
    %4861 = vmatpush2.msra.mxu0 0.0
    %4862 = vmatprep.subr.mxu0 0.0
    %4863 = vmatpush2.msra.mxu0 0.0
    %4864 = vmatprep.subr.mxu0 0.0
    %4865 = vmatpush2.msra.mxu0 0.0
    %4866 = vmatprep.mubr.f32.mxu0 0.0
    %4867 = vmatmul.mubr.f32.gmra.mxu0 %v4800
    %v4868 = vpop.f32.mrf.mxu0
    %v4869 = vadd.f32 0.0, %v4868
    %v4870 = vpop.f32.mrf.mxu0
    %4871 = vdwg.mxu0
    %v4872 = vadd.f32 %v4544, %v4869
    %v4873 = vtanh.pop %v4872
    %4874 = vst [vmem:[#allocation2 + $0x8] sm:$0x3] %v4873
    %4875 = vmatprep.subr.mxu0 0.0
    %4876 = vmatpush1.msra.mxu0 %v4562
    %4877 = vmatprep.subr.mxu0 0.0
    %4878 = vmatpush1.msra.mxu0 %v4561
    %4879 = vmatprep.subr.mxu0 0.0
    %4880 = vmatpush1.msra.mxu0 %v4560
    %4881 = vmatprep.subr.mxu0 0.0
    %4882 = vmatpush1.msra.mxu0 %v4559
    %4883 = vmatprep.subr.mxu0 0.0
    %4884 = vmatpush1.msra.mxu0 %v4558
    %4885 = vmatprep.subr.mxu0 0.0
    %4886 = vmatpush1.msra.mxu0 %v4557
    %4887 = vmatprep.subr.mxu0 0.0
    %4888 = vmatpush1.msra.mxu0 %v4556
    %4889 = vmatprep.subr.mxu0 0.0
    %4890 = vmatpush1.msra.mxu0 %v4555
    %4891 = vmatprep.subr.mxu0 0.0
    %4892 = vmatpush1.msra.mxu0 %v4554
    %4893 = vmatprep.subr.mxu0 0.0
    %4894 = vmatpush1.msra.mxu0 %v4553
    %4895 = vmatprep.subr.mxu0 0.0
    %4896 = vmatpush1.msra.mxu0 %v4552
    %4897 = vmatprep.subr.mxu0 0.0
    %4898 = vmatpush1.msra.mxu0 %v4551
    %4899 = vmatprep.subr.mxu0 0.0
    %4900 = vmatpush1.msra.mxu0 %v4550
    %4901 = vmatprep.subr.mxu0 0.0
    %4902 = vmatpush1.msra.mxu0 %v4549
    %4903 = vmatprep.subr.mxu0 0.0
    %4904 = vmatpush1.msra.mxu0 %v4548
    %4905 = vmatprep.subr.mxu0 0.0
    %4906 = vmatpush1.msra.mxu0 %v4547
    %4907 = vmatprep.subr.mxu0 0.0
    %4908 = vmatpush2.msra.mxu0 0.0
    %4909 = vmatprep.subr.mxu0 0.0
    %4910 = vmatpush2.msra.mxu0 0.0
    %4911 = vmatprep.subr.mxu0 0.0
    %4912 = vmatpush2.msra.mxu0 0.0
    %4913 = vmatprep.subr.mxu0 0.0
    %4914 = vmatpush2.msra.mxu0 0.0
    %4915 = vmatprep.subr.mxu0 0.0
    %4916 = vmatpush2.msra.mxu0 0.0
    %4917 = vmatprep.subr.mxu0 0.0
    %4918 = vmatpush2.msra.mxu0 0.0
    %4919 = vmatprep.subr.mxu0 0.0
    %4920 = vmatpush2.msra.mxu0 0.0
    %4921 = vmatprep.subr.mxu0 0.0
    %4922 = vmatpush2.msra.mxu0 0.0
    %4923 = vmatprep.subr.mxu0 0.0
    %4924 = vmatpush2.msra.mxu0 0.0
    %4925 = vmatprep.subr.mxu0 0.0
    %4926 = vmatpush2.msra.mxu0 0.0
    %4927 = vmatprep.subr.mxu0 0.0
    %4928 = vmatpush2.msra.mxu0 0.0
    %4929 = vmatprep.subr.mxu0 0.0
    %4930 = vmatpush2.msra.mxu0 0.0
    %4931 = vmatprep.subr.mxu0 0.0
    %4932 = vmatpush2.msra.mxu0 0.0
    %4933 = vmatprep.subr.mxu0 0.0
    %4934 = vmatpush2.msra.mxu0 0.0
    %4935 = vmatprep.subr.mxu0 0.0
    %4936 = vmatpush2.msra.mxu0 0.0
    %4937 = vmatprep.subr.mxu0 0.0
    %4938 = vmatpush2.msra.mxu0 0.0
    %4939 = vmatprep.mubr.f32.mxu0 0.0
    %4940 = vmatmul.mubr.f32.gmra.mxu0 %v4873
    %v4941 = vpop.f32.mrf.mxu0
    %v4942 = vadd.f32 0.0, %v4941
    %v4943 = vpop.f32.mrf.mxu0
    %4944 = vdwg.mxu0
    %v4946 = vrot.slane %v4942, 6
    %v4948 = vadd.f32 %v4544, %v4946
    %v4949 = vtanh.pop %v4948
    %4950 = vst [vmem:[#allocation2 + $0x8] sm:$0xc] %v4949
    %v4952 = vrot.slane %v4949, 2
    %4954 = vmatprep.subr.mxu0 0.0
    %4955 = vmatpush1.msra.mxu0 %v4562
    %4956 = vmatprep.subr.mxu0 0.0
    %4957 = vmatpush1.msra.mxu0 %v4561
    %4958 = vmatprep.subr.mxu0 0.0
    %4959 = vmatpush1.msra.mxu0 %v4560
    %4960 = vmatprep.subr.mxu0 0.0
    %4961 = vmatpush1.msra.mxu0 %v4559
    %4962 = vmatprep.subr.mxu0 0.0
    %4963 = vmatpush1.msra.mxu0 %v4558
    %4964 = vmatprep.subr.mxu0 0.0
    %4965 = vmatpush1.msra.mxu0 %v4557
    %4966 = vmatprep.subr.mxu0 0.0
    %4967 = vmatpush1.msra.mxu0 %v4556
    %4968 = vmatprep.subr.mxu0 0.0
    %4969 = vmatpush1.msra.mxu0 %v4555
    %4970 = vmatprep.subr.mxu0 0.0
    %4971 = vmatpush1.msra.mxu0 %v4554
    %4972 = vmatprep.subr.mxu0 0.0
    %4973 = vmatpush1.msra.mxu0 %v4553
    %4974 = vmatprep.subr.mxu0 0.0
    %4975 = vmatpush1.msra.mxu0 %v4552
    %4976 = vmatprep.subr.mxu0 0.0
    %4977 = vmatpush1.msra.mxu0 %v4551
    %4978 = vmatprep.subr.mxu0 0.0
    %4979 = vmatpush1.msra.mxu0 %v4550
    %4980 = vmatprep.subr.mxu0 0.0
    %4981 = vmatpush1.msra.mxu0 %v4549
    %4982 = vmatprep.subr.mxu0 0.0
    %4983 = vmatpush1.msra.mxu0 %v4548
    %4984 = vmatprep.subr.mxu0 0.0
    %4985 = vmatpush1.msra.mxu0 %v4547
    %4986 = vmatprep.subr.mxu0 0.0
    %4987 = vmatpush2.msra.mxu0 0.0
    %4988 = vmatprep.subr.mxu0 0.0
    %4989 = vmatpush2.msra.mxu0 0.0
    %4990 = vmatprep.subr.mxu0 0.0
    %4991 = vmatpush2.msra.mxu0 0.0
    %4992 = vmatprep.subr.mxu0 0.0
    %4993 = vmatpush2.msra.mxu0 0.0
    %4994 = vmatprep.subr.mxu0 0.0
    %4995 = vmatpush2.msra.mxu0 0.0
    %4996 = vmatprep.subr.mxu0 0.0
    %4997 = vmatpush2.msra.mxu0 0.0
    %4998 = vmatprep.subr.mxu0 0.0
    %4999 = vmatpush2.msra.mxu0 0.0
    %5000 = vmatprep.subr.mxu0 0.0
    %5001 = vmatpush2.msra.mxu0 0.0
    %5002 = vmatprep.subr.mxu0 0.0
    %5003 = vmatpush2.msra.mxu0 0.0
    %5004 = vmatprep.subr.mxu0 0.0
    %5005 = vmatpush2.msra.mxu0 0.0
    %5006 = vmatprep.subr.mxu0 0.0
    %5007 = vmatpush2.msra.mxu0 0.0
    %5008 = vmatprep.subr.mxu0 0.0
    %5009 = vmatpush2.msra.mxu0 0.0
    %5010 = vmatprep.subr.mxu0 0.0
    %5011 = vmatpush2.msra.mxu0 0.0
    %5012 = vmatprep.subr.mxu0 0.0
    %5013 = vmatpush2.msra.mxu0 0.0
    %5014 = vmatprep.subr.mxu0 0.0
    %5015 = vmatpush2.msra.mxu0 0.0
    %5016 = vmatprep.subr.mxu0 0.0
    %5017 = vmatpush2.msra.mxu0 0.0
    %5018 = vmatprep.mubr.f32.mxu0 0.0
    %5019 = vmatmul.mubr.f32.gmra.mxu0 %v4952
    %v5020 = vpop.f32.mrf.mxu0
    %v5021 = vadd.f32 0.0, %v5020
    %v5022 = vpop.f32.mrf.mxu0
    %5023 = vdwg.mxu0
    %v5025 = vrot.slane %v5021, 4
    %v5027 = vadd.f32 %v4544, %v5025
    %v5028 = vtanh.pop %v5027
    %5029 = vst [vmem:[#allocation2 + $0x8] sm:$0x30] %v5028
    %v5031 = vrot.slane %v5028, 4
    %5033 = vmatprep.subr.mxu0 0.0
    %5034 = vmatpush1.msra.mxu0 %v4562
    %5035 = vmatprep.subr.mxu0 0.0
    %5036 = vmatpush1.msra.mxu0 %v4561
    %5037 = vmatprep.subr.mxu0 0.0
    %5038 = vmatpush1.msra.mxu0 %v4560
    %5039 = vmatprep.subr.mxu0 0.0
    %5040 = vmatpush1.msra.mxu0 %v4559
    %5041 = vmatprep.subr.mxu0 0.0
    %5042 = vmatpush1.msra.mxu0 %v4558
    %5043 = vmatprep.subr.mxu0 0.0
    %5044 = vmatpush1.msra.mxu0 %v4557
    %5045 = vmatprep.subr.mxu0 0.0
    %5046 = vmatpush1.msra.mxu0 %v4556
    %5047 = vmatprep.subr.mxu0 0.0
    %5048 = vmatpush1.msra.mxu0 %v4555
    %5049 = vmatprep.subr.mxu0 0.0
    %5050 = vmatpush1.msra.mxu0 %v4554
    %5051 = vmatprep.subr.mxu0 0.0
    %5052 = vmatpush1.msra.mxu0 %v4553
    %5053 = vmatprep.subr.mxu0 0.0
    %5054 = vmatpush1.msra.mxu0 %v4552
    %5055 = vmatprep.subr.mxu0 0.0
    %5056 = vmatpush1.msra.mxu0 %v4551
    %5057 = vmatprep.subr.mxu0 0.0
    %5058 = vmatpush1.msra.mxu0 %v4550
    %5059 = vmatprep.subr.mxu0 0.0
    %5060 = vmatpush1.msra.mxu0 %v4549
    %5061 = vmatprep.subr.mxu0 0.0
    %5062 = vmatpush1.msra.mxu0 %v4548
    %5063 = vmatprep.subr.mxu0 0.0
    %5064 = vmatpush1.msra.mxu0 %v4547
    %5065 = vmatprep.subr.mxu0 0.0
    %5066 = vmatpush2.msra.mxu0 0.0
    %5067 = vmatprep.subr.mxu0 0.0
    %5068 = vmatpush2.msra.mxu0 0.0
    %5069 = vmatprep.subr.mxu0 0.0
    %5070 = vmatpush2.msra.mxu0 0.0
    %5071 = vmatprep.subr.mxu0 0.0
    %5072 = vmatpush2.msra.mxu0 0.0
    %5073 = vmatprep.subr.mxu0 0.0
    %5074 = vmatpush2.msra.mxu0 0.0
    %5075 = vmatprep.subr.mxu0 0.0
    %5076 = vmatpush2.msra.mxu0 0.0
    %5077 = vmatprep.subr.mxu0 0.0
    %5078 = vmatpush2.msra.mxu0 0.0
    %5079 = vmatprep.subr.mxu0 0.0
    %5080 = vmatpush2.msra.mxu0 0.0
    %5081 = vmatprep.subr.mxu0 0.0
    %5082 = vmatpush2.msra.mxu0 0.0
    %5083 = vmatprep.subr.mxu0 0.0
    %5084 = vmatpush2.msra.mxu0 0.0
    %5085 = vmatprep.subr.mxu0 0.0
    %5086 = vmatpush2.msra.mxu0 0.0
    %5087 = vmatprep.subr.mxu0 0.0
    %5088 = vmatpush2.msra.mxu0 0.0
    %5089 = vmatprep.subr.mxu0 0.0
    %5090 = vmatpush2.msra.mxu0 0.0
    %5091 = vmatprep.subr.mxu0 0.0
    %5092 = vmatpush2.msra.mxu0 0.0
    %5093 = vmatprep.subr.mxu0 0.0
    %5094 = vmatpush2.msra.mxu0 0.0
    %5095 = vmatprep.subr.mxu0 0.0
    %5096 = vmatpush2.msra.mxu0 0.0
    %5097 = vmatprep.mubr.f32.mxu0 0.0
    %5098 = vmatmul.mubr.f32.gmra.mxu0 %v5031
    %v5099 = vpop.f32.mrf.mxu0
    %v5100 = vadd.f32 0.0, %v5099
    %v5101 = vpop.f32.mrf.mxu0
    %5102 = vdwg.mxu0
    %v5104 = vrot.slane %v5100, 2
    %v5106 = vadd.f32 %v4544, %v5104
    %v5107 = vtanh.pop %v5106
    %5108 = vst [vmem:[#allocation2 + $0x8] sm:$0xc0] %v5107
    %v5109 = vld [vmem:[#allocation2] sm:$0xff]
    %v5110 = vld [vmem:[#allocation2 + $0x8] sm:$0xff]
    %v5111 = vld [vmem:[#allocation23] sm:$0xff]
    %v5112 = vld [vmem:[#allocation23 + $0x8] sm:$0xff]
    %v5113 = vld [vmem:[#allocation23 + $0x10] sm:$0xff]
    %v5114 = vld [vmem:[#allocation23 + $0x18] sm:$0xff]
    %v5115 = vld [vmem:[#allocation23 + $0x20] sm:$0xff]
    %v5116 = vld [vmem:[#allocation23 + $0x28] sm:$0xff]
    %v5117 = vld [vmem:[#allocation23 + $0x30] sm:$0xff]
    %v5118 = vld [vmem:[#allocation23 + $0x38] sm:$0xff]
    %v5119 = vld [vmem:[#allocation23 + $0x40] sm:$0xff]
    %v5120 = vld [vmem:[#allocation23 + $0x48] sm:$0xff]
    %v5121 = vld [vmem:[#allocation23 + $0x50] sm:$0xff]
    %v5122 = vld [vmem:[#allocation23 + $0x58] sm:$0xff]
    %v5123 = vld [vmem:[#allocation23 + $0x60] sm:$0xff]
    %v5124 = vld [vmem:[#allocation23 + $0x68] sm:$0xff]
    %v5125 = vld [vmem:[#allocation23 + $0x70] sm:$0xff]
    %v5126 = vld [vmem:[#allocation23 + $0x78] sm:$0xff]
    %v5127 = vld [vmem:[%s49] sm:$0x1]
    %v5129 = vlaneseq
    %v5130 = vshrl.u32 %v5129, 7
    %v5131 = vsub.s32 0, %v5130
    %v5132 = vrot.slane %v5127, %v5131
    %5134 = vmatprep.subr.mxu0 0.0
    %5135 = vmatpush1.msra.mxu0 %v5126
    %5136 = vmatprep.subr.mxu0 0.0
    %5137 = vmatpush1.msra.mxu0 %v5125
    %5138 = vmatprep.subr.mxu0 0.0
    %5139 = vmatpush1.msra.mxu0 %v5124
    %5140 = vmatprep.subr.mxu0 0.0
    %5141 = vmatpush1.msra.mxu0 %v5123
    %5142 = vmatprep.subr.mxu0 0.0
    %5143 = vmatpush1.msra.mxu0 %v5122
    %5144 = vmatprep.subr.mxu0 0.0
    %5145 = vmatpush1.msra.mxu0 %v5121
    %5146 = vmatprep.subr.mxu0 0.0
    %5147 = vmatpush1.msra.mxu0 %v5120
    %5148 = vmatprep.subr.mxu0 0.0
    %5149 = vmatpush1.msra.mxu0 %v5119
    %5150 = vmatprep.subr.mxu0 0.0
    %5151 = vmatpush1.msra.mxu0 %v5118
    %5152 = vmatprep.subr.mxu0 0.0
    %5153 = vmatpush1.msra.mxu0 %v5117
    %5154 = vmatprep.subr.mxu0 0.0
    %5155 = vmatpush1.msra.mxu0 %v5116
    %5156 = vmatprep.subr.mxu0 0.0
    %5157 = vmatpush1.msra.mxu0 %v5115
    %5158 = vmatprep.subr.mxu0 0.0
    %5159 = vmatpush1.msra.mxu0 %v5114
    %5160 = vmatprep.subr.mxu0 0.0
    %5161 = vmatpush1.msra.mxu0 %v5113
    %5162 = vmatprep.subr.mxu0 0.0
    %5163 = vmatpush1.msra.mxu0 %v5112
    %5164 = vmatprep.subr.mxu0 0.0
    %5165 = vmatpush1.msra.mxu0 %v5111
    %5166 = vmatprep.subr.mxu0 0.0
    %5167 = vmatpush2.msra.mxu0 0.0
    %5168 = vmatprep.subr.mxu0 0.0
    %5169 = vmatpush2.msra.mxu0 0.0
    %5170 = vmatprep.subr.mxu0 0.0
    %5171 = vmatpush2.msra.mxu0 0.0
    %5172 = vmatprep.subr.mxu0 0.0
    %5173 = vmatpush2.msra.mxu0 0.0
    %5174 = vmatprep.subr.mxu0 0.0
    %5175 = vmatpush2.msra.mxu0 0.0
    %5176 = vmatprep.subr.mxu0 0.0
    %5177 = vmatpush2.msra.mxu0 0.0
    %5178 = vmatprep.subr.mxu0 0.0
    %5179 = vmatpush2.msra.mxu0 0.0
    %5180 = vmatprep.subr.mxu0 0.0
    %5181 = vmatpush2.msra.mxu0 0.0
    %5182 = vmatprep.subr.mxu0 0.0
    %5183 = vmatpush2.msra.mxu0 0.0
    %5184 = vmatprep.subr.mxu0 0.0
    %5185 = vmatpush2.msra.mxu0 0.0
    %5186 = vmatprep.subr.mxu0 0.0
    %5187 = vmatpush2.msra.mxu0 0.0
    %5188 = vmatprep.subr.mxu0 0.0
    %5189 = vmatpush2.msra.mxu0 0.0
    %5190 = vmatprep.subr.mxu0 0.0
    %5191 = vmatpush2.msra.mxu0 0.0
    %5192 = vmatprep.subr.mxu0 0.0
    %5193 = vmatpush2.msra.mxu0 0.0
    %5194 = vmatprep.subr.mxu0 0.0
    %5195 = vmatpush2.msra.mxu0 0.0
    %5196 = vmatprep.subr.mxu0 0.0
    %5197 = vmatpush2.msra.mxu0 0.0
    %5198 = vmatprep.mubr.f32.mxu0 0.0
    %5199 = vmatmul.mubr.f32.gmra.mxu0 %v5109
    %v5200 = vpop.f32.mrf.mxu0
    %v5201 = vadd.f32 %v5132, %v5200
    %v5202 = vpop.f32.mrf.mxu0
    %5203 = vmatprep.mubr.f32.mxu0 0.0
    %5204 = vmatmul.mubr.f32.gmra.mxu0 %v5110
    %v5205 = vpop.f32.mrf.mxu0
    %v5206 = vadd.f32 %v5132, %v5205
    %v5207 = vpop.f32.mrf.mxu0
    %5208 = vdwg.mxu0
    %v5209 = vld [vmem:[#allocation25] sm:$0xff]
    %v5210 = vld [vmem:[#allocation25 + $0x8] sm:$0xff]
    %v5211 = vld [vmem:[#allocation25 + $0x10] sm:$0xff]
    %v5212 = vld [vmem:[#allocation25 + $0x18] sm:$0xff]
    %v5213 = vld [vmem:[#allocation25 + $0x20] sm:$0xff]
    %v5214 = vld [vmem:[#allocation25 + $0x28] sm:$0xff]
    %v5215 = vld [vmem:[#allocation25 + $0x30] sm:$0xff]
    %v5216 = vld [vmem:[#allocation25 + $0x38] sm:$0xff]
    %v5217 = vld [vmem:[#allocation25 + $0x40] sm:$0xff]
    %v5218 = vld [vmem:[#allocation25 + $0x48] sm:$0xff]
    %v5219 = vld [vmem:[#allocation25 + $0x50] sm:$0xff]
    %v5220 = vld [vmem:[#allocation25 + $0x58] sm:$0xff]
    %v5221 = vld [vmem:[#allocation25 + $0x60] sm:$0xff]
    %v5222 = vld [vmem:[#allocation25 + $0x68] sm:$0xff]
    %v5223 = vld [vmem:[#allocation25 + $0x70] sm:$0xff]
    %v5224 = vld [vmem:[#allocation25 + $0x78] sm:$0xff]
    %v5225 = vtanh.pop %v5201
    %5226 = vst [vmem:[#allocation2] sm:$0x3] %v5225
    %5227 = vmatprep.subr.mxu0 0.0
    %5228 = vmatpush1.msra.mxu0 %v5224
    %5229 = vmatprep.subr.mxu0 0.0
    %5230 = vmatpush1.msra.mxu0 %v5223
    %5231 = vmatprep.subr.mxu0 0.0
    %5232 = vmatpush1.msra.mxu0 %v5222
    %5233 = vmatprep.subr.mxu0 0.0
    %5234 = vmatpush1.msra.mxu0 %v5221
    %5235 = vmatprep.subr.mxu0 0.0
    %5236 = vmatpush1.msra.mxu0 %v5220
    %5237 = vmatprep.subr.mxu0 0.0
    %5238 = vmatpush1.msra.mxu0 %v5219
    %5239 = vmatprep.subr.mxu0 0.0
    %5240 = vmatpush1.msra.mxu0 %v5218
    %5241 = vmatprep.subr.mxu0 0.0
    %5242 = vmatpush1.msra.mxu0 %v5217
    %5243 = vmatprep.subr.mxu0 0.0
    %5244 = vmatpush1.msra.mxu0 %v5216
    %5245 = vmatprep.subr.mxu0 0.0
    %5246 = vmatpush1.msra.mxu0 %v5215
    %5247 = vmatprep.subr.mxu0 0.0
    %5248 = vmatpush1.msra.mxu0 %v5214
    %5249 = vmatprep.subr.mxu0 0.0
    %5250 = vmatpush1.msra.mxu0 %v5213
    %5251 = vmatprep.subr.mxu0 0.0
    %5252 = vmatpush1.msra.mxu0 %v5212
    %5253 = vmatprep.subr.mxu0 0.0
    %5254 = vmatpush1.msra.mxu0 %v5211
    %5255 = vmatprep.subr.mxu0 0.0
    %5256 = vmatpush1.msra.mxu0 %v5210
    %5257 = vmatprep.subr.mxu0 0.0
    %5258 = vmatpush1.msra.mxu0 %v5209
    %5259 = vmatprep.subr.mxu0 0.0
    %5260 = vmatpush2.msra.mxu0 0.0
    %5261 = vmatprep.subr.mxu0 0.0
    %5262 = vmatpush2.msra.mxu0 0.0
    %5263 = vmatprep.subr.mxu0 0.0
    %5264 = vmatpush2.msra.mxu0 0.0
    %5265 = vmatprep.subr.mxu0 0.0
    %5266 = vmatpush2.msra.mxu0 0.0
    %5267 = vmatprep.subr.mxu0 0.0
    %5268 = vmatpush2.msra.mxu0 0.0
    %5269 = vmatprep.subr.mxu0 0.0
    %5270 = vmatpush2.msra.mxu0 0.0
    %5271 = vmatprep.subr.mxu0 0.0
    %5272 = vmatpush2.msra.mxu0 0.0
    %5273 = vmatprep.subr.mxu0 0.0
    %5274 = vmatpush2.msra.mxu0 0.0
    %5275 = vmatprep.subr.mxu0 0.0
    %5276 = vmatpush2.msra.mxu0 0.0
    %5277 = vmatprep.subr.mxu0 0.0
    %5278 = vmatpush2.msra.mxu0 0.0
    %5279 = vmatprep.subr.mxu0 0.0
    %5280 = vmatpush2.msra.mxu0 0.0
    %5281 = vmatprep.subr.mxu0 0.0
    %5282 = vmatpush2.msra.mxu0 0.0
    %5283 = vmatprep.subr.mxu0 0.0
    %5284 = vmatpush2.msra.mxu0 0.0
    %5285 = vmatprep.subr.mxu0 0.0
    %5286 = vmatpush2.msra.mxu0 0.0
    %5287 = vmatprep.subr.mxu0 0.0
    %5288 = vmatpush2.msra.mxu0 0.0
    %5289 = vmatprep.subr.mxu0 0.0
    %5290 = vmatpush2.msra.mxu0 0.0
    %5291 = vmatprep.mubr.f32.mxu0 0.0
    %5292 = vmatmul.mubr.f32.gmra.mxu0 %v5225
    %v5293 = vpop.f32.mrf.mxu0
    %v5294 = vadd.f32 0.0, %v5293
    %v5295 = vpop.f32.mrf.mxu0
    %5296 = vdwg.mxu0
    %v5298 = vrot.slane %v5294, 6
    %v5300 = vadd.f32 %v5201, %v5298
    %v5301 = vtanh.pop %v5300
    %5302 = vst [vmem:[#allocation2] sm:$0xc] %v5301
    %v5304 = vrot.slane %v5301, 2
    %5306 = vmatprep.subr.mxu0 0.0
    %5307 = vmatpush1.msra.mxu0 %v5224
    %5308 = vmatprep.subr.mxu0 0.0
    %5309 = vmatpush1.msra.mxu0 %v5223
    %5310 = vmatprep.subr.mxu0 0.0
    %5311 = vmatpush1.msra.mxu0 %v5222
    %5312 = vmatprep.subr.mxu0 0.0
    %5313 = vmatpush1.msra.mxu0 %v5221
    %5314 = vmatprep.subr.mxu0 0.0
    %5315 = vmatpush1.msra.mxu0 %v5220
    %5316 = vmatprep.subr.mxu0 0.0
    %5317 = vmatpush1.msra.mxu0 %v5219
    %5318 = vmatprep.subr.mxu0 0.0
    %5319 = vmatpush1.msra.mxu0 %v5218
    %5320 = vmatprep.subr.mxu0 0.0
    %5321 = vmatpush1.msra.mxu0 %v5217
    %5322 = vmatprep.subr.mxu0 0.0
    %5323 = vmatpush1.msra.mxu0 %v5216
    %5324 = vmatprep.subr.mxu0 0.0
    %5325 = vmatpush1.msra.mxu0 %v5215
    %5326 = vmatprep.subr.mxu0 0.0
    %5327 = vmatpush1.msra.mxu0 %v5214
    %5328 = vmatprep.subr.mxu0 0.0
    %5329 = vmatpush1.msra.mxu0 %v5213
    %5330 = vmatprep.subr.mxu0 0.0
    %5331 = vmatpush1.msra.mxu0 %v5212
    %5332 = vmatprep.subr.mxu0 0.0
    %5333 = vmatpush1.msra.mxu0 %v5211
    %5334 = vmatprep.subr.mxu0 0.0
    %5335 = vmatpush1.msra.mxu0 %v5210
    %5336 = vmatprep.subr.mxu0 0.0
    %5337 = vmatpush1.msra.mxu0 %v5209
    %5338 = vmatprep.subr.mxu0 0.0
    %5339 = vmatpush2.msra.mxu0 0.0
    %5340 = vmatprep.subr.mxu0 0.0
    %5341 = vmatpush2.msra.mxu0 0.0
    %5342 = vmatprep.subr.mxu0 0.0
    %5343 = vmatpush2.msra.mxu0 0.0
    %5344 = vmatprep.subr.mxu0 0.0
    %5345 = vmatpush2.msra.mxu0 0.0
    %5346 = vmatprep.subr.mxu0 0.0
    %5347 = vmatpush2.msra.mxu0 0.0
    %5348 = vmatprep.subr.mxu0 0.0
    %5349 = vmatpush2.msra.mxu0 0.0
    %5350 = vmatprep.subr.mxu0 0.0
    %5351 = vmatpush2.msra.mxu0 0.0
    %5352 = vmatprep.subr.mxu0 0.0
    %5353 = vmatpush2.msra.mxu0 0.0
    %5354 = vmatprep.subr.mxu0 0.0
    %5355 = vmatpush2.msra.mxu0 0.0
    %5356 = vmatprep.subr.mxu0 0.0
    %5357 = vmatpush2.msra.mxu0 0.0
    %5358 = vmatprep.subr.mxu0 0.0
    %5359 = vmatpush2.msra.mxu0 0.0
    %5360 = vmatprep.subr.mxu0 0.0
    %5361 = vmatpush2.msra.mxu0 0.0
    %5362 = vmatprep.subr.mxu0 0.0
    %5363 = vmatpush2.msra.mxu0 0.0
    %5364 = vmatprep.subr.mxu0 0.0
    %5365 = vmatpush2.msra.mxu0 0.0
    %5366 = vmatprep.subr.mxu0 0.0
    %5367 = vmatpush2.msra.mxu0 0.0
    %5368 = vmatprep.subr.mxu0 0.0
    %5369 = vmatpush2.msra.mxu0 0.0
    %5370 = vmatprep.mubr.f32.mxu0 0.0
    %5371 = vmatmul.mubr.f32.gmra.mxu0 %v5304
    %v5372 = vpop.f32.mrf.mxu0
    %v5373 = vadd.f32 0.0, %v5372
    %v5374 = vpop.f32.mrf.mxu0
    %5375 = vdwg.mxu0
    %v5377 = vrot.slane %v5373, 4
    %v5379 = vadd.f32 %v5201, %v5377
    %v5380 = vtanh.pop %v5379
    %5381 = vst [vmem:[#allocation2] sm:$0x30] %v5380
    %v5383 = vrot.slane %v5380, 4
    %5385 = vmatprep.subr.mxu0 0.0
    %5386 = vmatpush1.msra.mxu0 %v5224
    %5387 = vmatprep.subr.mxu0 0.0
    %5388 = vmatpush1.msra.mxu0 %v5223
    %5389 = vmatprep.subr.mxu0 0.0
    %5390 = vmatpush1.msra.mxu0 %v5222
    %5391 = vmatprep.subr.mxu0 0.0
    %5392 = vmatpush1.msra.mxu0 %v5221
    %5393 = vmatprep.subr.mxu0 0.0
    %5394 = vmatpush1.msra.mxu0 %v5220
    %5395 = vmatprep.subr.mxu0 0.0
    %5396 = vmatpush1.msra.mxu0 %v5219
    %5397 = vmatprep.subr.mxu0 0.0
    %5398 = vmatpush1.msra.mxu0 %v5218
    %5399 = vmatprep.subr.mxu0 0.0
    %5400 = vmatpush1.msra.mxu0 %v5217
    %5401 = vmatprep.subr.mxu0 0.0
    %5402 = vmatpush1.msra.mxu0 %v5216
    %5403 = vmatprep.subr.mxu0 0.0
    %5404 = vmatpush1.msra.mxu0 %v5215
    %5405 = vmatprep.subr.mxu0 0.0
    %5406 = vmatpush1.msra.mxu0 %v5214
    %5407 = vmatprep.subr.mxu0 0.0
    %5408 = vmatpush1.msra.mxu0 %v5213
    %5409 = vmatprep.subr.mxu0 0.0
    %5410 = vmatpush1.msra.mxu0 %v5212
    %5411 = vmatprep.subr.mxu0 0.0
    %5412 = vmatpush1.msra.mxu0 %v5211
    %5413 = vmatprep.subr.mxu0 0.0
    %5414 = vmatpush1.msra.mxu0 %v5210
    %5415 = vmatprep.subr.mxu0 0.0
    %5416 = vmatpush1.msra.mxu0 %v5209
    %5417 = vmatprep.subr.mxu0 0.0
    %5418 = vmatpush2.msra.mxu0 0.0
    %5419 = vmatprep.subr.mxu0 0.0
    %5420 = vmatpush2.msra.mxu0 0.0
    %5421 = vmatprep.subr.mxu0 0.0
    %5422 = vmatpush2.msra.mxu0 0.0
    %5423 = vmatprep.subr.mxu0 0.0
    %5424 = vmatpush2.msra.mxu0 0.0
    %5425 = vmatprep.subr.mxu0 0.0
    %5426 = vmatpush2.msra.mxu0 0.0
    %5427 = vmatprep.subr.mxu0 0.0
    %5428 = vmatpush2.msra.mxu0 0.0
    %5429 = vmatprep.subr.mxu0 0.0
    %5430 = vmatpush2.msra.mxu0 0.0
    %5431 = vmatprep.subr.mxu0 0.0
    %5432 = vmatpush2.msra.mxu0 0.0
    %5433 = vmatprep.subr.mxu0 0.0
    %5434 = vmatpush2.msra.mxu0 0.0
    %5435 = vmatprep.subr.mxu0 0.0
    %5436 = vmatpush2.msra.mxu0 0.0
    %5437 = vmatprep.subr.mxu0 0.0
    %5438 = vmatpush2.msra.mxu0 0.0
    %5439 = vmatprep.subr.mxu0 0.0
    %5440 = vmatpush2.msra.mxu0 0.0
    %5441 = vmatprep.subr.mxu0 0.0
    %5442 = vmatpush2.msra.mxu0 0.0
    %5443 = vmatprep.subr.mxu0 0.0
    %5444 = vmatpush2.msra.mxu0 0.0
    %5445 = vmatprep.subr.mxu0 0.0
    %5446 = vmatpush2.msra.mxu0 0.0
    %5447 = vmatprep.subr.mxu0 0.0
    %5448 = vmatpush2.msra.mxu0 0.0
    %5449 = vmatprep.mubr.f32.mxu0 0.0
    %5450 = vmatmul.mubr.f32.gmra.mxu0 %v5383
    %v5451 = vpop.f32.mrf.mxu0
    %v5452 = vadd.f32 0.0, %v5451
    %v5453 = vpop.f32.mrf.mxu0
    %5454 = vdwg.mxu0
    %v5456 = vrot.slane %v5452, 2
    %v5458 = vadd.f32 %v5201, %v5456
    %v5459 = vtanh.pop %v5458
    %5460 = vst [vmem:[#allocation2] sm:$0xc0] %v5459
    %v5462 = vrot.slane %v5459, 6
    %5464 = vmatprep.subr.mxu0 0.0
    %5465 = vmatpush1.msra.mxu0 %v5224
    %5466 = vmatprep.subr.mxu0 0.0
    %5467 = vmatpush1.msra.mxu0 %v5223
    %5468 = vmatprep.subr.mxu0 0.0
    %5469 = vmatpush1.msra.mxu0 %v5222
    %5470 = vmatprep.subr.mxu0 0.0
    %5471 = vmatpush1.msra.mxu0 %v5221
    %5472 = vmatprep.subr.mxu0 0.0
    %5473 = vmatpush1.msra.mxu0 %v5220
    %5474 = vmatprep.subr.mxu0 0.0
    %5475 = vmatpush1.msra.mxu0 %v5219
    %5476 = vmatprep.subr.mxu0 0.0
    %5477 = vmatpush1.msra.mxu0 %v5218
    %5478 = vmatprep.subr.mxu0 0.0
    %5479 = vmatpush1.msra.mxu0 %v5217
    %5480 = vmatprep.subr.mxu0 0.0
    %5481 = vmatpush1.msra.mxu0 %v5216
    %5482 = vmatprep.subr.mxu0 0.0
    %5483 = vmatpush1.msra.mxu0 %v5215
    %5484 = vmatprep.subr.mxu0 0.0
    %5485 = vmatpush1.msra.mxu0 %v5214
    %5486 = vmatprep.subr.mxu0 0.0
    %5487 = vmatpush1.msra.mxu0 %v5213
    %5488 = vmatprep.subr.mxu0 0.0
    %5489 = vmatpush1.msra.mxu0 %v5212
    %5490 = vmatprep.subr.mxu0 0.0
    %5491 = vmatpush1.msra.mxu0 %v5211
    %5492 = vmatprep.subr.mxu0 0.0
    %5493 = vmatpush1.msra.mxu0 %v5210
    %5494 = vmatprep.subr.mxu0 0.0
    %5495 = vmatpush1.msra.mxu0 %v5209
    %5496 = vmatprep.subr.mxu0 0.0
    %5497 = vmatpush2.msra.mxu0 0.0
    %5498 = vmatprep.subr.mxu0 0.0
    %5499 = vmatpush2.msra.mxu0 0.0
    %5500 = vmatprep.subr.mxu0 0.0
    %5501 = vmatpush2.msra.mxu0 0.0
    %5502 = vmatprep.subr.mxu0 0.0
    %5503 = vmatpush2.msra.mxu0 0.0
    %5504 = vmatprep.subr.mxu0 0.0
    %5505 = vmatpush2.msra.mxu0 0.0
    %5506 = vmatprep.subr.mxu0 0.0
    %5507 = vmatpush2.msra.mxu0 0.0
    %5508 = vmatprep.subr.mxu0 0.0
    %5509 = vmatpush2.msra.mxu0 0.0
    %5510 = vmatprep.subr.mxu0 0.0
    %5511 = vmatpush2.msra.mxu0 0.0
    %5512 = vmatprep.subr.mxu0 0.0
    %5513 = vmatpush2.msra.mxu0 0.0
    %5514 = vmatprep.subr.mxu0 0.0
    %5515 = vmatpush2.msra.mxu0 0.0
    %5516 = vmatprep.subr.mxu0 0.0
    %5517 = vmatpush2.msra.mxu0 0.0
    %5518 = vmatprep.subr.mxu0 0.0
    %5519 = vmatpush2.msra.mxu0 0.0
    %5520 = vmatprep.subr.mxu0 0.0
    %5521 = vmatpush2.msra.mxu0 0.0
    %5522 = vmatprep.subr.mxu0 0.0
    %5523 = vmatpush2.msra.mxu0 0.0
    %5524 = vmatprep.subr.mxu0 0.0
    %5525 = vmatpush2.msra.mxu0 0.0
    %5526 = vmatprep.subr.mxu0 0.0
    %5527 = vmatpush2.msra.mxu0 0.0
    %5528 = vmatprep.mubr.f32.mxu0 0.0
    %5529 = vmatmul.mubr.f32.gmra.mxu0 %v5462
    %v5530 = vpop.f32.mrf.mxu0
    %v5531 = vadd.f32 0.0, %v5530
    %v5532 = vpop.f32.mrf.mxu0
    %5533 = vdwg.mxu0
    %v5534 = vadd.f32 %v5206, %v5531
    %v5535 = vtanh.pop %v5534
    %5536 = vst [vmem:[#allocation2 + $0x8] sm:$0x3] %v5535
    %5537 = vmatprep.subr.mxu0 0.0
    %5538 = vmatpush1.msra.mxu0 %v5224
    %5539 = vmatprep.subr.mxu0 0.0
    %5540 = vmatpush1.msra.mxu0 %v5223
    %5541 = vmatprep.subr.mxu0 0.0
    %5542 = vmatpush1.msra.mxu0 %v5222
    %5543 = vmatprep.subr.mxu0 0.0
    %5544 = vmatpush1.msra.mxu0 %v5221
    %5545 = vmatprep.subr.mxu0 0.0
    %5546 = vmatpush1.msra.mxu0 %v5220
    %5547 = vmatprep.subr.mxu0 0.0
    %5548 = vmatpush1.msra.mxu0 %v5219
    %5549 = vmatprep.subr.mxu0 0.0
    %5550 = vmatpush1.msra.mxu0 %v5218
    %5551 = vmatprep.subr.mxu0 0.0
    %5552 = vmatpush1.msra.mxu0 %v5217
    %5553 = vmatprep.subr.mxu0 0.0
    %5554 = vmatpush1.msra.mxu0 %v5216
    %5555 = vmatprep.subr.mxu0 0.0
    %5556 = vmatpush1.msra.mxu0 %v5215
    %5557 = vmatprep.subr.mxu0 0.0
    %5558 = vmatpush1.msra.mxu0 %v5214
    %5559 = vmatprep.subr.mxu0 0.0
    %5560 = vmatpush1.msra.mxu0 %v5213
    %5561 = vmatprep.subr.mxu0 0.0
    %5562 = vmatpush1.msra.mxu0 %v5212
    %5563 = vmatprep.subr.mxu0 0.0
    %5564 = vmatpush1.msra.mxu0 %v5211
    %5565 = vmatprep.subr.mxu0 0.0
    %5566 = vmatpush1.msra.mxu0 %v5210
    %5567 = vmatprep.subr.mxu0 0.0
    %5568 = vmatpush1.msra.mxu0 %v5209
    %5569 = vmatprep.subr.mxu0 0.0
    %5570 = vmatpush2.msra.mxu0 0.0
    %5571 = vmatprep.subr.mxu0 0.0
    %5572 = vmatpush2.msra.mxu0 0.0
    %5573 = vmatprep.subr.mxu0 0.0
    %5574 = vmatpush2.msra.mxu0 0.0
    %5575 = vmatprep.subr.mxu0 0.0
    %5576 = vmatpush2.msra.mxu0 0.0
    %5577 = vmatprep.subr.mxu0 0.0
    %5578 = vmatpush2.msra.mxu0 0.0
    %5579 = vmatprep.subr.mxu0 0.0
    %5580 = vmatpush2.msra.mxu0 0.0
    %5581 = vmatprep.subr.mxu0 0.0
    %5582 = vmatpush2.msra.mxu0 0.0
    %5583 = vmatprep.subr.mxu0 0.0
    %5584 = vmatpush2.msra.mxu0 0.0
    %5585 = vmatprep.subr.mxu0 0.0
    %5586 = vmatpush2.msra.mxu0 0.0
    %5587 = vmatprep.subr.mxu0 0.0
    %5588 = vmatpush2.msra.mxu0 0.0
    %5589 = vmatprep.subr.mxu0 0.0
    %5590 = vmatpush2.msra.mxu0 0.0
    %5591 = vmatprep.subr.mxu0 0.0
    %5592 = vmatpush2.msra.mxu0 0.0
    %5593 = vmatprep.subr.mxu0 0.0
    %5594 = vmatpush2.msra.mxu0 0.0
    %5595 = vmatprep.subr.mxu0 0.0
    %5596 = vmatpush2.msra.mxu0 0.0
    %5597 = vmatprep.subr.mxu0 0.0
    %5598 = vmatpush2.msra.mxu0 0.0
    %5599 = vmatprep.subr.mxu0 0.0
    %5600 = vmatpush2.msra.mxu0 0.0
    %5601 = vmatprep.mubr.f32.mxu0 0.0
    %5602 = vmatmul.mubr.f32.gmra.mxu0 %v5535
    %v5603 = vpop.f32.mrf.mxu0
    %v5604 = vadd.f32 0.0, %v5603
    %v5605 = vpop.f32.mrf.mxu0
    %5606 = vdwg.mxu0
    %v5608 = vrot.slane %v5604, 6
    %v5610 = vadd.f32 %v5206, %v5608
    %v5611 = vtanh.pop %v5610
    %5612 = vst [vmem:[#allocation2 + $0x8] sm:$0xc] %v5611
    %v5614 = vrot.slane %v5611, 2
    %5616 = vmatprep.subr.mxu0 0.0
    %5617 = vmatpush1.msra.mxu0 %v5224
    %5618 = vmatprep.subr.mxu0 0.0
    %5619 = vmatpush1.msra.mxu0 %v5223
    %5620 = vmatprep.subr.mxu0 0.0
    %5621 = vmatpush1.msra.mxu0 %v5222
    %5622 = vmatprep.subr.mxu0 0.0
    %5623 = vmatpush1.msra.mxu0 %v5221
    %5624 = vmatprep.subr.mxu0 0.0
    %5625 = vmatpush1.msra.mxu0 %v5220
    %5626 = vmatprep.subr.mxu0 0.0
    %5627 = vmatpush1.msra.mxu0 %v5219
    %5628 = vmatprep.subr.mxu0 0.0
    %5629 = vmatpush1.msra.mxu0 %v5218
    %5630 = vmatprep.subr.mxu0 0.0
    %5631 = vmatpush1.msra.mxu0 %v5217
    %5632 = vmatprep.subr.mxu0 0.0
    %5633 = vmatpush1.msra.mxu0 %v5216
    %5634 = vmatprep.subr.mxu0 0.0
    %5635 = vmatpush1.msra.mxu0 %v5215
    %5636 = vmatprep.subr.mxu0 0.0
    %5637 = vmatpush1.msra.mxu0 %v5214
    %5638 = vmatprep.subr.mxu0 0.0
    %5639 = vmatpush1.msra.mxu0 %v5213
    %5640 = vmatprep.subr.mxu0 0.0
    %5641 = vmatpush1.msra.mxu0 %v5212
    %5642 = vmatprep.subr.mxu0 0.0
    %5643 = vmatpush1.msra.mxu0 %v5211
    %5644 = vmatprep.subr.mxu0 0.0
    %5645 = vmatpush1.msra.mxu0 %v5210
    %5646 = vmatprep.subr.mxu0 0.0
    %5647 = vmatpush1.msra.mxu0 %v5209
    %5648 = vmatprep.subr.mxu0 0.0
    %5649 = vmatpush2.msra.mxu0 0.0
    %5650 = vmatprep.subr.mxu0 0.0
    %5651 = vmatpush2.msra.mxu0 0.0
    %5652 = vmatprep.subr.mxu0 0.0
    %5653 = vmatpush2.msra.mxu0 0.0
    %5654 = vmatprep.subr.mxu0 0.0
    %5655 = vmatpush2.msra.mxu0 0.0
    %5656 = vmatprep.subr.mxu0 0.0
    %5657 = vmatpush2.msra.mxu0 0.0
    %5658 = vmatprep.subr.mxu0 0.0
    %5659 = vmatpush2.msra.mxu0 0.0
    %5660 = vmatprep.subr.mxu0 0.0
    %5661 = vmatpush2.msra.mxu0 0.0
    %5662 = vmatprep.subr.mxu0 0.0
    %5663 = vmatpush2.msra.mxu0 0.0
    %5664 = vmatprep.subr.mxu0 0.0
    %5665 = vmatpush2.msra.mxu0 0.0
    %5666 = vmatprep.subr.mxu0 0.0
    %5667 = vmatpush2.msra.mxu0 0.0
    %5668 = vmatprep.subr.mxu0 0.0
    %5669 = vmatpush2.msra.mxu0 0.0
    %5670 = vmatprep.subr.mxu0 0.0
    %5671 = vmatpush2.msra.mxu0 0.0
    %5672 = vmatprep.subr.mxu0 0.0
    %5673 = vmatpush2.msra.mxu0 0.0
    %5674 = vmatprep.subr.mxu0 0.0
    %5675 = vmatpush2.msra.mxu0 0.0
    %5676 = vmatprep.subr.mxu0 0.0
    %5677 = vmatpush2.msra.mxu0 0.0
    %5678 = vmatprep.subr.mxu0 0.0
    %5679 = vmatpush2.msra.mxu0 0.0
    %5680 = vmatprep.mubr.f32.mxu0 0.0
    %5681 = vmatmul.mubr.f32.gmra.mxu0 %v5614
    %v5682 = vpop.f32.mrf.mxu0
    %v5683 = vadd.f32 0.0, %v5682
    %v5684 = vpop.f32.mrf.mxu0
    %5685 = vdwg.mxu0
    %v5687 = vrot.slane %v5683, 4
    %v5689 = vadd.f32 %v5206, %v5687
    %v5690 = vtanh.pop %v5689
    %5691 = vst [vmem:[#allocation2 + $0x8] sm:$0x30] %v5690
    %v5693 = vrot.slane %v5690, 4
    %5695 = vmatprep.subr.mxu0 0.0
    %5696 = vmatpush1.msra.mxu0 %v5224
    %5697 = vmatprep.subr.mxu0 0.0
    %5698 = vmatpush1.msra.mxu0 %v5223
    %5699 = vmatprep.subr.mxu0 0.0
    %5700 = vmatpush1.msra.mxu0 %v5222
    %5701 = vmatprep.subr.mxu0 0.0
    %5702 = vmatpush1.msra.mxu0 %v5221
    %5703 = vmatprep.subr.mxu0 0.0
    %5704 = vmatpush1.msra.mxu0 %v5220
    %5705 = vmatprep.subr.mxu0 0.0
    %5706 = vmatpush1.msra.mxu0 %v5219
    %5707 = vmatprep.subr.mxu0 0.0
    %5708 = vmatpush1.msra.mxu0 %v5218
    %5709 = vmatprep.subr.mxu0 0.0
    %5710 = vmatpush1.msra.mxu0 %v5217
    %5711 = vmatprep.subr.mxu0 0.0
    %5712 = vmatpush1.msra.mxu0 %v5216
    %5713 = vmatprep.subr.mxu0 0.0
    %5714 = vmatpush1.msra.mxu0 %v5215
    %5715 = vmatprep.subr.mxu0 0.0
    %5716 = vmatpush1.msra.mxu0 %v5214
    %5717 = vmatprep.subr.mxu0 0.0
    %5718 = vmatpush1.msra.mxu0 %v5213
    %5719 = vmatprep.subr.mxu0 0.0
    %5720 = vmatpush1.msra.mxu0 %v5212
    %5721 = vmatprep.subr.mxu0 0.0
    %5722 = vmatpush1.msra.mxu0 %v5211
    %5723 = vmatprep.subr.mxu0 0.0
    %5724 = vmatpush1.msra.mxu0 %v5210
    %5725 = vmatprep.subr.mxu0 0.0
    %5726 = vmatpush1.msra.mxu0 %v5209
    %5727 = vmatprep.subr.mxu0 0.0
    %5728 = vmatpush2.msra.mxu0 0.0
    %5729 = vmatprep.subr.mxu0 0.0
    %5730 = vmatpush2.msra.mxu0 0.0
    %5731 = vmatprep.subr.mxu0 0.0
    %5732 = vmatpush2.msra.mxu0 0.0
    %5733 = vmatprep.subr.mxu0 0.0
    %5734 = vmatpush2.msra.mxu0 0.0
    %5735 = vmatprep.subr.mxu0 0.0
    %5736 = vmatpush2.msra.mxu0 0.0
    %5737 = vmatprep.subr.mxu0 0.0
    %5738 = vmatpush2.msra.mxu0 0.0
    %5739 = vmatprep.subr.mxu0 0.0
    %5740 = vmatpush2.msra.mxu0 0.0
    %5741 = vmatprep.subr.mxu0 0.0
    %5742 = vmatpush2.msra.mxu0 0.0
    %5743 = vmatprep.subr.mxu0 0.0
    %5744 = vmatpush2.msra.mxu0 0.0
    %5745 = vmatprep.subr.mxu0 0.0
    %5746 = vmatpush2.msra.mxu0 0.0
    %5747 = vmatprep.subr.mxu0 0.0
    %5748 = vmatpush2.msra.mxu0 0.0
    %5749 = vmatprep.subr.mxu0 0.0
    %5750 = vmatpush2.msra.mxu0 0.0
    %5751 = vmatprep.subr.mxu0 0.0
    %5752 = vmatpush2.msra.mxu0 0.0
    %5753 = vmatprep.subr.mxu0 0.0
    %5754 = vmatpush2.msra.mxu0 0.0
    %5755 = vmatprep.subr.mxu0 0.0
    %5756 = vmatpush2.msra.mxu0 0.0
    %5757 = vmatprep.subr.mxu0 0.0
    %5758 = vmatpush2.msra.mxu0 0.0
    %5759 = vmatprep.mubr.f32.mxu0 0.0
    %5760 = vmatmul.mubr.f32.gmra.mxu0 %v5693
    %v5761 = vpop.f32.mrf.mxu0
    %v5762 = vadd.f32 0.0, %v5761
    %v5763 = vpop.f32.mrf.mxu0
    %5764 = vdwg.mxu0
    %v5766 = vrot.slane %v5762, 2
    %v5768 = vadd.f32 %v5206, %v5766
    %v5769 = vtanh.pop %v5768
    %5770 = vst [vmem:[#allocation2 + $0x8] sm:$0xc0] %v5769
    %v5771 = vld [vmem:[#allocation2] sm:$0xff]
    %v5772 = vld [vmem:[#allocation2 + $0x8] sm:$0xff]
    %v5773 = vld [vmem:[#allocation26] sm:$0xff]
    %v5774 = vld [vmem:[#allocation26 + $0x8] sm:$0xff]
    %v5775 = vld [vmem:[#allocation26 + $0x10] sm:$0xff]
    %v5776 = vld [vmem:[#allocation26 + $0x18] sm:$0xff]
    %v5777 = vld [vmem:[#allocation26 + $0x20] sm:$0xff]
    %v5778 = vld [vmem:[#allocation26 + $0x28] sm:$0xff]
    %v5779 = vld [vmem:[#allocation26 + $0x30] sm:$0xff]
    %v5780 = vld [vmem:[#allocation26 + $0x38] sm:$0xff]
    %v5781 = vld [vmem:[#allocation26 + $0x40] sm:$0xff]
    %v5782 = vld [vmem:[#allocation26 + $0x48] sm:$0xff]
    %v5783 = vld [vmem:[#allocation26 + $0x50] sm:$0xff]
    %v5784 = vld [vmem:[#allocation26 + $0x58] sm:$0xff]
    %v5785 = vld [vmem:[#allocation26 + $0x60] sm:$0xff]
    %v5786 = vld [vmem:[#allocation26 + $0x68] sm:$0xff]
    %v5787 = vld [vmem:[#allocation26 + $0x70] sm:$0xff]
    %v5788 = vld [vmem:[#allocation26 + $0x78] sm:$0xff]
    %v5789 = vld [vmem:[%s55] sm:$0x1]
    %v5791 = vlaneseq
    %v5792 = vshrl.u32 %v5791, 7
    %v5793 = vsub.s32 0, %v5792
    %v5794 = vrot.slane %v5789, %v5793
    %5796 = vmatprep.subr.mxu0 0.0
    %5797 = vmatpush1.msra.mxu0 %v5788
    %5798 = vmatprep.subr.mxu0 0.0
    %5799 = vmatpush1.msra.mxu0 %v5787
    %5800 = vmatprep.subr.mxu0 0.0
    %5801 = vmatpush1.msra.mxu0 %v5786
    %5802 = vmatprep.subr.mxu0 0.0
    %5803 = vmatpush1.msra.mxu0 %v5785
    %5804 = vmatprep.subr.mxu0 0.0
    %5805 = vmatpush1.msra.mxu0 %v5784
    %5806 = vmatprep.subr.mxu0 0.0
    %5807 = vmatpush1.msra.mxu0 %v5783
    %5808 = vmatprep.subr.mxu0 0.0
    %5809 = vmatpush1.msra.mxu0 %v5782
    %5810 = vmatprep.subr.mxu0 0.0
    %5811 = vmatpush1.msra.mxu0 %v5781
    %5812 = vmatprep.subr.mxu0 0.0
    %5813 = vmatpush1.msra.mxu0 %v5780
    %5814 = vmatprep.subr.mxu0 0.0
    %5815 = vmatpush1.msra.mxu0 %v5779
    %5816 = vmatprep.subr.mxu0 0.0
    %5817 = vmatpush1.msra.mxu0 %v5778
    %5818 = vmatprep.subr.mxu0 0.0
    %5819 = vmatpush1.msra.mxu0 %v5777
    %5820 = vmatprep.subr.mxu0 0.0
    %5821 = vmatpush1.msra.mxu0 %v5776
    %5822 = vmatprep.subr.mxu0 0.0
    %5823 = vmatpush1.msra.mxu0 %v5775
    %5824 = vmatprep.subr.mxu0 0.0
    %5825 = vmatpush1.msra.mxu0 %v5774
    %5826 = vmatprep.subr.mxu0 0.0
    %5827 = vmatpush1.msra.mxu0 %v5773
    %5828 = vmatprep.subr.mxu0 0.0
    %5829 = vmatpush2.msra.mxu0 0.0
    %5830 = vmatprep.subr.mxu0 0.0
    %5831 = vmatpush2.msra.mxu0 0.0
    %5832 = vmatprep.subr.mxu0 0.0
    %5833 = vmatpush2.msra.mxu0 0.0
    %5834 = vmatprep.subr.mxu0 0.0
    %5835 = vmatpush2.msra.mxu0 0.0
    %5836 = vmatprep.subr.mxu0 0.0
    %5837 = vmatpush2.msra.mxu0 0.0
    %5838 = vmatprep.subr.mxu0 0.0
    %5839 = vmatpush2.msra.mxu0 0.0
    %5840 = vmatprep.subr.mxu0 0.0
    %5841 = vmatpush2.msra.mxu0 0.0
    %5842 = vmatprep.subr.mxu0 0.0
    %5843 = vmatpush2.msra.mxu0 0.0
    %5844 = vmatprep.subr.mxu0 0.0
    %5845 = vmatpush2.msra.mxu0 0.0
    %5846 = vmatprep.subr.mxu0 0.0
    %5847 = vmatpush2.msra.mxu0 0.0
    %5848 = vmatprep.subr.mxu0 0.0
    %5849 = vmatpush2.msra.mxu0 0.0
    %5850 = vmatprep.subr.mxu0 0.0
    %5851 = vmatpush2.msra.mxu0 0.0
    %5852 = vmatprep.subr.mxu0 0.0
    %5853 = vmatpush2.msra.mxu0 0.0
    %5854 = vmatprep.subr.mxu0 0.0
    %5855 = vmatpush2.msra.mxu0 0.0
    %5856 = vmatprep.subr.mxu0 0.0
    %5857 = vmatpush2.msra.mxu0 0.0
    %5858 = vmatprep.subr.mxu0 0.0
    %5859 = vmatpush2.msra.mxu0 0.0
    %5860 = vmatprep.mubr.f32.mxu0 0.0
    %5861 = vmatmul.mubr.f32.gmra.mxu0 %v5771
    %v5862 = vpop.f32.mrf.mxu0
    %v5863 = vadd.f32 %v5794, %v5862
    %v5864 = vpop.f32.mrf.mxu0
    %5865 = vmatprep.mubr.f32.mxu0 0.0
    %5866 = vmatmul.mubr.f32.gmra.mxu0 %v5772
    %v5867 = vpop.f32.mrf.mxu0
    %v5868 = vadd.f32 %v5794, %v5867
    %v5869 = vpop.f32.mrf.mxu0
    %5870 = vdwg.mxu0
    %v5871 = vld [vmem:[#allocation28] sm:$0xff]
    %v5872 = vld [vmem:[#allocation28 + $0x8] sm:$0xff]
    %v5873 = vld [vmem:[#allocation28 + $0x10] sm:$0xff]
    %v5874 = vld [vmem:[#allocation28 + $0x18] sm:$0xff]
    %v5875 = vld [vmem:[#allocation28 + $0x20] sm:$0xff]
    %v5876 = vld [vmem:[#allocation28 + $0x28] sm:$0xff]
    %v5877 = vld [vmem:[#allocation28 + $0x30] sm:$0xff]
    %v5878 = vld [vmem:[#allocation28 + $0x38] sm:$0xff]
    %v5879 = vld [vmem:[#allocation28 + $0x40] sm:$0xff]
    %v5880 = vld [vmem:[#allocation28 + $0x48] sm:$0xff]
    %v5881 = vld [vmem:[#allocation28 + $0x50] sm:$0xff]
    %v5882 = vld [vmem:[#allocation28 + $0x58] sm:$0xff]
    %v5883 = vld [vmem:[#allocation28 + $0x60] sm:$0xff]
    %v5884 = vld [vmem:[#allocation28 + $0x68] sm:$0xff]
    %v5885 = vld [vmem:[#allocation28 + $0x70] sm:$0xff]
    %v5886 = vld [vmem:[#allocation28 + $0x78] sm:$0xff]
    %v5887 = vtanh.pop %v5863
    %5888 = vst [vmem:[#allocation2] sm:$0x3] %v5887
    %5889 = vmatprep.subr.mxu0 0.0
    %5890 = vmatpush1.msra.mxu0 %v5886
    %5891 = vmatprep.subr.mxu0 0.0
    %5892 = vmatpush1.msra.mxu0 %v5885
    %5893 = vmatprep.subr.mxu0 0.0
    %5894 = vmatpush1.msra.mxu0 %v5884
    %5895 = vmatprep.subr.mxu0 0.0
    %5896 = vmatpush1.msra.mxu0 %v5883
    %5897 = vmatprep.subr.mxu0 0.0
    %5898 = vmatpush1.msra.mxu0 %v5882
    %5899 = vmatprep.subr.mxu0 0.0
    %5900 = vmatpush1.msra.mxu0 %v5881
    %5901 = vmatprep.subr.mxu0 0.0
    %5902 = vmatpush1.msra.mxu0 %v5880
    %5903 = vmatprep.subr.mxu0 0.0
    %5904 = vmatpush1.msra.mxu0 %v5879
    %5905 = vmatprep.subr.mxu0 0.0
    %5906 = vmatpush1.msra.mxu0 %v5878
    %5907 = vmatprep.subr.mxu0 0.0
    %5908 = vmatpush1.msra.mxu0 %v5877
    %5909 = vmatprep.subr.mxu0 0.0
    %5910 = vmatpush1.msra.mxu0 %v5876
    %5911 = vmatprep.subr.mxu0 0.0
    %5912 = vmatpush1.msra.mxu0 %v5875
    %5913 = vmatprep.subr.mxu0 0.0
    %5914 = vmatpush1.msra.mxu0 %v5874
    %5915 = vmatprep.subr.mxu0 0.0
    %5916 = vmatpush1.msra.mxu0 %v5873
    %5917 = vmatprep.subr.mxu0 0.0
    %5918 = vmatpush1.msra.mxu0 %v5872
    %5919 = vmatprep.subr.mxu0 0.0
    %5920 = vmatpush1.msra.mxu0 %v5871
    %5921 = vmatprep.subr.mxu0 0.0
    %5922 = vmatpush2.msra.mxu0 0.0
    %5923 = vmatprep.subr.mxu0 0.0
    %5924 = vmatpush2.msra.mxu0 0.0
    %5925 = vmatprep.subr.mxu0 0.0
    %5926 = vmatpush2.msra.mxu0 0.0
    %5927 = vmatprep.subr.mxu0 0.0
    %5928 = vmatpush2.msra.mxu0 0.0
    %5929 = vmatprep.subr.mxu0 0.0
    %5930 = vmatpush2.msra.mxu0 0.0
    %5931 = vmatprep.subr.mxu0 0.0
    %5932 = vmatpush2.msra.mxu0 0.0
    %5933 = vmatprep.subr.mxu0 0.0
    %5934 = vmatpush2.msra.mxu0 0.0
    %5935 = vmatprep.subr.mxu0 0.0
    %5936 = vmatpush2.msra.mxu0 0.0
    %5937 = vmatprep.subr.mxu0 0.0
    %5938 = vmatpush2.msra.mxu0 0.0
    %5939 = vmatprep.subr.mxu0 0.0
    %5940 = vmatpush2.msra.mxu0 0.0
    %5941 = vmatprep.subr.mxu0 0.0
    %5942 = vmatpush2.msra.mxu0 0.0
    %5943 = vmatprep.subr.mxu0 0.0
    %5944 = vmatpush2.msra.mxu0 0.0
    %5945 = vmatprep.subr.mxu0 0.0
    %5946 = vmatpush2.msra.mxu0 0.0
    %5947 = vmatprep.subr.mxu0 0.0
    %5948 = vmatpush2.msra.mxu0 0.0
    %5949 = vmatprep.subr.mxu0 0.0
    %5950 = vmatpush2.msra.mxu0 0.0
    %5951 = vmatprep.subr.mxu0 0.0
    %5952 = vmatpush2.msra.mxu0 0.0
    %5953 = vmatprep.mubr.f32.mxu0 0.0
    %5954 = vmatmul.mubr.f32.gmra.mxu0 %v5887
    %v5955 = vpop.f32.mrf.mxu0
    %v5956 = vadd.f32 0.0, %v5955
    %v5957 = vpop.f32.mrf.mxu0
    %5958 = vdwg.mxu0
    %v5960 = vrot.slane %v5956, 6
    %v5962 = vadd.f32 %v5863, %v5960
    %v5963 = vtanh.pop %v5962
    %5964 = vst [vmem:[#allocation2] sm:$0xc] %v5963
    %v5966 = vrot.slane %v5963, 2
    %5968 = vmatprep.subr.mxu0 0.0
    %5969 = vmatpush1.msra.mxu0 %v5886
    %5970 = vmatprep.subr.mxu0 0.0
    %5971 = vmatpush1.msra.mxu0 %v5885
    %5972 = vmatprep.subr.mxu0 0.0
    %5973 = vmatpush1.msra.mxu0 %v5884
    %5974 = vmatprep.subr.mxu0 0.0
    %5975 = vmatpush1.msra.mxu0 %v5883
    %5976 = vmatprep.subr.mxu0 0.0
    %5977 = vmatpush1.msra.mxu0 %v5882
    %5978 = vmatprep.subr.mxu0 0.0
    %5979 = vmatpush1.msra.mxu0 %v5881
    %5980 = vmatprep.subr.mxu0 0.0
    %5981 = vmatpush1.msra.mxu0 %v5880
    %5982 = vmatprep.subr.mxu0 0.0
    %5983 = vmatpush1.msra.mxu0 %v5879
    %5984 = vmatprep.subr.mxu0 0.0
    %5985 = vmatpush1.msra.mxu0 %v5878
    %5986 = vmatprep.subr.mxu0 0.0
    %5987 = vmatpush1.msra.mxu0 %v5877
    %5988 = vmatprep.subr.mxu0 0.0
    %5989 = vmatpush1.msra.mxu0 %v5876
    %5990 = vmatprep.subr.mxu0 0.0
    %5991 = vmatpush1.msra.mxu0 %v5875
    %5992 = vmatprep.subr.mxu0 0.0
    %5993 = vmatpush1.msra.mxu0 %v5874
    %5994 = vmatprep.subr.mxu0 0.0
    %5995 = vmatpush1.msra.mxu0 %v5873
    %5996 = vmatprep.subr.mxu0 0.0
    %5997 = vmatpush1.msra.mxu0 %v5872
    %5998 = vmatprep.subr.mxu0 0.0
    %5999 = vmatpush1.msra.mxu0 %v5871
    %6000 = vmatprep.subr.mxu0 0.0
    %6001 = vmatpush2.msra.mxu0 0.0
    %6002 = vmatprep.subr.mxu0 0.0
    %6003 = vmatpush2.msra.mxu0 0.0
    %6004 = vmatprep.subr.mxu0 0.0
    %6005 = vmatpush2.msra.mxu0 0.0
    %6006 = vmatprep.subr.mxu0 0.0
    %6007 = vmatpush2.msra.mxu0 0.0
    %6008 = vmatprep.subr.mxu0 0.0
    %6009 = vmatpush2.msra.mxu0 0.0
    %6010 = vmatprep.subr.mxu0 0.0
    %6011 = vmatpush2.msra.mxu0 0.0
    %6012 = vmatprep.subr.mxu0 0.0
    %6013 = vmatpush2.msra.mxu0 0.0
    %6014 = vmatprep.subr.mxu0 0.0
    %6015 = vmatpush2.msra.mxu0 0.0
    %6016 = vmatprep.subr.mxu0 0.0
    %6017 = vmatpush2.msra.mxu0 0.0
    %6018 = vmatprep.subr.mxu0 0.0
    %6019 = vmatpush2.msra.mxu0 0.0
    %6020 = vmatprep.subr.mxu0 0.0
    %6021 = vmatpush2.msra.mxu0 0.0
    %6022 = vmatprep.subr.mxu0 0.0
    %6023 = vmatpush2.msra.mxu0 0.0
    %6024 = vmatprep.subr.mxu0 0.0
    %6025 = vmatpush2.msra.mxu0 0.0
    %6026 = vmatprep.subr.mxu0 0.0
    %6027 = vmatpush2.msra.mxu0 0.0
    %6028 = vmatprep.subr.mxu0 0.0
    %6029 = vmatpush2.msra.mxu0 0.0
    %6030 = vmatprep.subr.mxu0 0.0
    %6031 = vmatpush2.msra.mxu0 0.0
    %6032 = vmatprep.mubr.f32.mxu0 0.0
    %6033 = vmatmul.mubr.f32.gmra.mxu0 %v5966
    %v6034 = vpop.f32.mrf.mxu0
    %v6035 = vadd.f32 0.0, %v6034
    %v6036 = vpop.f32.mrf.mxu0
    %6037 = vdwg.mxu0
    %v6039 = vrot.slane %v6035, 4
    %v6041 = vadd.f32 %v5863, %v6039
    %v6042 = vtanh.pop %v6041
    %6043 = vst [vmem:[#allocation2] sm:$0x30] %v6042
    %v6045 = vrot.slane %v6042, 4
    %6047 = vmatprep.subr.mxu0 0.0
    %6048 = vmatpush1.msra.mxu0 %v5886
    %6049 = vmatprep.subr.mxu0 0.0
    %6050 = vmatpush1.msra.mxu0 %v5885
    %6051 = vmatprep.subr.mxu0 0.0
    %6052 = vmatpush1.msra.mxu0 %v5884
    %6053 = vmatprep.subr.mxu0 0.0
    %6054 = vmatpush1.msra.mxu0 %v5883
    %6055 = vmatprep.subr.mxu0 0.0
    %6056 = vmatpush1.msra.mxu0 %v5882
    %6057 = vmatprep.subr.mxu0 0.0
    %6058 = vmatpush1.msra.mxu0 %v5881
    %6059 = vmatprep.subr.mxu0 0.0
    %6060 = vmatpush1.msra.mxu0 %v5880
    %6061 = vmatprep.subr.mxu0 0.0
    %6062 = vmatpush1.msra.mxu0 %v5879
    %6063 = vmatprep.subr.mxu0 0.0
    %6064 = vmatpush1.msra.mxu0 %v5878
    %6065 = vmatprep.subr.mxu0 0.0
    %6066 = vmatpush1.msra.mxu0 %v5877
    %6067 = vmatprep.subr.mxu0 0.0
    %6068 = vmatpush1.msra.mxu0 %v5876
    %6069 = vmatprep.subr.mxu0 0.0
    %6070 = vmatpush1.msra.mxu0 %v5875
    %6071 = vmatprep.subr.mxu0 0.0
    %6072 = vmatpush1.msra.mxu0 %v5874
    %6073 = vmatprep.subr.mxu0 0.0
    %6074 = vmatpush1.msra.mxu0 %v5873
    %6075 = vmatprep.subr.mxu0 0.0
    %6076 = vmatpush1.msra.mxu0 %v5872
    %6077 = vmatprep.subr.mxu0 0.0
    %6078 = vmatpush1.msra.mxu0 %v5871
    %6079 = vmatprep.subr.mxu0 0.0
    %6080 = vmatpush2.msra.mxu0 0.0
    %6081 = vmatprep.subr.mxu0 0.0
    %6082 = vmatpush2.msra.mxu0 0.0
    %6083 = vmatprep.subr.mxu0 0.0
    %6084 = vmatpush2.msra.mxu0 0.0
    %6085 = vmatprep.subr.mxu0 0.0
    %6086 = vmatpush2.msra.mxu0 0.0
    %6087 = vmatprep.subr.mxu0 0.0
    %6088 = vmatpush2.msra.mxu0 0.0
    %6089 = vmatprep.subr.mxu0 0.0
    %6090 = vmatpush2.msra.mxu0 0.0
    %6091 = vmatprep.subr.mxu0 0.0
    %6092 = vmatpush2.msra.mxu0 0.0
    %6093 = vmatprep.subr.mxu0 0.0
    %6094 = vmatpush2.msra.mxu0 0.0
    %6095 = vmatprep.subr.mxu0 0.0
    %6096 = vmatpush2.msra.mxu0 0.0
    %6097 = vmatprep.subr.mxu0 0.0
    %6098 = vmatpush2.msra.mxu0 0.0
    %6099 = vmatprep.subr.mxu0 0.0
    %6100 = vmatpush2.msra.mxu0 0.0
    %6101 = vmatprep.subr.mxu0 0.0
    %6102 = vmatpush2.msra.mxu0 0.0
    %6103 = vmatprep.subr.mxu0 0.0
    %6104 = vmatpush2.msra.mxu0 0.0
    %6105 = vmatprep.subr.mxu0 0.0
    %6106 = vmatpush2.msra.mxu0 0.0
    %6107 = vmatprep.subr.mxu0 0.0
    %6108 = vmatpush2.msra.mxu0 0.0
    %6109 = vmatprep.subr.mxu0 0.0
    %6110 = vmatpush2.msra.mxu0 0.0
    %6111 = vmatprep.mubr.f32.mxu0 0.0
    %6112 = vmatmul.mubr.f32.gmra.mxu0 %v6045
    %v6113 = vpop.f32.mrf.mxu0
    %v6114 = vadd.f32 0.0, %v6113
    %v6115 = vpop.f32.mrf.mxu0
    %6116 = vdwg.mxu0
    %v6118 = vrot.slane %v6114, 2
    %v6120 = vadd.f32 %v5863, %v6118
    %v6121 = vtanh.pop %v6120
    %6122 = vst [vmem:[#allocation2] sm:$0xc0] %v6121
    %v6124 = vrot.slane %v6121, 6
    %6126 = vmatprep.subr.mxu0 0.0
    %6127 = vmatpush1.msra.mxu0 %v5886
    %6128 = vmatprep.subr.mxu0 0.0
    %6129 = vmatpush1.msra.mxu0 %v5885
    %6130 = vmatprep.subr.mxu0 0.0
    %6131 = vmatpush1.msra.mxu0 %v5884
    %6132 = vmatprep.subr.mxu0 0.0
    %6133 = vmatpush1.msra.mxu0 %v5883
    %6134 = vmatprep.subr.mxu0 0.0
    %6135 = vmatpush1.msra.mxu0 %v5882
    %6136 = vmatprep.subr.mxu0 0.0
    %6137 = vmatpush1.msra.mxu0 %v5881
    %6138 = vmatprep.subr.mxu0 0.0
    %6139 = vmatpush1.msra.mxu0 %v5880
    %6140 = vmatprep.subr.mxu0 0.0
    %6141 = vmatpush1.msra.mxu0 %v5879
    %6142 = vmatprep.subr.mxu0 0.0
    %6143 = vmatpush1.msra.mxu0 %v5878
    %6144 = vmatprep.subr.mxu0 0.0
    %6145 = vmatpush1.msra.mxu0 %v5877
    %6146 = vmatprep.subr.mxu0 0.0
    %6147 = vmatpush1.msra.mxu0 %v5876
    %6148 = vmatprep.subr.mxu0 0.0
    %6149 = vmatpush1.msra.mxu0 %v5875
    %6150 = vmatprep.subr.mxu0 0.0
    %6151 = vmatpush1.msra.mxu0 %v5874
    %6152 = vmatprep.subr.mxu0 0.0
    %6153 = vmatpush1.msra.mxu0 %v5873
    %6154 = vmatprep.subr.mxu0 0.0
    %6155 = vmatpush1.msra.mxu0 %v5872
    %6156 = vmatprep.subr.mxu0 0.0
    %6157 = vmatpush1.msra.mxu0 %v5871
    %6158 = vmatprep.subr.mxu0 0.0
    %6159 = vmatpush2.msra.mxu0 0.0
    %6160 = vmatprep.subr.mxu0 0.0
    %6161 = vmatpush2.msra.mxu0 0.0
    %6162 = vmatprep.subr.mxu0 0.0
    %6163 = vmatpush2.msra.mxu0 0.0
    %6164 = vmatprep.subr.mxu0 0.0
    %6165 = vmatpush2.msra.mxu0 0.0
    %6166 = vmatprep.subr.mxu0 0.0
    %6167 = vmatpush2.msra.mxu0 0.0
    %6168 = vmatprep.subr.mxu0 0.0
    %6169 = vmatpush2.msra.mxu0 0.0
    %6170 = vmatprep.subr.mxu0 0.0
    %6171 = vmatpush2.msra.mxu0 0.0
    %6172 = vmatprep.subr.mxu0 0.0
    %6173 = vmatpush2.msra.mxu0 0.0
    %6174 = vmatprep.subr.mxu0 0.0
    %6175 = vmatpush2.msra.mxu0 0.0
    %6176 = vmatprep.subr.mxu0 0.0
    %6177 = vmatpush2.msra.mxu0 0.0
    %6178 = vmatprep.subr.mxu0 0.0
    %6179 = vmatpush2.msra.mxu0 0.0
    %6180 = vmatprep.subr.mxu0 0.0
    %6181 = vmatpush2.msra.mxu0 0.0
    %6182 = vmatprep.subr.mxu0 0.0
    %6183 = vmatpush2.msra.mxu0 0.0
    %6184 = vmatprep.subr.mxu0 0.0
    %6185 = vmatpush2.msra.mxu0 0.0
    %6186 = vmatprep.subr.mxu0 0.0
    %6187 = vmatpush2.msra.mxu0 0.0
    %6188 = vmatprep.subr.mxu0 0.0
    %6189 = vmatpush2.msra.mxu0 0.0
    %6190 = vmatprep.mubr.f32.mxu0 0.0
    %6191 = vmatmul.mubr.f32.gmra.mxu0 %v6124
    %v6192 = vpop.f32.mrf.mxu0
    %v6193 = vadd.f32 0.0, %v6192
    %v6194 = vpop.f32.mrf.mxu0
    %6195 = vdwg.mxu0
    %v6196 = vadd.f32 %v5868, %v6193
    %v6197 = vtanh.pop %v6196
    %6198 = vst [vmem:[#allocation2 + $0x8] sm:$0x3] %v6197
    %6199 = vmatprep.subr.mxu0 0.0
    %6200 = vmatpush1.msra.mxu0 %v5886
    %6201 = vmatprep.subr.mxu0 0.0
    %6202 = vmatpush1.msra.mxu0 %v5885
    %6203 = vmatprep.subr.mxu0 0.0
    %6204 = vmatpush1.msra.mxu0 %v5884
    %6205 = vmatprep.subr.mxu0 0.0
    %6206 = vmatpush1.msra.mxu0 %v5883
    %6207 = vmatprep.subr.mxu0 0.0
    %6208 = vmatpush1.msra.mxu0 %v5882
    %6209 = vmatprep.subr.mxu0 0.0
    %6210 = vmatpush1.msra.mxu0 %v5881
    %6211 = vmatprep.subr.mxu0 0.0
    %6212 = vmatpush1.msra.mxu0 %v5880
    %6213 = vmatprep.subr.mxu0 0.0
    %6214 = vmatpush1.msra.mxu0 %v5879
    %6215 = vmatprep.subr.mxu0 0.0
    %6216 = vmatpush1.msra.mxu0 %v5878
    %6217 = vmatprep.subr.mxu0 0.0
    %6218 = vmatpush1.msra.mxu0 %v5877
    %6219 = vmatprep.subr.mxu0 0.0
    %6220 = vmatpush1.msra.mxu0 %v5876
    %6221 = vmatprep.subr.mxu0 0.0
    %6222 = vmatpush1.msra.mxu0 %v5875
    %6223 = vmatprep.subr.mxu0 0.0
    %6224 = vmatpush1.msra.mxu0 %v5874
    %6225 = vmatprep.subr.mxu0 0.0
    %6226 = vmatpush1.msra.mxu0 %v5873
    %6227 = vmatprep.subr.mxu0 0.0
    %6228 = vmatpush1.msra.mxu0 %v5872
    %6229 = vmatprep.subr.mxu0 0.0
    %6230 = vmatpush1.msra.mxu0 %v5871
    %6231 = vmatprep.subr.mxu0 0.0
    %6232 = vmatpush2.msra.mxu0 0.0
    %6233 = vmatprep.subr.mxu0 0.0
    %6234 = vmatpush2.msra.mxu0 0.0
    %6235 = vmatprep.subr.mxu0 0.0
    %6236 = vmatpush2.msra.mxu0 0.0
    %6237 = vmatprep.subr.mxu0 0.0
    %6238 = vmatpush2.msra.mxu0 0.0
    %6239 = vmatprep.subr.mxu0 0.0
    %6240 = vmatpush2.msra.mxu0 0.0
    %6241 = vmatprep.subr.mxu0 0.0
    %6242 = vmatpush2.msra.mxu0 0.0
    %6243 = vmatprep.subr.mxu0 0.0
    %6244 = vmatpush2.msra.mxu0 0.0
    %6245 = vmatprep.subr.mxu0 0.0
    %6246 = vmatpush2.msra.mxu0 0.0
    %6247 = vmatprep.subr.mxu0 0.0
    %6248 = vmatpush2.msra.mxu0 0.0
    %6249 = vmatprep.subr.mxu0 0.0
    %6250 = vmatpush2.msra.mxu0 0.0
    %6251 = vmatprep.subr.mxu0 0.0
    %6252 = vmatpush2.msra.mxu0 0.0
    %6253 = vmatprep.subr.mxu0 0.0
    %6254 = vmatpush2.msra.mxu0 0.0
    %6255 = vmatprep.subr.mxu0 0.0
    %6256 = vmatpush2.msra.mxu0 0.0
    %6257 = vmatprep.subr.mxu0 0.0
    %6258 = vmatpush2.msra.mxu0 0.0
    %6259 = vmatprep.subr.mxu0 0.0
    %6260 = vmatpush2.msra.mxu0 0.0
    %6261 = vmatprep.subr.mxu0 0.0
    %6262 = vmatpush2.msra.mxu0 0.0
    %6263 = vmatprep.mubr.f32.mxu0 0.0
    %6264 = vmatmul.mubr.f32.gmra.mxu0 %v6197
    %v6265 = vpop.f32.mrf.mxu0
    %v6266 = vadd.f32 0.0, %v6265
    %v6267 = vpop.f32.mrf.mxu0
    %6268 = vdwg.mxu0
    %v6270 = vrot.slane %v6266, 6
    %v6272 = vadd.f32 %v5868, %v6270
    %v6273 = vtanh.pop %v6272
    %6274 = vst [vmem:[#allocation2 + $0x8] sm:$0xc] %v6273
    %v6276 = vrot.slane %v6273, 2
    %6278 = vmatprep.subr.mxu0 0.0
    %6279 = vmatpush1.msra.mxu0 %v5886
    %6280 = vmatprep.subr.mxu0 0.0
    %6281 = vmatpush1.msra.mxu0 %v5885
    %6282 = vmatprep.subr.mxu0 0.0
    %6283 = vmatpush1.msra.mxu0 %v5884
    %6284 = vmatprep.subr.mxu0 0.0
    %6285 = vmatpush1.msra.mxu0 %v5883
    %6286 = vmatprep.subr.mxu0 0.0
    %6287 = vmatpush1.msra.mxu0 %v5882
    %6288 = vmatprep.subr.mxu0 0.0
    %6289 = vmatpush1.msra.mxu0 %v5881
    %6290 = vmatprep.subr.mxu0 0.0
    %6291 = vmatpush1.msra.mxu0 %v5880
    %6292 = vmatprep.subr.mxu0 0.0
    %6293 = vmatpush1.msra.mxu0 %v5879
    %6294 = vmatprep.subr.mxu0 0.0
    %6295 = vmatpush1.msra.mxu0 %v5878
    %6296 = vmatprep.subr.mxu0 0.0
    %6297 = vmatpush1.msra.mxu0 %v5877
    %6298 = vmatprep.subr.mxu0 0.0
    %6299 = vmatpush1.msra.mxu0 %v5876
    %6300 = vmatprep.subr.mxu0 0.0
    %6301 = vmatpush1.msra.mxu0 %v5875
    %6302 = vmatprep.subr.mxu0 0.0
    %6303 = vmatpush1.msra.mxu0 %v5874
    %6304 = vmatprep.subr.mxu0 0.0
    %6305 = vmatpush1.msra.mxu0 %v5873
    %6306 = vmatprep.subr.mxu0 0.0
    %6307 = vmatpush1.msra.mxu0 %v5872
    %6308 = vmatprep.subr.mxu0 0.0
    %6309 = vmatpush1.msra.mxu0 %v5871
    %6310 = vmatprep.subr.mxu0 0.0
    %6311 = vmatpush2.msra.mxu0 0.0
    %6312 = vmatprep.subr.mxu0 0.0
    %6313 = vmatpush2.msra.mxu0 0.0
    %6314 = vmatprep.subr.mxu0 0.0
    %6315 = vmatpush2.msra.mxu0 0.0
    %6316 = vmatprep.subr.mxu0 0.0
    %6317 = vmatpush2.msra.mxu0 0.0
    %6318 = vmatprep.subr.mxu0 0.0
    %6319 = vmatpush2.msra.mxu0 0.0
    %6320 = vmatprep.subr.mxu0 0.0
    %6321 = vmatpush2.msra.mxu0 0.0
    %6322 = vmatprep.subr.mxu0 0.0
    %6323 = vmatpush2.msra.mxu0 0.0
    %6324 = vmatprep.subr.mxu0 0.0
    %6325 = vmatpush2.msra.mxu0 0.0
    %6326 = vmatprep.subr.mxu0 0.0
    %6327 = vmatpush2.msra.mxu0 0.0
    %6328 = vmatprep.subr.mxu0 0.0
    %6329 = vmatpush2.msra.mxu0 0.0
    %6330 = vmatprep.subr.mxu0 0.0
    %6331 = vmatpush2.msra.mxu0 0.0
    %6332 = vmatprep.subr.mxu0 0.0
    %6333 = vmatpush2.msra.mxu0 0.0
    %6334 = vmatprep.subr.mxu0 0.0
    %6335 = vmatpush2.msra.mxu0 0.0
    %6336 = vmatprep.subr.mxu0 0.0
    %6337 = vmatpush2.msra.mxu0 0.0
    %6338 = vmatprep.subr.mxu0 0.0
    %6339 = vmatpush2.msra.mxu0 0.0
    %6340 = vmatprep.subr.mxu0 0.0
    %6341 = vmatpush2.msra.mxu0 0.0
    %6342 = vmatprep.mubr.f32.mxu0 0.0
    %6343 = vmatmul.mubr.f32.gmra.mxu0 %v6276
    %v6344 = vpop.f32.mrf.mxu0
    %v6345 = vadd.f32 0.0, %v6344
    %v6346 = vpop.f32.mrf.mxu0
    %6347 = vdwg.mxu0
    %v6349 = vrot.slane %v6345, 4
    %v6351 = vadd.f32 %v5868, %v6349
    %v6352 = vtanh.pop %v6351
    %6353 = vst [vmem:[#allocation2 + $0x8] sm:$0x30] %v6352
    %v6355 = vrot.slane %v6352, 4
    %6357 = vmatprep.subr.mxu0 0.0
    %6358 = vmatpush1.msra.mxu0 %v5886
    %6359 = vmatprep.subr.mxu0 0.0
    %6360 = vmatpush1.msra.mxu0 %v5885
    %6361 = vmatprep.subr.mxu0 0.0
    %6362 = vmatpush1.msra.mxu0 %v5884
    %6363 = vmatprep.subr.mxu0 0.0
    %6364 = vmatpush1.msra.mxu0 %v5883
    %6365 = vmatprep.subr.mxu0 0.0
    %6366 = vmatpush1.msra.mxu0 %v5882
    %6367 = vmatprep.subr.mxu0 0.0
    %6368 = vmatpush1.msra.mxu0 %v5881
    %6369 = vmatprep.subr.mxu0 0.0
    %6370 = vmatpush1.msra.mxu0 %v5880
    %6371 = vmatprep.subr.mxu0 0.0
    %6372 = vmatpush1.msra.mxu0 %v5879
    %6373 = vmatprep.subr.mxu0 0.0
    %6374 = vmatpush1.msra.mxu0 %v5878
    %6375 = vmatprep.subr.mxu0 0.0
    %6376 = vmatpush1.msra.mxu0 %v5877
    %6377 = vmatprep.subr.mxu0 0.0
    %6378 = vmatpush1.msra.mxu0 %v5876
    %6379 = vmatprep.subr.mxu0 0.0
    %6380 = vmatpush1.msra.mxu0 %v5875
    %6381 = vmatprep.subr.mxu0 0.0
    %6382 = vmatpush1.msra.mxu0 %v5874
    %6383 = vmatprep.subr.mxu0 0.0
    %6384 = vmatpush1.msra.mxu0 %v5873
    %6385 = vmatprep.subr.mxu0 0.0
    %6386 = vmatpush1.msra.mxu0 %v5872
    %6387 = vmatprep.subr.mxu0 0.0
    %6388 = vmatpush1.msra.mxu0 %v5871
    %6389 = vmatprep.subr.mxu0 0.0
    %6390 = vmatpush2.msra.mxu0 0.0
    %6391 = vmatprep.subr.mxu0 0.0
    %6392 = vmatpush2.msra.mxu0 0.0
    %6393 = vmatprep.subr.mxu0 0.0
    %6394 = vmatpush2.msra.mxu0 0.0
    %6395 = vmatprep.subr.mxu0 0.0
    %6396 = vmatpush2.msra.mxu0 0.0
    %6397 = vmatprep.subr.mxu0 0.0
    %6398 = vmatpush2.msra.mxu0 0.0
    %6399 = vmatprep.subr.mxu0 0.0
    %6400 = vmatpush2.msra.mxu0 0.0
    %6401 = vmatprep.subr.mxu0 0.0
    %6402 = vmatpush2.msra.mxu0 0.0
    %6403 = vmatprep.subr.mxu0 0.0
    %6404 = vmatpush2.msra.mxu0 0.0
    %6405 = vmatprep.subr.mxu0 0.0
    %6406 = vmatpush2.msra.mxu0 0.0
    %6407 = vmatprep.subr.mxu0 0.0
    %6408 = vmatpush2.msra.mxu0 0.0
    %6409 = vmatprep.subr.mxu0 0.0
    %6410 = vmatpush2.msra.mxu0 0.0
    %6411 = vmatprep.subr.mxu0 0.0
    %6412 = vmatpush2.msra.mxu0 0.0
    %6413 = vmatprep.subr.mxu0 0.0
    %6414 = vmatpush2.msra.mxu0 0.0
    %6415 = vmatprep.subr.mxu0 0.0
    %6416 = vmatpush2.msra.mxu0 0.0
    %6417 = vmatprep.subr.mxu0 0.0
    %6418 = vmatpush2.msra.mxu0 0.0
    %6419 = vmatprep.subr.mxu0 0.0
    %6420 = vmatpush2.msra.mxu0 0.0
    %6421 = vmatprep.mubr.f32.mxu0 0.0
    %6422 = vmatmul.mubr.f32.gmra.mxu0 %v6355
    %v6423 = vpop.f32.mrf.mxu0
    %v6424 = vadd.f32 0.0, %v6423
    %v6425 = vpop.f32.mrf.mxu0
    %6426 = vdwg.mxu0
    %v6428 = vrot.slane %v6424, 2
    %v6430 = vadd.f32 %v5868, %v6428
    %v6431 = vtanh.pop %v6430
    %6432 = vst [vmem:[#allocation2 + $0x8] sm:$0xc0] %v6431
    %v6433 = vld [vmem:[#allocation2] sm:$0xff]
    %v6434 = vld [vmem:[#allocation2 + $0x8] sm:$0xff]
    %v6435 = vadd.f32 %v4447, %v6433
    %v6436 = vadd.f32 %v4448, %v6434
    %v6437 = vld [vmem:[#allocation29] sm:$0xff]
    %v6438 = vld [vmem:[#allocation29 + $0x8] sm:$0xff]
    %v6439 = vld [vmem:[#allocation29 + $0x10] sm:$0xff]
    %v6440 = vld [vmem:[#allocation29 + $0x18] sm:$0xff]
    %v6441 = vld [vmem:[#allocation29 + $0x20] sm:$0xff]
    %v6442 = vld [vmem:[#allocation29 + $0x28] sm:$0xff]
    %v6443 = vld [vmem:[#allocation29 + $0x30] sm:$0xff]
    %v6444 = vld [vmem:[#allocation29 + $0x38] sm:$0xff]
    %v6445 = vld [vmem:[#allocation29 + $0x40] sm:$0xff]
    %v6446 = vld [vmem:[#allocation29 + $0x48] sm:$0xff]
    %v6447 = vld [vmem:[#allocation29 + $0x50] sm:$0xff]
    %v6448 = vld [vmem:[#allocation29 + $0x58] sm:$0xff]
    %v6449 = vld [vmem:[#allocation29 + $0x60] sm:$0xff]
    %v6450 = vld [vmem:[#allocation29 + $0x68] sm:$0xff]
    %v6451 = vld [vmem:[#allocation29 + $0x70] sm:$0xff]
    %v6452 = vld [vmem:[#allocation29 + $0x78] sm:$0xff]
    %v6453 = vld [vmem:[%s59] sm:$0x1]
    %v6455 = vlaneseq
    %v6456 = vshrl.u32 %v6455, 7
    %v6457 = vsub.s32 0, %v6456
    %v6458 = vrot.slane %v6453, %v6457
    %6460 = vmatprep.subr.mxu0 0.0
    %6461 = vmatpush1.msra.mxu0 %v6452
    %6462 = vmatprep.subr.mxu0 0.0
    %6463 = vmatpush1.msra.mxu0 %v6451
    %6464 = vmatprep.subr.mxu0 0.0
    %6465 = vmatpush1.msra.mxu0 %v6450
    %6466 = vmatprep.subr.mxu0 0.0
    %6467 = vmatpush1.msra.mxu0 %v6449
    %6468 = vmatprep.subr.mxu0 0.0
    %6469 = vmatpush1.msra.mxu0 %v6448
    %6470 = vmatprep.subr.mxu0 0.0
    %6471 = vmatpush1.msra.mxu0 %v6447
    %6472 = vmatprep.subr.mxu0 0.0
    %6473 = vmatpush1.msra.mxu0 %v6446
    %6474 = vmatprep.subr.mxu0 0.0
    %6475 = vmatpush1.msra.mxu0 %v6445
    %6476 = vmatprep.subr.mxu0 0.0
    %6477 = vmatpush1.msra.mxu0 %v6444
    %6478 = vmatprep.subr.mxu0 0.0
    %6479 = vmatpush1.msra.mxu0 %v6443
    %6480 = vmatprep.subr.mxu0 0.0
    %6481 = vmatpush1.msra.mxu0 %v6442
    %6482 = vmatprep.subr.mxu0 0.0
    %6483 = vmatpush1.msra.mxu0 %v6441
    %6484 = vmatprep.subr.mxu0 0.0
    %6485 = vmatpush1.msra.mxu0 %v6440
    %6486 = vmatprep.subr.mxu0 0.0
    %6487 = vmatpush1.msra.mxu0 %v6439
    %6488 = vmatprep.subr.mxu0 0.0
    %6489 = vmatpush1.msra.mxu0 %v6438
    %6490 = vmatprep.subr.mxu0 0.0
    %6491 = vmatpush1.msra.mxu0 %v6437
    %6492 = vmatprep.subr.mxu0 0.0
    %6493 = vmatpush2.msra.mxu0 0.0
    %6494 = vmatprep.subr.mxu0 0.0
    %6495 = vmatpush2.msra.mxu0 0.0
    %6496 = vmatprep.subr.mxu0 0.0
    %6497 = vmatpush2.msra.mxu0 0.0
    %6498 = vmatprep.subr.mxu0 0.0
    %6499 = vmatpush2.msra.mxu0 0.0
    %6500 = vmatprep.subr.mxu0 0.0
    %6501 = vmatpush2.msra.mxu0 0.0
    %6502 = vmatprep.subr.mxu0 0.0
    %6503 = vmatpush2.msra.mxu0 0.0
    %6504 = vmatprep.subr.mxu0 0.0
    %6505 = vmatpush2.msra.mxu0 0.0
    %6506 = vmatprep.subr.mxu0 0.0
    %6507 = vmatpush2.msra.mxu0 0.0
    %6508 = vmatprep.subr.mxu0 0.0
    %6509 = vmatpush2.msra.mxu0 0.0
    %6510 = vmatprep.subr.mxu0 0.0
    %6511 = vmatpush2.msra.mxu0 0.0
    %6512 = vmatprep.subr.mxu0 0.0
    %6513 = vmatpush2.msra.mxu0 0.0
    %6514 = vmatprep.subr.mxu0 0.0
    %6515 = vmatpush2.msra.mxu0 0.0
    %6516 = vmatprep.subr.mxu0 0.0
    %6517 = vmatpush2.msra.mxu0 0.0
    %6518 = vmatprep.subr.mxu0 0.0
    %6519 = vmatpush2.msra.mxu0 0.0
    %6520 = vmatprep.subr.mxu0 0.0
    %6521 = vmatpush2.msra.mxu0 0.0
    %6522 = vmatprep.subr.mxu0 0.0
    %6523 = vmatpush2.msra.mxu0 0.0
    %6524 = vmatprep.mubr.f32.mxu0 0.0
    %6525 = vmatmul.mubr.f32.gmra.mxu0 %v6435
    %v6526 = vpop.f32.mrf.mxu0
    %v6527 = vadd.f32 %v6458, %v6526
    %v6528 = vpop.f32.mrf.mxu0
    %6529 = vmatprep.mubr.f32.mxu0 0.0
    %6530 = vmatmul.mubr.f32.gmra.mxu0 %v6436
    %v6531 = vpop.f32.mrf.mxu0
    %v6532 = vadd.f32 %v6458, %v6531
    %v6533 = vpop.f32.mrf.mxu0
    %6534 = vdwg.mxu0
    %v6535 = vtanh.pop %v6527
    %v6536 = vtanh.pop %v6532
    %v6537 = vld [vmem:[#allocation31] sm:$0xff]
    %v6538 = vld [vmem:[#allocation31 + $0x8] sm:$0xff]
    %v6539 = vld [vmem:[#allocation31 + $0x10] sm:$0xff]
    %v6540 = vld [vmem:[#allocation31 + $0x18] sm:$0xff]
    %v6541 = vld [vmem:[#allocation31 + $0x20] sm:$0xff]
    %v6542 = vld [vmem:[#allocation31 + $0x28] sm:$0xff]
    %v6543 = vld [vmem:[#allocation31 + $0x30] sm:$0xff]
    %v6544 = vld [vmem:[#allocation31 + $0x38] sm:$0xff]
    %v6545 = vld [vmem:[#allocation31 + $0x40] sm:$0xff]
    %v6546 = vld [vmem:[#allocation31 + $0x48] sm:$0xff]
    %v6547 = vld [vmem:[#allocation31 + $0x50] sm:$0xff]
    %v6548 = vld [vmem:[#allocation31 + $0x58] sm:$0xff]
    %v6549 = vld [vmem:[#allocation31 + $0x60] sm:$0xff]
    %v6550 = vld [vmem:[#allocation31 + $0x68] sm:$0xff]
    %v6551 = vld [vmem:[#allocation31 + $0x70] sm:$0xff]
    %v6552 = vld [vmem:[#allocation31 + $0x78] sm:$0xff]
    %v6553 = vld [vmem:[%s63] sm:$0x1]
    %v6555 = vlaneseq
    %v6556 = vshrl.u32 %v6555, 7
    %v6557 = vsub.s32 0, %v6556
    %v6558 = vrot.slane %v6553, %v6557
    %6560 = vmatprep.subr.mxu0 0.0
    %6561 = vmatpush1.msra.mxu0 %v6552
    %6562 = vmatprep.subr.mxu0 0.0
    %6563 = vmatpush1.msra.mxu0 %v6551
    %6564 = vmatprep.subr.mxu0 0.0
    %6565 = vmatpush1.msra.mxu0 %v6550
    %6566 = vmatprep.subr.mxu0 0.0
    %6567 = vmatpush1.msra.mxu0 %v6549
    %6568 = vmatprep.subr.mxu0 0.0
    %6569 = vmatpush1.msra.mxu0 %v6548
    %6570 = vmatprep.subr.mxu0 0.0
    %6571 = vmatpush1.msra.mxu0 %v6547
    %6572 = vmatprep.subr.mxu0 0.0
    %6573 = vmatpush1.msra.mxu0 %v6546
    %6574 = vmatprep.subr.mxu0 0.0
    %6575 = vmatpush1.msra.mxu0 %v6545
    %6576 = vmatprep.subr.mxu0 0.0
    %6577 = vmatpush1.msra.mxu0 %v6544
    %6578 = vmatprep.subr.mxu0 0.0
    %6579 = vmatpush1.msra.mxu0 %v6543
    %6580 = vmatprep.subr.mxu0 0.0
    %6581 = vmatpush1.msra.mxu0 %v6542
    %6582 = vmatprep.subr.mxu0 0.0
    %6583 = vmatpush1.msra.mxu0 %v6541
    %6584 = vmatprep.subr.mxu0 0.0
    %6585 = vmatpush1.msra.mxu0 %v6540
    %6586 = vmatprep.subr.mxu0 0.0
    %6587 = vmatpush1.msra.mxu0 %v6539
    %6588 = vmatprep.subr.mxu0 0.0
    %6589 = vmatpush1.msra.mxu0 %v6538
    %6590 = vmatprep.subr.mxu0 0.0
    %6591 = vmatpush1.msra.mxu0 %v6537
    %6592 = vmatprep.subr.mxu0 0.0
    %6593 = vmatpush2.msra.mxu0 0.0
    %6594 = vmatprep.subr.mxu0 0.0
    %6595 = vmatpush2.msra.mxu0 0.0
    %6596 = vmatprep.subr.mxu0 0.0
    %6597 = vmatpush2.msra.mxu0 0.0
    %6598 = vmatprep.subr.mxu0 0.0
    %6599 = vmatpush2.msra.mxu0 0.0
    %6600 = vmatprep.subr.mxu0 0.0
    %6601 = vmatpush2.msra.mxu0 0.0
    %6602 = vmatprep.subr.mxu0 0.0
    %6603 = vmatpush2.msra.mxu0 0.0
    %6604 = vmatprep.subr.mxu0 0.0
    %6605 = vmatpush2.msra.mxu0 0.0
    %6606 = vmatprep.subr.mxu0 0.0
    %6607 = vmatpush2.msra.mxu0 0.0
    %6608 = vmatprep.subr.mxu0 0.0
    %6609 = vmatpush2.msra.mxu0 0.0
    %6610 = vmatprep.subr.mxu0 0.0
    %6611 = vmatpush2.msra.mxu0 0.0
    %6612 = vmatprep.subr.mxu0 0.0
    %6613 = vmatpush2.msra.mxu0 0.0
    %6614 = vmatprep.subr.mxu0 0.0
    %6615 = vmatpush2.msra.mxu0 0.0
    %6616 = vmatprep.subr.mxu0 0.0
    %6617 = vmatpush2.msra.mxu0 0.0
    %6618 = vmatprep.subr.mxu0 0.0
    %6619 = vmatpush2.msra.mxu0 0.0
    %6620 = vmatprep.subr.mxu0 0.0
    %6621 = vmatpush2.msra.mxu0 0.0
    %6622 = vmatprep.subr.mxu0 0.0
    %6623 = vmatpush2.msra.mxu0 0.0
    %6624 = vmatprep.mubr.f32.mxu0 0.0
    %6625 = vmatmul.mubr.f32.gmra.mxu0 %v6535
    %v6626 = vpop.f32.mrf.mxu0
    %v6627 = vadd.f32 %v6558, %v6626
    %v6628 = vpop.f32.mrf.mxu0
    %6629 = vmatprep.mubr.f32.mxu0 0.0
    %6630 = vmatmul.mubr.f32.gmra.mxu0 %v6536
    %v6631 = vpop.f32.mrf.mxu0
    %v6632 = vadd.f32 %v6558, %v6631
    %v6633 = vpop.f32.mrf.mxu0
    %6634 = vdwg.mxu0
    %v6635 = vtanh.pop %v6627
    %v6636 = vtanh.pop %v6632
    %v6637 = vld [vmem:[#allocation32] sm:$0xff]
    %v6638 = vld [vmem:[#allocation32 + $0x8] sm:$0xff]
    %v6639 = vld [vmem:[#allocation32 + $0x10] sm:$0xff]
    %v6640 = vld [vmem:[#allocation32 + $0x18] sm:$0xff]
    %v6641 = vld [vmem:[#allocation32 + $0x20] sm:$0xff]
    %v6642 = vld [vmem:[#allocation32 + $0x28] sm:$0xff]
    %v6643 = vld [vmem:[#allocation32 + $0x30] sm:$0xff]
    %v6644 = vld [vmem:[#allocation32 + $0x38] sm:$0xff]
    %v6645 = vld [vmem:[#allocation32 + $0x40] sm:$0xff]
    %v6646 = vld [vmem:[#allocation32 + $0x48] sm:$0xff]
    %v6647 = vld [vmem:[#allocation32 + $0x50] sm:$0xff]
    %v6648 = vld [vmem:[#allocation32 + $0x58] sm:$0xff]
    %v6649 = vld [vmem:[#allocation32 + $0x60] sm:$0xff]
    %v6650 = vld [vmem:[#allocation32 + $0x68] sm:$0xff]
    %v6651 = vld [vmem:[#allocation32 + $0x70] sm:$0xff]
    %v6652 = vld [vmem:[#allocation32 + $0x78] sm:$0xff]
    %v6653 = vld [vmem:[%s67] sm:$0x1]
    %v6655 = vlaneseq
    %v6656 = vshrl.u32 %v6655, 7
    %v6657 = vsub.s32 0, %v6656
    %v6658 = vrot.slane %v6653, %v6657
    %6660 = vmatprep.subr.mxu0 0.0
    %6661 = vmatpush1.msra.mxu0 %v6652
    %6662 = vmatprep.subr.mxu0 0.0
    %6663 = vmatpush1.msra.mxu0 %v6651
    %6664 = vmatprep.subr.mxu0 0.0
    %6665 = vmatpush1.msra.mxu0 %v6650
    %6666 = vmatprep.subr.mxu0 0.0
    %6667 = vmatpush1.msra.mxu0 %v6649
    %6668 = vmatprep.subr.mxu0 0.0
    %6669 = vmatpush1.msra.mxu0 %v6648
    %6670 = vmatprep.subr.mxu0 0.0
    %6671 = vmatpush1.msra.mxu0 %v6647
    %6672 = vmatprep.subr.mxu0 0.0
    %6673 = vmatpush1.msra.mxu0 %v6646
    %6674 = vmatprep.subr.mxu0 0.0
    %6675 = vmatpush1.msra.mxu0 %v6645
    %6676 = vmatprep.subr.mxu0 0.0
    %6677 = vmatpush1.msra.mxu0 %v6644
    %6678 = vmatprep.subr.mxu0 0.0
    %6679 = vmatpush1.msra.mxu0 %v6643
    %6680 = vmatprep.subr.mxu0 0.0
    %6681 = vmatpush1.msra.mxu0 %v6642
    %6682 = vmatprep.subr.mxu0 0.0
    %6683 = vmatpush1.msra.mxu0 %v6641
    %6684 = vmatprep.subr.mxu0 0.0
    %6685 = vmatpush1.msra.mxu0 %v6640
    %6686 = vmatprep.subr.mxu0 0.0
    %6687 = vmatpush1.msra.mxu0 %v6639
    %6688 = vmatprep.subr.mxu0 0.0
    %6689 = vmatpush1.msra.mxu0 %v6638
    %6690 = vmatprep.subr.mxu0 0.0
    %6691 = vmatpush1.msra.mxu0 %v6637
    %6692 = vmatprep.subr.mxu0 0.0
    %6693 = vmatpush2.msra.mxu0 0.0
    %6694 = vmatprep.subr.mxu0 0.0
    %6695 = vmatpush2.msra.mxu0 0.0
    %6696 = vmatprep.subr.mxu0 0.0
    %6697 = vmatpush2.msra.mxu0 0.0
    %6698 = vmatprep.subr.mxu0 0.0
    %6699 = vmatpush2.msra.mxu0 0.0
    %6700 = vmatprep.subr.mxu0 0.0
    %6701 = vmatpush2.msra.mxu0 0.0
    %6702 = vmatprep.subr.mxu0 0.0
    %6703 = vmatpush2.msra.mxu0 0.0
    %6704 = vmatprep.subr.mxu0 0.0
    %6705 = vmatpush2.msra.mxu0 0.0
    %6706 = vmatprep.subr.mxu0 0.0
    %6707 = vmatpush2.msra.mxu0 0.0
    %6708 = vmatprep.subr.mxu0 0.0
    %6709 = vmatpush2.msra.mxu0 0.0
    %6710 = vmatprep.subr.mxu0 0.0
    %6711 = vmatpush2.msra.mxu0 0.0
    %6712 = vmatprep.subr.mxu0 0.0
    %6713 = vmatpush2.msra.mxu0 0.0
    %6714 = vmatprep.subr.mxu0 0.0
    %6715 = vmatpush2.msra.mxu0 0.0
    %6716 = vmatprep.subr.mxu0 0.0
    %6717 = vmatpush2.msra.mxu0 0.0
    %6718 = vmatprep.subr.mxu0 0.0
    %6719 = vmatpush2.msra.mxu0 0.0
    %6720 = vmatprep.subr.mxu0 0.0
    %6721 = vmatpush2.msra.mxu0 0.0
    %6722 = vmatprep.subr.mxu0 0.0
    %6723 = vmatpush2.msra.mxu0 0.0
    %6724 = vmatprep.mubr.f32.mxu0 0.0
    %6725 = vmatmul.mubr.f32.gmra.mxu0 %v6635
    %v6726 = vpop.f32.mrf.mxu0
    %v6727 = vadd.f32 %v6658, %v6726
    %v6728 = vpop.f32.mrf.mxu0
    %6729 = vmatprep.mubr.f32.mxu0 0.0
    %6730 = vmatmul.mubr.f32.gmra.mxu0 %v6636
    %v6731 = vpop.f32.mrf.mxu0
    %v6732 = vadd.f32 %v6658, %v6731
    %v6733 = vpop.f32.mrf.mxu0
    %6734 = vdwg.mxu0
    %v6735 = vtanh.pop %v6727
    %v6736 = vtanh.pop %v6732
    %v6737 = vld [vmem:[#allocation34] sm:$0xff]
    %v6738 = vld [vmem:[#allocation34 + $0x8] sm:$0xff]
    %v6739 = vld [vmem:[#allocation34 + $0x10] sm:$0xff]
    %v6740 = vld [vmem:[#allocation34 + $0x18] sm:$0xff]
    %v6741 = vld [vmem:[#allocation34 + $0x20] sm:$0xff]
    %v6742 = vld [vmem:[#allocation34 + $0x28] sm:$0xff]
    %v6743 = vld [vmem:[#allocation34 + $0x30] sm:$0xff]
    %v6744 = vld [vmem:[#allocation34 + $0x38] sm:$0xff]
    %v6745 = vld [vmem:[#allocation34 + $0x40] sm:$0xff]
    %v6746 = vld [vmem:[#allocation34 + $0x48] sm:$0xff]
    %v6747 = vld [vmem:[#allocation34 + $0x50] sm:$0xff]
    %v6748 = vld [vmem:[#allocation34 + $0x58] sm:$0xff]
    %v6749 = vld [vmem:[#allocation34 + $0x60] sm:$0xff]
    %v6750 = vld [vmem:[#allocation34 + $0x68] sm:$0xff]
    %v6751 = vld [vmem:[#allocation34 + $0x70] sm:$0xff]
    %v6752 = vld [vmem:[#allocation34 + $0x78] sm:$0xff]
    %v6753 = vld [vmem:[%s71] sm:$0x1]
    %v6755 = vlaneseq
    %v6756 = vshrl.u32 %v6755, 7
    %v6757 = vsub.s32 0, %v6756
    %v6758 = vrot.slane %v6753, %v6757
    %6760 = vmatprep.subr.mxu0 0.0
    %6761 = vmatpush1.msra.mxu0 %v6752
    %6762 = vmatprep.subr.mxu0 0.0
    %6763 = vmatpush1.msra.mxu0 %v6751
    %6764 = vmatprep.subr.mxu0 0.0
    %6765 = vmatpush1.msra.mxu0 %v6750
    %6766 = vmatprep.subr.mxu0 0.0
    %6767 = vmatpush1.msra.mxu0 %v6749
    %6768 = vmatprep.subr.mxu0 0.0
    %6769 = vmatpush1.msra.mxu0 %v6748
    %6770 = vmatprep.subr.mxu0 0.0
    %6771 = vmatpush1.msra.mxu0 %v6747
    %6772 = vmatprep.subr.mxu0 0.0
    %6773 = vmatpush1.msra.mxu0 %v6746
    %6774 = vmatprep.subr.mxu0 0.0
    %6775 = vmatpush1.msra.mxu0 %v6745
    %6776 = vmatprep.subr.mxu0 0.0
    %6777 = vmatpush1.msra.mxu0 %v6744
    %6778 = vmatprep.subr.mxu0 0.0
    %6779 = vmatpush1.msra.mxu0 %v6743
    %6780 = vmatprep.subr.mxu0 0.0
    %6781 = vmatpush1.msra.mxu0 %v6742
    %6782 = vmatprep.subr.mxu0 0.0
    %6783 = vmatpush1.msra.mxu0 %v6741
    %6784 = vmatprep.subr.mxu0 0.0
    %6785 = vmatpush1.msra.mxu0 %v6740
    %6786 = vmatprep.subr.mxu0 0.0
    %6787 = vmatpush1.msra.mxu0 %v6739
    %6788 = vmatprep.subr.mxu0 0.0
    %6789 = vmatpush1.msra.mxu0 %v6738
    %6790 = vmatprep.subr.mxu0 0.0
    %6791 = vmatpush1.msra.mxu0 %v6737
    %6792 = vmatprep.subr.mxu0 0.0
    %6793 = vmatpush2.msra.mxu0 0.0
    %6794 = vmatprep.subr.mxu0 0.0
    %6795 = vmatpush2.msra.mxu0 0.0
    %6796 = vmatprep.subr.mxu0 0.0
    %6797 = vmatpush2.msra.mxu0 0.0
    %6798 = vmatprep.subr.mxu0 0.0
    %6799 = vmatpush2.msra.mxu0 0.0
    %6800 = vmatprep.subr.mxu0 0.0
    %6801 = vmatpush2.msra.mxu0 0.0
    %6802 = vmatprep.subr.mxu0 0.0
    %6803 = vmatpush2.msra.mxu0 0.0
    %6804 = vmatprep.subr.mxu0 0.0
    %6805 = vmatpush2.msra.mxu0 0.0
    %6806 = vmatprep.subr.mxu0 0.0
    %6807 = vmatpush2.msra.mxu0 0.0
    %6808 = vmatprep.subr.mxu0 0.0
    %6809 = vmatpush2.msra.mxu0 0.0
    %6810 = vmatprep.subr.mxu0 0.0
    %6811 = vmatpush2.msra.mxu0 0.0
    %6812 = vmatprep.subr.mxu0 0.0
    %6813 = vmatpush2.msra.mxu0 0.0
    %6814 = vmatprep.subr.mxu0 0.0
    %6815 = vmatpush2.msra.mxu0 0.0
    %6816 = vmatprep.subr.mxu0 0.0
    %6817 = vmatpush2.msra.mxu0 0.0
    %6818 = vmatprep.subr.mxu0 0.0
    %6819 = vmatpush2.msra.mxu0 0.0
    %6820 = vmatprep.subr.mxu0 0.0
    %6821 = vmatpush2.msra.mxu0 0.0
    %6822 = vmatprep.subr.mxu0 0.0
    %6823 = vmatpush2.msra.mxu0 0.0
    %6824 = vmatprep.mubr.f32.mxu0 0.0
    %6825 = vmatmul.mubr.f32.gmra.mxu0 %v6735
    %v6826 = vpop.f32.mrf.mxu0
    %v6827 = vadd.f32 %v6758, %v6826
    %v6828 = vpop.f32.mrf.mxu0
    %6829 = vmatprep.mubr.f32.mxu0 0.0
    %6830 = vmatmul.mubr.f32.gmra.mxu0 %v6736
    %v6831 = vpop.f32.mrf.mxu0
    %v6832 = vadd.f32 %v6758, %v6831
    %v6833 = vpop.f32.mrf.mxu0
    %6834 = vdwg.mxu0
    %v6835 = vtanh.pop %v6827
    %v6836 = vtanh.pop %v6832
    %v6837 = vld [vmem:[#allocation35] sm:$0xff]
    %v6838 = vld [vmem:[#allocation35 + $0x8] sm:$0xff]
    %v6839 = vld [vmem:[#allocation35 + $0x10] sm:$0xff]
    %v6840 = vld [vmem:[#allocation35 + $0x18] sm:$0xff]
    %v6841 = vld [vmem:[#allocation35 + $0x20] sm:$0xff]
    %v6842 = vld [vmem:[#allocation35 + $0x28] sm:$0xff]
    %v6843 = vld [vmem:[#allocation35 + $0x30] sm:$0xff]
    %v6844 = vld [vmem:[#allocation35 + $0x38] sm:$0xff]
    %v6845 = vld [vmem:[#allocation35 + $0x40] sm:$0xff]
    %v6846 = vld [vmem:[#allocation35 + $0x48] sm:$0xff]
    %v6847 = vld [vmem:[#allocation35 + $0x50] sm:$0xff]
    %v6848 = vld [vmem:[#allocation35 + $0x58] sm:$0xff]
    %v6849 = vld [vmem:[#allocation35 + $0x60] sm:$0xff]
    %v6850 = vld [vmem:[#allocation35 + $0x68] sm:$0xff]
    %v6851 = vld [vmem:[#allocation35 + $0x70] sm:$0xff]
    %v6852 = vld [vmem:[#allocation35 + $0x78] sm:$0xff]
    %v6853 = vld [vmem:[%s75] sm:$0x1]
    %v6855 = vlaneseq
    %v6856 = vshrl.u32 %v6855, 7
    %v6857 = vsub.s32 0, %v6856
    %v6858 = vrot.slane %v6853, %v6857
    %6860 = vmatprep.subr.mxu0 0.0
    %6861 = vmatpush1.msra.mxu0 %v6852
    %6862 = vmatprep.subr.mxu0 0.0
    %6863 = vmatpush1.msra.mxu0 %v6851
    %6864 = vmatprep.subr.mxu0 0.0
    %6865 = vmatpush1.msra.mxu0 %v6850
    %6866 = vmatprep.subr.mxu0 0.0
    %6867 = vmatpush1.msra.mxu0 %v6849
    %6868 = vmatprep.subr.mxu0 0.0
    %6869 = vmatpush1.msra.mxu0 %v6848
    %6870 = vmatprep.subr.mxu0 0.0
    %6871 = vmatpush1.msra.mxu0 %v6847
    %6872 = vmatprep.subr.mxu0 0.0
    %6873 = vmatpush1.msra.mxu0 %v6846
    %6874 = vmatprep.subr.mxu0 0.0
    %6875 = vmatpush1.msra.mxu0 %v6845
    %6876 = vmatprep.subr.mxu0 0.0
    %6877 = vmatpush1.msra.mxu0 %v6844
    %6878 = vmatprep.subr.mxu0 0.0
    %6879 = vmatpush1.msra.mxu0 %v6843
    %6880 = vmatprep.subr.mxu0 0.0
    %6881 = vmatpush1.msra.mxu0 %v6842
    %6882 = vmatprep.subr.mxu0 0.0
    %6883 = vmatpush1.msra.mxu0 %v6841
    %6884 = vmatprep.subr.mxu0 0.0
    %6885 = vmatpush1.msra.mxu0 %v6840
    %6886 = vmatprep.subr.mxu0 0.0
    %6887 = vmatpush1.msra.mxu0 %v6839
    %6888 = vmatprep.subr.mxu0 0.0
    %6889 = vmatpush1.msra.mxu0 %v6838
    %6890 = vmatprep.subr.mxu0 0.0
    %6891 = vmatpush1.msra.mxu0 %v6837
    %6892 = vmatprep.subr.mxu0 0.0
    %6893 = vmatpush2.msra.mxu0 0.0
    %6894 = vmatprep.subr.mxu0 0.0
    %6895 = vmatpush2.msra.mxu0 0.0
    %6896 = vmatprep.subr.mxu0 0.0
    %6897 = vmatpush2.msra.mxu0 0.0
    %6898 = vmatprep.subr.mxu0 0.0
    %6899 = vmatpush2.msra.mxu0 0.0
    %6900 = vmatprep.subr.mxu0 0.0
    %6901 = vmatpush2.msra.mxu0 0.0
    %6902 = vmatprep.subr.mxu0 0.0
    %6903 = vmatpush2.msra.mxu0 0.0
    %6904 = vmatprep.subr.mxu0 0.0
    %6905 = vmatpush2.msra.mxu0 0.0
    %6906 = vmatprep.subr.mxu0 0.0
    %6907 = vmatpush2.msra.mxu0 0.0
    %6908 = vmatprep.subr.mxu0 0.0
    %6909 = vmatpush2.msra.mxu0 0.0
    %6910 = vmatprep.subr.mxu0 0.0
    %6911 = vmatpush2.msra.mxu0 0.0
    %6912 = vmatprep.subr.mxu0 0.0
    %6913 = vmatpush2.msra.mxu0 0.0
    %6914 = vmatprep.subr.mxu0 0.0
    %6915 = vmatpush2.msra.mxu0 0.0
    %6916 = vmatprep.subr.mxu0 0.0
    %6917 = vmatpush2.msra.mxu0 0.0
    %6918 = vmatprep.subr.mxu0 0.0
    %6919 = vmatpush2.msra.mxu0 0.0
    %6920 = vmatprep.subr.mxu0 0.0
    %6921 = vmatpush2.msra.mxu0 0.0
    %6922 = vmatprep.subr.mxu0 0.0
    %6923 = vmatpush2.msra.mxu0 0.0
    %6924 = vmatprep.mubr.f32.mxu0 0.0
    %6925 = vmatmul.mubr.f32.gmra.mxu0 %v6835
    %v6926 = vpop.f32.mrf.mxu0
    %v6927 = vadd.f32 %v6858, %v6926
    %v6928 = vpop.f32.mrf.mxu0
    %6929 = vmatprep.mubr.f32.mxu0 0.0
    %6930 = vmatmul.mubr.f32.gmra.mxu0 %v6836
    %v6931 = vpop.f32.mrf.mxu0
    %v6932 = vadd.f32 %v6858, %v6931
    %v6933 = vpop.f32.mrf.mxu0
    %6934 = vdwg.mxu0
    %v6935 = vld [vmem:[#allocation37] sm:$0xff]
    %v6936 = vld [vmem:[#allocation37 + $0x8] sm:$0xff]
    %v6937 = vld [vmem:[#allocation37 + $0x10] sm:$0xff]
    %v6938 = vld [vmem:[#allocation37 + $0x18] sm:$0xff]
    %v6939 = vld [vmem:[#allocation37 + $0x20] sm:$0xff]
    %v6940 = vld [vmem:[#allocation37 + $0x28] sm:$0xff]
    %v6941 = vld [vmem:[#allocation37 + $0x30] sm:$0xff]
    %v6942 = vld [vmem:[#allocation37 + $0x38] sm:$0xff]
    %v6943 = vld [vmem:[#allocation37 + $0x40] sm:$0xff]
    %v6944 = vld [vmem:[#allocation37 + $0x48] sm:$0xff]
    %v6945 = vld [vmem:[#allocation37 + $0x50] sm:$0xff]
    %v6946 = vld [vmem:[#allocation37 + $0x58] sm:$0xff]
    %v6947 = vld [vmem:[#allocation37 + $0x60] sm:$0xff]
    %v6948 = vld [vmem:[#allocation37 + $0x68] sm:$0xff]
    %v6949 = vld [vmem:[#allocation37 + $0x70] sm:$0xff]
    %v6950 = vld [vmem:[#allocation37 + $0x78] sm:$0xff]
    %v6951 = vld [vmem:[%s79] sm:$0x1]
    %v6953 = vlaneseq
    %v6954 = vshrl.u32 %v6953, 7
    %v6955 = vsub.s32 0, %v6954
    %v6956 = vrot.slane %v6951, %v6955
    %6958 = vmatprep.subr.mxu0 0.0
    %6959 = vmatpush1.msra.mxu0 %v6950
    %6960 = vmatprep.subr.mxu0 0.0
    %6961 = vmatpush1.msra.mxu0 %v6949
    %6962 = vmatprep.subr.mxu0 0.0
    %6963 = vmatpush1.msra.mxu0 %v6948
    %6964 = vmatprep.subr.mxu0 0.0
    %6965 = vmatpush1.msra.mxu0 %v6947
    %6966 = vmatprep.subr.mxu0 0.0
    %6967 = vmatpush1.msra.mxu0 %v6946
    %6968 = vmatprep.subr.mxu0 0.0
    %6969 = vmatpush1.msra.mxu0 %v6945
    %6970 = vmatprep.subr.mxu0 0.0
    %6971 = vmatpush1.msra.mxu0 %v6944
    %6972 = vmatprep.subr.mxu0 0.0
    %6973 = vmatpush1.msra.mxu0 %v6943
    %6974 = vmatprep.subr.mxu0 0.0
    %6975 = vmatpush1.msra.mxu0 %v6942
    %6976 = vmatprep.subr.mxu0 0.0
    %6977 = vmatpush1.msra.mxu0 %v6941
    %6978 = vmatprep.subr.mxu0 0.0
    %6979 = vmatpush1.msra.mxu0 %v6940
    %6980 = vmatprep.subr.mxu0 0.0
    %6981 = vmatpush1.msra.mxu0 %v6939
    %6982 = vmatprep.subr.mxu0 0.0
    %6983 = vmatpush1.msra.mxu0 %v6938
    %6984 = vmatprep.subr.mxu0 0.0
    %6985 = vmatpush1.msra.mxu0 %v6937
    %6986 = vmatprep.subr.mxu0 0.0
    %6987 = vmatpush1.msra.mxu0 %v6936
    %6988 = vmatprep.subr.mxu0 0.0
    %6989 = vmatpush1.msra.mxu0 %v6935
    %6990 = vmatprep.subr.mxu0 0.0
    %6991 = vmatpush2.msra.mxu0 0.0
    %6992 = vmatprep.subr.mxu0 0.0
    %6993 = vmatpush2.msra.mxu0 0.0
    %6994 = vmatprep.subr.mxu0 0.0
    %6995 = vmatpush2.msra.mxu0 0.0
    %6996 = vmatprep.subr.mxu0 0.0
    %6997 = vmatpush2.msra.mxu0 0.0
    %6998 = vmatprep.subr.mxu0 0.0
    %6999 = vmatpush2.msra.mxu0 0.0
    %7000 = vmatprep.subr.mxu0 0.0
    %7001 = vmatpush2.msra.mxu0 0.0
    %7002 = vmatprep.subr.mxu0 0.0
    %7003 = vmatpush2.msra.mxu0 0.0
    %7004 = vmatprep.subr.mxu0 0.0
    %7005 = vmatpush2.msra.mxu0 0.0
    %7006 = vmatprep.subr.mxu0 0.0
    %7007 = vmatpush2.msra.mxu0 0.0
    %7008 = vmatprep.subr.mxu0 0.0
    %7009 = vmatpush2.msra.mxu0 0.0
    %7010 = vmatprep.subr.mxu0 0.0
    %7011 = vmatpush2.msra.mxu0 0.0
    %7012 = vmatprep.subr.mxu0 0.0
    %7013 = vmatpush2.msra.mxu0 0.0
    %7014 = vmatprep.subr.mxu0 0.0
    %7015 = vmatpush2.msra.mxu0 0.0
    %7016 = vmatprep.subr.mxu0 0.0
    %7017 = vmatpush2.msra.mxu0 0.0
    %7018 = vmatprep.subr.mxu0 0.0
    %7019 = vmatpush2.msra.mxu0 0.0
    %7020 = vmatprep.subr.mxu0 0.0
    %7021 = vmatpush2.msra.mxu0 0.0
    %7022 = vmatprep.mubr.f32.mxu0 0.0
    %7023 = vmatmul.mubr.f32.gmra.mxu0 %v6927
    %v7024 = vpop.f32.mrf.mxu0
    %v7025 = vadd.f32 %v6956, %v7024
    %v7026 = vpop.f32.mrf.mxu0
    %7027 = vmatprep.mubr.f32.mxu0 0.0
    %7028 = vmatmul.mubr.f32.gmra.mxu0 %v6932
    %v7029 = vpop.f32.mrf.mxu0
    %v7030 = vadd.f32 %v6956, %v7029
    %v7031 = vpop.f32.mrf.mxu0
    %7032 = vdwg.mxu0
    %7033 = vst [vmem:[%s81] sm:$0xff] %v7025
    %7034 = vst [vmem:[%s81 + $0x8] sm:$0xff] %v7030
    // Predicated region
    $region254: #{nnfunc_forward.1} parent=1 // pred_check
      _
    $region255: #{nnfunc_forward.1} parent=1 // pred_check_branch
      %7036 = sbr.rel (0) target = $region257
    $region256: #{nnfunc_forward.1} parent=1 // pred_region
      _
    $region257: #{nnfunc_forward.1} parent=1 // pred_fallthru
      _
    // Predicated region
    $region258: #{nnfunc_forward.1} parent=1 // pred_check
      _
    $region259: #{nnfunc_forward.1} parent=1 // pred_check_branch
      %7038 = sbr.rel (0) target = $region261
    $region260: #{nnfunc_forward.1} parent=1 // pred_region
      _
    $region261: #{nnfunc_forward.1} parent=1 // pred_fallthru
      _
    %7039 = vsyncpa [#allocation4], 1
    %7040 = vsyncpa [#allocation6], 1
    %7041 = vsyncpa [#allocation9], 1
    %7042 = vsyncpa [#allocation12], 1
    %7043 = vsyncpa [#allocation15], 1
    %7044 = vsyncpa [#allocation18], 1
    %7045 = vsyncpa [#allocation21], 1
    %7046 = vsyncpa [#allocation24], 1
    %7047 = vsyncpa [#allocation27], 1
    %7048 = vsyncpa [#allocation30], 1
    %7049 = vsyncpa [#allocation33], 1
    %7050 = vsyncpa [#allocation36], 1

</llo_original>
